<compile_context>
chip_gen: v7x
topology: tpu7x:2x2x1
jax: 0.10.0
libtpu: 0.0.40
codegen_flags: <defaults>
</compile_context>

<pallas_src>
import jax
import jax.numpy as jnp
import numpy as np
from jax import lax
from jax.experimental import pallas as pl
from jax.experimental.pallas import tpu as pltpu

_VMEM_LIMIT_BYTES = 48 * 1024 * 1024   # fits v7x (64 MiB phys) with headroom
_NEG = -1e30
_BIG = 1e30


def _round_up(x, m):
    return ((x + m - 1) // m) * m


# ----------------------------------------------------------------------------
# Kernel 1: tiled pairwise squared-distance and/or fused cos row/col maxes
# ----------------------------------------------------------------------------
def _make_pairwise_kernel(want_d2, want_cosmax, tn, tm, n_real, m_real,
                          mask_rows, mask_cols):
    def kernel(*refs):
        pos = 0
        a_ref = refs[pos]; pos += 1
        bt_ref = refs[pos]; pos += 1
        if want_d2:
            na2_ref = refs[pos]; pos += 1
            nb2_ref = refs[pos]; pos += 1
        if want_cosmax:
            inva_ref = refs[pos]; pos += 1
            invb_ref = refs[pos]; pos += 1
        if want_d2:
            d2_ref = refs[pos]; pos += 1
        if want_cosmax:
            rmax_ref = refs[pos]; pos += 1
            cmax_ref = refs[pos]; pos += 1

        i = pl.program_id(1)
        j = pl.program_id(2)

        a = a_ref[0].astype(jnp.float32)                          # (tn, C)
        bt = bt_ref[0].astype(jnp.float32)                        # (C, tm)
        dots = jnp.dot(a, bt, preferred_element_type=jnp.float32)  # MXU

        col_ok = None
        if mask_cols:
            col_ids = lax.broadcasted_iota(jnp.int32, (tn, tm), 1)
            col_ok = col_ids < (m_real - j * tm)
        row_ok = None
        if mask_rows and want_cosmax:
            row_ids = lax.broadcasted_iota(jnp.int32, (tn, tm), 0)
            row_ok = row_ids < (n_real - i * tn)

        if want_d2:
            d2 = na2_ref[0] + nb2_ref[0] - 2.0 * dots
            if col_ok is not None:
                d2 = jnp.where(col_ok, d2, _BIG)                  # padded cols out of top-k
            d2_ref[0] = d2.astype(d2_ref.dtype)

        if want_cosmax:
            cos = dots * (inva_ref[0] * invb_ref[0])
            if col_ok is not None:
                cos = jnp.where(col_ok, cos, _NEG)
            if row_ok is not None:
                cos = jnp.where(row_ok, cos, _NEG)
            tile_rmax = jnp.max(cos, axis=1, keepdims=True)       # (tn, 1)

            @pl.when(j == 0)
            def _():
                rmax_ref[0] = jnp.full((tn, 1), _NEG, jnp.float32)

            rmax_ref[0] = jnp.maximum(rmax_ref[0], tile_rmax)     # resident across j
            tile_cmax = jnp.max(cos, axis=0, keepdims=True)       # (1, tm)
            cmax_ref[0] = jnp.broadcast_to(tile_cmax, (8, tm))    # per-i-tile partial

    return kernel


def pairwise_dist_cosmax(a, b_t, *, want_d2=True, want_cosmax=False,
                         tn_max=256, tm_max=512):
    """a: (B, N, C) points-major; b_t: (B, C, M) channel-major.

    Returns (d2, row_max, col_max):
      d2      : (B, Np, Mp) padded squared distances (padded cols = 1e30) or None
      row_max : (B, N, 1)   max_m cos(a[n], b[m])                          or None
      col_max : (B, M)      max_n cos(a[n], b[m])                          or None
    The full cos matrix is never written to HBM.
    """
    B, N, C = a.shape
    M = b_t.shape[2]

    Np = _round_up(N, 8)
    if Np > tn_max:
        Np = _round_up(Np, tn_max)
        tn = tn_max
    else:
        tn = Np
    Mp = _round_up(M, 128)
    if Mp > tm_max:
        Mp = _round_up(Mp, tm_max)
        tm = tm_max
    else:
        tm = Mp

    af = a.astype(jnp.float32)
    btf = b_t.astype(jnp.float32)
    if Np != N:
        af = jnp.pad(af, ((0, 0), (0, Np - N), (0, 0)))
    if Mp != M:
        btf = jnp.pad(btf, ((0, 0), (0, 0), (0, Mp - M)))

    nI, nJ = Np // tn, Mp // tm

    inputs = [af, btf]
    in_specs = [pl.BlockSpec((1, tn, C), lambda b, i, j: (b, i, 0)),
                pl.BlockSpec((1, C, tm), lambda b, i, j: (b, 0, j))]
    if want_d2:
        na2 = jnp.sum(jnp.square(af), axis=2, keepdims=True)        # (B, Np, 1)
        nb2 = jnp.sum(jnp.square(btf), axis=1, keepdims=True)       # (B, 1, Mp)
        inputs += [na2, nb2]
        in_specs += [pl.BlockSpec((1, tn, 1), lambda b, i, j: (b, i, 0)),
                     pl.BlockSpec((1, 1, tm), lambda b, i, j: (b, 0, j))]
    if want_cosmax:
        # inverse norms precomputed in the wrapper (tiny arrays).
        inva = 1.0 / (jnp.linalg.norm(af, axis=2, keepdims=True) + 1e-6)
        invb = 1.0 / (jnp.linalg.norm(btf, axis=1, keepdims=True) + 1e-6)
        inputs += [inva, invb]
        in_specs += [pl.BlockSpec((1, tn, 1), lambda b, i, j: (b, i, 0)),
                     pl.BlockSpec((1, 1, tm), lambda b, i, j: (b, 0, j))]

    out_shapes, out_specs = [], []
    if want_d2:
        out_shapes.append(jax.ShapeDtypeStruct((B, Np, Mp), jnp.float32))
        out_specs.append(pl.BlockSpec((1, tn, tm), lambda b, i, j: (b, i, j)))
    if want_cosmax:
        out_shapes.append(jax.ShapeDtypeStruct((B, Np, 1), jnp.float32))
        out_specs.append(pl.BlockSpec((1, tn, 1), lambda b, i, j: (b, i, 0)))
        out_shapes.append(jax.ShapeDtypeStruct((B, nI * 8, Mp), jnp.float32))
        out_specs.append(pl.BlockSpec((1, 8, tm), lambda b, i, j: (b, i, j)))

    grid_spec = pltpu.PrefetchScalarGridSpec(
        num_scalar_prefetch=0,
        grid=(B, nI, nJ),
        in_specs=in_specs,
        out_specs=tuple(out_specs),
    )

    flops = int(2 * B * Np * Mp * C + 12 * B * Np * Mp)
    out_bytes = 0
    if want_d2:
        out_bytes += 4 * B * Np * Mp
    if want_cosmax:
        out_bytes += 4 * B * (Np + nI * 8 * Mp)
    in_bytes = 4 * B * (Np * C * nJ + C * Mp * nI + 4 * (Np + Mp))
    kernel = _make_pairwise_kernel(want_d2, want_cosmax, tn, tm, N, M,
                                   mask_rows=(Np != N), mask_cols=(Mp != M))

    outs = pl.pallas_call(
        kernel,
        out_shape=tuple(out_shapes),
        grid_spec=grid_spec,
        compiler_params=pltpu.CompilerParams(
            dimension_semantics=("parallel", "parallel", "arbitrary"),
            vmem_limit_bytes=_VMEM_LIMIT_BYTES),
        cost_estimate=pl.CostEstimate(flops=flops, transcendentals=0,
                                      bytes_accessed=int(in_bytes + out_bytes)),
    )(*inputs)
    if not isinstance(outs, (tuple, list)):
        outs = (outs,)

    pos = 0
    d2 = row_max = col_max = None
    if want_d2:
        d2 = outs[pos]; pos += 1
    if want_cosmax:
        row_max = outs[pos][:, :N, :]; pos += 1
        col_max = jnp.max(outs[pos], axis=1)[:, :M]; pos += 1
    return d2, row_max, col_max


# ----------------------------------------------------------------------------
# Kernel 2: fused 1x1-conv (+ folded BN) + ReLU stacks, multi-branch,
# channels-last or channel-major input, lane-dense (Cout, TL) output.
# ----------------------------------------------------------------------------
def _make_stack_kernel(branch_flags, contract_last_first):
    total_layers = sum(len(f) for f in branch_flags)

    def kernel(x_ref, *args):
        param_refs = args[:2 * total_layers]
        out_refs = args[2 * total_layers:]
        x = x_ref[0].astype(jnp.float32)          # (Cin, TL) or (TL, Cin)
        p = 0
        for bi, flags in enumerate(branch_flags):
            h = x
            for li, do_relu in enumerate(flags):
                w = param_refs[2 * p][...].astype(jnp.float32)       # (Cout, Cin)
                t = param_refs[2 * p + 1][...].astype(jnp.float32)   # (Cout, 1)
                p += 1
                if li == 0 and contract_last_first:
                    # channels-last tile: contract the trailing channel axis.
                    h = lax.dot_general(w, h, (((1,), (1,)), ((), ())),
                                        preferred_element_type=jnp.float32)
                else:
                    h = jnp.dot(w, h, preferred_element_type=jnp.float32)
                h = h + t                                            # BN scale folded into W
                if do_relu:
                    h = jnp.maximum(h, 0.0)
            out_refs[bi][0] = h.astype(out_refs[bi].dtype)

    return kernel


def mlp_stacks(x, branches, *, channels_last=False, tile_l=1024):
    """x: (B, Cin, L) if channels_last=False else (B, L, Cin).

    branches: list of (layers, relu_flags) where layers = [(W, scale, shift), ...].
    Each branch applies y = relu?((scale*W) @ y + shift), fully fused in VMEM,
    sharing one read of x.  Returns a list of (B, Cout_i, L) arrays.
    """
    assert tile_l % 128 == 0
    if channels_last:
        B, L, Cin = x.shape
    else:
        B, Cin, L = x.shape
    Lp = _round_up(L, 128)
    if Lp > tile_l:
        Lp = _round_up(Lp, tile_l)
        TL = tile_l
    else:
        TL = Lp
    if Lp != L:
        pad = ((0, 0), (0, Lp - L), (0, 0)) if channels_last else ((0, 0), (0, 0), (0, Lp - L))
        x = jnp.pad(x, pad)

    if channels_last:
        in_specs = [pl.BlockSpec((1, TL, Cin), lambda b, l: (b, l, 0))]
    else:
        in_specs = [pl.BlockSpec((1, Cin, TL), lambda b, l: (b, 0, l))]

    params, relu_flags_all, out_channels = [], [], []
    flops, wbytes = 0, 0
    for layers, flags in branches:
        relu_flags_all.append(tuple(flags))
        out_channels.append(layers[-1][0].shape[0])
        for (w, s, t) in layers:
            co, ci = w.shape
            wf = (w.astype(jnp.float32) * s.astype(jnp.float32)[:, None])  # fold BN scale
            in_specs.append(pl.BlockSpec((co, ci), lambda b, l: (0, 0)))
            in_specs.append(pl.BlockSpec((co, 1), lambda b, l: (0, 0)))
            params += [wf, t.reshape(co, 1).astype(jnp.float32)]
            flops += int(2 * B * Lp * co * ci + 2 * B * Lp * co)
            wbytes += int(4 * co * (ci + 1))

    out_specs = tuple(pl.BlockSpec((1, co, TL), lambda b, l: (b, 0, l))
                      for co in out_channels)
    out_shape = tuple(jax.ShapeDtypeStruct((B, co, Lp), jnp.float32)
                      for co in out_channels)

    grid_spec = pltpu.PrefetchScalarGridSpec(
        num_scalar_prefetch=0,
        grid=(B, Lp // TL),
        in_specs=in_specs,
        out_specs=out_specs,
    )
    bytes_accessed = int(4 * B * Lp * (Cin + sum(out_channels))) + wbytes

    outs = pl.pallas_call(
        _make_stack_kernel(tuple(relu_flags_all), channels_last),
        out_shape=out_shape,
        grid_spec=grid_spec,
        compiler_params=pltpu.CompilerParams(
            dimension_semantics=("parallel", "parallel"),
            vmem_limit_bytes=_VMEM_LIMIT_BYTES),
        cost_estimate=pl.CostEstimate(flops=flops, transcendentals=0,
                                      bytes_accessed=bytes_accessed),
    )(x, *params)
    if not isinstance(outs, (tuple, list)):
        outs = (outs,)
    return [o[:, :, :L] for o in outs]


# ----------------------------------------------------------------------------
# Plain-JAX helpers (irregular / tiny ops)
# ----------------------------------------------------------------------------
def knn_gather(x, idx):
    """x: (B, M, D), idx: (B, N, K) -> (B, N, K, D)."""
    # TODO(synk): index gather has no clean Pallas TPU primitive; done in XLA.
    return jax.vmap(lambda xb, ib: xb[ib])(x, idx)


def _cosine(d1, d2):
    inner = jnp.sum(d1 * d2, axis=-1)
    n1 = jnp.linalg.norm(d1, axis=-1)
    n2 = jnp.linalg.norm(d2, axis=-1)
    return inner / (n1 * n2 + 1e-6)


def _nbr_pool(xyz, desc_t, convs_2_layers, k):
    """Self-KNN in xyz space + convs_2 attention pooling. xyz (Bq,N,3), desc_t (Bq,N,C)."""
    Bq, n, _ = xyz.shape
    C = desc_t.shape[2]
    # distance-only pairwise kernel (no discarded cos matrix).
    d2, _, _ = pairwise_dist_cosmax(xyz, jnp.swapaxes(xyz, 1, 2),
                                    want_d2=True, want_cosmax=False)
    # TODO(synk): top-k selection has no Pallas TPU primitive; done in plain JAX.
    _, idx = jax.lax.top_k(-d2, k)
    idx = idx[:, :n]
    knn_xyz = knn_gather(xyz, idx)                                   # (Bq,N,K,3)
    knn_feats = knn_gather(desc_t, idx)                              # (Bq,N,K,C)
    rela_xyz = knn_xyz - xyz[:, :, None, :]
    rela_dist = jnp.linalg.norm(rela_xyz, axis=-1, keepdims=True)
    feats = jnp.concatenate([knn_feats, rela_xyz, rela_dist], axis=-1)  # (Bq,N,K,C+4)
    y = mlp_stacks(feats.reshape(Bq, n * k, C + 4),
                   [(convs_2_layers, (True, True, True))],
                   channels_last=True)[0].reshape(Bq, C, n, k)
    w = jax.nn.softmax(jnp.max(y, axis=1), axis=-1)                  # (Bq,N,K)
    return jnp.sum(knn_feats * w[..., None], axis=2)                 # (Bq,N,C)


def init_params(key, c):
    keys = iter(jax.random.split(key, 16))

    def conv_bn(cin, cout, bias=False, bn=True):
        kw, kg, kb, km, kv, kbias = jax.random.split(next(keys), 6)
        w = jax.random.normal(kw, (cout, cin), jnp.float32) / np.sqrt(cin)
        b = (jax.random.normal(kbias, (cout,), jnp.float32) * 0.1
             if bias else jnp.zeros((cout,), jnp.float32))
        if bn:
            # TODO(synk): BatchNorm is applied in folded inference form
            # (scale/shift); training-mode batch statistics are not reproduced.
            gamma = jax.random.uniform(kg, (cout,), jnp.float32, 0.5, 1.5)
            beta = jax.random.normal(kb, (cout,), jnp.float32) * 0.1
            mean = jax.random.normal(km, (cout,), jnp.float32) * 0.1
            var = jax.random.uniform(kv, (cout,), jnp.float32, 0.5, 1.5)
            scale = gamma / jnp.sqrt(var + 1e-5)
            shift = beta + scale * (b - mean)
        else:
            scale = jnp.ones((cout,), jnp.float32)
            shift = b
        return (w, scale, shift)

    return {
        "convs_1": [conv_bn(2 * c + 16, 2 * c), conv_bn(2 * c, 2 * c), conv_bn(2 * c, 2 * c)],
        "convs_2": [conv_bn(c + 4, c), conv_bn(c, c), conv_bn(c, c)],
        "mlp": [conv_bn(2 * c, 2 * c, bias=True), conv_bn(2 * c, 2 * c, bias=True),
                conv_bn(2 * c, 1, bias=True, bn=False)],
        "mlpx": [conv_bn(2 * c, c, bias=True)],
    }


# ----------------------------------------------------------------------------
# Full CoarseReg forward (use_sim=True, use_neighbor=True)
# ----------------------------------------------------------------------------
def coarse_reg_forward(params, src_xyz, src_desc, dst_xyz, dst_desc,
                       src_weights, dst_weights, perms, *, k):
    B, ns, _ = src_xyz.shape
    nd = dst_xyz.shape[1]
    C = src_desc.shape[1]

    src_desc_t = jnp.swapaxes(src_desc, 1, 2)        # (B, Ns, C)
    dst_desc_t = jnp.swapaxes(dst_desc, 1, 2)        # (B, Nd, C)

    # ---- descriptor-space KNN with fused cos row/col maxes (Pallas) ----
    d2_desc, row_max, col_max = pairwise_dist_cosmax(
        src_desc_t, dst_desc, want_d2=True, want_cosmax=True)
    _, src_knn_idx = jax.lax.top_k(-d2_desc, k)                   # (B, Ns_p, K)
    src_knn_idx = src_knn_idx[:, :ns]                             # (B, Ns, K)

    src_knn_desc = knn_gather(dst_desc_t, src_knn_idx)            # (B, Ns, K, C)
    src_knn_xyz = knn_gather(dst_xyz, src_knn_idx)                # (B, Ns, K, 3)
    src_xyz_expand = jnp.broadcast_to(src_xyz[:, :, None, :], (B, ns, k, 3))
    src_desc_expand = jnp.broadcast_to(src_desc_t[:, :, None, :], (B, ns, k, C))
    src_rela_xyz = src_knn_xyz - src_xyz_expand
    src_rela_dist = jnp.linalg.norm(src_rela_xyz, axis=-1, keepdims=True)
    src_weights_expand = jnp.broadcast_to(src_weights[:, :, None, None], (B, ns, k, 1))
    src_knn_weights = knn_gather(dst_weights[:, :, None], src_knn_idx)    # (B, Ns, K, 1)

    # ---- use_sim: cos for the K neighbors recomputed exactly from descriptors,
    #      normalized by the fused row/col maxes (no (B,N,M) cos matrix in HBM).
    cos_knn = _cosine(src_desc_expand, src_knn_desc)                      # (B, Ns, K)
    col_max_knn = jax.vmap(lambda v, i: v[i])(col_max, src_knn_idx)       # (B, Ns, K)
    dst_src_cos = cos_knn / (col_max_knn + 1e-6)
    src_dst_cos = cos_knn / (row_max + 1e-6)

    # ---- use_neighbor: neighborhood-aware descriptors (src+dst batched together)
    if ns == nd:
        xyz_cat = jnp.concatenate([src_xyz, dst_xyz], axis=0)            # (2B, N, 3)
        desc_cat = jnp.concatenate([src_desc_t, dst_desc_t], axis=0)     # (2B, N, C)
        nbr_desc = _nbr_pool(xyz_cat, desc_cat, params["convs_2"], k)    # (2B, N, C)
        src_nbr_desc, dst_nbr_desc = nbr_desc[:B], nbr_desc[B:]
    else:
        src_nbr_desc = _nbr_pool(src_xyz, src_desc_t, params["convs_2"], k)
        dst_nbr_desc = _nbr_pool(dst_xyz, dst_desc_t, params["convs_2"], k)

    # neighbor-aware cos: only the row/col maxes need the full matrix (fused
    # in-kernel, no matrix output); the K cos values are recomputed via gather.
    _, row_max_n, col_max_n = pairwise_dist_cosmax(
        src_nbr_desc, jnp.swapaxes(dst_nbr_desc, 1, 2),
        want_d2=False, want_cosmax=True)
    src_nbr_knn_desc = knn_gather(dst_nbr_desc, src_knn_idx)              # (B, Ns, K, C)
    cos_nbr_knn = _cosine(
        jnp.broadcast_to(src_nbr_desc[:, :, None, :], (B, ns, k, C)), src_nbr_knn_desc)
    col_max_n_knn = jax.vmap(lambda v, i: v[i])(col_max_n, src_knn_idx)
    dst_src_nbr_cos = cos_nbr_knn / (col_max_n_knn + 1e-6)
    src_dst_nbr_cos = cos_nbr_knn / (row_max_n + 1e-6)

    # ---- feature concat + fused attention conv stack (Pallas, channels-last in) ----
    geom_feats = jnp.concatenate(
        [src_rela_xyz, src_rela_dist, src_xyz_expand, src_knn_xyz], axis=-1)            # 10
    desc_feats = jnp.concatenate(
        [src_desc_expand, src_knn_desc, src_weights_expand, src_knn_weights], axis=-1)  # 2C+2
    similarity_feats = jnp.stack(
        [src_dst_cos, dst_src_cos, src_dst_nbr_cos, dst_src_nbr_cos], axis=-1)          # 4
    feats = jnp.concatenate([geom_feats, desc_feats, similarity_feats], axis=-1)        # (B,Ns,K,2C+16)

    feats_out = mlp_stacks(feats.reshape(B, ns * k, 2 * C + 16),
                           [(params["convs_1"], (True, True, True))],
                           channels_last=True)[0].reshape(B, 2 * C, ns, k)

    attentive_weights = jax.nn.softmax(jnp.max(feats_out, axis=1), axis=-1)             # (B, Ns, K)
    corres_xyz = jnp.sum(attentive_weights[..., None] * src_knn_xyz, axis=2)            # (B, Ns, 3)
    attentive_feats = jnp.einsum('bnk,bcnk->bcn', attentive_weights, feats_out)         # (B, 2C, Ns)

    # ---- merged mlpx + (mlp1->mlp2->mlp3): one pallas_call, one input read ----
    mlpx_out, mlp_out = mlp_stacks(attentive_feats,
                                   [(params["mlpx"], (True,)),
                                    (params["mlp"], (True, True, False))],
                                   channels_last=False)
    attentive_features = jnp.swapaxes(mlpx_out, 1, 2)                                   # (B, Ns, C)
    weights = jax.nn.sigmoid(mlp_out[:, 0, :])                                          # (B, Ns)

    # TODO(synk): torch.randperm is nondeterministic; replaced with fixed permutations
    # (the reference draws two independent permutations, reproduced here).
    attentive_features_prime = attentive_features[perms[0]]
    weights_prime = weights[perms[1]]
    return corres_xyz, weights, weights_prime, attentive_features, attentive_features_prime


# ----------------------------------------------------------------------------
if __name__ == "__main__":
    key = jax.random.PRNGKey(0)
    B, N, C, K = 2, 64, 32, 8
    ks = jax.random.split(key, 12)
    src_xyz = jax.random.normal(ks[0], (B, N, 3), jnp.float32)
    dst_xyz = jax.random.normal(ks[1], (B, N, 3), jnp.float32)
    src_desc = jax.random.normal(ks[2], (B, C, N), jnp.float32)
    dst_desc = jax.random.normal(ks[3], (B, C, N), jnp.float32)
    src_weights = jax.random.uniform(ks[4], (B, N), dtype=jnp.float32)
    dst_weights = jax.random.uniform(ks[5], (B, N), dtype=jnp.float32)
    params = init_params(ks[6], C)
    perms = jnp.stack([jax.random.permutation(ks[7], B),
                       jax.random.permutation(ks[8], B)])

    fwd = jax.jit(coarse_reg_forward, static_argnames=("k",))
    outs = fwd(params, src_xyz, src_desc, dst_xyz, dst_desc,
               src_weights, dst_weights, perms, k=K)
    corres_xyz, weights, weights_prime, att_feats, att_feats_prime = jax.block_until_ready(outs)
    assert corres_xyz.shape == (B, N, 3)
    assert weights.shape == (B, N) and weights_prime.shape == (B, N)
    assert att_feats.shape == (B, N, C) and att_feats_prime.shape == (B, N, C)
    assert bool(jnp.all(jnp.isfinite(corres_xyz))) and bool(jnp.all(jnp.isfinite(weights)))

    # --- validate the pairwise kernel (d2 + fused row/col cos maxes) ---
    a = jnp.swapaxes(src_desc, 1, 2)
    d2_k, rmax_k, cmax_k = jax.block_until_ready(
        pairwise_dist_cosmax(a, dst_desc, want_d2=True, want_cosmax=True))
    dots = jnp.einsum("bnc,bcm->bnm", a, dst_desc, precision=jax.lax.Precision.HIGHEST)
    na = jnp.linalg.norm(a, axis=-1)
    nb = jnp.linalg.norm(dst_desc, axis=1)
    d2_r = jnp.square(na)[:, :, None] + jnp.square(nb)[:, None, :] - 2.0 * dots
    cos_r = dots / (na[:, :, None] * nb[:, None, :] + 1e-6)
    np.testing.assert_allclose(np.asarray(d2_k[:, :N, :N]), np.asarray(d2_r),
                               rtol=1e-2, atol=1e-2)
    np.testing.assert_allclose(np.asarray(rmax_k[..., 0]), np.asarray(cos_r.max(axis=2)),
                               rtol=1e-2, atol=1e-2)
    np.testing.assert_allclose(np.asarray(cmax_k), np.asarray(cos_r.max(axis=1)),
                               rtol=1e-2, atol=1e-2)

    # --- validate the fused conv/MLP stack kernels against pure-JAX references ---
    def _ref_stack(x_cm, layers, flags):
        h = x_cm
        for (w, s, t), f in zip(layers, flags):
            h = jnp.einsum("oc,bcl->bol", w, h, precision=jax.lax.Precision.HIGHEST)
            h = h * s[None, :, None] + t[None, :, None]
            if f:
                h = jnp.maximum(h, 0.0)
        return h

    x_cl = jax.random.normal(ks[9], (B, N * K, 2 * C + 16), jnp.float32)  # channels-last
    y_k = jax.block_until_ready(
        mlp_stacks(x_cl, [(params["convs_1"], (True, True, True))], channels_last=True))[0]
    y_r = _ref_stack(jnp.swapaxes(x_cl, 1, 2), params["convs_1"], (True, True, True))
    np.testing.assert_allclose(np.asarray(y_k), np.asarray(y_r), rtol=5e-2, atol=5e-2)

    att_chk = jax.random.normal(ks[10], (B, 2 * C, N), jnp.float32)       # channel-major
    yx_k, yw_k = jax.block_until_ready(
        mlp_stacks(att_chk, [(params["mlpx"], (True,)),
                             (params["mlp"], (True, True, False))], channels_last=False))
    yx_r = _ref_stack(att_chk, params["mlpx"], (True,))
    yw_r = _ref_stack(att_chk, params["mlp"], (True, True, False))
    np.testing.assert_allclose(np.asarray(yx_k), np.asarray(yx_r), rtol=5e-2, atol=5e-2)
    np.testing.assert_allclose(np.asarray(yw_k), np.asarray(yw_r), rtol=5e-2, atol=5e-2)

    print("KERNEL_OK")
</pallas_src>

<mosaic_0001>
module attributes {stable_mosaic.version = 11 : i64} {
  func.func @kernel(%arg0: i32, %arg1: i32, %arg2: i32, %arg3: memref<1x64x3xf32, #tpu.memory_space<vmem>>, %arg4: memref<1x3x128xf32, #tpu.memory_space<vmem>>, %arg5: memref<1x64x1xf32, #tpu.memory_space<vmem>>, %arg6: memref<1x1x128xf32, #tpu.memory_space<vmem>>, %arg7: memref<1x64x128xf32, #tpu.memory_space<vmem>>) attributes {dimension_semantics = [#tpu.dimension_semantics<parallel>, #tpu.dimension_semantics<parallel>, #tpu.dimension_semantics<arbitrary>], iteration_bounds = array<i64: 4, 1, 1>, scalar_prefetch = 0 : i64, scratch_operands = 0 : i64, tpu.core_type = #tpu.core_type<tc>, window_params = [{transform_indices = @transform_0, window_bounds = array<i64: 1, 64, 3>}, {transform_indices = @transform_1, window_bounds = array<i64: 1, 3, 128>}, {transform_indices = @transform_2, window_bounds = array<i64: 1, 64, 1>}, {transform_indices = @transform_3, window_bounds = array<i64: 1, 1, 128>}, {transform_indices = @transform_4, window_bounds = array<i64: 1, 64, 128>}]} {
    %c0 = arith.constant 0 : index
    %c0_0 = arith.constant 0 : index
    %c0_1 = arith.constant 0 : index
    %0 = vector.load %arg3[%c0, %c0_0, %c0_1] : memref<1x64x3xf32, #tpu.memory_space<vmem>>, vector<1x64x3xf32>
    %1 = vector.shape_cast %0 : vector<1x64x3xf32> to vector<64x3xf32>
    %c0_2 = arith.constant 0 : index
    %c0_3 = arith.constant 0 : index
    %c0_4 = arith.constant 0 : index
    %2 = vector.load %arg4[%c0_2, %c0_3, %c0_4] : memref<1x3x128xf32, #tpu.memory_space<vmem>>, vector<1x3x128xf32>
    %3 = vector.shape_cast %2 : vector<1x3x128xf32> to vector<3x128xf32>
    %cst = arith.constant dense<0.000000e+00> : vector<64x128xf32>
    %4 = tpu.matmul %1, %3, %cst {dimension_numbers = #tpu.dot_dimension_numbers<[1], [0], [0], [1], [0, 0, 1, 1], [], []>} : vector<64x3xf32>, vector<3x128xf32>, vector<64x128xf32> -> vector<64x128xf32>
    %5 = tpu.iota {dimensions = array<i32: 1>} : vector<64x128xi32>
    %c128_i32 = arith.constant 128 : i32
    %6 = arith.muli %arg2, %c128_i32 : i32
    %c64_i32 = arith.constant 64 : i32
    %7 = arith.subi %c64_i32, %6 : i32
    %8 = vector.broadcast %7 : i32 to vector<64x128xi32>
    %9 = arith.cmpi slt, %5, %8 : vector<64x128xi32>
    %c0_5 = arith.constant 0 : index
    %c0_6 = arith.constant 0 : index
    %c0_7 = arith.constant 0 : index
    %10 = vector.load %arg5[%c0_5, %c0_6, %c0_7] : memref<1x64x1xf32, #tpu.memory_space<vmem>>, vector<1x64x1xf32>
    %11 = vector.shape_cast %10 : vector<1x64x1xf32> to vector<64x1xf32>
    %c0_8 = arith.constant 0 : index
    %c0_9 = arith.constant 0 : index
    %c0_10 = arith.constant 0 : index
    %12 = vector.load %arg6[%c0_8, %c0_9, %c0_10] : memref<1x1x128xf32, #tpu.memory_space<vmem>>, vector<1x1x128xf32>
    %13 = vector.shape_cast %12 : vector<1x1x128xf32> to vector<1x128xf32>
    %14 = vector.broadcast %11 : vector<64x1xf32> to vector<64x128xf32>
    %15 = vector.broadcast %13 : vector<1x128xf32> to vector<64x128xf32>
    %16 = arith.addf %14, %15 : vector<64x128xf32>
    %cst_11 = arith.constant 2.000000e+00 : f32
    %17 = vector.broadcast %cst_11 : f32 to vector<64x128xf32>
    %18 = arith.mulf %17, %4 : vector<64x128xf32>
    %19 = arith.subf %16, %18 : vector<64x128xf32>
    %cst_12 = arith.constant 1.000000e+30 : f32
    %20 = vector.broadcast %cst_12 : f32 to vector<64x128xf32>
    %21 = arith.select %9, %19, %20 : vector<64x128xi1>, vector<64x128xf32>
    %c0_13 = arith.constant 0 : index
    %c0_14 = arith.constant 0 : index
    %c0_15 = arith.constant 0 : index
    %22 = vector.load %arg7[%c0_13, %c0_14, %c0_15] : memref<1x64x128xf32, #tpu.memory_space<vmem>>, vector<1x64x128xf32>
    %23 = vector.shape_cast %22 : vector<1x64x128xf32> to vector<64x128xf32>
    %24 = vector.shape_cast %21 : vector<64x128xf32> to vector<1x64x128xf32>
    tpu.vector_store %arg7[%c0_13, %c0_14, %c0_15], %24 {strides = array<i32>} : memref<1x64x128xf32, #tpu.memory_space<vmem>>, vector<1x64x128xf32>,
    return
  }
  func.func @transform_0(%arg0: i32, %arg1: i32, %arg2: i32) -> (i32, i32, i32) {
    %c0_i32 = arith.constant 0 : i32
    %c0_i32_0 = arith.constant 0 : i32
    return %arg0, %arg1, %c0_i32 : i32, i32, i32
  }
  func.func @transform_1(%arg0: i32, %arg1: i32, %arg2: i32) -> (i32, i32, i32) {
    %c0_i32 = arith.constant 0 : i32
    %c0_i32_0 = arith.constant 0 : i32
    return %arg0, %c0_i32, %arg2 : i32, i32, i32
  }
  func.func @transform_2(%arg0: i32, %arg1: i32, %arg2: i32) -> (i32, i32, i32) {
    %c0_i32 = arith.constant 0 : i32
    %c0_i32_0 = arith.constant 0 : i32
    return %arg0, %arg1, %c0_i32 : i32, i32, i32
  }
  func.func @transform_3(%arg0: i32, %arg1: i32, %arg2: i32) -> (i32, i32, i32) {
    %c0_i32 = arith.constant 0 : i32
    %c0_i32_0 = arith.constant 0 : i32
    return %arg0, %c0_i32, %arg2 : i32, i32, i32
  }
  func.func @transform_4(%arg0: i32, %arg1: i32, %arg2: i32) -> (i32, i32, i32) {
    %c0_i32 = arith.constant 0 : i32
    return %arg0, %arg1, %arg2 : i32, i32, i32
  }
}

module attributes {stable_mosaic.version = 11 : i64} {
  func.func @kernel(%arg0: i32, %arg1: i32, %arg2: memref<1x512x36xf32, #tpu.memory_space<vmem>>, %arg3: memref<32x36xf32, #tpu.memory_space<vmem>>, %arg4: memref<32x1xf32, #tpu.memory_space<vmem>>, %arg5: memref<32x32xf32, #tpu.memory_space<vmem>>, %arg6: memref<32x1xf32, #tpu.memory_space<vmem>>, %arg7: memref<32x32xf32, #tpu.memory_space<vmem>>, %arg8: memref<32x1xf32, #tpu.memory_space<vmem>>, %arg9: memref<1x32x512xf32, #tpu.memory_space<vmem>>) attributes {dimension_semantics = [#tpu.dimension_semantics<parallel>, #tpu.dimension_semantics<parallel>], iteration_bounds = array<i64: 4, 1>, scalar_prefetch = 0 : i64, scratch_operands = 0 : i64, tpu.core_type = #tpu.core_type<tc>, window_params = [{transform_indices = @transform_0, window_bounds = array<i64: 1, 512, 36>}, {pipeline_mode = #tpu.pipeline_mode<synchronous>, transform_indices = @transform_1, window_bounds = array<i64: 32, 36>}, {pipeline_mode = #tpu.pipeline_mode<synchronous>, transform_indices = @transform_2, window_bounds = array<i64: 32, 1>}, {pipeline_mode = #tpu.pipeline_mode<synchronous>, transform_indices = @transform_3, window_bounds = array<i64: 32, 32>}, {pipeline_mode = #tpu.pipeline_mode<synchronous>, transform_indices = @transform_4, window_bounds = array<i64: 32, 1>}, {pipeline_mode = #tpu.pipeline_mode<synchronous>, transform_indices = @transform_5, window_bounds = array<i64: 32, 32>}, {pipeline_mode = #tpu.pipeline_mode<synchronous>, transform_indices = @transform_6, window_bounds = array<i64: 32, 1>}, {transform_indices = @transform_7, window_bounds = array<i64: 1, 32, 512>}]} {
    %c0 = arith.constant 0 : index
    %c0_0 = arith.constant 0 : index
    %c0_1 = arith.constant 0 : index
    %0 = vector.load %arg2[%c0, %c0_0, %c0_1] : memref<1x512x36xf32, #tpu.memory_space<vmem>>, vector<1x512x36xf32>
    %1 = vector.shape_cast %0 : vector<1x512x36xf32> to vector<512x36xf32>
    %c0_2 = arith.constant 0 : index
    %c0_3 = arith.constant 0 : index
    %2 = vector.load %arg3[%c0_2, %c0_3] : memref<32x36xf32, #tpu.memory_space<vmem>>, vector<32x36xf32>
    %c0_4 = arith.constant 0 : index
    %c0_5 = arith.constant 0 : index
    %3 = vector.load %arg4[%c0_4, %c0_5] : memref<32x1xf32, #tpu.memory_space<vmem>>, vector<32x1xf32>
    %cst = arith.constant dense<0.000000e+00> : vector<32x512xf32>
    %4 = tpu.matmul %2, %1, %cst {dimension_numbers = #tpu.dot_dimension_numbers<[1], [1], [0], [0], [0, 0, 1, 0], [], []>} : vector<32x36xf32>, vector<512x36xf32>, vector<32x512xf32> -> vector<32x512xf32>
    %5 = vector.broadcast %3 : vector<32x1xf32> to vector<32x512xf32>
    %6 = arith.addf %4, %5 : vector<32x512xf32>
    %cst_6 = arith.constant 0.000000e+00 : f32
    %7 = vector.broadcast %cst_6 : f32 to vector<32x512xf32>
    %8 = arith.maximumf %6, %7 : vector<32x512xf32>
    %c0_7 = arith.constant 0 : index
    %c0_8 = arith.constant 0 : index
    %9 = vector.load %arg5[%c0_7, %c0_8] : memref<32x32xf32, #tpu.memory_space<vmem>>, vector<32x32xf32>
    %c0_9 = arith.constant 0 : index
    %c0_10 = arith.constant 0 : index
    %10 = vector.load %arg6[%c0_9, %c0_10] : memref<32x1xf32, #tpu.memory_space<vmem>>, vector<32x1xf32>
    %cst_11 = arith.constant dense<0.000000e+00> : vector<32x512xf32>
    %11 = tpu.matmul %9, %8, %cst_11 {dimension_numbers = #tpu.dot_dimension_numbers<[1], [0], [0], [1], [0, 0, 1, 1], [], []>} : vector<32x32xf32>, vector<32x512xf32>, vector<32x512xf32> -> vector<32x512xf32>
    %12 = vector.broadcast %10 : vector<32x1xf32> to vector<32x512xf32>
    %13 = arith.addf %11, %12 : vector<32x512xf32>
    %cst_12 = arith.constant 0.000000e+00 : f32
    %14 = vector.broadcast %cst_12 : f32 to vector<32x512xf32>
    %15 = arith.maximumf %13, %14 : vector<32x512xf32>
    %c0_13 = arith.constant 0 : index
    %c0_14 = arith.constant 0 : index
    %16 = vector.load %arg7[%c0_13, %c0_14] : memref<32x32xf32, #tpu.memory_space<vmem>>, vector<32x32xf32>
    %c0_15 = arith.constant 0 : index
    %c0_16 = arith.constant 0 : index
    %17 = vector.load %arg8[%c0_15, %c0_16] : memref<32x1xf32, #tpu.memory_space<vmem>>, vector<32x1xf32>
    %cst_17 = arith.constant dense<0.000000e+00> : vector<32x512xf32>
    %18 = tpu.matmul %16, %15, %cst_17 {dimension_numbers = #tpu.dot_dimension_numbers<[1], [0], [0], [1], [0, 0, 1, 1], [], []>} : vector<32x32xf32>, vector<32x512xf32>, vector<32x512xf32> -> vector<32x512xf32>
    %19 = vector.broadcast %17 : vector<32x1xf32> to vector<32x512xf32>
    %20 = arith.addf %18, %19 : vector<32x512xf32>
    %cst_18 = arith.constant 0.000000e+00 : f32
    %21 = vector.broadcast %cst_18 : f32 to vector<32x512xf32>
    %22 = arith.maximumf %20, %21 : vector<32x512xf32>
    %c0_19 = arith.constant 0 : index
    %c0_20 = arith.constant 0 : index
    %c0_21 = arith.constant 0 : index
    %23 = vector.load %arg9[%c0_19, %c0_20, %c0_21] : memref<1x32x512xf32, #tpu.memory_space<vmem>>, vector<1x32x512xf32>
    %24 = vector.shape_cast %23 : vector<1x32x512xf32> to vector<32x512xf32>
    %25 = vector.shape_cast %22 : vector<32x512xf32> to vector<1x32x512xf32>
    tpu.vector_store %arg9[%c0_19, %c0_20, %c0_21], %25 {strides = array<i32>} : memref<1x32x512xf32, #tpu.memory_space<vmem>>, vector<1x32x512xf32>,
    return
  }
  func.func @transform_0(%arg0: i32, %arg1: i32) -> (i32, i32, i32) {
    %c0_i32 = arith.constant 0 : i32
    %c0_i32_0 = arith.constant 0 : i32
    return %arg0, %arg1, %c0_i32 : i32, i32, i32
  }
  func.func @transform_1(%arg0: i32, %arg1: i32) -> (i32, i32) {
    %c0_i32 = arith.constant 0 : i32
    %c0_i32_0 = arith.constant 0 : i32
    %c0_i32_1 = arith.constant 0 : i32
    return %c0_i32, %c0_i32_0 : i32, i32
  }
  func.func @transform_2(%arg0: i32, %arg1: i32) -> (i32, i32) {
    %c0_i32 = arith.constant 0 : i32
    %c0_i32_0 = arith.constant 0 : i32
    %c0_i32_1 = arith.constant 0 : i32
    return %c0_i32, %c0_i32_0 : i32, i32
  }
  func.func @transform_3(%arg0: i32, %arg1: i32) -> (i32, i32) {
    %c0_i32 = arith.constant 0 : i32
    %c0_i32_0 = arith.constant 0 : i32
    %c0_i32_1 = arith.constant 0 : i32
    return %c0_i32, %c0_i32_0 : i32, i32
  }
  func.func @transform_4(%arg0: i32, %arg1: i32) -> (i32, i32) {
    %c0_i32 = arith.constant 0 : i32
    %c0_i32_0 = arith.constant 0 : i32
    %c0_i32_1 = arith.constant 0 : i32
    return %c0_i32, %c0_i32_0 : i32, i32
  }
  func.func @transform_5(%arg0: i32, %arg1: i32) -> (i32, i32) {
    %c0_i32 = arith.constant 0 : i32
    %c0_i32_0 = arith.constant 0 : i32
    %c0_i32_1 = arith.constant 0 : i32
    return %c0_i32, %c0_i32_0 : i32, i32
  }
  func.func @transform_6(%arg0: i32, %arg1: i32) -> (i32, i32) {
    %c0_i32 = arith.constant 0 : i32
    %c0_i32_0 = arith.constant 0 : i32
    %c0_i32_1 = arith.constant 0 : i32
    return %c0_i32, %c0_i32_0 : i32, i32
  }
  func.func @transform_7(%arg0: i32, %arg1: i32) -> (i32, i32, i32) {
    %c0_i32 = arith.constant 0 : i32
    %c0_i32_0 = arith.constant 0 : i32
    return %arg0, %c0_i32, %arg1 : i32, i32, i32
  }
}

module attributes {stable_mosaic.version = 11 : i64} {
  func.func @kernel(%arg0: i32, %arg1: i32, %arg2: i32, %arg3: memref<1x64x32xf32, #tpu.memory_space<vmem>>, %arg4: memref<1x32x128xf32, #tpu.memory_space<vmem>>, %arg5: memref<1x64x1xf32, #tpu.memory_space<vmem>>, %arg6: memref<1x1x128xf32, #tpu.memory_space<vmem>>, %arg7: memref<1x64x1xf32, #tpu.memory_space<vmem>>, %arg8: memref<1x8x128xf32, #tpu.memory_space<vmem>>) attributes {dimension_semantics = [#tpu.dimension_semantics<parallel>, #tpu.dimension_semantics<parallel>, #tpu.dimension_semantics<arbitrary>], iteration_bounds = array<i64: 2, 1, 1>, scalar_prefetch = 0 : i64, scratch_operands = 0 : i64, tpu.core_type = #tpu.core_type<tc>, window_params = [{transform_indices = @transform_0, window_bounds = array<i64: 1, 64, 32>}, {transform_indices = @transform_1, window_bounds = array<i64: 1, 32, 128>}, {transform_indices = @transform_2, window_bounds = array<i64: 1, 64, 1>}, {transform_indices = @transform_3, window_bounds = array<i64: 1, 1, 128>}, {transform_indices = @transform_4, window_bounds = array<i64: 1, 64, 1>}, {transform_indices = @transform_5, window_bounds = array<i64: 1, 8, 128>}]} {
    %c0 = arith.constant 0 : index
    %c0_0 = arith.constant 0 : index
    %c0_1 = arith.constant 0 : index
    %0 = vector.load %arg3[%c0, %c0_0, %c0_1] : memref<1x64x32xf32, #tpu.memory_space<vmem>>, vector<1x64x32xf32>
    %1 = vector.shape_cast %0 : vector<1x64x32xf32> to vector<64x32xf32>
    %c0_2 = arith.constant 0 : index
    %c0_3 = arith.constant 0 : index
    %c0_4 = arith.constant 0 : index
    %2 = vector.load %arg4[%c0_2, %c0_3, %c0_4] : memref<1x32x128xf32, #tpu.memory_space<vmem>>, vector<1x32x128xf32>
    %3 = vector.shape_cast %2 : vector<1x32x128xf32> to vector<32x128xf32>
    %cst = arith.constant dense<0.000000e+00> : vector<64x128xf32>
    %4 = tpu.matmul %1, %3, %cst {dimension_numbers = #tpu.dot_dimension_numbers<[1], [0], [0], [1], [0, 0, 1, 1], [], []>} : vector<64x32xf32>, vector<32x128xf32>, vector<64x128xf32> -> vector<64x128xf32>
    %5 = tpu.iota {dimensions = array<i32: 1>} : vector<64x128xi32>
    %c128_i32 = arith.constant 128 : i32
    %6 = arith.muli %arg2, %c128_i32 : i32
    %c64_i32 = arith.constant 64 : i32
    %7 = arith.subi %c64_i32, %6 : i32
    %8 = vector.broadcast %7 : i32 to vector<64x128xi32>
    %9 = arith.cmpi slt, %5, %8 : vector<64x128xi32>
    %c0_5 = arith.constant 0 : index
    %c0_6 = arith.constant 0 : index
    %c0_7 = arith.constant 0 : index
    %10 = vector.load %arg5[%c0_5, %c0_6, %c0_7] : memref<1x64x1xf32, #tpu.memory_space<vmem>>, vector<1x64x1xf32>
    %11 = vector.shape_cast %10 : vector<1x64x1xf32> to vector<64x1xf32>
    %c0_8 = arith.constant 0 : index
    %c0_9 = arith.constant 0 : index
    %c0_10 = arith.constant 0 : index
    %12 = vector.load %arg6[%c0_8, %c0_9, %c0_10] : memref<1x1x128xf32, #tpu.memory_space<vmem>>, vector<1x1x128xf32>
    %13 = vector.shape_cast %12 : vector<1x1x128xf32> to vector<1x128xf32>
    %14 = vector.broadcast %11 : vector<64x1xf32> to vector<64x128xf32>
    %15 = vector.broadcast %13 : vector<1x128xf32> to vector<64x128xf32>
    %16 = arith.mulf %14, %15 : vector<64x128xf32>
    %17 = arith.mulf %4, %16 : vector<64x128xf32>
    %cst_11 = arith.constant -1.000000e+30 : f32
    %18 = vector.broadcast %cst_11 : f32 to vector<64x128xf32>
    %19 = arith.select %9, %17, %18 : vector<64x128xi1>, vector<64x128xf32>
    %cst_12 = arith.constant dense<0xFF800000> : vector<64xf32>
    %20 = vector.multi_reduction <maximumf>, %19, %cst_12 [1] : vector<64x128xf32> to vector<64xf32>
    %21 = vector.shape_cast %20 : vector<64xf32> to vector<64x1xf32>
    %c0_i32 = arith.constant 0 : i32
    %22 = arith.cmpi eq, %arg2, %c0_i32 : i32
    %23 = arith.extui %22 : i1 to i32
    %c0_i32_13 = arith.constant 0 : i32
    %24 = arith.cmpi ne, %23, %c0_i32_13 : i32
    scf.if %24 {
      %cst_24 = arith.constant -1.000000e+30 : f32
      %38 = vector.broadcast %cst_24 : f32 to vector<64x1xf32>
      %c0_25 = arith.constant 0 : index
      %c0_26 = arith.constant 0 : index
      %c0_27 = arith.constant 0 : index
      %39 = vector.load %arg7[%c0_25, %c0_26, %c0_27] : memref<1x64x1xf32, #tpu.memory_space<vmem>>, vector<1x64x1xf32>
      %40 = vector.shape_cast %39 : vector<1x64x1xf32> to vector<64x1xf32>
      %41 = vector.shape_cast %38 : vector<64x1xf32> to vector<1x64x1xf32>
      tpu.vector_store %arg7[%c0_25, %c0_26, %c0_27], %41 {strides = array<i32>} : memref<1x64x1xf32, #tpu.memory_space<vmem>>, vector<1x64x1xf32>,
    } else {
    }
    %c0_14 = arith.constant 0 : index
    %c0_15 = arith.constant 0 : index
    %c0_16 = arith.constant 0 : index
    %25 = vector.load %arg7[%c0_14, %c0_15, %c0_16] : memref<1x64x1xf32, #tpu.memory_space<vmem>>, vector<1x64x1xf32>
    %26 = vector.shape_cast %25 : vector<1x64x1xf32> to vector<64x1xf32>
    %27 = arith.maximumf %26, %21 : vector<64x1xf32>
    %c0_17 = arith.constant 0 : index
    %c0_18 = arith.constant 0 : index
    %c0_19 = arith.constant 0 : index
    %28 = vector.load %arg7[%c0_17, %c0_18, %c0_19] : memref<1x64x1xf32, #tpu.memory_space<vmem>>, vector<1x64x1xf32>
    %29 = vector.shape_cast %28 : vector<1x64x1xf32> to vector<64x1xf32>
    %30 = vector.shape_cast %27 : vector<64x1xf32> to vector<1x64x1xf32>
    tpu.vector_store %arg7[%c0_17, %c0_18, %c0_19], %30 {strides = array<i32>} : memref<1x64x1xf32, #tpu.memory_space<vmem>>, vector<1x64x1xf32>,
    %cst_20 = arith.constant dense<0xFF800000> : vector<128xf32>
    %31 = vector.multi_reduction <maximumf>, %19, %cst_20 [0] : vector<64x128xf32> to vector<128xf32>
    %32 = vector.shape_cast %31 : vector<128xf32> to vector<1x128xf32>
    %33 = vector.shape_cast %32 : vector<1x128xf32> to vector<1x128xf32>
    %34 = vector.broadcast %33 : vector<1x128xf32> to vector<8x128xf32>
    %c0_21 = arith.constant 0 : index
    %c0_22 = arith.constant 0 : index
    %c0_23 = arith.constant 0 : index
    %35 = vector.load %arg8[%c0_21, %c0_22, %c0_23] : memref<1x8x128xf32, #tpu.memory_space<vmem>>, vector<1x8x128xf32>
    %36 = vector.shape_cast %35 : vector<1x8x128xf32> to vector<8x128xf32>
    %37 = vector.shape_cast %34 : vector<8x128xf32> to vector<1x8x128xf32>
    tpu.vector_store %arg8[%c0_21, %c0_22, %c0_23], %37 {strides = array<i32>} : memref<1x8x128xf32, #tpu.memory_space<vmem>>, vector<1x8x128xf32>,
    return
  }
  func.func @transform_0(%arg0: i32, %arg1: i32, %arg2: i32) -> (i32, i32, i32) {
    %c0_i32 = arith.constant 0 : i32
    %c0_i32_0 = arith.constant 0 : i32
    return %arg0, %arg1, %c0_i32 : i32, i32, i32
  }
  func.func @transform_1(%arg0: i32, %arg1: i32, %arg2: i32) -> (i32, i32, i32) {
    %c0_i32 = arith.constant 0 : i32
    %c0_i32_0 = arith.constant 0 : i32
    return %arg0, %c0_i32, %arg2 : i32, i32, i32
  }
  func.func @transform_2(%arg0: i32, %arg1: i32, %arg2: i32) -> (i32, i32, i32) {
    %c0_i32 = arith.constant 0 : i32
    %c0_i32_0 = arith.constant 0 : i32
    return %arg0, %arg1, %c0_i32 : i32, i32, i32
  }
  func.func @transform_3(%arg0: i32, %arg1: i32, %arg2: i32) -> (i32, i32, i32) {
    %c0_i32 = arith.constant 0 : i32
    %c0_i32_0 = arith.constant 0 : i32
    return %arg0, %c0_i32, %arg2 : i32, i32, i32
  }
  func.func @transform_4(%arg0: i32, %arg1: i32, %arg2: i32) -> (i32, i32, i32) {
    %c0_i32 = arith.constant 0 : i32
    %c0_i32_0 = arith.constant 0 : i32
    return %arg0, %arg1, %c0_i32 : i32, i32, i32
  }
  func.func @transform_5(%arg0: i32, %arg1: i32, %arg2: i32) -> (i32, i32, i32) {
    %c0_i32 = arith.constant 0 : i32
    return %arg0, %arg1, %arg2 : i32, i32, i32
  }
}

module attributes {stable_mosaic.version = 11 : i64} {
  func.func @kernel(%arg0: i32, %arg1: i32, %arg2: i32, %arg3: memref<1x64x32xf32, #tpu.memory_space<vmem>>, %arg4: memref<1x32x128xf32, #tpu.memory_space<vmem>>, %arg5: memref<1x64x1xf32, #tpu.memory_space<vmem>>, %arg6: memref<1x1x128xf32, #tpu.memory_space<vmem>>, %arg7: memref<1x64x1xf32, #tpu.memory_space<vmem>>, %arg8: memref<1x1x128xf32, #tpu.memory_space<vmem>>, %arg9: memref<1x64x128xf32, #tpu.memory_space<vmem>>, %arg10: memref<1x64x1xf32, #tpu.memory_space<vmem>>, %arg11: memref<1x8x128xf32, #tpu.memory_space<vmem>>) attributes {dimension_semantics = [#tpu.dimension_semantics<parallel>, #tpu.dimension_semantics<parallel>, #tpu.dimension_semantics<arbitrary>], iteration_bounds = array<i64: 2, 1, 1>, scalar_prefetch = 0 : i64, scratch_operands = 0 : i64, tpu.core_type = #tpu.core_type<tc>, window_params = [{transform_indices = @transform_0, window_bounds = array<i64: 1, 64, 32>}, {transform_indices = @transform_1, window_bounds = array<i64: 1, 32, 128>}, {transform_indices = @transform_2, window_bounds = array<i64: 1, 64, 1>}, {transform_indices = @transform_3, window_bounds = array<i64: 1, 1, 128>}, {transform_indices = @transform_4, window_bounds = array<i64: 1, 64, 1>}, {transform_indices = @transform_5, window_bounds = array<i64: 1, 1, 128>}, {transform_indices = @transform_6, window_bounds = array<i64: 1, 64, 128>}, {transform_indices = @transform_7, window_bounds = array<i64: 1, 64, 1>}, {transform_indices = @transform_8, window_bounds = array<i64: 1, 8, 128>}]} {
    %c0 = arith.constant 0 : index
    %c0_0 = arith.constant 0 : index
    %c0_1 = arith.constant 0 : index
    %0 = vector.load %arg3[%c0, %c0_0, %c0_1] : memref<1x64x32xf32, #tpu.memory_space<vmem>>, vector<1x64x32xf32>
    %1 = vector.shape_cast %0 : vector<1x64x32xf32> to vector<64x32xf32>
    %c0_2 = arith.constant 0 : index
    %c0_3 = arith.constant 0 : index
    %c0_4 = arith.constant 0 : index
    %2 = vector.load %arg4[%c0_2, %c0_3, %c0_4] : memref<1x32x128xf32, #tpu.memory_space<vmem>>, vector<1x32x128xf32>
    %3 = vector.shape_cast %2 : vector<1x32x128xf32> to vector<32x128xf32>
    %cst = arith.constant dense<0.000000e+00> : vector<64x128xf32>
    %4 = tpu.matmul %1, %3, %cst {dimension_numbers = #tpu.dot_dimension_numbers<[1], [0], [0], [1], [0, 0, 1, 1], [], []>} : vector<64x32xf32>, vector<32x128xf32>, vector<64x128xf32> -> vector<64x128xf32>
    %5 = tpu.iota {dimensions = array<i32: 1>} : vector<64x128xi32>
    %c128_i32 = arith.constant 128 : i32
    %6 = arith.muli %arg2, %c128_i32 : i32
    %c64_i32 = arith.constant 64 : i32
    %7 = arith.subi %c64_i32, %6 : i32
    %8 = vector.broadcast %7 : i32 to vector<64x128xi32>
    %9 = arith.cmpi slt, %5, %8 : vector<64x128xi32>
    %c0_5 = arith.constant 0 : index
    %c0_6 = arith.constant 0 : index
    %c0_7 = arith.constant 0 : index
    %10 = vector.load %arg5[%c0_5, %c0_6, %c0_7] : memref<1x64x1xf32, #tpu.memory_space<vmem>>, vector<1x64x1xf32>
    %11 = vector.shape_cast %10 : vector<1x64x1xf32> to vector<64x1xf32>
    %c0_8 = arith.constant 0 : index
    %c0_9 = arith.constant 0 : index
    %c0_10 = arith.constant 0 : index
    %12 = vector.load %arg6[%c0_8, %c0_9, %c0_10] : memref<1x1x128xf32, #tpu.memory_space<vmem>>, vector<1x1x128xf32>
    %13 = vector.shape_cast %12 : vector<1x1x128xf32> to vector<1x128xf32>
    %14 = vector.broadcast %11 : vector<64x1xf32> to vector<64x128xf32>
    %15 = vector.broadcast %13 : vector<1x128xf32> to vector<64x128xf32>
    %16 = arith.addf %14, %15 : vector<64x128xf32>
    %cst_11 = arith.constant 2.000000e+00 : f32
    %17 = vector.broadcast %cst_11 : f32 to vector<64x128xf32>
    %18 = arith.mulf %17, %4 : vector<64x128xf32>
    %19 = arith.subf %16, %18 : vector<64x128xf32>
    %cst_12 = arith.constant 1.000000e+30 : f32
    %20 = vector.broadcast %cst_12 : f32 to vector<64x128xf32>
    %21 = arith.select %9, %19, %20 : vector<64x128xi1>, vector<64x128xf32>
    %c0_13 = arith.constant 0 : index
    %c0_14 = arith.constant 0 : index
    %c0_15 = arith.constant 0 : index
    %22 = vector.load %arg9[%c0_13, %c0_14, %c0_15] : memref<1x64x128xf32, #tpu.memory_space<vmem>>, vector<1x64x128xf32>
    %23 = vector.shape_cast %22 : vector<1x64x128xf32> to vector<64x128xf32>
    %24 = vector.shape_cast %21 : vector<64x128xf32> to vector<1x64x128xf32>
    tpu.vector_store %arg9[%c0_13, %c0_14, %c0_15], %24 {strides = array<i32>} : memref<1x64x128xf32, #tpu.memory_space<vmem>>, vector<1x64x128xf32>,
    %c0_16 = arith.constant 0 : index
    %c0_17 = arith.constant 0 : index
    %c0_18 = arith.constant 0 : index
    %25 = vector.load %arg7[%c0_16, %c0_17, %c0_18] : memref<1x64x1xf32, #tpu.memory_space<vmem>>, vector<1x64x1xf32>
    %26 = vector.shape_cast %25 : vector<1x64x1xf32> to vector<64x1xf32>
    %c0_19 = arith.constant 0 : index
    %c0_20 = arith.constant 0 : index
    %c0_21 = arith.constant 0 : index
    %27 = vector.load %arg8[%c0_19, %c0_20, %c0_21] : memref<1x1x128xf32, #tpu.memory_space<vmem>>, vector<1x1x128xf32>
    %28 = vector.shape_cast %27 : vector<1x1x128xf32> to vector<1x128xf32>
    %29 = vector.broadcast %26 : vector<64x1xf32> to vector<64x128xf32>
    %30 = vector.broadcast %28 : vector<1x128xf32> to vector<64x128xf32>
    %31 = arith.mulf %29, %30 : vector<64x128xf32>
    %32 = arith.mulf %4, %31 : vector<64x128xf32>
    %cst_22 = arith.constant -1.000000e+30 : f32
    %33 = vector.broadcast %cst_22 : f32 to vector<64x128xf32>
    %34 = arith.select %9, %32, %33 : vector<64x128xi1>, vector<64x128xf32>
    %cst_23 = arith.constant dense<0xFF800000> : vector<64xf32>
    %35 = vector.multi_reduction <maximumf>, %34, %cst_23 [1] : vector<64x128xf32> to vector<64xf32>
    %36 = vector.shape_cast %35 : vector<64xf32> to vector<64x1xf32>
    %c0_i32 = arith.constant 0 : i32
    %37 = arith.cmpi eq, %arg2, %c0_i32 : i32
    %38 = arith.extui %37 : i1 to i32
    %c0_i32_24 = arith.constant 0 : i32
    %39 = arith.cmpi ne, %38, %c0_i32_24 : i32
    scf.if %39 {
      %cst_35 = arith.constant -1.000000e+30 : f32
      %53 = vector.broadcast %cst_35 : f32 to vector<64x1xf32>
      %c0_36 = arith.constant 0 : index
      %c0_37 = arith.constant 0 : index
      %c0_38 = arith.constant 0 : index
      %54 = vector.load %arg10[%c0_36, %c0_37, %c0_38] : memref<1x64x1xf32, #tpu.memory_space<vmem>>, vector<1x64x1xf32>
      %55 = vector.shape_cast %54 : vector<1x64x1xf32> to vector<64x1xf32>
      %56 = vector.shape_cast %53 : vector<64x1xf32> to vector<1x64x1xf32>
      tpu.vector_store %arg10[%c0_36, %c0_37, %c0_38], %56 {strides = array<i32>} : memref<1x64x1xf32, #tpu.memory_space<vmem>>, vector<1x64x1xf32>,
    } else {
    }
    %c0_25 = arith.constant 0 : index
    %c0_26 = arith.constant 0 : index
    %c0_27 = arith.constant 0 : index
    %40 = vector.load %arg10[%c0_25, %c0_26, %c0_27] : memref<1x64x1xf32, #tpu.memory_space<vmem>>, vector<1x64x1xf32>
    %41 = vector.shape_cast %40 : vector<1x64x1xf32> to vector<64x1xf32>
    %42 = arith.maximumf %41, %36 : vector<64x1xf32>
    %c0_28 = arith.constant 0 : index
    %c0_29 = arith.constant 0 : index
    %c0_30 = arith.constant 0 : index
    %43 = vector.load %arg10[%c0_28, %c0_29, %c0_30] : memref<1x64x1xf32, #tpu.memory_space<vmem>>, vector<1x64x1xf32>
    %44 = vector.shape_cast %43 : vector<1x64x1xf32> to vector<64x1xf32>
    %45 = vector.shape_cast %42 : vector<64x1xf32> to vector<1x64x1xf32>
    tpu.vector_store %arg10[%c0_28, %c0_29, %c0_30], %45 {strides = array<i32>} : memref<1x64x1xf32, #tpu.memory_space<vmem>>, vector<1x64x1xf32>,
    %cst_31 = arith.constant dense<0xFF800000> : vector<128xf32>
    %46 = vector.multi_reduction <maximumf>, %34, %cst_31 [0] : vector<64x128xf32> to vector<128xf32>
    %47 = vector.shape_cast %46 : vector<128xf32> to vector<1x128xf32>
    %48 = vector.shape_cast %47 : vector<1x128xf32> to vector<1x128xf32>
    %49 = vector.broadcast %48 : vector<1x128xf32> to vector<8x128xf32>
    %c0_32 = arith.constant 0 : index
    %c0_33 = arith.constant 0 : index
    %c0_34 = arith.constant 0 : index
    %50 = vector.load %arg11[%c0_32, %c0_33, %c0_34] : memref<1x8x128xf32, #tpu.memory_space<vmem>>, vector<1x8x128xf32>
    %51 = vector.shape_cast %50 : vector<1x8x128xf32> to vector<8x128xf32>
    %52 = vector.shape_cast %49 : vector<8x128xf32> to vector<1x8x128xf32>
    tpu.vector_store %arg11[%c0_32, %c0_33, %c0_34], %52 {strides = array<i32>} : memref<1x8x128xf32, #tpu.memory_space<vmem>>, vector<1x8x128xf32>,
    return
  }
  func.func @transform_0(%arg0: i32, %arg1: i32, %arg2: i32) -> (i32, i32, i32) {
    %c0_i32 = arith.constant 0 : i32
    %c0_i32_0 = arith.constant 0 : i32
    return %arg0, %arg1, %c0_i32 : i32, i32, i32
  }
  func.func @transform_1(%arg0: i32, %arg1: i32, %arg2: i32) -> (i32, i32, i32) {
    %c0_i32 = arith.constant 0 : i32
    %c0_i32_0 = arith.constant 0 : i32
    return %arg0, %c0_i32, %arg2 : i32, i32, i32
  }
  func.func @transform_2(%arg0: i32, %arg1: i32, %arg2: i32) -> (i32, i32, i32) {
    %c0_i32 = arith.constant 0 : i32
    %c0_i32_0 = arith.constant 0 : i32
    return %arg0, %arg1, %c0_i32 : i32, i32, i32
  }
  func.func @transform_3(%arg0: i32, %arg1: i32, %arg2: i32) -> (i32, i32, i32) {
    %c0_i32 = arith.constant 0 : i32
    %c0_i32_0 = arith.constant 0 : i32
    return %arg0, %c0_i32, %arg2 : i32, i32, i32
  }
  func.func @transform_4(%arg0: i32, %arg1: i32, %arg2: i32) -> (i32, i32, i32) {
    %c0_i32 = arith.constant 0 : i32
    %c0_i32_0 = arith.constant 0 : i32
    return %arg0, %arg1, %c0_i32 : i32, i32, i32
  }
  func.func @transform_5(%arg0: i32, %arg1: i32, %arg2: i32) -> (i32, i32, i32) {
    %c0_i32 = arith.constant 0 : i32
    %c0_i32_0 = arith.constant 0 : i32
    return %arg0, %c0_i32, %arg2 : i32, i32, i32
  }
  func.func @transform_6(%arg0: i32, %arg1: i32, %arg2: i32) -> (i32, i32, i32) {
    %c0_i32 = arith.constant 0 : i32
    return %arg0, %arg1, %arg2 : i32, i32, i32
  }
  func.func @transform_7(%arg0: i32, %arg1: i32, %arg2: i32) -> (i32, i32, i32) {
    %c0_i32 = arith.constant 0 : i32
    %c0_i32_0 = arith.constant 0 : i32
    return %arg0, %arg1, %c0_i32 : i32, i32, i32
  }
  func.func @transform_8(%arg0: i32, %arg1: i32, %arg2: i32) -> (i32, i32, i32) {
    %c0_i32 = arith.constant 0 : i32
    return %arg0, %arg1, %arg2 : i32, i32, i32
  }
}

module attributes {stable_mosaic.version = 11 : i64} {
  func.func @kernel(%arg0: i32, %arg1: i32, %arg2: memref<1x512x80xf32, #tpu.memory_space<vmem>>, %arg3: memref<64x80xf32, #tpu.memory_space<vmem>>, %arg4: memref<64x1xf32, #tpu.memory_space<vmem>>, %arg5: memref<64x64xf32, #tpu.memory_space<vmem>>, %arg6: memref<64x1xf32, #tpu.memory_space<vmem>>, %arg7: memref<64x64xf32, #tpu.memory_space<vmem>>, %arg8: memref<64x1xf32, #tpu.memory_space<vmem>>, %arg9: memref<1x64x512xf32, #tpu.memory_space<vmem>>) attributes {dimension_semantics = [#tpu.dimension_semantics<parallel>, #tpu.dimension_semantics<parallel>], iteration_bounds = array<i64: 2, 1>, scalar_prefetch = 0 : i64, scratch_operands = 0 : i64, tpu.core_type = #tpu.core_type<tc>, window_params = [{transform_indices = @transform_0, window_bounds = array<i64: 1, 512, 80>}, {pipeline_mode = #tpu.pipeline_mode<synchronous>, transform_indices = @transform_1, window_bounds = array<i64: 64, 80>}, {pipeline_mode = #tpu.pipeline_mode<synchronous>, transform_indices = @transform_2, window_bounds = array<i64: 64, 1>}, {pipeline_mode = #tpu.pipeline_mode<synchronous>, transform_indices = @transform_3, window_bounds = array<i64: 64, 64>}, {pipeline_mode = #tpu.pipeline_mode<synchronous>, transform_indices = @transform_4, window_bounds = array<i64: 64, 1>}, {pipeline_mode = #tpu.pipeline_mode<synchronous>, transform_indices = @transform_5, window_bounds = array<i64: 64, 64>}, {pipeline_mode = #tpu.pipeline_mode<synchronous>, transform_indices = @transform_6, window_bounds = array<i64: 64, 1>}, {transform_indices = @transform_7, window_bounds = array<i64: 1, 64, 512>}]} {
    %c0 = arith.constant 0 : index
    %c0_0 = arith.constant 0 : index
    %c0_1 = arith.constant 0 : index
    %0 = vector.load %arg2[%c0, %c0_0, %c0_1] : memref<1x512x80xf32, #tpu.memory_space<vmem>>, vector<1x512x80xf32>
    %1 = vector.shape_cast %0 : vector<1x512x80xf32> to vector<512x80xf32>
    %c0_2 = arith.constant 0 : index
    %c0_3 = arith.constant 0 : index
    %2 = vector.load %arg3[%c0_2, %c0_3] : memref<64x80xf32, #tpu.memory_space<vmem>>, vector<64x80xf32>
    %c0_4 = arith.constant 0 : index
    %c0_5 = arith.constant 0 : index
    %3 = vector.load %arg4[%c0_4, %c0_5] : memref<64x1xf32, #tpu.memory_space<vmem>>, vector<64x1xf32>
    %cst = arith.constant dense<0.000000e+00> : vector<64x512xf32>
    %4 = tpu.matmul %2, %1, %cst {dimension_numbers = #tpu.dot_dimension_numbers<[1], [1], [0], [0], [0, 0, 1, 0], [], []>} : vector<64x80xf32>, vector<512x80xf32>, vector<64x512xf32> -> vector<64x512xf32>
    %5 = vector.broadcast %3 : vector<64x1xf32> to vector<64x512xf32>
    %6 = arith.addf %4, %5 : vector<64x512xf32>
    %cst_6 = arith.constant 0.000000e+00 : f32
    %7 = vector.broadcast %cst_6 : f32 to vector<64x512xf32>
    %8 = arith.maximumf %6, %7 : vector<64x512xf32>
    %c0_7 = arith.constant 0 : index
    %c0_8 = arith.constant 0 : index
    %9 = vector.load %arg5[%c0_7, %c0_8] : memref<64x64xf32, #tpu.memory_space<vmem>>, vector<64x64xf32>
    %c0_9 = arith.constant 0 : index
    %c0_10 = arith.constant 0 : index
    %10 = vector.load %arg6[%c0_9, %c0_10] : memref<64x1xf32, #tpu.memory_space<vmem>>, vector<64x1xf32>
    %cst_11 = arith.constant dense<0.000000e+00> : vector<64x512xf32>
    %11 = tpu.matmul %9, %8, %cst_11 {dimension_numbers = #tpu.dot_dimension_numbers<[1], [0], [0], [1], [0, 0, 1, 1], [], []>} : vector<64x64xf32>, vector<64x512xf32>, vector<64x512xf32> -> vector<64x512xf32>
    %12 = vector.broadcast %10 : vector<64x1xf32> to vector<64x512xf32>
    %13 = arith.addf %11, %12 : vector<64x512xf32>
    %cst_12 = arith.constant 0.000000e+00 : f32
    %14 = vector.broadcast %cst_12 : f32 to vector<64x512xf32>
    %15 = arith.maximumf %13, %14 : vector<64x512xf32>
    %c0_13 = arith.constant 0 : index
    %c0_14 = arith.constant 0 : index
    %16 = vector.load %arg7[%c0_13, %c0_14] : memref<64x64xf32, #tpu.memory_space<vmem>>, vector<64x64xf32>
    %c0_15 = arith.constant 0 : index
    %c0_16 = arith.constant 0 : index
    %17 = vector.load %arg8[%c0_15, %c0_16] : memref<64x1xf32, #tpu.memory_space<vmem>>, vector<64x1xf32>
    %cst_17 = arith.constant dense<0.000000e+00> : vector<64x512xf32>
    %18 = tpu.matmul %16, %15, %cst_17 {dimension_numbers = #tpu.dot_dimension_numbers<[1], [0], [0], [1], [0, 0, 1, 1], [], []>} : vector<64x64xf32>, vector<64x512xf32>, vector<64x512xf32> -> vector<64x512xf32>
    %19 = vector.broadcast %17 : vector<64x1xf32> to vector<64x512xf32>
    %20 = arith.addf %18, %19 : vector<64x512xf32>
    %cst_18 = arith.constant 0.000000e+00 : f32
    %21 = vector.broadcast %cst_18 : f32 to vector<64x512xf32>
    %22 = arith.maximumf %20, %21 : vector<64x512xf32>
    %c0_19 = arith.constant 0 : index
    %c0_20 = arith.constant 0 : index
    %c0_21 = arith.constant 0 : index
    %23 = vector.load %arg9[%c0_19, %c0_20, %c0_21] : memref<1x64x512xf32, #tpu.memory_space<vmem>>, vector<1x64x512xf32>
    %24 = vector.shape_cast %23 : vector<1x64x512xf32> to vector<64x512xf32>
    %25 = vector.shape_cast %22 : vector<64x512xf32> to vector<1x64x512xf32>
    tpu.vector_store %arg9[%c0_19, %c0_20, %c0_21], %25 {strides = array<i32>} : memref<1x64x512xf32, #tpu.memory_space<vmem>>, vector<1x64x512xf32>,
    return
  }
  func.func @transform_0(%arg0: i32, %arg1: i32) -> (i32, i32, i32) {
    %c0_i32 = arith.constant 0 : i32
    %c0_i32_0 = arith.constant 0 : i32
    return %arg0, %arg1, %c0_i32 : i32, i32, i32
  }
  func.func @transform_1(%arg0: i32, %arg1: i32) -> (i32, i32) {
    %c0_i32 = arith.constant 0 : i32
    %c0_i32_0 = arith.constant 0 : i32
    %c0_i32_1 = arith.constant 0 : i32
    return %c0_i32, %c0_i32_0 : i32, i32
  }
  func.func @transform_2(%arg0: i32, %arg1: i32) -> (i32, i32) {
    %c0_i32 = arith.constant 0 : i32
    %c0_i32_0 = arith.constant 0 : i32
    %c0_i32_1 = arith.constant 0 : i32
    return %c0_i32, %c0_i32_0 : i32, i32
  }
  func.func @transform_3(%arg0: i32, %arg1: i32) -> (i32, i32) {
    %c0_i32 = arith.constant 0 : i32
    %c0_i32_0 = arith.constant 0 : i32
    %c0_i32_1 = arith.constant 0 : i32
    return %c0_i32, %c0_i32_0 : i32, i32
  }
  func.func @transform_4(%arg0: i32, %arg1: i32) -> (i32, i32) {
    %c0_i32 = arith.constant 0 : i32
    %c0_i32_0 = arith.constant 0 : i32
    %c0_i32_1 = arith.constant 0 : i32
    return %c0_i32, %c0_i32_0 : i32, i32
  }
  func.func @transform_5(%arg0: i32, %arg1: i32) -> (i32, i32) {
    %c0_i32 = arith.constant 0 : i32
    %c0_i32_0 = arith.constant 0 : i32
    %c0_i32_1 = arith.constant 0 : i32
    return %c0_i32, %c0_i32_0 : i32, i32
  }
  func.func @transform_6(%arg0: i32, %arg1: i32) -> (i32, i32) {
    %c0_i32 = arith.constant 0 : i32
    %c0_i32_0 = arith.constant 0 : i32
    %c0_i32_1 = arith.constant 0 : i32
    return %c0_i32, %c0_i32_0 : i32, i32
  }
  func.func @transform_7(%arg0: i32, %arg1: i32) -> (i32, i32, i32) {
    %c0_i32 = arith.constant 0 : i32
    %c0_i32_0 = arith.constant 0 : i32
    return %arg0, %c0_i32, %arg1 : i32, i32, i32
  }
}

module attributes {stable_mosaic.version = 11 : i64} {
  func.func @kernel(%arg0: i32, %arg1: i32, %arg2: memref<1x64x128xf32, #tpu.memory_space<vmem>>, %arg3: memref<32x64xf32, #tpu.memory_space<vmem>>, %arg4: memref<32x1xf32, #tpu.memory_space<vmem>>, %arg5: memref<64x64xf32, #tpu.memory_space<vmem>>, %arg6: memref<64x1xf32, #tpu.memory_space<vmem>>, %arg7: memref<64x64xf32, #tpu.memory_space<vmem>>, %arg8: memref<64x1xf32, #tpu.memory_space<vmem>>, %arg9: memref<1x64xf32, #tpu.memory_space<vmem>>, %arg10: memref<1x1xf32, #tpu.memory_space<vmem>>, %arg11: memref<1x32x128xf32, #tpu.memory_space<vmem>>, %arg12: memref<1x1x128xf32, #tpu.memory_space<vmem>>) attributes {dimension_semantics = [#tpu.dimension_semantics<parallel>, #tpu.dimension_semantics<parallel>], iteration_bounds = array<i64: 2, 1>, scalar_prefetch = 0 : i64, scratch_operands = 0 : i64, tpu.core_type = #tpu.core_type<tc>, window_params = [{transform_indices = @transform_0, window_bounds = array<i64: 1, 64, 128>}, {pipeline_mode = #tpu.pipeline_mode<synchronous>, transform_indices = @transform_1, window_bounds = array<i64: 32, 64>}, {pipeline_mode = #tpu.pipeline_mode<synchronous>, transform_indices = @transform_2, window_bounds = array<i64: 32, 1>}, {pipeline_mode = #tpu.pipeline_mode<synchronous>, transform_indices = @transform_3, window_bounds = array<i64: 64, 64>}, {pipeline_mode = #tpu.pipeline_mode<synchronous>, transform_indices = @transform_4, window_bounds = array<i64: 64, 1>}, {pipeline_mode = #tpu.pipeline_mode<synchronous>, transform_indices = @transform_5, window_bounds = array<i64: 64, 64>}, {pipeline_mode = #tpu.pipeline_mode<synchronous>, transform_indices = @transform_6, window_bounds = array<i64: 64, 1>}, {pipeline_mode = #tpu.pipeline_mode<synchronous>, transform_indices = @transform_7, window_bounds = array<i64: 1, 64>}, {pipeline_mode = #tpu.pipeline_mode<synchronous>, transform_indices = @transform_8, window_bounds = array<i64: 1, 1>}, {transform_indices = @transform_9, window_bounds = array<i64: 1, 32, 128>}, {transform_indices = @transform_10, window_bounds = array<i64: 1, 1, 128>}]} {
    %c0 = arith.constant 0 : index
    %c0_0 = arith.constant 0 : index
    %c0_1 = arith.constant 0 : index
    %0 = vector.load %arg2[%c0, %c0_0, %c0_1] : memref<1x64x128xf32, #tpu.memory_space<vmem>>, vector<1x64x128xf32>
    %1 = vector.shape_cast %0 : vector<1x64x128xf32> to vector<64x128xf32>
    %c0_2 = arith.constant 0 : index
    %c0_3 = arith.constant 0 : index
    %2 = vector.load %arg3[%c0_2, %c0_3] : memref<32x64xf32, #tpu.memory_space<vmem>>, vector<32x64xf32>
    %c0_4 = arith.constant 0 : index
    %c0_5 = arith.constant 0 : index
    %3 = vector.load %arg4[%c0_4, %c0_5] : memref<32x1xf32, #tpu.memory_space<vmem>>, vector<32x1xf32>
    %cst = arith.constant dense<0.000000e+00> : vector<32x128xf32>
    %4 = tpu.matmul %2, %1, %cst {dimension_numbers = #tpu.dot_dimension_numbers<[1], [0], [0], [1], [0, 0, 1, 1], [], []>} : vector<32x64xf32>, vector<64x128xf32>, vector<32x128xf32> -> vector<32x128xf32>
    %5 = vector.broadcast %3 : vector<32x1xf32> to vector<32x128xf32>
    %6 = arith.addf %4, %5 : vector<32x128xf32>
    %cst_6 = arith.constant 0.000000e+00 : f32
    %7 = vector.broadcast %cst_6 : f32 to vector<32x128xf32>
    %8 = arith.maximumf %6, %7 : vector<32x128xf32>
    %c0_7 = arith.constant 0 : index
    %c0_8 = arith.constant 0 : index
    %c0_9 = arith.constant 0 : index
    %9 = vector.load %arg11[%c0_7, %c0_8, %c0_9] : memref<1x32x128xf32, #tpu.memory_space<vmem>>, vector<1x32x128xf32>
    %10 = vector.shape_cast %9 : vector<1x32x128xf32> to vector<32x128xf32>
    %11 = vector.shape_cast %8 : vector<32x128xf32> to vector<1x32x128xf32>
    tpu.vector_store %arg11[%c0_7, %c0_8, %c0_9], %11 {strides = array<i32>} : memref<1x32x128xf32, #tpu.memory_space<vmem>>, vector<1x32x128xf32>,
    %c0_10 = arith.constant 0 : index
    %c0_11 = arith.constant 0 : index
    %12 = vector.load %arg5[%c0_10, %c0_11] : memref<64x64xf32, #tpu.memory_space<vmem>>, vector<64x64xf32>
    %c0_12 = arith.constant 0 : index
    %c0_13 = arith.constant 0 : index
    %13 = vector.load %arg6[%c0_12, %c0_13] : memref<64x1xf32, #tpu.memory_space<vmem>>, vector<64x1xf32>
    %cst_14 = arith.constant dense<0.000000e+00> : vector<64x128xf32>
    %14 = tpu.matmul %12, %1, %cst_14 {dimension_numbers = #tpu.dot_dimension_numbers<[1], [0], [0], [1], [0, 0, 1, 1], [], []>} : vector<64x64xf32>, vector<64x128xf32>, vector<64x128xf32> -> vector<64x128xf32>
    %15 = vector.broadcast %13 : vector<64x1xf32> to vector<64x128xf32>
    %16 = arith.addf %14, %15 : vector<64x128xf32>
    %cst_15 = arith.constant 0.000000e+00 : f32
    %17 = vector.broadcast %cst_15 : f32 to vector<64x128xf32>
    %18 = arith.maximumf %16, %17 : vector<64x128xf32>
    %c0_16 = arith.constant 0 : index
    %c0_17 = arith.constant 0 : index
    %19 = vector.load %arg7[%c0_16, %c0_17] : memref<64x64xf32, #tpu.memory_space<vmem>>, vector<64x64xf32>
    %c0_18 = arith.constant 0 : index
    %c0_19 = arith.constant 0 : index
    %20 = vector.load %arg8[%c0_18, %c0_19] : memref<64x1xf32, #tpu.memory_space<vmem>>, vector<64x1xf32>
    %cst_20 = arith.constant dense<0.000000e+00> : vector<64x128xf32>
    %21 = tpu.matmul %19, %18, %cst_20 {dimension_numbers = #tpu.dot_dimension_numbers<[1], [0], [0], [1], [0, 0, 1, 1], [], []>} : vector<64x64xf32>, vector<64x128xf32>, vector<64x128xf32> -> vector<64x128xf32>
    %22 = vector.broadcast %20 : vector<64x1xf32> to vector<64x128xf32>
    %23 = arith.addf %21, %22 : vector<64x128xf32>
    %cst_21 = arith.constant 0.000000e+00 : f32
    %24 = vector.broadcast %cst_21 : f32 to vector<64x128xf32>
    %25 = arith.maximumf %23, %24 : vector<64x128xf32>
    %c0_22 = arith.constant 0 : index
    %c0_23 = arith.constant 0 : index
    %26 = vector.load %arg9[%c0_22, %c0_23] : memref<1x64xf32, #tpu.memory_space<vmem>>, vector<1x64xf32>
    %c0_24 = arith.constant 0 : index
    %c0_25 = arith.constant 0 : index
    %27 = vector.load %arg10[%c0_24, %c0_25] : memref<1x1xf32, #tpu.memory_space<vmem>>, vector<1x1xf32>
    %cst_26 = arith.constant dense<0.000000e+00> : vector<1x128xf32>
    %28 = tpu.matmul %26, %25, %cst_26 {dimension_numbers = #tpu.dot_dimension_numbers<[1], [0], [0], [1], [0, 0, 1, 1], [], []>} : vector<1x64xf32>, vector<64x128xf32>, vector<1x128xf32> -> vector<1x128xf32>
    %29 = vector.broadcast %27 : vector<1x1xf32> to vector<1x128xf32>
    %30 = arith.addf %28, %29 : vector<1x128xf32>
    %c0_27 = arith.constant 0 : index
    %c0_28 = arith.constant 0 : index
    %c0_29 = arith.constant 0 : index
    %31 = vector.load %arg12[%c0_27, %c0_28, %c0_29] : memref<1x1x128xf32, #tpu.memory_space<vmem>>, vector<1x1x128xf32>
    %32 = vector.shape_cast %31 : vector<1x1x128xf32> to vector<1x128xf32>
    %33 = vector.shape_cast %30 : vector<1x128xf32> to vector<1x1x128xf32>
    tpu.vector_store %arg12[%c0_27, %c0_28, %c0_29], %33 {strides = array<i32>} : memref<1x1x128xf32, #tpu.memory_space<vmem>>, vector<1x1x128xf32>,
    return
  }
  func.func @transform_0(%arg0: i32, %arg1: i32) -> (i32, i32, i32) {
    %c0_i32 = arith.constant 0 : i32
    %c0_i32_0 = arith.constant 0 : i32
    return %arg0, %c0_i32, %arg1 : i32, i32, i32
  }
  func.func @transform_1(%arg0: i32, %arg1: i32) -> (i32, i32) {
    %c0_i32 = arith.constant 0 : i32
    %c0_i32_0 = arith.constant 0 : i32
    %c0_i32_1 = arith.constant 0 : i32
    return %c0_i32, %c0_i32_0 : i32, i32
  }
  func.func @transform_2(%arg0: i32, %arg1: i32) -> (i32, i32) {
    %c0_i32 = arith.constant 0 : i32
    %c0_i32_0 = arith.constant 0 : i32
    %c0_i32_1 = arith.constant 0 : i32
    return %c0_i32, %c0_i32_0 : i32, i32
  }
  func.func @transform_3(%arg0: i32, %arg1: i32) -> (i32, i32) {
    %c0_i32 = arith.constant 0 : i32
    %c0_i32_0 = arith.constant 0 : i32
    %c0_i32_1 = arith.constant 0 : i32
    return %c0_i32, %c0_i32_0 : i32, i32
  }
  func.func @transform_4(%arg0: i32, %arg1: i32) -> (i32, i32) {
    %c0_i32 = arith.constant 0 : i32
    %c0_i32_0 = arith.constant 0 : i32
    %c0_i32_1 = arith.constant 0 : i32
    return %c0_i32, %c0_i32_0 : i32, i32
  }
  func.func @transform_5(%arg0: i32, %arg1: i32) -> (i32, i32) {
    %c0_i32 = arith.constant 0 : i32
    %c0_i32_0 = arith.constant 0 : i32
    %c0_i32_1 = arith.constant 0 : i32
    return %c0_i32, %c0_i32_0 : i32, i32
  }
  func.func @transform_6(%arg0: i32, %arg1: i32) -> (i32, i32) {
    %c0_i32 = arith.constant 0 : i32
    %c0_i32_0 = arith.constant 0 : i32
    %c0_i32_1 = arith.constant 0 : i32
    return %c0_i32, %c0_i32_0 : i32, i32
  }
  func.func @transform_7(%arg0: i32, %arg1: i32) -> (i32, i32) {
    %c0_i32 = arith.constant 0 : i32
    %c0_i32_0 = arith.constant 0 : i32
    %c0_i32_1 = arith.constant 0 : i32
    return %c0_i32, %c0_i32_0 : i32, i32
  }
  func.func @transform_8(%arg0: i32, %arg1: i32) -> (i32, i32) {
    %c0_i32 = arith.constant 0 : i32
    %c0_i32_0 = arith.constant 0 : i32
    %c0_i32_1 = arith.constant 0 : i32
    return %c0_i32, %c0_i32_0 : i32, i32
  }
  func.func @transform_9(%arg0: i32, %arg1: i32) -> (i32, i32, i32) {
    %c0_i32 = arith.constant 0 : i32
    %c0_i32_0 = arith.constant 0 : i32
    return %arg0, %c0_i32, %arg1 : i32, i32, i32
  }
  func.func @transform_10(%arg0: i32, %arg1: i32) -> (i32, i32, i32) {
    %c0_i32 = arith.constant 0 : i32
    %c0_i32_0 = arith.constant 0 : i32
    return %arg0, %c0_i32, %arg1 : i32, i32, i32
  }
}

</mosaic_0001>

<llo_original>
// kernel: neg.4
$region0: #{neg.4}
  #allocation0 [shape = 's32[1]{0}', space=sflag, size = 0x4, scoped, tag = 'scoped memory for neg.4']
  %s0 = inlined_call_operand.vmem [shape: f32[4,64,128], index: 0, kind: input, shape index: {}]
  %s1 = inlined_call_operand.vmem [shape: f32[4,64,128], index: 1, kind: output, shape index: {}]
  %v2 = vld [vmem:[%s0] sm:$0xff]
  %3 = xla_tuple %v2
  %4 = xla_tuple %3
  %v5 = vxor.u32 %v2, 2147483648
  %6 = xla_tuple %v5
  %7 = vst [vmem:[%s1] sm:$0xff] %v5
  %s8 = scalar_lea.vmem %s0, 64
  %v9 = vld [vmem:[%s8] sm:$0xff]
  %10 = xla_tuple %v9
  %11 = xla_tuple %10
  %v12 = vxor.u32 %v9, 2147483648
  %13 = xla_tuple %v12
  %s14 = scalar_lea.vmem %s1, 64
  %15 = vst [vmem:[%s14] sm:$0xff] %v12
  %s16 = scalar_lea.vmem %s0, 128
  %v17 = vld [vmem:[%s16] sm:$0xff]
  %18 = xla_tuple %v17
  %19 = xla_tuple %18
  %v20 = vxor.u32 %v17, 2147483648
  %21 = xla_tuple %v20
  %s22 = scalar_lea.vmem %s1, 128
  %23 = vst [vmem:[%s22] sm:$0xff] %v20
  %s24 = scalar_lea.vmem %s0, 192
  %v25 = vld [vmem:[%s24] sm:$0xff]
  %26 = xla_tuple %v25
  %27 = xla_tuple %26
  %v28 = vxor.u32 %v25, 2147483648
  %29 = xla_tuple %v28
  %s30 = scalar_lea.vmem %s1, 192
  %31 = vst [vmem:[%s30] sm:$0xff] %v28
  %s32 = scalar_lea.vmem %s0, 8
  %v33 = vld [vmem:[%s32] sm:$0xff]
  %34 = xla_tuple %v33
  %35 = xla_tuple %34
  %v36 = vxor.u32 %v33, 2147483648
  %37 = xla_tuple %v36
  %s38 = scalar_lea.vmem %s1, 8
  %39 = vst [vmem:[%s38] sm:$0xff] %v36
  %s40 = scalar_lea.vmem %s0, 72
  %v41 = vld [vmem:[%s40] sm:$0xff]
  %42 = xla_tuple %v41
  %43 = xla_tuple %42
  %v44 = vxor.u32 %v41, 2147483648
  %45 = xla_tuple %v44
  %s46 = scalar_lea.vmem %s1, 72
  %47 = vst [vmem:[%s46] sm:$0xff] %v44
  %s48 = scalar_lea.vmem %s0, 136
  %v49 = vld [vmem:[%s48] sm:$0xff]
  %50 = xla_tuple %v49
  %51 = xla_tuple %50
  %v52 = vxor.u32 %v49, 2147483648
  %53 = xla_tuple %v52
  %s54 = scalar_lea.vmem %s1, 136
  %55 = vst [vmem:[%s54] sm:$0xff] %v52
  %s56 = scalar_lea.vmem %s0, 200
  %v57 = vld [vmem:[%s56] sm:$0xff]
  %58 = xla_tuple %v57
  %59 = xla_tuple %58
  %v60 = vxor.u32 %v57, 2147483648
  %61 = xla_tuple %v60
  %s62 = scalar_lea.vmem %s1, 200
  %63 = vst [vmem:[%s62] sm:$0xff] %v60
  %s64 = scalar_lea.vmem %s0, 16
  %v65 = vld [vmem:[%s64] sm:$0xff]
  %66 = xla_tuple %v65
  %67 = xla_tuple %66
  %v68 = vxor.u32 %v65, 2147483648
  %69 = xla_tuple %v68
  %s70 = scalar_lea.vmem %s1, 16
  %71 = vst [vmem:[%s70] sm:$0xff] %v68
  %s72 = scalar_lea.vmem %s0, 80
  %v73 = vld [vmem:[%s72] sm:$0xff]
  %74 = xla_tuple %v73
  %75 = xla_tuple %74
  %v76 = vxor.u32 %v73, 2147483648
  %77 = xla_tuple %v76
  %s78 = scalar_lea.vmem %s1, 80
  %79 = vst [vmem:[%s78] sm:$0xff] %v76
  %s80 = scalar_lea.vmem %s0, 144
  %v81 = vld [vmem:[%s80] sm:$0xff]
  %82 = xla_tuple %v81
  %83 = xla_tuple %82
  %v84 = vxor.u32 %v81, 2147483648
  %85 = xla_tuple %v84
  %s86 = scalar_lea.vmem %s1, 144
  %87 = vst [vmem:[%s86] sm:$0xff] %v84
  %s88 = scalar_lea.vmem %s0, 208
  %v89 = vld [vmem:[%s88] sm:$0xff]
  %90 = xla_tuple %v89
  %91 = xla_tuple %90
  %v92 = vxor.u32 %v89, 2147483648
  %93 = xla_tuple %v92
  %s94 = scalar_lea.vmem %s1, 208
  %95 = vst [vmem:[%s94] sm:$0xff] %v92
  %s96 = scalar_lea.vmem %s0, 24
  %v97 = vld [vmem:[%s96] sm:$0xff]
  %98 = xla_tuple %v97
  %99 = xla_tuple %98
  %v100 = vxor.u32 %v97, 2147483648
  %101 = xla_tuple %v100
  %s102 = scalar_lea.vmem %s1, 24
  %103 = vst [vmem:[%s102] sm:$0xff] %v100
  %s104 = scalar_lea.vmem %s0, 88
  %v105 = vld [vmem:[%s104] sm:$0xff]
  %106 = xla_tuple %v105
  %107 = xla_tuple %106
  %v108 = vxor.u32 %v105, 2147483648
  %109 = xla_tuple %v108
  %s110 = scalar_lea.vmem %s1, 88
  %111 = vst [vmem:[%s110] sm:$0xff] %v108
  %s112 = scalar_lea.vmem %s0, 152
  %v113 = vld [vmem:[%s112] sm:$0xff]
  %114 = xla_tuple %v113
  %115 = xla_tuple %114
  %v116 = vxor.u32 %v113, 2147483648
  %117 = xla_tuple %v116
  %s118 = scalar_lea.vmem %s1, 152
  %119 = vst [vmem:[%s118] sm:$0xff] %v116
  %s120 = scalar_lea.vmem %s0, 216
  %v121 = vld [vmem:[%s120] sm:$0xff]
  %122 = xla_tuple %v121
  %123 = xla_tuple %122
  %v124 = vxor.u32 %v121, 2147483648
  %125 = xla_tuple %v124
  %s126 = scalar_lea.vmem %s1, 216
  %127 = vst [vmem:[%s126] sm:$0xff] %v124
  %s128 = scalar_lea.vmem %s0, 32
  %v129 = vld [vmem:[%s128] sm:$0xff]
  %130 = xla_tuple %v129
  %131 = xla_tuple %130
  %v132 = vxor.u32 %v129, 2147483648
  %133 = xla_tuple %v132
  %s134 = scalar_lea.vmem %s1, 32
  %135 = vst [vmem:[%s134] sm:$0xff] %v132
  %s136 = scalar_lea.vmem %s0, 96
  %v137 = vld [vmem:[%s136] sm:$0xff]
  %138 = xla_tuple %v137
  %139 = xla_tuple %138
  %v140 = vxor.u32 %v137, 2147483648
  %141 = xla_tuple %v140
  %s142 = scalar_lea.vmem %s1, 96
  %143 = vst [vmem:[%s142] sm:$0xff] %v140
  %s144 = scalar_lea.vmem %s0, 160
  %v145 = vld [vmem:[%s144] sm:$0xff]
  %146 = xla_tuple %v145
  %147 = xla_tuple %146
  %v148 = vxor.u32 %v145, 2147483648
  %149 = xla_tuple %v148
  %s150 = scalar_lea.vmem %s1, 160
  %151 = vst [vmem:[%s150] sm:$0xff] %v148
  %s152 = scalar_lea.vmem %s0, 224
  %v153 = vld [vmem:[%s152] sm:$0xff]
  %154 = xla_tuple %v153
  %155 = xla_tuple %154
  %v156 = vxor.u32 %v153, 2147483648
  %157 = xla_tuple %v156
  %s158 = scalar_lea.vmem %s1, 224
  %159 = vst [vmem:[%s158] sm:$0xff] %v156
  %s160 = scalar_lea.vmem %s0, 40
  %v161 = vld [vmem:[%s160] sm:$0xff]
  %162 = xla_tuple %v161
  %163 = xla_tuple %162
  %v164 = vxor.u32 %v161, 2147483648
  %165 = xla_tuple %v164
  %s166 = scalar_lea.vmem %s1, 40
  %167 = vst [vmem:[%s166] sm:$0xff] %v164
  %s168 = scalar_lea.vmem %s0, 104
  %v169 = vld [vmem:[%s168] sm:$0xff]
  %170 = xla_tuple %v169
  %171 = xla_tuple %170
  %v172 = vxor.u32 %v169, 2147483648
  %173 = xla_tuple %v172
  %s174 = scalar_lea.vmem %s1, 104
  %175 = vst [vmem:[%s174] sm:$0xff] %v172
  %s176 = scalar_lea.vmem %s0, 168
  %v177 = vld [vmem:[%s176] sm:$0xff]
  %178 = xla_tuple %v177
  %179 = xla_tuple %178
  %v180 = vxor.u32 %v177, 2147483648
  %181 = xla_tuple %v180
  %s182 = scalar_lea.vmem %s1, 168
  %183 = vst [vmem:[%s182] sm:$0xff] %v180
  %s184 = scalar_lea.vmem %s0, 232
  %v185 = vld [vmem:[%s184] sm:$0xff]
  %186 = xla_tuple %v185
  %187 = xla_tuple %186
  %v188 = vxor.u32 %v185, 2147483648
  %189 = xla_tuple %v188
  %s190 = scalar_lea.vmem %s1, 232
  %191 = vst [vmem:[%s190] sm:$0xff] %v188
  %s192 = scalar_lea.vmem %s0, 48
  %v193 = vld [vmem:[%s192] sm:$0xff]
  %194 = xla_tuple %v193
  %195 = xla_tuple %194
  %v196 = vxor.u32 %v193, 2147483648
  %197 = xla_tuple %v196
  %s198 = scalar_lea.vmem %s1, 48
  %199 = vst [vmem:[%s198] sm:$0xff] %v196
  %s200 = scalar_lea.vmem %s0, 112
  %v201 = vld [vmem:[%s200] sm:$0xff]
  %202 = xla_tuple %v201
  %203 = xla_tuple %202
  %v204 = vxor.u32 %v201, 2147483648
  %205 = xla_tuple %v204
  %s206 = scalar_lea.vmem %s1, 112
  %207 = vst [vmem:[%s206] sm:$0xff] %v204
  %s208 = scalar_lea.vmem %s0, 176
  %v209 = vld [vmem:[%s208] sm:$0xff]
  %210 = xla_tuple %v209
  %211 = xla_tuple %210
  %v212 = vxor.u32 %v209, 2147483648
  %213 = xla_tuple %v212
  %s214 = scalar_lea.vmem %s1, 176
  %215 = vst [vmem:[%s214] sm:$0xff] %v212
  %s216 = scalar_lea.vmem %s0, 240
  %v217 = vld [vmem:[%s216] sm:$0xff]
  %218 = xla_tuple %v217
  %219 = xla_tuple %218
  %v220 = vxor.u32 %v217, 2147483648
  %221 = xla_tuple %v220
  %s222 = scalar_lea.vmem %s1, 240
  %223 = vst [vmem:[%s222] sm:$0xff] %v220
  %s224 = scalar_lea.vmem %s0, 56
  %v225 = vld [vmem:[%s224] sm:$0xff]
  %226 = xla_tuple %v225
  %227 = xla_tuple %226
  %v228 = vxor.u32 %v225, 2147483648
  %229 = xla_tuple %v228
  %s230 = scalar_lea.vmem %s1, 56
  %231 = vst [vmem:[%s230] sm:$0xff] %v228
  %s232 = scalar_lea.vmem %s0, 120
  %v233 = vld [vmem:[%s232] sm:$0xff]
  %234 = xla_tuple %v233
  %235 = xla_tuple %234
  %v236 = vxor.u32 %v233, 2147483648
  %237 = xla_tuple %v236
  %s238 = scalar_lea.vmem %s1, 120
  %239 = vst [vmem:[%s238] sm:$0xff] %v236
  %s240 = scalar_lea.vmem %s0, 184
  %v241 = vld [vmem:[%s240] sm:$0xff]
  %242 = xla_tuple %v241
  %243 = xla_tuple %242
  %v244 = vxor.u32 %v241, 2147483648
  %245 = xla_tuple %v244
  %s246 = scalar_lea.vmem %s1, 184
  %247 = vst [vmem:[%s246] sm:$0xff] %v244
  %s248 = scalar_lea.vmem %s0, 248
  %v249 = vld [vmem:[%s248] sm:$0xff]
  %250 = xla_tuple %v249
  %251 = xla_tuple %250
  %v252 = vxor.u32 %v249, 2147483648
  %253 = xla_tuple %v252
  %s254 = scalar_lea.vmem %s1, 248
  %255 = vst [vmem:[%s254] sm:$0xff] %v252

// kernel: coarse_reg_forward.7
$region0: #{coarse_reg_forward.7}
  #allocation0 [shape = 'u32[]', space=smem, size = 0x4, offset = 0x4, fixed_abs, tag = 'smem constant byte address 0x4 - core index']
  #allocation1 [shape = 'u32[144,128]{1,0:T(1,128)}', space=vmem, size = 0x12000, scoped, tag = 'internal scratch']
  %s0 = inlined_call_operand.vmem [shape: f32[4,64,3], index: 0, kind: input, shape index: {}]
  %s1 = inlined_call_operand.vmem [shape: f32[4,3,128], index: 1, kind: input, shape index: {}]
  %s2 = inlined_call_operand.vmem [shape: f32[4,64,1], index: 2, kind: input, shape index: {}]
  %s3 = inlined_call_operand.vmem [shape: f32[4,1,128], index: 3, kind: input, shape index: {}]
  %s4 = inlined_call_operand.vmem [shape: f32[4,64,128], index: 4, kind: output, shape index: {}]
  %s5 = sld [smem:[#allocation0]]
  $region49: #{coarse_reg_forward.7} parent=0
    _
  %s7 = ssub.s32 1, %s5
  %s8 = scalar_select 0, %s7, %s5
  loop: start=0, step=1, limit=6
  $region2: #{coarse_reg_forward.7} parent=0 // loop_pre_header
    _
  $region3: #{coarse_reg_forward.7} parent=0 // loop_header
    %s10 = sphi 0, %s14
    %p11 = scmp.ge.s32.totalorder %s10, 6
    %s17 = sphi 0, %s36
    %s18 = sphi 0, %s32
    %s19 = sphi 0, %s28
    %s20 = sphi 0, %s17
    %s21 = sphi 0, %s18
    %s22 = sphi 0, %s19
    %s23 = sphi 0, %s20
    %s24 = sphi 0, %s21
    %s25 = sphi 0, %s22
    %s41 = sphi 0, %s43
    %s44 = sphi 0, %s41
    %s45 = sphi 0, %s44
    %s61 = sphi 0, %s45
    %s69 = sphi 0, %s71
    %s72 = sphi 0, %s69
    %s73 = sphi 0, %s72
    %s89 = sphi 0, %s73
    %s97 = sphi 0, %s99
    %s100 = sphi 0, %s97
    %s101 = sphi 0, %s100
    %s117 = sphi 0, %s101
    %s125 = sphi 0, %s127
    %s128 = sphi 0, %s125
    %s129 = sphi 0, %s128
    %s145 = sphi 0, %s129
    %s155 = sphi 0, %s157
    %s158 = sphi 0, %s155
    %s159 = sphi 0, %s158
    %s175 = sphi 0, %s159
  $region4: #{coarse_reg_forward.7} parent=0 // loop_header_branch
    %13 = sbr.rel (%p11) target = $region8
  $region5: #{coarse_reg_forward.7} parent=0 // loop_body
    %s15 = ssub.s32 %s10, 1
    %s16 = ssub.s32 %s10, 2
    %s26 = sadd.s32 1, %s19
    %p27 = scmp.ge.s32.totalorder %s26, 1
    %s28 = scalar_select %p27, 0, %s26
    %s29 = sadd.s32 1, %s18
    %s30 = scalar_select %p27, %s29, %s18
    %p31 = scmp.ge.s32.totalorder %s30, 1
    %s32 = scalar_select %p31, 0, %s30
    %s33 = sadd.s32 1, %s17
    %s34 = scalar_select %p31, %s33, %s17
    %p35 = scmp.ge.s32.totalorder %s34, 4
    %s36 = scalar_select %p35, 0, %s34
    %s37 = ssub.s32 %s17, %s36
    %s38 = ssub.s32 %s18, %s32
    %s39 = sor.u32 %s37, %s38
    %p40 = scmp.eq.s32.totalorder %s39, 0
    %s42 = sadd.s32 %s41, 1
    %s43 = scalar_select %p40, %s41, %s42
    %p46 = pneg %p40
    %p47 = scmp.eq.s32.totalorder %s10, 3
    %p48 = por %p46, %p47
    %p49 = scmp.ne.s32.totalorder %s41, %s44
    %p50 = scmp.eq.s32.totalorder %s10, 0
    %p51 = por %p49, %p50
    %p52 = scmp.ne.s32.totalorder %s41, %s44
    %p53 = scmp.eq.s32.totalorder %s15, 3
    %p54 = por %p52, %p53
    %p55 = scmp.ne.s32.totalorder %s44, %s45
    %p56 = scmp.eq.s32.totalorder %s15, 0
    %p57 = por %p55, %p56
    %p58 = scmp.ne.s32.totalorder %s44, %s45
    %p59 = scmp.eq.s32.totalorder %s16, 3
    %p60 = por %p58, %p59
    %p62 = scmp.ne.s32.totalorder %s45, %s61
    %p63 = scmp.eq.s32.totalorder %s16, 0
    %p64 = por %p62, %p63
    %s65 = ssub.s32 %s17, %s36
    %s66 = ssub.s32 %s19, %s28
    %s67 = sor.u32 %s65, %s66
    %p68 = scmp.eq.s32.totalorder %s67, 0
    %s70 = sadd.s32 %s69, 1
    %s71 = scalar_select %p68, %s69, %s70
    %p74 = pneg %p68
    %p75 = scmp.eq.s32.totalorder %s10, 3
    %p76 = por %p74, %p75
    %p77 = scmp.ne.s32.totalorder %s69, %s72
    %p78 = scmp.eq.s32.totalorder %s10, 0
    %p79 = por %p77, %p78
    %p80 = scmp.ne.s32.totalorder %s69, %s72
    %p81 = scmp.eq.s32.totalorder %s15, 3
    %p82 = por %p80, %p81
    %p83 = scmp.ne.s32.totalorder %s72, %s73
    %p84 = scmp.eq.s32.totalorder %s15, 0
    %p85 = por %p83, %p84
    %p86 = scmp.ne.s32.totalorder %s72, %s73
    %p87 = scmp.eq.s32.totalorder %s16, 3
    %p88 = por %p86, %p87
    %p90 = scmp.ne.s32.totalorder %s73, %s89
    %p91 = scmp.eq.s32.totalorder %s16, 0
    %p92 = por %p90, %p91
    %s93 = ssub.s32 %s17, %s36
    %s94 = ssub.s32 %s18, %s32
    %s95 = sor.u32 %s93, %s94
    %p96 = scmp.eq.s32.totalorder %s95, 0
    %s98 = sadd.s32 %s97, 1
    %s99 = scalar_select %p96, %s97, %s98
    %p102 = pneg %p96
    %p103 = scmp.eq.s32.totalorder %s10, 3
    %p104 = por %p102, %p103
    %p105 = scmp.ne.s32.totalorder %s97, %s100
    %p106 = scmp.eq.s32.totalorder %s10, 0
    %p107 = por %p105, %p106
    %p108 = scmp.ne.s32.totalorder %s97, %s100
    %p109 = scmp.eq.s32.totalorder %s15, 3
    %p110 = por %p108, %p109
    %p111 = scmp.ne.s32.totalorder %s100, %s101
    %p112 = scmp.eq.s32.totalorder %s15, 0
    %p113 = por %p111, %p112
    %p114 = scmp.ne.s32.totalorder %s100, %s101
    %p115 = scmp.eq.s32.totalorder %s16, 3
    %p116 = por %p114, %p115
    %p118 = scmp.ne.s32.totalorder %s101, %s117
    %p119 = scmp.eq.s32.totalorder %s16, 0
    %p120 = por %p118, %p119
    %s121 = ssub.s32 %s17, %s36
    %s122 = ssub.s32 %s19, %s28
    %s123 = sor.u32 %s121, %s122
    %p124 = scmp.eq.s32.totalorder %s123, 0
    %s126 = sadd.s32 %s125, 1
    %s127 = scalar_select %p124, %s125, %s126
    %p130 = pneg %p124
    %p131 = scmp.eq.s32.totalorder %s10, 3
    %p132 = por %p130, %p131
    %p133 = scmp.ne.s32.totalorder %s125, %s128
    %p134 = scmp.eq.s32.totalorder %s10, 0
    %p135 = por %p133, %p134
    %p136 = scmp.ne.s32.totalorder %s125, %s128
    %p137 = scmp.eq.s32.totalorder %s15, 3
    %p138 = por %p136, %p137
    %p139 = scmp.ne.s32.totalorder %s128, %s129
    %p140 = scmp.eq.s32.totalorder %s15, 0
    %p141 = por %p139, %p140
    %p142 = scmp.ne.s32.totalorder %s128, %s129
    %p143 = scmp.eq.s32.totalorder %s16, 3
    %p144 = por %p142, %p143
    %p146 = scmp.ne.s32.totalorder %s129, %s145
    %p147 = scmp.eq.s32.totalorder %s16, 0
    %p148 = por %p146, %p147
    %s149 = ssub.s32 %s17, %s36
    %s150 = ssub.s32 %s18, %s32
    %s151 = sor.u32 %s149, %s150
    %s152 = ssub.s32 %s19, %s28
    %s153 = sor.u32 %s151, %s152
    %p154 = scmp.eq.s32.totalorder %s153, 0
    %s156 = sadd.s32 %s155, 1
    %s157 = scalar_select %p154, %s155, %s156
    %p160 = pneg %p154
    %p161 = scmp.eq.s32.totalorder %s10, 3
    %p162 = por %p160, %p161
    %p163 = scmp.ne.s32.totalorder %s155, %s158
    %p164 = scmp.eq.s32.totalorder %s10, 0
    %p165 = por %p163, %p164
    %p166 = scmp.ne.s32.totalorder %s155, %s158
    %p167 = scmp.eq.s32.totalorder %s15, 3
    %p168 = por %p166, %p167
    %p169 = scmp.ne.s32.totalorder %s158, %s159
    %p170 = scmp.eq.s32.totalorder %s15, 0
    %p171 = por %p169, %p170
    %p172 = scmp.ne.s32.totalorder %s158, %s159
    %p173 = scmp.eq.s32.totalorder %s16, 3
    %p174 = por %p172, %p173
    %p176 = scmp.ne.s32.totalorder %s159, %s175
    %p177 = scmp.eq.s32.totalorder %s16, 0
    %p178 = por %p176, %p177
    %p179 = scmp.le.s32.totalorder 1, %s10
    %p180 = scmp.lt.s32.totalorder %s10, 5
    %p181 = pnand %p179, %p180
    %p182 = pneg %p181
    // Predicated region
    $region9: #{coarse_reg_forward.7} parent=5 // pred_check
      _
    $region10: #{coarse_reg_forward.7} parent=5 // pred_check_branch
      %184 = sbr.rel (%p181) target = $region12
    $region11: #{coarse_reg_forward.7} parent=5 // pred_region
      %s185 = ssub.s32 %s10, 1
    $region12: #{coarse_reg_forward.7} parent=5 // pred_fallthru
      _
    %p186 = scmp.lt.s32.totalorder %s10, 4
    // Predicated region
    $region13: #{coarse_reg_forward.7} parent=5 // pred_check
      %p187 = pneg %p186
    $region14: #{coarse_reg_forward.7} parent=5 // pred_check_branch
      %189 = sbr.rel (%p187) target = $region16
    $region15: #{coarse_reg_forward.7} parent=5 // pred_region
      // Predicated region
      $region17: #{coarse_reg_forward.7} parent=15 // pred_check
        %p190 = pneg %p51
      $region18: #{coarse_reg_forward.7} parent=15 // pred_check_branch
        %192 = sbr.rel (%p190) target = $region20
      $region19: #{coarse_reg_forward.7} parent=15 // pred_region
        %s193 = smul.u32 8, %s18
        %p194 = scmp.lt.s32.totalorder %s17, 3
        %s195 = scalar_select %p194, %s17, 3
        %p196 = scmp.lt.s32.totalorder %s193, 7
        %s197 = scalar_select %p196, %s193, 7
        %s198 = smul.addr %s195, 8
        %s199 = sadd.s32 %s197, %s198
        %s200 = smul.addr %s199, 8
        %s201 = scalar_lea.vmem %s0, %s200
        %s202 = smul.u32 8, %s18
      $region20: #{coarse_reg_forward.7} parent=15 // pred_fallthru
        _
      // Predicated region
      $region21: #{coarse_reg_forward.7} parent=15 // pred_check
        %p203 = pneg %p79
      $region22: #{coarse_reg_forward.7} parent=15 // pred_check_branch
        %205 = sbr.rel (%p203) target = $region24
      $region23: #{coarse_reg_forward.7} parent=15 // pred_region
        %p206 = scmp.lt.s32.totalorder %s17, 3
        %s207 = scalar_select %p206, %s17, 3
        %p208 = scmp.lt.s32.totalorder %s19, 0
        %s209 = scalar_select %p208, %s19, 0
        %s210 = sadd.s32 %s209, %s207
        %s211 = smul.addr %s210, 4
        %s212 = scalar_lea.vmem %s1, %s211
      $region24: #{coarse_reg_forward.7} parent=15 // pred_fallthru
        _
      // Predicated region
      $region25: #{coarse_reg_forward.7} parent=15 // pred_check
        %p213 = pneg %p107
      $region26: #{coarse_reg_forward.7} parent=15 // pred_check_branch
        %215 = sbr.rel (%p213) target = $region28
      $region27: #{coarse_reg_forward.7} parent=15 // pred_region
        %s216 = smul.u32 8, %s18
        %p217 = scmp.lt.s32.totalorder %s17, 3
        %s218 = scalar_select %p217, %s17, 3
        %p219 = scmp.lt.s32.totalorder %s216, 7
        %s220 = scalar_select %p219, %s216, 7
        %s221 = smul.addr %s218, 8
        %s222 = sadd.s32 %s220, %s221
        %s223 = smul.addr %s222, 8
        %s224 = scalar_lea.vmem %s2, %s223
        %s225 = smul.u32 8, %s18
      $region28: #{coarse_reg_forward.7} parent=15 // pred_fallthru
        _
      // Predicated region
      $region29: #{coarse_reg_forward.7} parent=15 // pred_check
        %p226 = pneg %p135
      $region30: #{coarse_reg_forward.7} parent=15 // pred_check_branch
        %228 = sbr.rel (%p226) target = $region32
      $region31: #{coarse_reg_forward.7} parent=15 // pred_region
        %p229 = scmp.lt.s32.totalorder %s17, 3
        %s230 = scalar_select %p229, %s17, 3
        %p231 = scmp.lt.s32.totalorder %s19, 0
        %s232 = scalar_select %p231, %s19, 0
        %s233 = sadd.s32 %s232, %s230
        %s234 = scalar_lea.vmem %s3, %s233
      $region32: #{coarse_reg_forward.7} parent=15 // pred_fallthru
        _
    $region16: #{coarse_reg_forward.7} parent=5 // pred_fallthru
      _
    %p235 = scmp.le.s32.totalorder 1, %s10
    %p236 = scmp.lt.s32.totalorder %s10, 5
    %p237 = pnand %p235, %p236
    %p238 = pneg %p237
    // Predicated region
    $region33: #{coarse_reg_forward.7} parent=5 // pred_check
      _
    $region34: #{coarse_reg_forward.7} parent=5 // pred_check_branch
      %240 = sbr.rel (%p237) target = $region36
    $region35: #{coarse_reg_forward.7} parent=5 // pred_region
      %s241 = ssub.s32 %s10, 1
      %s242 = smul.u32 8, %s21
      %p243 = scmp.lt.s32.totalorder %s20, 3
      %s244 = scalar_select %p243, %s20, 3
      %p245 = scmp.lt.s32.totalorder %s242, 7
      %s246 = scalar_select %p245, %s242, 7
      %s247 = smul.addr %s244, 8
      %s248 = sadd.s32 %s246, %s247
      %s249 = smul.addr %s248, 8
      %s250 = scalar_lea.vmem %s0, %s249
      %p251 = pneg %p57
      %p252 = pneg %p54
      %p253 = scmp.lt.s32.totalorder %s20, 3
      %s254 = scalar_select %p253, %s20, 3
      %p255 = scmp.lt.s32.totalorder %s22, 0
      %s256 = scalar_select %p255, %s22, 0
      %s257 = sadd.s32 %s256, %s254
      %s258 = smul.addr %s257, 4
      %s259 = scalar_lea.vmem %s1, %s258
      %p260 = pneg %p85
      %p261 = pneg %p82
      %s262 = smul.u32 8, %s21
      %p263 = scmp.lt.s32.totalorder %s20, 3
      %s264 = scalar_select %p263, %s20, 3
      %p265 = scmp.lt.s32.totalorder %s262, 7
      %s266 = scalar_select %p265, %s262, 7
      %s267 = smul.addr %s264, 8
      %s268 = sadd.s32 %s266, %s267
      %s269 = smul.addr %s268, 8
      %s270 = scalar_lea.vmem %s2, %s269
      %p271 = pneg %p113
      %p272 = pneg %p110
      %p273 = scmp.lt.s32.totalorder %s20, 3
      %s274 = scalar_select %p273, %s20, 3
      %p275 = scmp.lt.s32.totalorder %s22, 0
      %s276 = scalar_select %p275, %s22, 0
      %s277 = sadd.s32 %s276, %s274
      %s278 = scalar_lea.vmem %s3, %s277
      %p279 = pneg %p141
      %p280 = pneg %p138
      %p281 = pneg %p171
      %p282 = pneg %p168
      %s283 = smul.u32 8, %s21
      %p284 = scmp.lt.s32.totalorder %s20, 3
      %s285 = scalar_select %p284, %s20, 3
      %p286 = scmp.lt.s32.totalorder %s283, 7
      %s287 = scalar_select %p286, %s283, 7
      %p288 = scmp.lt.s32.totalorder %s22, 0
      %s289 = scalar_select %p288, %s22, 0
      %s290 = sadd.s32 %s289, %s287
      %s291 = smul.addr %s285, 8
      %s292 = sadd.s32 %s290, %s291
      %s293 = smul.addr %s292, 8
      %s294 = scalar_lea.vmem %s4, %s293
      %s295 = smul.u32 8, %s21
      %p296 = scmp.lt.s32.totalorder %s20, 3
      %s297 = scalar_select %p296, %s20, 3
      %p298 = scmp.lt.s32.totalorder %s295, 7
      %s299 = scalar_select %p298, %s295, 7
      %s300 = smul.addr %s297, 8
      %s301 = sadd.s32 %s299, %s300
      %s302 = smul.addr %s301, 8
      %s303 = scalar_lea.vmem %s0, %s302
      %s304 = smul.u32 8, %s21
      %p305 = scmp.lt.s32.totalorder %s20, 3
      %s306 = scalar_select %p305, %s20, 3
      %p307 = scmp.lt.s32.totalorder %s22, 0
      %s308 = scalar_select %p307, %s22, 0
      %s309 = sadd.s32 %s308, %s306
      %s310 = smul.addr %s309, 4
      %s311 = scalar_lea.vmem %s1, %s310
      %s312 = smul.u32 8, %s21
      %p313 = scmp.lt.s32.totalorder %s20, 3
      %s314 = scalar_select %p313, %s20, 3
      %p315 = scmp.lt.s32.totalorder %s312, 7
      %s316 = scalar_select %p315, %s312, 7
      %s317 = smul.addr %s314, 8
      %s318 = sadd.s32 %s316, %s317
      %s319 = smul.addr %s318, 8
      %s320 = scalar_lea.vmem %s2, %s319
      %s321 = smul.u32 8, %s21
      %p322 = scmp.lt.s32.totalorder %s20, 3
      %s323 = scalar_select %p322, %s20, 3
      %p324 = scmp.lt.s32.totalorder %s22, 0
      %s325 = scalar_select %p324, %s22, 0
      %s326 = sadd.s32 %s325, %s323
      %s327 = scalar_lea.vmem %s3, %s326
      %s328 = smul.u32 8, %s21
      %p329 = scmp.lt.s32.totalorder %s20, 3
      %s330 = scalar_select %p329, %s20, 3
      %p331 = scmp.lt.s32.totalorder %s328, 7
      %s332 = scalar_select %p331, %s328, 7
      %p333 = scmp.lt.s32.totalorder %s22, 0
      %s334 = scalar_select %p333, %s22, 0
      %s335 = sadd.s32 %s334, %s332
      %s336 = smul.addr %s330, 8
      %s337 = sadd.s32 %s335, %s336
      %s338 = smul.addr %s337, 8
      %s339 = scalar_lea.vmem %s4, %s338
      %s340 = smul.u32 8, %s21
      %v341 = vld [vmem:[%s303] sm:$0xff]
      %v342 = vld [vmem:[%s303 + $0x8] sm:$0xff]
      %v343 = vld [vmem:[%s303 + $0x10] sm:$0xff]
      %v344 = vld [vmem:[%s303 + $0x18] sm:$0xff]
      %v345 = vld [vmem:[%s303 + $0x20] sm:$0xff]
      %v346 = vld [vmem:[%s303 + $0x28] sm:$0xff]
      %v347 = vld [vmem:[%s303 + $0x30] sm:$0xff]
      %v348 = vld [vmem:[%s303 + $0x38] sm:$0xff]
      %v349 = vld [vmem:[%s311] sm:$0x7]
      %vm350 = vcmask 23552
      %v352 = vsel %vm350, %v341, 0
      %v355 = vsel %vm350, %v342, 0
      %v358 = vsel %vm350, %v343, 0
      %v361 = vsel %vm350, %v344, 0
      %v364 = vsel %vm350, %v345, 0
      %v367 = vsel %vm350, %v346, 0
      %v370 = vsel %vm350, %v347, 0
      %v373 = vsel %vm350, %v348, 0
      %vm375 = vcmask 1042432
      %v377 = vsel %vm375, %v349, 0
      %379 = vmatprep.subr.mxu0 0.0
      %380 = vmatpush1.msra.mxu0 %v377
      %381 = vmatprep.subr.mxu0 0.0
      %382 = vmatpush1.msra.mxu0 0.0
      %383 = vmatprep.subr.mxu0 0.0
      %384 = vmatpush1.msra.mxu0 0.0
      %385 = vmatprep.subr.mxu0 0.0
      %386 = vmatpush1.msra.mxu0 0.0
      %387 = vmatprep.subr.mxu0 0.0
      %388 = vmatpush1.msra.mxu0 0.0
      %389 = vmatprep.subr.mxu0 0.0
      %390 = vmatpush1.msra.mxu0 0.0
      %391 = vmatprep.subr.mxu0 0.0
      %392 = vmatpush1.msra.mxu0 0.0
      %393 = vmatprep.subr.mxu0 0.0
      %394 = vmatpush1.msra.mxu0 0.0
      %395 = vmatprep.subr.mxu0 0.0
      %396 = vmatpush1.msra.mxu0 0.0
      %397 = vmatprep.subr.mxu0 0.0
      %398 = vmatpush1.msra.mxu0 0.0
      %399 = vmatprep.subr.mxu0 0.0
      %400 = vmatpush1.msra.mxu0 0.0
      %401 = vmatprep.subr.mxu0 0.0
      %402 = vmatpush1.msra.mxu0 0.0
      %403 = vmatprep.subr.mxu0 0.0
      %404 = vmatpush1.msra.mxu0 0.0
      %405 = vmatprep.subr.mxu0 0.0
      %406 = vmatpush1.msra.mxu0 0.0
      %407 = vmatprep.subr.mxu0 0.0
      %408 = vmatpush1.msra.mxu0 0.0
      %409 = vmatprep.subr.mxu0 0.0
      %410 = vmatpush1.msra.mxu0 0.0
      %411 = vmatprep.subr.mxu0 0.0
      %412 = vmatpush1.msra.mxu0 0.0
      %413 = vmatprep.subr.mxu0 0.0
      %414 = vmatpush1.msra.mxu0 0.0
      %415 = vmatprep.subr.mxu0 0.0
      %416 = vmatpush1.msra.mxu0 0.0
      %417 = vmatprep.subr.mxu0 0.0
      %418 = vmatpush1.msra.mxu0 0.0
      %419 = vmatprep.subr.mxu0 0.0
      %420 = vmatpush1.msra.mxu0 0.0
      %421 = vmatprep.subr.mxu0 0.0
      %422 = vmatpush1.msra.mxu0 0.0
      %423 = vmatprep.subr.mxu0 0.0
      %424 = vmatpush1.msra.mxu0 0.0
      %425 = vmatprep.subr.mxu0 0.0
      %426 = vmatpush1.msra.mxu0 0.0
      %427 = vmatprep.subr.mxu0 0.0
      %428 = vmatpush1.msra.mxu0 0.0
      %429 = vmatprep.subr.mxu0 0.0
      %430 = vmatpush1.msra.mxu0 0.0
      %431 = vmatprep.subr.mxu0 0.0
      %432 = vmatpush1.msra.mxu0 0.0
      %433 = vmatprep.subr.mxu0 0.0
      %434 = vmatpush1.msra.mxu0 0.0
      %435 = vmatprep.subr.mxu0 0.0
      %436 = vmatpush1.msra.mxu0 0.0
      %437 = vmatprep.subr.mxu0 0.0
      %438 = vmatpush1.msra.mxu0 0.0
      %439 = vmatprep.subr.mxu0 0.0
      %440 = vmatpush1.msra.mxu0 0.0
      %441 = vmatprep.subr.mxu0 0.0
      %442 = vmatpush1.msra.mxu0 0.0
      %443 = vmatprep.mubr.f32.mxu0 0.0
      %444 = vmatmul.mubr.f32.gmra.mrb[0].mxu0 %v352
      %v445 = vpop.f32.mrb[0].mxu0
      %v446 = vadd.f32 0.0, %v445
      %v447 = vpop.f32.mrb[0].mxu0
      %448 = vmatprep.mubr.f32.mxu0 0.0
      %449 = vmatmul.mubr.f32.gmra.mrb[0].mxu0 %v355
      %v450 = vpop.f32.mrb[0].mxu0
      %v451 = vadd.f32 0.0, %v450
      %v452 = vpop.f32.mrb[0].mxu0
      %453 = vmatprep.mubr.f32.mxu0 0.0
      %454 = vmatmul.mubr.f32.gmra.mrb[0].mxu0 %v358
      %v455 = vpop.f32.mrb[0].mxu0
      %v456 = vadd.f32 0.0, %v455
      %v457 = vpop.f32.mrb[0].mxu0
      %458 = vmatprep.mubr.f32.mxu0 0.0
      %459 = vmatmul.mubr.f32.gmra.mrb[0].mxu0 %v361
      %v460 = vpop.f32.mrb[0].mxu0
      %v461 = vadd.f32 0.0, %v460
      %v462 = vpop.f32.mrb[0].mxu0
      %463 = vmatprep.mubr.f32.mxu0 0.0
      %464 = vmatmul.mubr.f32.gmra.mrb[0].mxu0 %v364
      %v465 = vpop.f32.mrb[0].mxu0
      %v466 = vadd.f32 0.0, %v465
      %v467 = vpop.f32.mrb[0].mxu0
      %468 = vmatprep.mubr.f32.mxu0 0.0
      %469 = vmatmul.mubr.f32.gmra.mrb[0].mxu0 %v367
      %v470 = vpop.f32.mrb[0].mxu0
      %v471 = vadd.f32 0.0, %v470
      %v472 = vpop.f32.mrb[0].mxu0
      %473 = vmatprep.mubr.f32.mxu0 0.0
      %474 = vmatmul.mubr.f32.gmra.mrb[0].mxu0 %v370
      %v475 = vpop.f32.mrb[0].mxu0
      %v476 = vadd.f32 0.0, %v475
      %v477 = vpop.f32.mrb[0].mxu0
      %478 = vmatprep.mubr.f32.mxu0 0.0
      %479 = vmatmul.mubr.f32.gmra.mrb[0].mxu0 %v373
      %v480 = vpop.f32.mrb[0].mxu0
      %v481 = vadd.f32 0.0, %v480
      %v482 = vpop.f32.mrb[0].mxu0
      %483 = vdwg.mxu0
      %v484 = vlaneseq
      %v485 = vand.u32 %v484, 127
      %s486 = smul.u32 %s22, 128
      %s487 = ssub.s32 64, %s486
      %v488 = vstv %s487
      %vm489 = vcmp.lt.s32.totalorder %v485, %v488
      %v490 = vld [vmem:[%s320] sm:$0xff]
      %v491 = vld [vmem:[%s320 + $0x8] sm:$0xff]
      %v492 = vld [vmem:[%s320 + $0x10] sm:$0xff]
      %v493 = vld [vmem:[%s320 + $0x18] sm:$0xff]
      %v494 = vld [vmem:[%s320 + $0x20] sm:$0xff]
      %v495 = vld [vmem:[%s320 + $0x28] sm:$0xff]
      %v496 = vld [vmem:[%s320 + $0x30] sm:$0xff]
      %v497 = vld [vmem:[%s320 + $0x38] sm:$0xff]
      %v498 = vld [vmem:[%s327] sm:$0x1]
      %500 = vset.pattern.permute.xlu0 0
      %501 = vperm.xlu0 %500, %v490
      %v502 = vpop.permute.xlu0 %501
      %505 = vset.pattern.permute.xlu0 0
      %506 = vperm.xlu0 %505, %v491
      %v507 = vpop.permute.xlu0 %506
      %510 = vset.pattern.permute.xlu0 0
      %511 = vperm.xlu0 %510, %v492
      %v512 = vpop.permute.xlu0 %511
      %515 = vset.pattern.permute.xlu0 0
      %516 = vperm.xlu0 %515, %v493
      %v517 = vpop.permute.xlu0 %516
      %520 = vset.pattern.permute.xlu0 0
      %521 = vperm.xlu0 %520, %v494
      %v522 = vpop.permute.xlu0 %521
      %525 = vset.pattern.permute.xlu0 0
      %526 = vperm.xlu0 %525, %v495
      %v527 = vpop.permute.xlu0 %526
      %530 = vset.pattern.permute.xlu0 0
      %531 = vperm.xlu0 %530, %v496
      %v532 = vpop.permute.xlu0 %531
      %535 = vset.pattern.permute.xlu0 0
      %536 = vperm.xlu0 %535, %v497
      %v537 = vpop.permute.xlu0 %536
      %v540 = vlaneseq
      %v541 = vshrl.u32 %v540, 7
      %v542 = vsub.s32 0, %v541
      %v543 = vrot.slane %v498, %v542
      %v545 = vadd.f32 %v502, %v543
      %v546 = vadd.f32 %v507, %v543
      %v547 = vadd.f32 %v512, %v543
      %v548 = vadd.f32 %v517, %v543
      %v549 = vadd.f32 %v522, %v543
      %v550 = vadd.f32 %v527, %v543
      %v551 = vadd.f32 %v532, %v543
      %v552 = vadd.f32 %v537, %v543
      %v553 = vmul.f32 %v446, 2.0
      %v554 = vmul.f32 %v451, 2.0
      %v555 = vmul.f32 %v456, 2.0
      %v556 = vmul.f32 %v461, 2.0
      %v557 = vmul.f32 %v466, 2.0
      %v558 = vmul.f32 %v471, 2.0
      %v559 = vmul.f32 %v476, 2.0
      %v560 = vmul.f32 %v481, 2.0
      %v561 = vsub.f32 %v545, %v553
      %v562 = vsub.f32 %v546, %v554
      %v563 = vsub.f32 %v547, %v555
      %v564 = vsub.f32 %v548, %v556
      %v565 = vsub.f32 %v549, %v557
      %v566 = vsub.f32 %v550, %v558
      %v567 = vsub.f32 %v551, %v559
      %v568 = vsub.f32 %v552, %v560
      %v569 = vsel %vm489, %v561, 1e+30
      %v570 = vsel %vm489, %v562, 1e+30
      %v571 = vsel %vm489, %v563, 1e+30
      %v572 = vsel %vm489, %v564, 1e+30
      %v573 = vsel %vm489, %v565, 1e+30
      %v574 = vsel %vm489, %v566, 1e+30
      %v575 = vsel %vm489, %v567, 1e+30
      %v576 = vsel %vm489, %v568, 1e+30
      %577 = vst [vmem:[%s339] sm:$0xff] %v569
      %578 = vst [vmem:[%s339 + $0x8] sm:$0xff] %v570
      %579 = vst [vmem:[%s339 + $0x10] sm:$0xff] %v571
      %580 = vst [vmem:[%s339 + $0x18] sm:$0xff] %v572
      %581 = vst [vmem:[%s339 + $0x20] sm:$0xff] %v573
      %582 = vst [vmem:[%s339 + $0x28] sm:$0xff] %v574
      %583 = vst [vmem:[%s339 + $0x30] sm:$0xff] %v575
      %584 = vst [vmem:[%s339 + $0x38] sm:$0xff] %v576
      %s585 = smul.u32 8, %s21
      %p586 = scmp.lt.s32.totalorder %s20, 3
      %s587 = scalar_select %p586, %s20, 3
      %p588 = scmp.lt.s32.totalorder %s585, 7
      %s589 = scalar_select %p588, %s585, 7
      %p590 = scmp.lt.s32.totalorder %s22, 0
      %s591 = scalar_select %p590, %s22, 0
      %s592 = sadd.s32 %s591, %s589
      %s593 = smul.addr %s587, 8
      %s594 = sadd.s32 %s592, %s593
      %s595 = smul.addr %s594, 8
      %s596 = scalar_lea.vmem %s4, %s595
      // Predicated region
      $region37: #{coarse_reg_forward.7} parent=35 // pred_check
        %p597 = pneg %p168
      $region38: #{coarse_reg_forward.7} parent=35 // pred_check_branch
        %599 = sbr.rel (%p597) target = $region40
      $region39: #{coarse_reg_forward.7} parent=35 // pred_region
        %s600 = smul.u32 8, %s21
      $region40: #{coarse_reg_forward.7} parent=35 // pred_fallthru
        _
    $region36: #{coarse_reg_forward.7} parent=5 // pred_fallthru
      _
    %p601 = scmp.le.s32.totalorder 2, %s10
    // Predicated region
    $region41: #{coarse_reg_forward.7} parent=5 // pred_check
      %p602 = pneg %p601
    $region42: #{coarse_reg_forward.7} parent=5 // pred_check_branch
      %604 = sbr.rel (%p602) target = $region44
    $region43: #{coarse_reg_forward.7} parent=5 // pred_region
      %s605 = ssub.s32 %s10, 2
      // Predicated region
      $region45: #{coarse_reg_forward.7} parent=43 // pred_check
        %p606 = pneg %p174
      $region46: #{coarse_reg_forward.7} parent=43 // pred_check_branch
        %608 = sbr.rel (%p606) target = $region48
      $region47: #{coarse_reg_forward.7} parent=43 // pred_region
        %s609 = smul.u32 8, %s24
        %p610 = scmp.lt.s32.totalorder %s23, 3
        %s611 = scalar_select %p610, %s23, 3
        %p612 = scmp.lt.s32.totalorder %s609, 7
        %s613 = scalar_select %p612, %s609, 7
        %p614 = scmp.lt.s32.totalorder %s25, 0
        %s615 = scalar_select %p614, %s25, 0
        %s616 = sadd.s32 %s615, %s613
        %s617 = smul.addr %s611, 8
        %s618 = sadd.s32 %s616, %s617
        %s619 = smul.addr %s618, 8
        %s620 = scalar_lea.vmem %s4, %s619
      $region48: #{coarse_reg_forward.7} parent=43 // pred_fallthru
        _
    $region44: #{coarse_reg_forward.7} parent=5 // pred_fallthru
      _
  $region6: #{coarse_reg_forward.7} parent=0 // loop_footer
    %s14 = sadd.s32 1, %s10
  $region7: #{coarse_reg_forward.7} parent=0 // loop_footer_branch
    %9 = sbr.rel target = $region3
  $region8: #{coarse_reg_forward.7} parent=0 // loop_exit
    _

// kernel: coarse_reg_forward.8
$region0: #{coarse_reg_forward.8}
  #allocation0 [shape = 'u32[]', space=smem, size = 0x4, offset = 0x4, fixed_abs, tag = 'smem constant byte address 0x4 - core index']
  #allocation1 [shape = 'u32[144,128]{1,0:T(1,128)}', space=vmem, size = 0x12000, scoped, tag = 'internal scratch']
  %s0 = inlined_call_operand.vmem [shape: f32[4,512,36], index: 0, kind: input, shape index: {}]
  %s1 = inlined_call_operand.vmem [shape: f32[32,36], index: 1, kind: input, shape index: {}]
  %s2 = inlined_call_operand.vmem [shape: f32[32,1], index: 2, kind: input, shape index: {}]
  %s3 = inlined_call_operand.vmem [shape: f32[32,32], index: 3, kind: input, shape index: {}]
  %s4 = inlined_call_operand.vmem [shape: f32[32,1], index: 4, kind: input, shape index: {}]
  %s5 = inlined_call_operand.vmem [shape: f32[32,32], index: 5, kind: input, shape index: {}]
  %s6 = inlined_call_operand.vmem [shape: f32[32,1], index: 6, kind: input, shape index: {}]
  %s7 = inlined_call_operand.vmem [shape: f32[4,32,512], index: 7, kind: output, shape index: {}]
  %s8 = sld [smem:[#allocation0]]
  $region61: #{coarse_reg_forward.8} parent=0
    _
  %s10 = ssub.s32 1, %s8
  %s11 = scalar_select 0, %s10, %s8
  loop: start=0, step=1, limit=6
  $region2: #{coarse_reg_forward.8} parent=0 // loop_pre_header
    _
  $region3: #{coarse_reg_forward.8} parent=0 // loop_header
    %s13 = sphi 0, %s17
    %p14 = scmp.ge.s32.totalorder %s13, 6
    %s20 = sphi 0, %s32
    %s21 = sphi 0, %s28
    %s22 = sphi 0, %s20
    %s23 = sphi 0, %s21
    %s24 = sphi 0, %s22
    %s25 = sphi 0, %s23
    %s37 = sphi 0, %s39
    %s40 = sphi 0, %s37
    %s41 = sphi 0, %s40
    %s57 = sphi 0, %s41
    %s61 = sphi 0, %s61
    %s63 = sphi 0, %s61
    %s64 = sphi 0, %s63
    %s78 = sphi 0, %s64
    %s82 = sphi 0, %s82
    %s84 = sphi 0, %s82
    %s85 = sphi 0, %s84
    %s99 = sphi 0, %s85
    %s103 = sphi 0, %s103
    %s105 = sphi 0, %s103
    %s106 = sphi 0, %s105
    %s120 = sphi 0, %s106
    %s124 = sphi 0, %s124
    %s126 = sphi 0, %s124
    %s127 = sphi 0, %s126
    %s141 = sphi 0, %s127
    %s145 = sphi 0, %s145
    %s147 = sphi 0, %s145
    %s148 = sphi 0, %s147
    %s162 = sphi 0, %s148
    %s166 = sphi 0, %s166
    %s168 = sphi 0, %s166
    %s169 = sphi 0, %s168
    %s183 = sphi 0, %s169
    %s191 = sphi 0, %s193
    %s194 = sphi 0, %s191
    %s195 = sphi 0, %s194
    %s211 = sphi 0, %s195
  $region4: #{coarse_reg_forward.8} parent=0 // loop_header_branch
    %16 = sbr.rel (%p14) target = $region8
  $region5: #{coarse_reg_forward.8} parent=0 // loop_body
    %s18 = ssub.s32 %s13, 1
    %s19 = ssub.s32 %s13, 2
    %s26 = sadd.s32 1, %s21
    %p27 = scmp.ge.s32.totalorder %s26, 1
    %s28 = scalar_select %p27, 0, %s26
    %s29 = sadd.s32 1, %s20
    %s30 = scalar_select %p27, %s29, %s20
    %p31 = scmp.ge.s32.totalorder %s30, 4
    %s32 = scalar_select %p31, 0, %s30
    %s33 = ssub.s32 %s20, %s32
    %s34 = ssub.s32 %s21, %s28
    %s35 = sor.u32 %s33, %s34
    %p36 = scmp.eq.s32.totalorder %s35, 0
    %s38 = sadd.s32 %s37, 1
    %s39 = scalar_select %p36, %s37, %s38
    %p42 = pneg %p36
    %p43 = scmp.eq.s32.totalorder %s13, 3
    %p44 = por %p42, %p43
    %p45 = scmp.ne.s32.totalorder %s37, %s40
    %p46 = scmp.eq.s32.totalorder %s13, 0
    %p47 = por %p45, %p46
    %p48 = scmp.ne.s32.totalorder %s37, %s40
    %p49 = scmp.eq.s32.totalorder %s18, 3
    %p50 = por %p48, %p49
    %p51 = scmp.ne.s32.totalorder %s40, %s41
    %p52 = scmp.eq.s32.totalorder %s18, 0
    %p53 = por %p51, %p52
    %p54 = scmp.ne.s32.totalorder %s40, %s41
    %p55 = scmp.eq.s32.totalorder %s19, 3
    %p56 = por %p54, %p55
    %p58 = scmp.ne.s32.totalorder %s41, %s57
    %p59 = scmp.eq.s32.totalorder %s19, 0
    %p60 = por %p58, %p59
    %s62 = sadd.s32 %s61, 1
    %p65 = scmp.eq.s32.totalorder %s13, 3
    %p66 = scmp.ne.s32.totalorder %s61, %s63
    %p67 = scmp.eq.s32.totalorder %s13, 0
    %p68 = por %p66, %p67
    %p69 = scmp.ne.s32.totalorder %s61, %s63
    %p70 = scmp.eq.s32.totalorder %s18, 3
    %p71 = por %p69, %p70
    %p72 = scmp.ne.s32.totalorder %s63, %s64
    %p73 = scmp.eq.s32.totalorder %s18, 0
    %p74 = por %p72, %p73
    %p75 = scmp.ne.s32.totalorder %s63, %s64
    %p76 = scmp.eq.s32.totalorder %s19, 3
    %p77 = por %p75, %p76
    %p79 = scmp.ne.s32.totalorder %s64, %s78
    %p80 = scmp.eq.s32.totalorder %s19, 0
    %p81 = por %p79, %p80
    %s83 = sadd.s32 %s82, 1
    %p86 = scmp.eq.s32.totalorder %s13, 3
    %p87 = scmp.ne.s32.totalorder %s82, %s84
    %p88 = scmp.eq.s32.totalorder %s13, 0
    %p89 = por %p87, %p88
    %p90 = scmp.ne.s32.totalorder %s82, %s84
    %p91 = scmp.eq.s32.totalorder %s18, 3
    %p92 = por %p90, %p91
    %p93 = scmp.ne.s32.totalorder %s84, %s85
    %p94 = scmp.eq.s32.totalorder %s18, 0
    %p95 = por %p93, %p94
    %p96 = scmp.ne.s32.totalorder %s84, %s85
    %p97 = scmp.eq.s32.totalorder %s19, 3
    %p98 = por %p96, %p97
    %p100 = scmp.ne.s32.totalorder %s85, %s99
    %p101 = scmp.eq.s32.totalorder %s19, 0
    %p102 = por %p100, %p101
    %s104 = sadd.s32 %s103, 1
    %p107 = scmp.eq.s32.totalorder %s13, 3
    %p108 = scmp.ne.s32.totalorder %s103, %s105
    %p109 = scmp.eq.s32.totalorder %s13, 0
    %p110 = por %p108, %p109
    %p111 = scmp.ne.s32.totalorder %s103, %s105
    %p112 = scmp.eq.s32.totalorder %s18, 3
    %p113 = por %p111, %p112
    %p114 = scmp.ne.s32.totalorder %s105, %s106
    %p115 = scmp.eq.s32.totalorder %s18, 0
    %p116 = por %p114, %p115
    %p117 = scmp.ne.s32.totalorder %s105, %s106
    %p118 = scmp.eq.s32.totalorder %s19, 3
    %p119 = por %p117, %p118
    %p121 = scmp.ne.s32.totalorder %s106, %s120
    %p122 = scmp.eq.s32.totalorder %s19, 0
    %p123 = por %p121, %p122
    %s125 = sadd.s32 %s124, 1
    %p128 = scmp.eq.s32.totalorder %s13, 3
    %p129 = scmp.ne.s32.totalorder %s124, %s126
    %p130 = scmp.eq.s32.totalorder %s13, 0
    %p131 = por %p129, %p130
    %p132 = scmp.ne.s32.totalorder %s124, %s126
    %p133 = scmp.eq.s32.totalorder %s18, 3
    %p134 = por %p132, %p133
    %p135 = scmp.ne.s32.totalorder %s126, %s127
    %p136 = scmp.eq.s32.totalorder %s18, 0
    %p137 = por %p135, %p136
    %p138 = scmp.ne.s32.totalorder %s126, %s127
    %p139 = scmp.eq.s32.totalorder %s19, 3
    %p140 = por %p138, %p139
    %p142 = scmp.ne.s32.totalorder %s127, %s141
    %p143 = scmp.eq.s32.totalorder %s19, 0
    %p144 = por %p142, %p143
    %s146 = sadd.s32 %s145, 1
    %p149 = scmp.eq.s32.totalorder %s13, 3
    %p150 = scmp.ne.s32.totalorder %s145, %s147
    %p151 = scmp.eq.s32.totalorder %s13, 0
    %p152 = por %p150, %p151
    %p153 = scmp.ne.s32.totalorder %s145, %s147
    %p154 = scmp.eq.s32.totalorder %s18, 3
    %p155 = por %p153, %p154
    %p156 = scmp.ne.s32.totalorder %s147, %s148
    %p157 = scmp.eq.s32.totalorder %s18, 0
    %p158 = por %p156, %p157
    %p159 = scmp.ne.s32.totalorder %s147, %s148
    %p160 = scmp.eq.s32.totalorder %s19, 3
    %p161 = por %p159, %p160
    %p163 = scmp.ne.s32.totalorder %s148, %s162
    %p164 = scmp.eq.s32.totalorder %s19, 0
    %p165 = por %p163, %p164
    %s167 = sadd.s32 %s166, 1
    %p170 = scmp.eq.s32.totalorder %s13, 3
    %p171 = scmp.ne.s32.totalorder %s166, %s168
    %p172 = scmp.eq.s32.totalorder %s13, 0
    %p173 = por %p171, %p172
    %p174 = scmp.ne.s32.totalorder %s166, %s168
    %p175 = scmp.eq.s32.totalorder %s18, 3
    %p176 = por %p174, %p175
    %p177 = scmp.ne.s32.totalorder %s168, %s169
    %p178 = scmp.eq.s32.totalorder %s18, 0
    %p179 = por %p177, %p178
    %p180 = scmp.ne.s32.totalorder %s168, %s169
    %p181 = scmp.eq.s32.totalorder %s19, 3
    %p182 = por %p180, %p181
    %p184 = scmp.ne.s32.totalorder %s169, %s183
    %p185 = scmp.eq.s32.totalorder %s19, 0
    %p186 = por %p184, %p185
    %s187 = ssub.s32 %s20, %s32
    %s188 = ssub.s32 %s21, %s28
    %s189 = sor.u32 %s187, %s188
    %p190 = scmp.eq.s32.totalorder %s189, 0
    %s192 = sadd.s32 %s191, 1
    %s193 = scalar_select %p190, %s191, %s192
    %p196 = pneg %p190
    %p197 = scmp.eq.s32.totalorder %s13, 3
    %p198 = por %p196, %p197
    %p199 = scmp.ne.s32.totalorder %s191, %s194
    %p200 = scmp.eq.s32.totalorder %s13, 0
    %p201 = por %p199, %p200
    %p202 = scmp.ne.s32.totalorder %s191, %s194
    %p203 = scmp.eq.s32.totalorder %s18, 3
    %p204 = por %p202, %p203
    %p205 = scmp.ne.s32.totalorder %s194, %s195
    %p206 = scmp.eq.s32.totalorder %s18, 0
    %p207 = por %p205, %p206
    %p208 = scmp.ne.s32.totalorder %s194, %s195
    %p209 = scmp.eq.s32.totalorder %s19, 3
    %p210 = por %p208, %p209
    %p212 = scmp.ne.s32.totalorder %s195, %s211
    %p213 = scmp.eq.s32.totalorder %s19, 0
    %p214 = por %p212, %p213
    %p215 = scmp.le.s32.totalorder 1, %s13
    %p216 = scmp.lt.s32.totalorder %s13, 5
    %p217 = pnand %p215, %p216
    %p218 = pneg %p217
    // Predicated region
    $region9: #{coarse_reg_forward.8} parent=5 // pred_check
      _
    $region10: #{coarse_reg_forward.8} parent=5 // pred_check_branch
      %220 = sbr.rel (%p217) target = $region12
    $region11: #{coarse_reg_forward.8} parent=5 // pred_region
      %s221 = ssub.s32 %s13, 1
      // Predicated region
      $region13: #{coarse_reg_forward.8} parent=11 // pred_check
        %p222 = pneg %p74
      $region14: #{coarse_reg_forward.8} parent=11 // pred_check_branch
        %224 = sbr.rel (%p222) target = $region16
      $region15: #{coarse_reg_forward.8} parent=11 // pred_region
        _
      $region16: #{coarse_reg_forward.8} parent=11 // pred_fallthru
        _
      // Predicated region
      $region17: #{coarse_reg_forward.8} parent=11 // pred_check
        %p225 = pneg %p95
      $region18: #{coarse_reg_forward.8} parent=11 // pred_check_branch
        %227 = sbr.rel (%p225) target = $region20
      $region19: #{coarse_reg_forward.8} parent=11 // pred_region
        _
      $region20: #{coarse_reg_forward.8} parent=11 // pred_fallthru
        _
      // Predicated region
      $region21: #{coarse_reg_forward.8} parent=11 // pred_check
        %p228 = pneg %p116
      $region22: #{coarse_reg_forward.8} parent=11 // pred_check_branch
        %230 = sbr.rel (%p228) target = $region24
      $region23: #{coarse_reg_forward.8} parent=11 // pred_region
        _
      $region24: #{coarse_reg_forward.8} parent=11 // pred_fallthru
        _
      // Predicated region
      $region25: #{coarse_reg_forward.8} parent=11 // pred_check
        %p231 = pneg %p137
      $region26: #{coarse_reg_forward.8} parent=11 // pred_check_branch
        %233 = sbr.rel (%p231) target = $region28
      $region27: #{coarse_reg_forward.8} parent=11 // pred_region
        _
      $region28: #{coarse_reg_forward.8} parent=11 // pred_fallthru
        _
      // Predicated region
      $region29: #{coarse_reg_forward.8} parent=11 // pred_check
        %p234 = pneg %p158
      $region30: #{coarse_reg_forward.8} parent=11 // pred_check_branch
        %236 = sbr.rel (%p234) target = $region32
      $region31: #{coarse_reg_forward.8} parent=11 // pred_region
        _
      $region32: #{coarse_reg_forward.8} parent=11 // pred_fallthru
        _
      // Predicated region
      $region33: #{coarse_reg_forward.8} parent=11 // pred_check
        %p237 = pneg %p179
      $region34: #{coarse_reg_forward.8} parent=11 // pred_check_branch
        %239 = sbr.rel (%p237) target = $region36
      $region35: #{coarse_reg_forward.8} parent=11 // pred_region
        _
      $region36: #{coarse_reg_forward.8} parent=11 // pred_fallthru
        _
    $region12: #{coarse_reg_forward.8} parent=5 // pred_fallthru
      _
    %p240 = scmp.lt.s32.totalorder %s13, 4
    // Predicated region
    $region37: #{coarse_reg_forward.8} parent=5 // pred_check
      %p241 = pneg %p240
    $region38: #{coarse_reg_forward.8} parent=5 // pred_check_branch
      %243 = sbr.rel (%p241) target = $region40
    $region39: #{coarse_reg_forward.8} parent=5 // pred_region
      // Predicated region
      $region41: #{coarse_reg_forward.8} parent=39 // pred_check
        %p244 = pneg %p47
      $region42: #{coarse_reg_forward.8} parent=39 // pred_check_branch
        %246 = sbr.rel (%p244) target = $region44
      $region43: #{coarse_reg_forward.8} parent=39 // pred_region
        %s247 = smul.u32 64, %s21
        %p248 = scmp.lt.s32.totalorder %s20, 3
        %s249 = scalar_select %p248, %s20, 3
        %p250 = scmp.lt.s32.totalorder %s247, 63
        %s251 = scalar_select %p250, %s247, 63
        %s252 = smul.addr %s249, 64
        %s253 = sadd.s32 %s251, %s252
        %s254 = smul.addr %s253, 8
        %s255 = scalar_lea.vmem %s0, %s254
        %s256 = smul.u32 64, %s21
      $region44: #{coarse_reg_forward.8} parent=39 // pred_fallthru
        _
    $region40: #{coarse_reg_forward.8} parent=5 // pred_fallthru
      _
    %p257 = scmp.le.s32.totalorder 1, %s13
    %p258 = scmp.lt.s32.totalorder %s13, 5
    %p259 = pnand %p257, %p258
    %p260 = pneg %p259
    // Predicated region
    $region45: #{coarse_reg_forward.8} parent=5 // pred_check
      _
    $region46: #{coarse_reg_forward.8} parent=5 // pred_check_branch
      %262 = sbr.rel (%p259) target = $region48
    $region47: #{coarse_reg_forward.8} parent=5 // pred_region
      %s263 = ssub.s32 %s13, 1
      %s264 = smul.u32 64, %s23
      %p265 = scmp.lt.s32.totalorder %s22, 3
      %s266 = scalar_select %p265, %s22, 3
      %p267 = scmp.lt.s32.totalorder %s264, 63
      %s268 = scalar_select %p267, %s264, 63
      %s269 = smul.addr %s266, 64
      %s270 = sadd.s32 %s268, %s269
      %s271 = smul.addr %s270, 8
      %s272 = scalar_lea.vmem %s0, %s271
      %p273 = pneg %p53
      %p274 = pneg %p50
      %p275 = pneg %p74
      %p276 = pneg %p71
      %p277 = pneg %p95
      %p278 = pneg %p92
      %p279 = pneg %p116
      %p280 = pneg %p113
      %p281 = pneg %p137
      %p282 = pneg %p134
      %p283 = pneg %p158
      %p284 = pneg %p155
      %p285 = pneg %p179
      %p286 = pneg %p176
      %p287 = pneg %p207
      %p288 = pneg %p204
      %s289 = smul.u32 4, %s23
      %p290 = scmp.lt.s32.totalorder %s22, 3
      %s291 = scalar_select %p290, %s22, 3
      %p292 = scmp.lt.s32.totalorder %s289, 3
      %s293 = scalar_select %p292, %s289, 3
      %s294 = smul.addr %s291, 16
      %s295 = sadd.s32 %s293, %s294
      %s296 = smul.addr %s295, 8
      %s297 = scalar_lea.vmem %s7, %s296
      %s298 = smul.u32 64, %s23
      %p299 = scmp.lt.s32.totalorder %s22, 3
      %s300 = scalar_select %p299, %s22, 3
      %p301 = scmp.lt.s32.totalorder %s298, 63
      %s302 = scalar_select %p301, %s298, 63
      %s303 = smul.addr %s300, 64
      %s304 = sadd.s32 %s302, %s303
      %s305 = smul.addr %s304, 8
      %s306 = scalar_lea.vmem %s0, %s305
      %s307 = smul.u32 64, %s23
      %s308 = smul.u32 4, %s23
      %p309 = scmp.lt.s32.totalorder %s22, 3
      %s310 = scalar_select %p309, %s22, 3
      %p311 = scmp.lt.s32.totalorder %s308, 3
      %s312 = scalar_select %p311, %s308, 3
      %s313 = smul.addr %s310, 16
      %s314 = sadd.s32 %s312, %s313
      %s315 = smul.addr %s314, 8
      %s316 = scalar_lea.vmem %s7, %s315
      %s317 = smul.u32 4, %s23
      %v318 = vld [vmem:[%s306] sm:$0xff]
      %v319 = vld [vmem:[%s306 + $0x8] sm:$0xff]
      %v320 = vld [vmem:[%s306 + $0x10] sm:$0xff]
      %v321 = vld [vmem:[%s306 + $0x18] sm:$0xff]
      %v322 = vld [vmem:[%s306 + $0x20] sm:$0xff]
      %v323 = vld [vmem:[%s306 + $0x28] sm:$0xff]
      %v324 = vld [vmem:[%s306 + $0x30] sm:$0xff]
      %v325 = vld [vmem:[%s306 + $0x38] sm:$0xff]
      %v326 = vld [vmem:[%s306 + $0x40] sm:$0xff]
      %v327 = vld [vmem:[%s306 + $0x48] sm:$0xff]
      %v328 = vld [vmem:[%s306 + $0x50] sm:$0xff]
      %v329 = vld [vmem:[%s306 + $0x58] sm:$0xff]
      %v330 = vld [vmem:[%s306 + $0x60] sm:$0xff]
      %v331 = vld [vmem:[%s306 + $0x68] sm:$0xff]
      %v332 = vld [vmem:[%s306 + $0x70] sm:$0xff]
      %v333 = vld [vmem:[%s306 + $0x78] sm:$0xff]
      %v334 = vld [vmem:[%s306 + $0x80] sm:$0xff]
      %v335 = vld [vmem:[%s306 + $0x88] sm:$0xff]
      %v336 = vld [vmem:[%s306 + $0x90] sm:$0xff]
      %v337 = vld [vmem:[%s306 + $0x98] sm:$0xff]
      %v338 = vld [vmem:[%s306 + $0xa0] sm:$0xff]
      %v339 = vld [vmem:[%s306 + $0xa8] sm:$0xff]
      %v340 = vld [vmem:[%s306 + $0xb0] sm:$0xff]
      %v341 = vld [vmem:[%s306 + $0xb8] sm:$0xff]
      %v342 = vld [vmem:[%s306 + $0xc0] sm:$0xff]
      %v343 = vld [vmem:[%s306 + $0xc8] sm:$0xff]
      %v344 = vld [vmem:[%s306 + $0xd0] sm:$0xff]
      %v345 = vld [vmem:[%s306 + $0xd8] sm:$0xff]
      %v346 = vld [vmem:[%s306 + $0xe0] sm:$0xff]
      %v347 = vld [vmem:[%s306 + $0xe8] sm:$0xff]
      %v348 = vld [vmem:[%s306 + $0xf0] sm:$0xff]
      %v349 = vld [vmem:[%s306 + $0xf8] sm:$0xff]
      %v350 = vld [vmem:[%s306 + $0x100] sm:$0xff]
      %v351 = vld [vmem:[%s306 + $0x108] sm:$0xff]
      %v352 = vld [vmem:[%s306 + $0x110] sm:$0xff]
      %v353 = vld [vmem:[%s306 + $0x118] sm:$0xff]
      %v354 = vld [vmem:[%s306 + $0x120] sm:$0xff]
      %v355 = vld [vmem:[%s306 + $0x128] sm:$0xff]
      %v356 = vld [vmem:[%s306 + $0x130] sm:$0xff]
      %v357 = vld [vmem:[%s306 + $0x138] sm:$0xff]
      %v358 = vld [vmem:[%s306 + $0x140] sm:$0xff]
      %v359 = vld [vmem:[%s306 + $0x148] sm:$0xff]
      %v360 = vld [vmem:[%s306 + $0x150] sm:$0xff]
      %v361 = vld [vmem:[%s306 + $0x158] sm:$0xff]
      %v362 = vld [vmem:[%s306 + $0x160] sm:$0xff]
      %v363 = vld [vmem:[%s306 + $0x168] sm:$0xff]
      %v364 = vld [vmem:[%s306 + $0x170] sm:$0xff]
      %v365 = vld [vmem:[%s306 + $0x178] sm:$0xff]
      %v366 = vld [vmem:[%s306 + $0x180] sm:$0xff]
      %v367 = vld [vmem:[%s306 + $0x188] sm:$0xff]
      %v368 = vld [vmem:[%s306 + $0x190] sm:$0xff]
      %v369 = vld [vmem:[%s306 + $0x198] sm:$0xff]
      %v370 = vld [vmem:[%s306 + $0x1a0] sm:$0xff]
      %v371 = vld [vmem:[%s306 + $0x1a8] sm:$0xff]
      %v372 = vld [vmem:[%s306 + $0x1b0] sm:$0xff]
      %v373 = vld [vmem:[%s306 + $0x1b8] sm:$0xff]
      %v374 = vld [vmem:[%s306 + $0x1c0] sm:$0xff]
      %v375 = vld [vmem:[%s306 + $0x1c8] sm:$0xff]
      %v376 = vld [vmem:[%s306 + $0x1d0] sm:$0xff]
      %v377 = vld [vmem:[%s306 + $0x1d8] sm:$0xff]
      %v378 = vld [vmem:[%s306 + $0x1e0] sm:$0xff]
      %v379 = vld [vmem:[%s306 + $0x1e8] sm:$0xff]
      %v380 = vld [vmem:[%s306 + $0x1f0] sm:$0xff]
      %v381 = vld [vmem:[%s306 + $0x1f8] sm:$0xff]
      %v382 = vld [vmem:[%s1] sm:$0xff]
      %v383 = vld [vmem:[%s1 + $0x8] sm:$0xff]
      %v384 = vld [vmem:[%s1 + $0x10] sm:$0xff]
      %v385 = vld [vmem:[%s1 + $0x18] sm:$0xff]
      %v386 = vld [vmem:[%s2] sm:$0xff]
      %v387 = vld [vmem:[%s2 + $0x8] sm:$0xff]
      %v388 = vld [vmem:[%s2 + $0x10] sm:$0xff]
      %v389 = vld [vmem:[%s2 + $0x18] sm:$0xff]
      %391 = vset.pattern.permute.xlu0 0
      %392 = vperm.xlu0 %391, %v386
      %v393 = vpop.permute.xlu0 %392
      %396 = vset.pattern.permute.xlu0 0
      %397 = vperm.xlu0 %396, %v387
      %v398 = vpop.permute.xlu0 %397
      %401 = vset.pattern.permute.xlu0 0
      %402 = vperm.xlu0 %401, %v388
      %v403 = vpop.permute.xlu0 %402
      %406 = vset.pattern.permute.xlu0 0
      %407 = vperm.xlu0 %406, %v389
      %v408 = vpop.permute.xlu0 %407
      %vm410 = vcmask 293888
      %v412 = vsel %vm410, %v382, 0
      %v415 = vsel %vm410, %v383, 0
      %v418 = vsel %vm410, %v384, 0
      %v421 = vsel %vm410, %v385, 0
      %v424 = vsel %vm410, %v318, 0
      %v427 = vsel %vm410, %v319, 0
      %v430 = vsel %vm410, %v320, 0
      %v433 = vsel %vm410, %v321, 0
      %v436 = vsel %vm410, %v322, 0
      %v439 = vsel %vm410, %v323, 0
      %v442 = vsel %vm410, %v324, 0
      %v445 = vsel %vm410, %v325, 0
      %v448 = vsel %vm410, %v326, 0
      %v451 = vsel %vm410, %v327, 0
      %v454 = vsel %vm410, %v328, 0
      %v457 = vsel %vm410, %v329, 0
      %v460 = vsel %vm410, %v330, 0
      %v463 = vsel %vm410, %v331, 0
      %v466 = vsel %vm410, %v332, 0
      %v469 = vsel %vm410, %v333, 0
      %v472 = vsel %vm410, %v334, 0
      %v475 = vsel %vm410, %v335, 0
      %v478 = vsel %vm410, %v336, 0
      %v481 = vsel %vm410, %v337, 0
      %v484 = vsel %vm410, %v338, 0
      %v487 = vsel %vm410, %v339, 0
      %v490 = vsel %vm410, %v340, 0
      %v493 = vsel %vm410, %v341, 0
      %v496 = vsel %vm410, %v342, 0
      %v499 = vsel %vm410, %v343, 0
      %v502 = vsel %vm410, %v344, 0
      %v505 = vsel %vm410, %v345, 0
      %v508 = vsel %vm410, %v346, 0
      %v511 = vsel %vm410, %v347, 0
      %v514 = vsel %vm410, %v348, 0
      %v517 = vsel %vm410, %v349, 0
      %v520 = vsel %vm410, %v350, 0
      %v523 = vsel %vm410, %v351, 0
      %v526 = vsel %vm410, %v352, 0
      %v529 = vsel %vm410, %v353, 0
      %v532 = vsel %vm410, %v354, 0
      %v535 = vsel %vm410, %v355, 0
      %v538 = vsel %vm410, %v356, 0
      %v541 = vsel %vm410, %v357, 0
      %v544 = vsel %vm410, %v358, 0
      %v547 = vsel %vm410, %v359, 0
      %v550 = vsel %vm410, %v360, 0
      %v553 = vsel %vm410, %v361, 0
      %v556 = vsel %vm410, %v362, 0
      %v559 = vsel %vm410, %v363, 0
      %v562 = vsel %vm410, %v364, 0
      %v565 = vsel %vm410, %v365, 0
      %v568 = vsel %vm410, %v366, 0
      %v571 = vsel %vm410, %v367, 0
      %v574 = vsel %vm410, %v368, 0
      %v577 = vsel %vm410, %v369, 0
      %v580 = vsel %vm410, %v370, 0
      %v583 = vsel %vm410, %v371, 0
      %v586 = vsel %vm410, %v372, 0
      %v589 = vsel %vm410, %v373, 0
      %v592 = vsel %vm410, %v374, 0
      %v595 = vsel %vm410, %v375, 0
      %v598 = vsel %vm410, %v376, 0
      %v601 = vsel %vm410, %v377, 0
      %v604 = vsel %vm410, %v378, 0
      %v607 = vsel %vm410, %v379, 0
      %v610 = vsel %vm410, %v380, 0
      %v613 = vsel %vm410, %v381, 0
      %615 = vmatprep.subr.mxu0 0.0
      %616 = vmatpush1.xpose.msra.mxu0 %v424
      %617 = vmatprep.subr.mxu0 0.0
      %618 = vmatpush1.xpose.msra.mxu0 %v427
      %619 = vmatprep.subr.mxu0 0.0
      %620 = vmatpush1.xpose.msra.mxu0 %v430
      %621 = vmatprep.subr.mxu0 0.0
      %622 = vmatpush1.xpose.msra.mxu0 %v433
      %623 = vmatprep.subr.mxu0 0.0
      %624 = vmatpush1.xpose.msra.mxu0 %v436
      %625 = vmatprep.subr.mxu0 0.0
      %626 = vmatpush1.xpose.msra.mxu0 %v439
      %627 = vmatprep.subr.mxu0 0.0
      %628 = vmatpush1.xpose.msra.mxu0 %v442
      %629 = vmatprep.subr.mxu0 0.0
      %630 = vmatpush1.xpose.msra.mxu0 %v445
      %631 = vmatprep.subr.mxu0 0.0
      %632 = vmatpush1.xpose.msra.mxu0 %v448
      %633 = vmatprep.subr.mxu0 0.0
      %634 = vmatpush1.xpose.msra.mxu0 %v451
      %635 = vmatprep.subr.mxu0 0.0
      %636 = vmatpush1.xpose.msra.mxu0 %v454
      %637 = vmatprep.subr.mxu0 0.0
      %638 = vmatpush1.xpose.msra.mxu0 %v457
      %639 = vmatprep.subr.mxu0 0.0
      %640 = vmatpush1.xpose.msra.mxu0 %v460
      %641 = vmatprep.subr.mxu0 0.0
      %642 = vmatpush1.xpose.msra.mxu0 %v463
      %643 = vmatprep.subr.mxu0 0.0
      %644 = vmatpush1.xpose.msra.mxu0 %v466
      %645 = vmatprep.subr.mxu0 0.0
      %646 = vmatpush1.xpose.msra.mxu0 %v469
      %647 = vmatprep.subr.mxu0 0.0
      %648 = vmatpush1.xpose.msra.mxu0 %v472
      %649 = vmatprep.subr.mxu0 0.0
      %650 = vmatpush1.xpose.msra.mxu0 %v475
      %651 = vmatprep.subr.mxu0 0.0
      %652 = vmatpush1.xpose.msra.mxu0 %v478
      %653 = vmatprep.subr.mxu0 0.0
      %654 = vmatpush1.xpose.msra.mxu0 %v481
      %655 = vmatprep.subr.mxu0 0.0
      %656 = vmatpush1.xpose.msra.mxu0 %v484
      %657 = vmatprep.subr.mxu0 0.0
      %658 = vmatpush1.xpose.msra.mxu0 %v487
      %659 = vmatprep.subr.mxu0 0.0
      %660 = vmatpush1.xpose.msra.mxu0 %v490
      %661 = vmatprep.subr.mxu0 0.0
      %662 = vmatpush1.xpose.msra.mxu0 %v493
      %663 = vmatprep.subr.mxu0 0.0
      %664 = vmatpush1.xpose.msra.mxu0 %v496
      %665 = vmatprep.subr.mxu0 0.0
      %666 = vmatpush1.xpose.msra.mxu0 %v499
      %667 = vmatprep.subr.mxu0 0.0
      %668 = vmatpush1.xpose.msra.mxu0 %v502
      %669 = vmatprep.subr.mxu0 0.0
      %670 = vmatpush1.xpose.msra.mxu0 %v505
      %671 = vmatprep.subr.mxu0 0.0
      %672 = vmatpush1.xpose.msra.mxu0 %v508
      %673 = vmatprep.subr.mxu0 0.0
      %674 = vmatpush1.xpose.msra.mxu0 %v511
      %675 = vmatprep.subr.mxu0 0.0
      %676 = vmatpush1.xpose.msra.mxu0 %v514
      %677 = vmatprep.subr.mxu0 0.0
      %678 = vmatpush1.xpose.msra.mxu0 %v517
      %679 = vmatprep.mubr.f32.mxu0 0.0
      %680 = vmatmul.mubr.f32.gmra.mrb[0].mxu0 %v412
      %v681 = vpop.f32.mrb[0].mxu0
      %v682 = vadd.f32 %v393, %v681
      %v683 = vpop.f32.mrb[0].mxu0
      %v684 = vadd.f32 %v393, %v683
      %685 = vmatprep.mubr.f32.mxu0 0.0
      %686 = vmatmul.mubr.f32.gmra.mrb[0].mxu0 %v415
      %v687 = vpop.f32.mrb[0].mxu0
      %v688 = vadd.f32 %v398, %v687
      %v689 = vpop.f32.mrb[0].mxu0
      %v690 = vadd.f32 %v398, %v689
      %691 = vmatprep.mubr.f32.mxu0 0.0
      %692 = vmatmul.mubr.f32.gmra.mrb[0].mxu0 %v418
      %v693 = vpop.f32.mrb[0].mxu0
      %v694 = vadd.f32 %v403, %v693
      %v695 = vpop.f32.mrb[0].mxu0
      %v696 = vadd.f32 %v403, %v695
      %697 = vmatprep.mubr.f32.mxu0 0.0
      %698 = vmatmul.mubr.f32.gmra.mrb[0].mxu0 %v421
      %v699 = vpop.f32.mrb[0].mxu0
      %v700 = vadd.f32 %v408, %v699
      %v701 = vpop.f32.mrb[0].mxu0
      %v702 = vadd.f32 %v408, %v701
      %703 = vdwg.mxu0
      %704 = vmatprep.subr.mxu0 0.0
      %705 = vmatpush1.xpose.msra.mxu0 %v520
      %706 = vmatprep.subr.mxu0 0.0
      %707 = vmatpush1.xpose.msra.mxu0 %v523
      %708 = vmatprep.subr.mxu0 0.0
      %709 = vmatpush1.xpose.msra.mxu0 %v526
      %710 = vmatprep.subr.mxu0 0.0
      %711 = vmatpush1.xpose.msra.mxu0 %v529
      %712 = vmatprep.subr.mxu0 0.0
      %713 = vmatpush1.xpose.msra.mxu0 %v532
      %714 = vmatprep.subr.mxu0 0.0
      %715 = vmatpush1.xpose.msra.mxu0 %v535
      %716 = vmatprep.subr.mxu0 0.0
      %717 = vmatpush1.xpose.msra.mxu0 %v538
      %718 = vmatprep.subr.mxu0 0.0
      %719 = vmatpush1.xpose.msra.mxu0 %v541
      %720 = vmatprep.subr.mxu0 0.0
      %721 = vmatpush1.xpose.msra.mxu0 %v544
      %722 = vmatprep.subr.mxu0 0.0
      %723 = vmatpush1.xpose.msra.mxu0 %v547
      %724 = vmatprep.subr.mxu0 0.0
      %725 = vmatpush1.xpose.msra.mxu0 %v550
      %726 = vmatprep.subr.mxu0 0.0
      %727 = vmatpush1.xpose.msra.mxu0 %v553
      %728 = vmatprep.subr.mxu0 0.0
      %729 = vmatpush1.xpose.msra.mxu0 %v556
      %730 = vmatprep.subr.mxu0 0.0
      %731 = vmatpush1.xpose.msra.mxu0 %v559
      %732 = vmatprep.subr.mxu0 0.0
      %733 = vmatpush1.xpose.msra.mxu0 %v562
      %734 = vmatprep.subr.mxu0 0.0
      %735 = vmatpush1.xpose.msra.mxu0 %v565
      %736 = vmatprep.subr.mxu0 0.0
      %737 = vmatpush1.xpose.msra.mxu0 %v568
      %738 = vmatprep.subr.mxu0 0.0
      %739 = vmatpush1.xpose.msra.mxu0 %v571
      %740 = vmatprep.subr.mxu0 0.0
      %741 = vmatpush1.xpose.msra.mxu0 %v574
      %742 = vmatprep.subr.mxu0 0.0
      %743 = vmatpush1.xpose.msra.mxu0 %v577
      %744 = vmatprep.subr.mxu0 0.0
      %745 = vmatpush1.xpose.msra.mxu0 %v580
      %746 = vmatprep.subr.mxu0 0.0
      %747 = vmatpush1.xpose.msra.mxu0 %v583
      %748 = vmatprep.subr.mxu0 0.0
      %749 = vmatpush1.xpose.msra.mxu0 %v586
      %750 = vmatprep.subr.mxu0 0.0
      %751 = vmatpush1.xpose.msra.mxu0 %v589
      %752 = vmatprep.subr.mxu0 0.0
      %753 = vmatpush1.xpose.msra.mxu0 %v592
      %754 = vmatprep.subr.mxu0 0.0
      %755 = vmatpush1.xpose.msra.mxu0 %v595
      %756 = vmatprep.subr.mxu0 0.0
      %757 = vmatpush1.xpose.msra.mxu0 %v598
      %758 = vmatprep.subr.mxu0 0.0
      %759 = vmatpush1.xpose.msra.mxu0 %v601
      %760 = vmatprep.subr.mxu0 0.0
      %761 = vmatpush1.xpose.msra.mxu0 %v604
      %762 = vmatprep.subr.mxu0 0.0
      %763 = vmatpush1.xpose.msra.mxu0 %v607
      %764 = vmatprep.subr.mxu0 0.0
      %765 = vmatpush1.xpose.msra.mxu0 %v610
      %766 = vmatprep.subr.mxu0 0.0
      %767 = vmatpush1.xpose.msra.mxu0 %v613
      %768 = vmatprep.mubr.f32.mxu0 0.0
      %769 = vmatmul.mubr.f32.gmra.mrb[0].mxu0 %v412
      %v770 = vpop.f32.mrb[0].mxu0
      %v771 = vadd.f32 %v393, %v770
      %v772 = vpop.f32.mrb[0].mxu0
      %v773 = vadd.f32 %v393, %v772
      %774 = vmatprep.mubr.f32.mxu0 0.0
      %775 = vmatmul.mubr.f32.gmra.mrb[0].mxu0 %v415
      %v776 = vpop.f32.mrb[0].mxu0
      %v777 = vadd.f32 %v398, %v776
      %v778 = vpop.f32.mrb[0].mxu0
      %v779 = vadd.f32 %v398, %v778
      %780 = vmatprep.mubr.f32.mxu0 0.0
      %781 = vmatmul.mubr.f32.gmra.mrb[0].mxu0 %v418
      %v782 = vpop.f32.mrb[0].mxu0
      %v783 = vadd.f32 %v403, %v782
      %v784 = vpop.f32.mrb[0].mxu0
      %v785 = vadd.f32 %v403, %v784
      %786 = vmatprep.mubr.f32.mxu0 0.0
      %787 = vmatmul.mubr.f32.gmra.mrb[0].mxu0 %v421
      %v788 = vpop.f32.mrb[0].mxu0
      %v789 = vadd.f32 %v408, %v788
      %v790 = vpop.f32.mrb[0].mxu0
      %v791 = vadd.f32 %v408, %v790
      %792 = vdwg.mxu0
      %v793 = vmax.f32 %v682, 0.0
      %v794 = vmax.f32 %v684, 0.0
      %v795 = vmax.f32 %v771, 0.0
      %v796 = vmax.f32 %v773, 0.0
      %v797 = vmax.f32 %v688, 0.0
      %v798 = vmax.f32 %v690, 0.0
      %v799 = vmax.f32 %v777, 0.0
      %v800 = vmax.f32 %v779, 0.0
      %v801 = vmax.f32 %v694, 0.0
      %v802 = vmax.f32 %v696, 0.0
      %v803 = vmax.f32 %v783, 0.0
      %v804 = vmax.f32 %v785, 0.0
      %v805 = vmax.f32 %v700, 0.0
      %v806 = vmax.f32 %v702, 0.0
      %v807 = vmax.f32 %v789, 0.0
      %v808 = vmax.f32 %v791, 0.0
      %v809 = vld [vmem:[%s3] sm:$0xff]
      %v810 = vld [vmem:[%s3 + $0x8] sm:$0xff]
      %v811 = vld [vmem:[%s3 + $0x10] sm:$0xff]
      %v812 = vld [vmem:[%s3 + $0x18] sm:$0xff]
      %v813 = vld [vmem:[%s4] sm:$0xff]
      %v814 = vld [vmem:[%s4 + $0x8] sm:$0xff]
      %v815 = vld [vmem:[%s4 + $0x10] sm:$0xff]
      %v816 = vld [vmem:[%s4 + $0x18] sm:$0xff]
      %818 = vset.pattern.permute.xlu0 0
      %819 = vperm.xlu0 %818, %v813
      %v820 = vpop.permute.xlu0 %819
      %823 = vset.pattern.permute.xlu0 0
      %824 = vperm.xlu0 %823, %v814
      %v825 = vpop.permute.xlu0 %824
      %828 = vset.pattern.permute.xlu0 0
      %829 = vperm.xlu0 %828, %v815
      %v830 = vpop.permute.xlu0 %829
      %833 = vset.pattern.permute.xlu0 0
      %834 = vperm.xlu0 %833, %v816
      %v835 = vpop.permute.xlu0 %834
      %vm837 = vcmask 261120
      %v839 = vsel %vm837, %v809, 0
      %v842 = vsel %vm837, %v810, 0
      %v845 = vsel %vm837, %v811, 0
      %v848 = vsel %vm837, %v812, 0
      %850 = vmatprep.subr.mxu0 %v794
      %851 = vmatpush1.msra.mxu0 %v793
      %852 = vmatprep.subr.mxu0 %v798
      %853 = vmatpush1.msra.mxu0 %v797
      %854 = vmatprep.subr.mxu0 %v802
      %855 = vmatpush1.msra.mxu0 %v801
      %856 = vmatprep.subr.mxu0 %v806
      %857 = vmatpush1.msra.mxu0 %v805
      %858 = vmatprep.subr.mxu0 0.0
      %859 = vmatpush1.msra.mxu0 0.0
      %860 = vmatprep.subr.mxu0 0.0
      %861 = vmatpush1.msra.mxu0 0.0
      %862 = vmatprep.subr.mxu0 0.0
      %863 = vmatpush1.msra.mxu0 0.0
      %864 = vmatprep.subr.mxu0 0.0
      %865 = vmatpush1.msra.mxu0 0.0
      %866 = vmatprep.subr.mxu0 0.0
      %867 = vmatpush1.msra.mxu0 0.0
      %868 = vmatprep.subr.mxu0 0.0
      %869 = vmatpush1.msra.mxu0 0.0
      %870 = vmatprep.subr.mxu0 0.0
      %871 = vmatpush1.msra.mxu0 0.0
      %872 = vmatprep.subr.mxu0 0.0
      %873 = vmatpush1.msra.mxu0 0.0
      %874 = vmatprep.subr.mxu0 0.0
      %875 = vmatpush1.msra.mxu0 0.0
      %876 = vmatprep.subr.mxu0 0.0
      %877 = vmatpush1.msra.mxu0 0.0
      %878 = vmatprep.subr.mxu0 0.0
      %879 = vmatpush1.msra.mxu0 0.0
      %880 = vmatprep.subr.mxu0 0.0
      %881 = vmatpush1.msra.mxu0 0.0
      %882 = vmatprep.subr.mxu0 0.0
      %883 = vmatpush1.msra.mxu0 0.0
      %884 = vmatprep.subr.mxu0 0.0
      %885 = vmatpush1.msra.mxu0 0.0
      %886 = vmatprep.subr.mxu0 0.0
      %887 = vmatpush1.msra.mxu0 0.0
      %888 = vmatprep.subr.mxu0 0.0
      %889 = vmatpush1.msra.mxu0 0.0
      %890 = vmatprep.subr.mxu0 0.0
      %891 = vmatpush1.msra.mxu0 0.0
      %892 = vmatprep.subr.mxu0 0.0
      %893 = vmatpush1.msra.mxu0 0.0
      %894 = vmatprep.subr.mxu0 0.0
      %895 = vmatpush1.msra.mxu0 0.0
      %896 = vmatprep.subr.mxu0 0.0
      %897 = vmatpush1.msra.mxu0 0.0
      %898 = vmatprep.subr.mxu0 0.0
      %899 = vmatpush1.msra.mxu0 0.0
      %900 = vmatprep.subr.mxu0 0.0
      %901 = vmatpush1.msra.mxu0 0.0
      %902 = vmatprep.subr.mxu0 0.0
      %903 = vmatpush1.msra.mxu0 0.0
      %904 = vmatprep.subr.mxu0 0.0
      %905 = vmatpush1.msra.mxu0 0.0
      %906 = vmatprep.subr.mxu0 0.0
      %907 = vmatpush1.msra.mxu0 0.0
      %908 = vmatprep.subr.mxu0 0.0
      %909 = vmatpush1.msra.mxu0 0.0
      %910 = vmatprep.subr.mxu0 0.0
      %911 = vmatpush1.msra.mxu0 0.0
      %912 = vmatprep.subr.mxu0 0.0
      %913 = vmatpush1.msra.mxu0 0.0
      %914 = vmatprep.mubr.f32.mxu0 0.0
      %915 = vmatmul.mubr.f32.gmra.mrb[0].mxu0 %v839
      %v916 = vpop.f32.mrb[0].mxu0
      %v917 = vadd.f32 %v820, %v916
      %v918 = vpop.f32.mrb[0].mxu0
      %v919 = vadd.f32 %v820, %v918
      %920 = vmatprep.mubr.f32.mxu0 0.0
      %921 = vmatmul.mubr.f32.gmra.mrb[0].mxu0 %v842
      %v922 = vpop.f32.mrb[0].mxu0
      %v923 = vadd.f32 %v825, %v922
      %v924 = vpop.f32.mrb[0].mxu0
      %v925 = vadd.f32 %v825, %v924
      %926 = vmatprep.mubr.f32.mxu0 0.0
      %927 = vmatmul.mubr.f32.gmra.mrb[0].mxu0 %v845
      %v928 = vpop.f32.mrb[0].mxu0
      %v929 = vadd.f32 %v830, %v928
      %v930 = vpop.f32.mrb[0].mxu0
      %v931 = vadd.f32 %v830, %v930
      %932 = vmatprep.mubr.f32.mxu0 0.0
      %933 = vmatmul.mubr.f32.gmra.mrb[0].mxu0 %v848
      %v934 = vpop.f32.mrb[0].mxu0
      %v935 = vadd.f32 %v835, %v934
      %v936 = vpop.f32.mrb[0].mxu0
      %v937 = vadd.f32 %v835, %v936
      %938 = vdwg.mxu0
      %939 = vmatprep.subr.mxu0 %v796
      %940 = vmatpush1.msra.mxu0 %v795
      %941 = vmatprep.subr.mxu0 %v800
      %942 = vmatpush1.msra.mxu0 %v799
      %943 = vmatprep.subr.mxu0 %v804
      %944 = vmatpush1.msra.mxu0 %v803
      %945 = vmatprep.subr.mxu0 %v808
      %946 = vmatpush1.msra.mxu0 %v807
      %947 = vmatprep.subr.mxu0 0.0
      %948 = vmatpush1.msra.mxu0 0.0
      %949 = vmatprep.subr.mxu0 0.0
      %950 = vmatpush1.msra.mxu0 0.0
      %951 = vmatprep.subr.mxu0 0.0
      %952 = vmatpush1.msra.mxu0 0.0
      %953 = vmatprep.subr.mxu0 0.0
      %954 = vmatpush1.msra.mxu0 0.0
      %955 = vmatprep.subr.mxu0 0.0
      %956 = vmatpush1.msra.mxu0 0.0
      %957 = vmatprep.subr.mxu0 0.0
      %958 = vmatpush1.msra.mxu0 0.0
      %959 = vmatprep.subr.mxu0 0.0
      %960 = vmatpush1.msra.mxu0 0.0
      %961 = vmatprep.subr.mxu0 0.0
      %962 = vmatpush1.msra.mxu0 0.0
      %963 = vmatprep.subr.mxu0 0.0
      %964 = vmatpush1.msra.mxu0 0.0
      %965 = vmatprep.subr.mxu0 0.0
      %966 = vmatpush1.msra.mxu0 0.0
      %967 = vmatprep.subr.mxu0 0.0
      %968 = vmatpush1.msra.mxu0 0.0
      %969 = vmatprep.subr.mxu0 0.0
      %970 = vmatpush1.msra.mxu0 0.0
      %971 = vmatprep.subr.mxu0 0.0
      %972 = vmatpush1.msra.mxu0 0.0
      %973 = vmatprep.subr.mxu0 0.0
      %974 = vmatpush1.msra.mxu0 0.0
      %975 = vmatprep.subr.mxu0 0.0
      %976 = vmatpush1.msra.mxu0 0.0
      %977 = vmatprep.subr.mxu0 0.0
      %978 = vmatpush1.msra.mxu0 0.0
      %979 = vmatprep.subr.mxu0 0.0
      %980 = vmatpush1.msra.mxu0 0.0
      %981 = vmatprep.subr.mxu0 0.0
      %982 = vmatpush1.msra.mxu0 0.0
      %983 = vmatprep.subr.mxu0 0.0
      %984 = vmatpush1.msra.mxu0 0.0
      %985 = vmatprep.subr.mxu0 0.0
      %986 = vmatpush1.msra.mxu0 0.0
      %987 = vmatprep.subr.mxu0 0.0
      %988 = vmatpush1.msra.mxu0 0.0
      %989 = vmatprep.subr.mxu0 0.0
      %990 = vmatpush1.msra.mxu0 0.0
      %991 = vmatprep.subr.mxu0 0.0
      %992 = vmatpush1.msra.mxu0 0.0
      %993 = vmatprep.subr.mxu0 0.0
      %994 = vmatpush1.msra.mxu0 0.0
      %995 = vmatprep.subr.mxu0 0.0
      %996 = vmatpush1.msra.mxu0 0.0
      %997 = vmatprep.subr.mxu0 0.0
      %998 = vmatpush1.msra.mxu0 0.0
      %999 = vmatprep.subr.mxu0 0.0
      %1000 = vmatpush1.msra.mxu0 0.0
      %1001 = vmatprep.subr.mxu0 0.0
      %1002 = vmatpush1.msra.mxu0 0.0
      %1003 = vmatprep.mubr.f32.mxu0 0.0
      %1004 = vmatmul.mubr.f32.gmra.mrb[0].mxu0 %v839
      %v1005 = vpop.f32.mrb[0].mxu0
      %v1006 = vadd.f32 %v820, %v1005
      %v1007 = vpop.f32.mrb[0].mxu0
      %v1008 = vadd.f32 %v820, %v1007
      %1009 = vmatprep.mubr.f32.mxu0 0.0
      %1010 = vmatmul.mubr.f32.gmra.mrb[0].mxu0 %v842
      %v1011 = vpop.f32.mrb[0].mxu0
      %v1012 = vadd.f32 %v825, %v1011
      %v1013 = vpop.f32.mrb[0].mxu0
      %v1014 = vadd.f32 %v825, %v1013
      %1015 = vmatprep.mubr.f32.mxu0 0.0
      %1016 = vmatmul.mubr.f32.gmra.mrb[0].mxu0 %v845
      %v1017 = vpop.f32.mrb[0].mxu0
      %v1018 = vadd.f32 %v830, %v1017
      %v1019 = vpop.f32.mrb[0].mxu0
      %v1020 = vadd.f32 %v830, %v1019
      %1021 = vmatprep.mubr.f32.mxu0 0.0
      %1022 = vmatmul.mubr.f32.gmra.mrb[0].mxu0 %v848
      %v1023 = vpop.f32.mrb[0].mxu0
      %v1024 = vadd.f32 %v835, %v1023
      %v1025 = vpop.f32.mrb[0].mxu0
      %v1026 = vadd.f32 %v835, %v1025
      %1027 = vdwg.mxu0
      %v1028 = vmax.f32 %v917, 0.0
      %v1029 = vmax.f32 %v919, 0.0
      %v1030 = vmax.f32 %v1006, 0.0
      %v1031 = vmax.f32 %v1008, 0.0
      %v1032 = vmax.f32 %v923, 0.0
      %v1033 = vmax.f32 %v925, 0.0
      %v1034 = vmax.f32 %v1012, 0.0
      %v1035 = vmax.f32 %v1014, 0.0
      %v1036 = vmax.f32 %v929, 0.0
      %v1037 = vmax.f32 %v931, 0.0
      %v1038 = vmax.f32 %v1018, 0.0
      %v1039 = vmax.f32 %v1020, 0.0
      %v1040 = vmax.f32 %v935, 0.0
      %v1041 = vmax.f32 %v937, 0.0
      %v1042 = vmax.f32 %v1024, 0.0
      %v1043 = vmax.f32 %v1026, 0.0
      %v1044 = vld [vmem:[%s5] sm:$0xff]
      %v1045 = vld [vmem:[%s5 + $0x8] sm:$0xff]
      %v1046 = vld [vmem:[%s5 + $0x10] sm:$0xff]
      %v1047 = vld [vmem:[%s5 + $0x18] sm:$0xff]
      %v1048 = vld [vmem:[%s6] sm:$0xff]
      %v1049 = vld [vmem:[%s6 + $0x8] sm:$0xff]
      %v1050 = vld [vmem:[%s6 + $0x10] sm:$0xff]
      %v1051 = vld [vmem:[%s6 + $0x18] sm:$0xff]
      %1053 = vset.pattern.permute.xlu0 0
      %1054 = vperm.xlu0 %1053, %v1048
      %v1055 = vpop.permute.xlu0 %1054
      %1058 = vset.pattern.permute.xlu0 0
      %1059 = vperm.xlu0 %1058, %v1049
      %v1060 = vpop.permute.xlu0 %1059
      %1063 = vset.pattern.permute.xlu0 0
      %1064 = vperm.xlu0 %1063, %v1050
      %v1065 = vpop.permute.xlu0 %1064
      %1068 = vset.pattern.permute.xlu0 0
      %1069 = vperm.xlu0 %1068, %v1051
      %v1070 = vpop.permute.xlu0 %1069
      %v1073 = vsel %vm837, %v1044, 0
      %v1076 = vsel %vm837, %v1045, 0
      %v1079 = vsel %vm837, %v1046, 0
      %v1082 = vsel %vm837, %v1047, 0
      %1084 = vmatprep.subr.mxu0 %v1029
      %1085 = vmatpush1.msra.mxu0 %v1028
      %1086 = vmatprep.subr.mxu0 %v1033
      %1087 = vmatpush1.msra.mxu0 %v1032
      %1088 = vmatprep.subr.mxu0 %v1037
      %1089 = vmatpush1.msra.mxu0 %v1036
      %1090 = vmatprep.subr.mxu0 %v1041
      %1091 = vmatpush1.msra.mxu0 %v1040
      %1092 = vmatprep.subr.mxu0 0.0
      %1093 = vmatpush1.msra.mxu0 0.0
      %1094 = vmatprep.subr.mxu0 0.0
      %1095 = vmatpush1.msra.mxu0 0.0
      %1096 = vmatprep.subr.mxu0 0.0
      %1097 = vmatpush1.msra.mxu0 0.0
      %1098 = vmatprep.subr.mxu0 0.0
      %1099 = vmatpush1.msra.mxu0 0.0
      %1100 = vmatprep.subr.mxu0 0.0
      %1101 = vmatpush1.msra.mxu0 0.0
      %1102 = vmatprep.subr.mxu0 0.0
      %1103 = vmatpush1.msra.mxu0 0.0
      %1104 = vmatprep.subr.mxu0 0.0
      %1105 = vmatpush1.msra.mxu0 0.0
      %1106 = vmatprep.subr.mxu0 0.0
      %1107 = vmatpush1.msra.mxu0 0.0
      %1108 = vmatprep.subr.mxu0 0.0
      %1109 = vmatpush1.msra.mxu0 0.0
      %1110 = vmatprep.subr.mxu0 0.0
      %1111 = vmatpush1.msra.mxu0 0.0
      %1112 = vmatprep.subr.mxu0 0.0
      %1113 = vmatpush1.msra.mxu0 0.0
      %1114 = vmatprep.subr.mxu0 0.0
      %1115 = vmatpush1.msra.mxu0 0.0
      %1116 = vmatprep.subr.mxu0 0.0
      %1117 = vmatpush1.msra.mxu0 0.0
      %1118 = vmatprep.subr.mxu0 0.0
      %1119 = vmatpush1.msra.mxu0 0.0
      %1120 = vmatprep.subr.mxu0 0.0
      %1121 = vmatpush1.msra.mxu0 0.0
      %1122 = vmatprep.subr.mxu0 0.0
      %1123 = vmatpush1.msra.mxu0 0.0
      %1124 = vmatprep.subr.mxu0 0.0
      %1125 = vmatpush1.msra.mxu0 0.0
      %1126 = vmatprep.subr.mxu0 0.0
      %1127 = vmatpush1.msra.mxu0 0.0
      %1128 = vmatprep.subr.mxu0 0.0
      %1129 = vmatpush1.msra.mxu0 0.0
      %1130 = vmatprep.subr.mxu0 0.0
      %1131 = vmatpush1.msra.mxu0 0.0
      %1132 = vmatprep.subr.mxu0 0.0
      %1133 = vmatpush1.msra.mxu0 0.0
      %1134 = vmatprep.subr.mxu0 0.0
      %1135 = vmatpush1.msra.mxu0 0.0
      %1136 = vmatprep.subr.mxu0 0.0
      %1137 = vmatpush1.msra.mxu0 0.0
      %1138 = vmatprep.subr.mxu0 0.0
      %1139 = vmatpush1.msra.mxu0 0.0
      %1140 = vmatprep.subr.mxu0 0.0
      %1141 = vmatpush1.msra.mxu0 0.0
      %1142 = vmatprep.subr.mxu0 0.0
      %1143 = vmatpush1.msra.mxu0 0.0
      %1144 = vmatprep.subr.mxu0 0.0
      %1145 = vmatpush1.msra.mxu0 0.0
      %1146 = vmatprep.subr.mxu0 0.0
      %1147 = vmatpush1.msra.mxu0 0.0
      %1148 = vmatprep.mubr.f32.mxu0 0.0
      %1149 = vmatmul.mubr.f32.gmra.mrb[0].mxu0 %v1073
      %v1150 = vpop.f32.mrb[0].mxu0
      %v1151 = vadd.f32 %v1055, %v1150
      %v1152 = vpop.f32.mrb[0].mxu0
      %v1153 = vadd.f32 %v1055, %v1152
      %1154 = vmatprep.mubr.f32.mxu0 0.0
      %1155 = vmatmul.mubr.f32.gmra.mrb[0].mxu0 %v1076
      %v1156 = vpop.f32.mrb[0].mxu0
      %v1157 = vadd.f32 %v1060, %v1156
      %v1158 = vpop.f32.mrb[0].mxu0
      %v1159 = vadd.f32 %v1060, %v1158
      %1160 = vmatprep.mubr.f32.mxu0 0.0
      %1161 = vmatmul.mubr.f32.gmra.mrb[0].mxu0 %v1079
      %v1162 = vpop.f32.mrb[0].mxu0
      %v1163 = vadd.f32 %v1065, %v1162
      %v1164 = vpop.f32.mrb[0].mxu0
      %v1165 = vadd.f32 %v1065, %v1164
      %1166 = vmatprep.mubr.f32.mxu0 0.0
      %1167 = vmatmul.mubr.f32.gmra.mrb[0].mxu0 %v1082
      %v1168 = vpop.f32.mrb[0].mxu0
      %v1169 = vadd.f32 %v1070, %v1168
      %v1170 = vpop.f32.mrb[0].mxu0
      %v1171 = vadd.f32 %v1070, %v1170
      %1172 = vdwg.mxu0
      %1173 = vmatprep.subr.mxu0 %v1031
      %1174 = vmatpush1.msra.mxu0 %v1030
      %1175 = vmatprep.subr.mxu0 %v1035
      %1176 = vmatpush1.msra.mxu0 %v1034
      %1177 = vmatprep.subr.mxu0 %v1039
      %1178 = vmatpush1.msra.mxu0 %v1038
      %1179 = vmatprep.subr.mxu0 %v1043
      %1180 = vmatpush1.msra.mxu0 %v1042
      %1181 = vmatprep.subr.mxu0 0.0
      %1182 = vmatpush1.msra.mxu0 0.0
      %1183 = vmatprep.subr.mxu0 0.0
      %1184 = vmatpush1.msra.mxu0 0.0
      %1185 = vmatprep.subr.mxu0 0.0
      %1186 = vmatpush1.msra.mxu0 0.0
      %1187 = vmatprep.subr.mxu0 0.0
      %1188 = vmatpush1.msra.mxu0 0.0
      %1189 = vmatprep.subr.mxu0 0.0
      %1190 = vmatpush1.msra.mxu0 0.0
      %1191 = vmatprep.subr.mxu0 0.0
      %1192 = vmatpush1.msra.mxu0 0.0
      %1193 = vmatprep.subr.mxu0 0.0
      %1194 = vmatpush1.msra.mxu0 0.0
      %1195 = vmatprep.subr.mxu0 0.0
      %1196 = vmatpush1.msra.mxu0 0.0
      %1197 = vmatprep.subr.mxu0 0.0
      %1198 = vmatpush1.msra.mxu0 0.0
      %1199 = vmatprep.subr.mxu0 0.0
      %1200 = vmatpush1.msra.mxu0 0.0
      %1201 = vmatprep.subr.mxu0 0.0
      %1202 = vmatpush1.msra.mxu0 0.0
      %1203 = vmatprep.subr.mxu0 0.0
      %1204 = vmatpush1.msra.mxu0 0.0
      %1205 = vmatprep.subr.mxu0 0.0
      %1206 = vmatpush1.msra.mxu0 0.0
      %1207 = vmatprep.subr.mxu0 0.0
      %1208 = vmatpush1.msra.mxu0 0.0
      %1209 = vmatprep.subr.mxu0 0.0
      %1210 = vmatpush1.msra.mxu0 0.0
      %1211 = vmatprep.subr.mxu0 0.0
      %1212 = vmatpush1.msra.mxu0 0.0
      %1213 = vmatprep.subr.mxu0 0.0
      %1214 = vmatpush1.msra.mxu0 0.0
      %1215 = vmatprep.subr.mxu0 0.0
      %1216 = vmatpush1.msra.mxu0 0.0
      %1217 = vmatprep.subr.mxu0 0.0
      %1218 = vmatpush1.msra.mxu0 0.0
      %1219 = vmatprep.subr.mxu0 0.0
      %1220 = vmatpush1.msra.mxu0 0.0
      %1221 = vmatprep.subr.mxu0 0.0
      %1222 = vmatpush1.msra.mxu0 0.0
      %1223 = vmatprep.subr.mxu0 0.0
      %1224 = vmatpush1.msra.mxu0 0.0
      %1225 = vmatprep.subr.mxu0 0.0
      %1226 = vmatpush1.msra.mxu0 0.0
      %1227 = vmatprep.subr.mxu0 0.0
      %1228 = vmatpush1.msra.mxu0 0.0
      %1229 = vmatprep.subr.mxu0 0.0
      %1230 = vmatpush1.msra.mxu0 0.0
      %1231 = vmatprep.subr.mxu0 0.0
      %1232 = vmatpush1.msra.mxu0 0.0
      %1233 = vmatprep.subr.mxu0 0.0
      %1234 = vmatpush1.msra.mxu0 0.0
      %1235 = vmatprep.subr.mxu0 0.0
      %1236 = vmatpush1.msra.mxu0 0.0
      %1237 = vmatprep.mubr.f32.mxu0 0.0
      %1238 = vmatmul.mubr.f32.gmra.mrb[0].mxu0 %v1073
      %v1239 = vpop.f32.mrb[0].mxu0
      %v1240 = vadd.f32 %v1055, %v1239
      %v1241 = vpop.f32.mrb[0].mxu0
      %v1242 = vadd.f32 %v1055, %v1241
      %1243 = vmatprep.mubr.f32.mxu0 0.0
      %1244 = vmatmul.mubr.f32.gmra.mrb[0].mxu0 %v1076
      %v1245 = vpop.f32.mrb[0].mxu0
      %v1246 = vadd.f32 %v1060, %v1245
      %v1247 = vpop.f32.mrb[0].mxu0
      %v1248 = vadd.f32 %v1060, %v1247
      %1249 = vmatprep.mubr.f32.mxu0 0.0
      %1250 = vmatmul.mubr.f32.gmra.mrb[0].mxu0 %v1079
      %v1251 = vpop.f32.mrb[0].mxu0
      %v1252 = vadd.f32 %v1065, %v1251
      %v1253 = vpop.f32.mrb[0].mxu0
      %v1254 = vadd.f32 %v1065, %v1253
      %1255 = vmatprep.mubr.f32.mxu0 0.0
      %1256 = vmatmul.mubr.f32.gmra.mrb[0].mxu0 %v1082
      %v1257 = vpop.f32.mrb[0].mxu0
      %v1258 = vadd.f32 %v1070, %v1257
      %v1259 = vpop.f32.mrb[0].mxu0
      %v1260 = vadd.f32 %v1070, %v1259
      %1261 = vdwg.mxu0
      %v1262 = vmax.f32 %v1151, 0.0
      %v1263 = vmax.f32 %v1153, 0.0
      %v1264 = vmax.f32 %v1240, 0.0
      %v1265 = vmax.f32 %v1242, 0.0
      %v1266 = vmax.f32 %v1157, 0.0
      %v1267 = vmax.f32 %v1159, 0.0
      %v1268 = vmax.f32 %v1246, 0.0
      %v1269 = vmax.f32 %v1248, 0.0
      %v1270 = vmax.f32 %v1163, 0.0
      %v1271 = vmax.f32 %v1165, 0.0
      %v1272 = vmax.f32 %v1252, 0.0
      %v1273 = vmax.f32 %v1254, 0.0
      %v1274 = vmax.f32 %v1169, 0.0
      %v1275 = vmax.f32 %v1171, 0.0
      %v1276 = vmax.f32 %v1258, 0.0
      %v1277 = vmax.f32 %v1260, 0.0
      %1278 = vst [vmem:[%s316] sm:$0xff] %v1262
      %1279 = vst [vmem:[%s316 + $0x8] sm:$0xff] %v1263
      %1280 = vst [vmem:[%s316 + $0x10] sm:$0xff] %v1264
      %1281 = vst [vmem:[%s316 + $0x18] sm:$0xff] %v1265
      %1282 = vst [vmem:[%s316 + $0x20] sm:$0xff] %v1266
      %1283 = vst [vmem:[%s316 + $0x28] sm:$0xff] %v1267
      %1284 = vst [vmem:[%s316 + $0x30] sm:$0xff] %v1268
      %1285 = vst [vmem:[%s316 + $0x38] sm:$0xff] %v1269
      %1286 = vst [vmem:[%s316 + $0x40] sm:$0xff] %v1270
      %1287 = vst [vmem:[%s316 + $0x48] sm:$0xff] %v1271
      %1288 = vst [vmem:[%s316 + $0x50] sm:$0xff] %v1272
      %1289 = vst [vmem:[%s316 + $0x58] sm:$0xff] %v1273
      %1290 = vst [vmem:[%s316 + $0x60] sm:$0xff] %v1274
      %1291 = vst [vmem:[%s316 + $0x68] sm:$0xff] %v1275
      %1292 = vst [vmem:[%s316 + $0x70] sm:$0xff] %v1276
      %1293 = vst [vmem:[%s316 + $0x78] sm:$0xff] %v1277
      %s1294 = smul.u32 4, %s23
      %p1295 = scmp.lt.s32.totalorder %s22, 3
      %s1296 = scalar_select %p1295, %s22, 3
      %p1297 = scmp.lt.s32.totalorder %s1294, 3
      %s1298 = scalar_select %p1297, %s1294, 3
      %s1299 = smul.addr %s1296, 16
      %s1300 = sadd.s32 %s1298, %s1299
      %s1301 = smul.addr %s1300, 8
      %s1302 = scalar_lea.vmem %s7, %s1301
      // Predicated region
      $region49: #{coarse_reg_forward.8} parent=47 // pred_check
        %p1303 = pneg %p204
      $region50: #{coarse_reg_forward.8} parent=47 // pred_check_branch
        %1305 = sbr.rel (%p1303) target = $region52
      $region51: #{coarse_reg_forward.8} parent=47 // pred_region
        %s1306 = smul.u32 4, %s23
      $region52: #{coarse_reg_forward.8} parent=47 // pred_fallthru
        _
    $region48: #{coarse_reg_forward.8} parent=5 // pred_fallthru
      _
    %p1307 = scmp.le.s32.totalorder 2, %s13
    // Predicated region
    $region53: #{coarse_reg_forward.8} parent=5 // pred_check
      %p1308 = pneg %p1307
    $region54: #{coarse_reg_forward.8} parent=5 // pred_check_branch
      %1310 = sbr.rel (%p1308) target = $region56
    $region55: #{coarse_reg_forward.8} parent=5 // pred_region
      %s1311 = ssub.s32 %s13, 2
      // Predicated region
      $region57: #{coarse_reg_forward.8} parent=55 // pred_check
        %p1312 = pneg %p210
      $region58: #{coarse_reg_forward.8} parent=55 // pred_check_branch
        %1314 = sbr.rel (%p1312) target = $region60
      $region59: #{coarse_reg_forward.8} parent=55 // pred_region
        %s1315 = smul.u32 4, %s25
        %p1316 = scmp.lt.s32.totalorder %s24, 3
        %s1317 = scalar_select %p1316, %s24, 3
        %p1318 = scmp.lt.s32.totalorder %s1315, 3
        %s1319 = scalar_select %p1318, %s1315, 3
        %s1320 = smul.addr %s1317, 16
        %s1321 = sadd.s32 %s1319, %s1320
        %s1322 = smul.addr %s1321, 8
        %s1323 = scalar_lea.vmem %s7, %s1322
      $region60: #{coarse_reg_forward.8} parent=55 // pred_fallthru
        _
    $region56: #{coarse_reg_forward.8} parent=5 // pred_fallthru
      _
  $region6: #{coarse_reg_forward.8} parent=0 // loop_footer
    %s17 = sadd.s32 1, %s13
  $region7: #{coarse_reg_forward.8} parent=0 // loop_footer_branch
    %12 = sbr.rel target = $region3
  $region8: #{coarse_reg_forward.8} parent=0 // loop_exit
    _

// kernel: neg.3
$region0: #{neg.3}
  #allocation0 [shape = 's32[1]{0}', space=sflag, size = 0x4, scoped, tag = 'scoped memory for neg.3']
  %s0 = inlined_call_operand.vmem [shape: f32[2,64,128], index: 0, kind: input, shape index: {}]
  %s1 = inlined_call_operand.vmem [shape: f32[2,64,128], index: 1, kind: output, shape index: {}]
  %v2 = vld [vmem:[%s0] sm:$0xff]
  %3 = xla_tuple %v2
  %4 = xla_tuple %3
  %v5 = vxor.u32 %v2, 2147483648
  %6 = xla_tuple %v5
  %7 = vst [vmem:[%s1] sm:$0xff] %v5
  %s8 = scalar_lea.vmem %s0, 64
  %v9 = vld [vmem:[%s8] sm:$0xff]
  %10 = xla_tuple %v9
  %11 = xla_tuple %10
  %v12 = vxor.u32 %v9, 2147483648
  %13 = xla_tuple %v12
  %s14 = scalar_lea.vmem %s1, 64
  %15 = vst [vmem:[%s14] sm:$0xff] %v12
  %s16 = scalar_lea.vmem %s0, 8
  %v17 = vld [vmem:[%s16] sm:$0xff]
  %18 = xla_tuple %v17
  %19 = xla_tuple %18
  %v20 = vxor.u32 %v17, 2147483648
  %21 = xla_tuple %v20
  %s22 = scalar_lea.vmem %s1, 8
  %23 = vst [vmem:[%s22] sm:$0xff] %v20
  %s24 = scalar_lea.vmem %s0, 72
  %v25 = vld [vmem:[%s24] sm:$0xff]
  %26 = xla_tuple %v25
  %27 = xla_tuple %26
  %v28 = vxor.u32 %v25, 2147483648
  %29 = xla_tuple %v28
  %s30 = scalar_lea.vmem %s1, 72
  %31 = vst [vmem:[%s30] sm:$0xff] %v28
  %s32 = scalar_lea.vmem %s0, 16
  %v33 = vld [vmem:[%s32] sm:$0xff]
  %34 = xla_tuple %v33
  %35 = xla_tuple %34
  %v36 = vxor.u32 %v33, 2147483648
  %37 = xla_tuple %v36
  %s38 = scalar_lea.vmem %s1, 16
  %39 = vst [vmem:[%s38] sm:$0xff] %v36
  %s40 = scalar_lea.vmem %s0, 80
  %v41 = vld [vmem:[%s40] sm:$0xff]
  %42 = xla_tuple %v41
  %43 = xla_tuple %42
  %v44 = vxor.u32 %v41, 2147483648
  %45 = xla_tuple %v44
  %s46 = scalar_lea.vmem %s1, 80
  %47 = vst [vmem:[%s46] sm:$0xff] %v44
  %s48 = scalar_lea.vmem %s0, 24
  %v49 = vld [vmem:[%s48] sm:$0xff]
  %50 = xla_tuple %v49
  %51 = xla_tuple %50
  %v52 = vxor.u32 %v49, 2147483648
  %53 = xla_tuple %v52
  %s54 = scalar_lea.vmem %s1, 24
  %55 = vst [vmem:[%s54] sm:$0xff] %v52
  %s56 = scalar_lea.vmem %s0, 88
  %v57 = vld [vmem:[%s56] sm:$0xff]
  %58 = xla_tuple %v57
  %59 = xla_tuple %58
  %v60 = vxor.u32 %v57, 2147483648
  %61 = xla_tuple %v60
  %s62 = scalar_lea.vmem %s1, 88
  %63 = vst [vmem:[%s62] sm:$0xff] %v60
  %s64 = scalar_lea.vmem %s0, 32
  %v65 = vld [vmem:[%s64] sm:$0xff]
  %66 = xla_tuple %v65
  %67 = xla_tuple %66
  %v68 = vxor.u32 %v65, 2147483648
  %69 = xla_tuple %v68
  %s70 = scalar_lea.vmem %s1, 32
  %71 = vst [vmem:[%s70] sm:$0xff] %v68
  %s72 = scalar_lea.vmem %s0, 96
  %v73 = vld [vmem:[%s72] sm:$0xff]
  %74 = xla_tuple %v73
  %75 = xla_tuple %74
  %v76 = vxor.u32 %v73, 2147483648
  %77 = xla_tuple %v76
  %s78 = scalar_lea.vmem %s1, 96
  %79 = vst [vmem:[%s78] sm:$0xff] %v76
  %s80 = scalar_lea.vmem %s0, 40
  %v81 = vld [vmem:[%s80] sm:$0xff]
  %82 = xla_tuple %v81
  %83 = xla_tuple %82
  %v84 = vxor.u32 %v81, 2147483648
  %85 = xla_tuple %v84
  %s86 = scalar_lea.vmem %s1, 40
  %87 = vst [vmem:[%s86] sm:$0xff] %v84
  %s88 = scalar_lea.vmem %s0, 104
  %v89 = vld [vmem:[%s88] sm:$0xff]
  %90 = xla_tuple %v89
  %91 = xla_tuple %90
  %v92 = vxor.u32 %v89, 2147483648
  %93 = xla_tuple %v92
  %s94 = scalar_lea.vmem %s1, 104
  %95 = vst [vmem:[%s94] sm:$0xff] %v92
  %s96 = scalar_lea.vmem %s0, 48
  %v97 = vld [vmem:[%s96] sm:$0xff]
  %98 = xla_tuple %v97
  %99 = xla_tuple %98
  %v100 = vxor.u32 %v97, 2147483648
  %101 = xla_tuple %v100
  %s102 = scalar_lea.vmem %s1, 48
  %103 = vst [vmem:[%s102] sm:$0xff] %v100
  %s104 = scalar_lea.vmem %s0, 112
  %v105 = vld [vmem:[%s104] sm:$0xff]
  %106 = xla_tuple %v105
  %107 = xla_tuple %106
  %v108 = vxor.u32 %v105, 2147483648
  %109 = xla_tuple %v108
  %s110 = scalar_lea.vmem %s1, 112
  %111 = vst [vmem:[%s110] sm:$0xff] %v108
  %s112 = scalar_lea.vmem %s0, 56
  %v113 = vld [vmem:[%s112] sm:$0xff]
  %114 = xla_tuple %v113
  %115 = xla_tuple %114
  %v116 = vxor.u32 %v113, 2147483648
  %117 = xla_tuple %v116
  %s118 = scalar_lea.vmem %s1, 56
  %119 = vst [vmem:[%s118] sm:$0xff] %v116
  %s120 = scalar_lea.vmem %s0, 120
  %v121 = vld [vmem:[%s120] sm:$0xff]
  %122 = xla_tuple %v121
  %123 = xla_tuple %122
  %v124 = vxor.u32 %v121, 2147483648
  %125 = xla_tuple %v124
  %s126 = scalar_lea.vmem %s1, 120
  %127 = vst [vmem:[%s126] sm:$0xff] %v124

// kernel: coarse_reg_forward.9
$region0: #{coarse_reg_forward.9}
  #allocation0 [shape = 'u32[]', space=smem, size = 0x4, offset = 0x4, fixed_abs, tag = 'smem constant byte address 0x4 - core index']
  #allocation1 [shape = 'u32[144,128]{1,0:T(1,128)}', space=vmem, size = 0x12000, scoped, tag = 'internal scratch']
  %s0 = inlined_call_operand.vmem [shape: f32[2,64,32], index: 0, kind: input, shape index: {}]
  %s1 = inlined_call_operand.vmem [shape: f32[2,32,128], index: 1, kind: input, shape index: {}]
  %s2 = inlined_call_operand.vmem [shape: f32[2,64,1], index: 2, kind: input, shape index: {}]
  %s3 = inlined_call_operand.vmem [shape: f32[2,1,128], index: 3, kind: input, shape index: {}]
  %s4 = inlined_call_operand.vmem [shape: f32[2,64,1], index: 4, kind: output, shape index: {0}]
  %s5 = inlined_call_operand.vmem [shape: f32[2,8,128], index: 5, kind: output, shape index: {1}]
  %6 = xla_tuple %s4, %s5
  %s7 = sld [smem:[#allocation0]]
  $region61: #{coarse_reg_forward.9} parent=0
    _
  %s9 = ssub.s32 1, %s7
  %s10 = scalar_select 0, %s9, %s7
  loop: start=0, step=1, limit=4
  $region2: #{coarse_reg_forward.9} parent=0 // loop_pre_header
    _
  $region3: #{coarse_reg_forward.9} parent=0 // loop_header
    %s12 = sphi 0, %s16
    %p13 = scmp.ge.s32.totalorder %s12, 4
    %s19 = sphi 0, %s38
    %s20 = sphi 0, %s34
    %s21 = sphi 0, %s30
    %s22 = sphi 0, %s19
    %s23 = sphi 0, %s20
    %s24 = sphi 0, %s21
    %s25 = sphi 0, %s22
    %s26 = sphi 0, %s23
    %s27 = sphi 0, %s24
    %s43 = sphi 0, %s45
    %s46 = sphi 0, %s43
    %s47 = sphi 0, %s46
    %s63 = sphi 0, %s47
    %s71 = sphi 0, %s73
    %s74 = sphi 0, %s71
    %s75 = sphi 0, %s74
    %s91 = sphi 0, %s75
    %s99 = sphi 0, %s101
    %s102 = sphi 0, %s99
    %s103 = sphi 0, %s102
    %s119 = sphi 0, %s103
    %s127 = sphi 0, %s129
    %s130 = sphi 0, %s127
    %s131 = sphi 0, %s130
    %s147 = sphi 0, %s131
    %s155 = sphi 0, %s157
    %s158 = sphi 0, %s155
    %s159 = sphi 0, %s158
    %s175 = sphi 0, %s159
    %s185 = sphi 0, %s187
    %s188 = sphi 0, %s185
    %s189 = sphi 0, %s188
    %s205 = sphi 0, %s189
  $region4: #{coarse_reg_forward.9} parent=0 // loop_header_branch
    %15 = sbr.rel (%p13) target = $region8
  $region5: #{coarse_reg_forward.9} parent=0 // loop_body
    %s17 = ssub.s32 %s12, 1
    %s18 = ssub.s32 %s12, 2
    %s28 = sadd.s32 1, %s21
    %p29 = scmp.ge.s32.totalorder %s28, 1
    %s30 = scalar_select %p29, 0, %s28
    %s31 = sadd.s32 1, %s20
    %s32 = scalar_select %p29, %s31, %s20
    %p33 = scmp.ge.s32.totalorder %s32, 1
    %s34 = scalar_select %p33, 0, %s32
    %s35 = sadd.s32 1, %s19
    %s36 = scalar_select %p33, %s35, %s19
    %p37 = scmp.ge.s32.totalorder %s36, 2
    %s38 = scalar_select %p37, 0, %s36
    %s39 = ssub.s32 %s19, %s38
    %s40 = ssub.s32 %s20, %s34
    %s41 = sor.u32 %s39, %s40
    %p42 = scmp.eq.s32.totalorder %s41, 0
    %s44 = sadd.s32 %s43, 1
    %s45 = scalar_select %p42, %s43, %s44
    %p48 = pneg %p42
    %p49 = scmp.eq.s32.totalorder %s12, 1
    %p50 = por %p48, %p49
    %p51 = scmp.ne.s32.totalorder %s43, %s46
    %p52 = scmp.eq.s32.totalorder %s12, 0
    %p53 = por %p51, %p52
    %p54 = scmp.ne.s32.totalorder %s43, %s46
    %p55 = scmp.eq.s32.totalorder %s17, 1
    %p56 = por %p54, %p55
    %p57 = scmp.ne.s32.totalorder %s46, %s47
    %p58 = scmp.eq.s32.totalorder %s17, 0
    %p59 = por %p57, %p58
    %p60 = scmp.ne.s32.totalorder %s46, %s47
    %p61 = scmp.eq.s32.totalorder %s18, 1
    %p62 = por %p60, %p61
    %p64 = scmp.ne.s32.totalorder %s47, %s63
    %p65 = scmp.eq.s32.totalorder %s18, 0
    %p66 = por %p64, %p65
    %s67 = ssub.s32 %s19, %s38
    %s68 = ssub.s32 %s21, %s30
    %s69 = sor.u32 %s67, %s68
    %p70 = scmp.eq.s32.totalorder %s69, 0
    %s72 = sadd.s32 %s71, 1
    %s73 = scalar_select %p70, %s71, %s72
    %p76 = pneg %p70
    %p77 = scmp.eq.s32.totalorder %s12, 1
    %p78 = por %p76, %p77
    %p79 = scmp.ne.s32.totalorder %s71, %s74
    %p80 = scmp.eq.s32.totalorder %s12, 0
    %p81 = por %p79, %p80
    %p82 = scmp.ne.s32.totalorder %s71, %s74
    %p83 = scmp.eq.s32.totalorder %s17, 1
    %p84 = por %p82, %p83
    %p85 = scmp.ne.s32.totalorder %s74, %s75
    %p86 = scmp.eq.s32.totalorder %s17, 0
    %p87 = por %p85, %p86
    %p88 = scmp.ne.s32.totalorder %s74, %s75
    %p89 = scmp.eq.s32.totalorder %s18, 1
    %p90 = por %p88, %p89
    %p92 = scmp.ne.s32.totalorder %s75, %s91
    %p93 = scmp.eq.s32.totalorder %s18, 0
    %p94 = por %p92, %p93
    %s95 = ssub.s32 %s19, %s38
    %s96 = ssub.s32 %s20, %s34
    %s97 = sor.u32 %s95, %s96
    %p98 = scmp.eq.s32.totalorder %s97, 0
    %s100 = sadd.s32 %s99, 1
    %s101 = scalar_select %p98, %s99, %s100
    %p104 = pneg %p98
    %p105 = scmp.eq.s32.totalorder %s12, 1
    %p106 = por %p104, %p105
    %p107 = scmp.ne.s32.totalorder %s99, %s102
    %p108 = scmp.eq.s32.totalorder %s12, 0
    %p109 = por %p107, %p108
    %p110 = scmp.ne.s32.totalorder %s99, %s102
    %p111 = scmp.eq.s32.totalorder %s17, 1
    %p112 = por %p110, %p111
    %p113 = scmp.ne.s32.totalorder %s102, %s103
    %p114 = scmp.eq.s32.totalorder %s17, 0
    %p115 = por %p113, %p114
    %p116 = scmp.ne.s32.totalorder %s102, %s103
    %p117 = scmp.eq.s32.totalorder %s18, 1
    %p118 = por %p116, %p117
    %p120 = scmp.ne.s32.totalorder %s103, %s119
    %p121 = scmp.eq.s32.totalorder %s18, 0
    %p122 = por %p120, %p121
    %s123 = ssub.s32 %s19, %s38
    %s124 = ssub.s32 %s21, %s30
    %s125 = sor.u32 %s123, %s124
    %p126 = scmp.eq.s32.totalorder %s125, 0
    %s128 = sadd.s32 %s127, 1
    %s129 = scalar_select %p126, %s127, %s128
    %p132 = pneg %p126
    %p133 = scmp.eq.s32.totalorder %s12, 1
    %p134 = por %p132, %p133
    %p135 = scmp.ne.s32.totalorder %s127, %s130
    %p136 = scmp.eq.s32.totalorder %s12, 0
    %p137 = por %p135, %p136
    %p138 = scmp.ne.s32.totalorder %s127, %s130
    %p139 = scmp.eq.s32.totalorder %s17, 1
    %p140 = por %p138, %p139
    %p141 = scmp.ne.s32.totalorder %s130, %s131
    %p142 = scmp.eq.s32.totalorder %s17, 0
    %p143 = por %p141, %p142
    %p144 = scmp.ne.s32.totalorder %s130, %s131
    %p145 = scmp.eq.s32.totalorder %s18, 1
    %p146 = por %p144, %p145
    %p148 = scmp.ne.s32.totalorder %s131, %s147
    %p149 = scmp.eq.s32.totalorder %s18, 0
    %p150 = por %p148, %p149
    %s151 = ssub.s32 %s19, %s38
    %s152 = ssub.s32 %s20, %s34
    %s153 = sor.u32 %s151, %s152
    %p154 = scmp.eq.s32.totalorder %s153, 0
    %s156 = sadd.s32 %s155, 1
    %s157 = scalar_select %p154, %s155, %s156
    %p160 = pneg %p154
    %p161 = scmp.eq.s32.totalorder %s12, 1
    %p162 = por %p160, %p161
    %p163 = scmp.ne.s32.totalorder %s155, %s158
    %p164 = scmp.eq.s32.totalorder %s12, 0
    %p165 = por %p163, %p164
    %p166 = scmp.ne.s32.totalorder %s155, %s158
    %p167 = scmp.eq.s32.totalorder %s17, 1
    %p168 = por %p166, %p167
    %p169 = scmp.ne.s32.totalorder %s158, %s159
    %p170 = scmp.eq.s32.totalorder %s17, 0
    %p171 = por %p169, %p170
    %p172 = scmp.ne.s32.totalorder %s158, %s159
    %p173 = scmp.eq.s32.totalorder %s18, 1
    %p174 = por %p172, %p173
    %p176 = scmp.ne.s32.totalorder %s159, %s175
    %p177 = scmp.eq.s32.totalorder %s18, 0
    %p178 = por %p176, %p177
    %s179 = ssub.s32 %s19, %s38
    %s180 = ssub.s32 %s20, %s34
    %s181 = sor.u32 %s179, %s180
    %s182 = ssub.s32 %s21, %s30
    %s183 = sor.u32 %s181, %s182
    %p184 = scmp.eq.s32.totalorder %s183, 0
    %s186 = sadd.s32 %s185, 1
    %s187 = scalar_select %p184, %s185, %s186
    %p190 = pneg %p184
    %p191 = scmp.eq.s32.totalorder %s12, 1
    %p192 = por %p190, %p191
    %p193 = scmp.ne.s32.totalorder %s185, %s188
    %p194 = scmp.eq.s32.totalorder %s12, 0
    %p195 = por %p193, %p194
    %p196 = scmp.ne.s32.totalorder %s185, %s188
    %p197 = scmp.eq.s32.totalorder %s17, 1
    %p198 = por %p196, %p197
    %p199 = scmp.ne.s32.totalorder %s188, %s189
    %p200 = scmp.eq.s32.totalorder %s17, 0
    %p201 = por %p199, %p200
    %p202 = scmp.ne.s32.totalorder %s188, %s189
    %p203 = scmp.eq.s32.totalorder %s18, 1
    %p204 = por %p202, %p203
    %p206 = scmp.ne.s32.totalorder %s189, %s205
    %p207 = scmp.eq.s32.totalorder %s18, 0
    %p208 = por %p206, %p207
    %p209 = scmp.le.s32.totalorder 1, %s12
    %p210 = scmp.lt.s32.totalorder %s12, 3
    %p211 = pnand %p209, %p210
    %p212 = pneg %p211
    // Predicated region
    $region9: #{coarse_reg_forward.9} parent=5 // pred_check
      _
    $region10: #{coarse_reg_forward.9} parent=5 // pred_check_branch
      %214 = sbr.rel (%p211) target = $region12
    $region11: #{coarse_reg_forward.9} parent=5 // pred_region
      %s215 = ssub.s32 %s12, 1
    $region12: #{coarse_reg_forward.9} parent=5 // pred_fallthru
      _
    %p216 = scmp.lt.s32.totalorder %s12, 2
    // Predicated region
    $region13: #{coarse_reg_forward.9} parent=5 // pred_check
      %p217 = pneg %p216
    $region14: #{coarse_reg_forward.9} parent=5 // pred_check_branch
      %219 = sbr.rel (%p217) target = $region16
    $region15: #{coarse_reg_forward.9} parent=5 // pred_region
      // Predicated region
      $region17: #{coarse_reg_forward.9} parent=15 // pred_check
        %p220 = pneg %p53
      $region18: #{coarse_reg_forward.9} parent=15 // pred_check_branch
        %222 = sbr.rel (%p220) target = $region20
      $region19: #{coarse_reg_forward.9} parent=15 // pred_region
        %s223 = smul.u32 8, %s20
        %p224 = scmp.lt.s32.totalorder %s19, 1
        %s225 = scalar_select %p224, %s19, 1
        %p226 = scmp.lt.s32.totalorder %s223, 7
        %s227 = scalar_select %p226, %s223, 7
        %s228 = smul.addr %s225, 8
        %s229 = sadd.s32 %s227, %s228
        %s230 = smul.addr %s229, 8
        %s231 = scalar_lea.vmem %s0, %s230
        %s232 = smul.u32 8, %s20
      $region20: #{coarse_reg_forward.9} parent=15 // pred_fallthru
        _
      // Predicated region
      $region21: #{coarse_reg_forward.9} parent=15 // pred_check
        %p233 = pneg %p81
      $region22: #{coarse_reg_forward.9} parent=15 // pred_check_branch
        %235 = sbr.rel (%p233) target = $region24
      $region23: #{coarse_reg_forward.9} parent=15 // pred_region
        %p236 = scmp.lt.s32.totalorder %s19, 1
        %s237 = scalar_select %p236, %s19, 1
        %p238 = scmp.lt.s32.totalorder %s21, 0
        %s239 = scalar_select %p238, %s21, 0
        %s240 = smul.addr %s237, 4
        %s241 = sadd.s32 %s239, %s240
        %s242 = smul.addr %s241, 8
        %s243 = scalar_lea.vmem %s1, %s242
      $region24: #{coarse_reg_forward.9} parent=15 // pred_fallthru
        _
      // Predicated region
      $region25: #{coarse_reg_forward.9} parent=15 // pred_check
        %p244 = pneg %p109
      $region26: #{coarse_reg_forward.9} parent=15 // pred_check_branch
        %246 = sbr.rel (%p244) target = $region28
      $region27: #{coarse_reg_forward.9} parent=15 // pred_region
        %s247 = smul.u32 8, %s20
        %p248 = scmp.lt.s32.totalorder %s19, 1
        %s249 = scalar_select %p248, %s19, 1
        %p250 = scmp.lt.s32.totalorder %s247, 7
        %s251 = scalar_select %p250, %s247, 7
        %s252 = smul.addr %s249, 8
        %s253 = sadd.s32 %s251, %s252
        %s254 = smul.addr %s253, 8
        %s255 = scalar_lea.vmem %s2, %s254
        %s256 = smul.u32 8, %s20
      $region28: #{coarse_reg_forward.9} parent=15 // pred_fallthru
        _
      // Predicated region
      $region29: #{coarse_reg_forward.9} parent=15 // pred_check
        %p257 = pneg %p137
      $region30: #{coarse_reg_forward.9} parent=15 // pred_check_branch
        %259 = sbr.rel (%p257) target = $region32
      $region31: #{coarse_reg_forward.9} parent=15 // pred_region
        %p260 = scmp.lt.s32.totalorder %s19, 1
        %s261 = scalar_select %p260, %s19, 1
        %p262 = scmp.lt.s32.totalorder %s21, 0
        %s263 = scalar_select %p262, %s21, 0
        %s264 = sadd.s32 %s263, %s261
        %s265 = scalar_lea.vmem %s3, %s264
      $region32: #{coarse_reg_forward.9} parent=15 // pred_fallthru
        _
    $region16: #{coarse_reg_forward.9} parent=5 // pred_fallthru
      _
    %p266 = scmp.le.s32.totalorder 1, %s12
    %p267 = scmp.lt.s32.totalorder %s12, 3
    %p268 = pnand %p266, %p267
    %p269 = pneg %p268
    // Predicated region
    $region33: #{coarse_reg_forward.9} parent=5 // pred_check
      _
    $region34: #{coarse_reg_forward.9} parent=5 // pred_check_branch
      %271 = sbr.rel (%p268) target = $region36
    $region35: #{coarse_reg_forward.9} parent=5 // pred_region
      %s272 = ssub.s32 %s12, 1
      %s273 = smul.u32 8, %s23
      %p274 = scmp.lt.s32.totalorder %s22, 1
      %s275 = scalar_select %p274, %s22, 1
      %p276 = scmp.lt.s32.totalorder %s273, 7
      %s277 = scalar_select %p276, %s273, 7
      %s278 = smul.addr %s275, 8
      %s279 = sadd.s32 %s277, %s278
      %s280 = smul.addr %s279, 8
      %s281 = scalar_lea.vmem %s0, %s280
      %p282 = pneg %p59
      %p283 = pneg %p56
      %p284 = scmp.lt.s32.totalorder %s22, 1
      %s285 = scalar_select %p284, %s22, 1
      %p286 = scmp.lt.s32.totalorder %s24, 0
      %s287 = scalar_select %p286, %s24, 0
      %s288 = smul.addr %s285, 4
      %s289 = sadd.s32 %s287, %s288
      %s290 = smul.addr %s289, 8
      %s291 = scalar_lea.vmem %s1, %s290
      %p292 = pneg %p87
      %p293 = pneg %p84
      %s294 = smul.u32 8, %s23
      %p295 = scmp.lt.s32.totalorder %s22, 1
      %s296 = scalar_select %p295, %s22, 1
      %p297 = scmp.lt.s32.totalorder %s294, 7
      %s298 = scalar_select %p297, %s294, 7
      %s299 = smul.addr %s296, 8
      %s300 = sadd.s32 %s298, %s299
      %s301 = smul.addr %s300, 8
      %s302 = scalar_lea.vmem %s2, %s301
      %p303 = pneg %p115
      %p304 = pneg %p112
      %p305 = scmp.lt.s32.totalorder %s22, 1
      %s306 = scalar_select %p305, %s22, 1
      %p307 = scmp.lt.s32.totalorder %s24, 0
      %s308 = scalar_select %p307, %s24, 0
      %s309 = sadd.s32 %s308, %s306
      %s310 = scalar_lea.vmem %s3, %s309
      %p311 = pneg %p143
      %p312 = pneg %p140
      %p313 = pneg %p171
      %p314 = pneg %p168
      %s315 = smul.u32 8, %s23
      %p316 = scmp.lt.s32.totalorder %s22, 1
      %s317 = scalar_select %p316, %s22, 1
      %p318 = scmp.lt.s32.totalorder %s315, 7
      %s319 = scalar_select %p318, %s315, 7
      %s320 = smul.addr %s317, 8
      %s321 = sadd.s32 %s319, %s320
      %s322 = smul.addr %s321, 8
      %s323 = scalar_lea.vmem %s4, %s322
      %p324 = pneg %p201
      %p325 = pneg %p198
      %p326 = scmp.lt.s32.totalorder %s22, 1
      %s327 = scalar_select %p326, %s22, 1
      %p328 = scmp.lt.s32.totalorder %s23, 0
      %s329 = scalar_select %p328, %s23, 0
      %p330 = scmp.lt.s32.totalorder %s24, 0
      %s331 = scalar_select %p330, %s24, 0
      %s332 = sadd.s32 %s331, %s329
      %s333 = sadd.s32 %s332, %s327
      %s334 = smul.addr %s333, 8
      %s335 = scalar_lea.vmem %s5, %s334
      %s336 = smul.u32 8, %s23
      %p337 = scmp.lt.s32.totalorder %s22, 1
      %s338 = scalar_select %p337, %s22, 1
      %p339 = scmp.lt.s32.totalorder %s336, 7
      %s340 = scalar_select %p339, %s336, 7
      %s341 = smul.addr %s338, 8
      %s342 = sadd.s32 %s340, %s341
      %s343 = smul.addr %s342, 8
      %s344 = scalar_lea.vmem %s0, %s343
      %s345 = smul.u32 8, %s23
      %p346 = scmp.lt.s32.totalorder %s22, 1
      %s347 = scalar_select %p346, %s22, 1
      %p348 = scmp.lt.s32.totalorder %s24, 0
      %s349 = scalar_select %p348, %s24, 0
      %s350 = smul.addr %s347, 4
      %s351 = sadd.s32 %s349, %s350
      %s352 = smul.addr %s351, 8
      %s353 = scalar_lea.vmem %s1, %s352
      %s354 = smul.u32 8, %s23
      %p355 = scmp.lt.s32.totalorder %s22, 1
      %s356 = scalar_select %p355, %s22, 1
      %p357 = scmp.lt.s32.totalorder %s354, 7
      %s358 = scalar_select %p357, %s354, 7
      %s359 = smul.addr %s356, 8
      %s360 = sadd.s32 %s358, %s359
      %s361 = smul.addr %s360, 8
      %s362 = scalar_lea.vmem %s2, %s361
      %s363 = smul.u32 8, %s23
      %p364 = scmp.lt.s32.totalorder %s22, 1
      %s365 = scalar_select %p364, %s22, 1
      %p366 = scmp.lt.s32.totalorder %s24, 0
      %s367 = scalar_select %p366, %s24, 0
      %s368 = sadd.s32 %s367, %s365
      %s369 = scalar_lea.vmem %s3, %s368
      %s370 = smul.u32 8, %s23
      %p371 = scmp.lt.s32.totalorder %s22, 1
      %s372 = scalar_select %p371, %s22, 1
      %p373 = scmp.lt.s32.totalorder %s370, 7
      %s374 = scalar_select %p373, %s370, 7
      %s375 = smul.addr %s372, 8
      %s376 = sadd.s32 %s374, %s375
      %s377 = smul.addr %s376, 8
      %s378 = scalar_lea.vmem %s4, %s377
      %s379 = smul.u32 8, %s23
      %p380 = scmp.lt.s32.totalorder %s22, 1
      %s381 = scalar_select %p380, %s22, 1
      %p382 = scmp.lt.s32.totalorder %s23, 0
      %s383 = scalar_select %p382, %s23, 0
      %p384 = scmp.lt.s32.totalorder %s24, 0
      %s385 = scalar_select %p384, %s24, 0
      %s386 = sadd.s32 %s385, %s383
      %s387 = sadd.s32 %s386, %s381
      %s388 = smul.addr %s387, 8
      %s389 = scalar_lea.vmem %s5, %s388
      %v390 = vld [vmem:[%s344] sm:$0xff]
      %v391 = vld [vmem:[%s344 + $0x8] sm:$0xff]
      %v392 = vld [vmem:[%s344 + $0x10] sm:$0xff]
      %v393 = vld [vmem:[%s344 + $0x18] sm:$0xff]
      %v394 = vld [vmem:[%s344 + $0x20] sm:$0xff]
      %v395 = vld [vmem:[%s344 + $0x28] sm:$0xff]
      %v396 = vld [vmem:[%s344 + $0x30] sm:$0xff]
      %v397 = vld [vmem:[%s344 + $0x38] sm:$0xff]
      %v398 = vld [vmem:[%s353] sm:$0xff]
      %v399 = vld [vmem:[%s353 + $0x8] sm:$0xff]
      %v400 = vld [vmem:[%s353 + $0x10] sm:$0xff]
      %v401 = vld [vmem:[%s353 + $0x18] sm:$0xff]
      %vm402 = vcmask 261120
      %v404 = vsel %vm402, %v390, 0
      %v407 = vsel %vm402, %v391, 0
      %v410 = vsel %vm402, %v392, 0
      %v413 = vsel %vm402, %v393, 0
      %v416 = vsel %vm402, %v394, 0
      %v419 = vsel %vm402, %v395, 0
      %v422 = vsel %vm402, %v396, 0
      %v425 = vsel %vm402, %v397, 0
      %427 = vmatprep.subr.mxu0 0.0
      %428 = vmatpush1.msra.mxu0 %v398
      %429 = vmatprep.subr.mxu0 0.0
      %430 = vmatpush1.msra.mxu0 %v399
      %431 = vmatprep.subr.mxu0 0.0
      %432 = vmatpush1.msra.mxu0 %v400
      %433 = vmatprep.subr.mxu0 0.0
      %434 = vmatpush1.msra.mxu0 %v401
      %435 = vmatprep.subr.mxu0 0.0
      %436 = vmatpush1.msra.mxu0 0.0
      %437 = vmatprep.subr.mxu0 0.0
      %438 = vmatpush1.msra.mxu0 0.0
      %439 = vmatprep.subr.mxu0 0.0
      %440 = vmatpush1.msra.mxu0 0.0
      %441 = vmatprep.subr.mxu0 0.0
      %442 = vmatpush1.msra.mxu0 0.0
      %443 = vmatprep.subr.mxu0 0.0
      %444 = vmatpush1.msra.mxu0 0.0
      %445 = vmatprep.subr.mxu0 0.0
      %446 = vmatpush1.msra.mxu0 0.0
      %447 = vmatprep.subr.mxu0 0.0
      %448 = vmatpush1.msra.mxu0 0.0
      %449 = vmatprep.subr.mxu0 0.0
      %450 = vmatpush1.msra.mxu0 0.0
      %451 = vmatprep.subr.mxu0 0.0
      %452 = vmatpush1.msra.mxu0 0.0
      %453 = vmatprep.subr.mxu0 0.0
      %454 = vmatpush1.msra.mxu0 0.0
      %455 = vmatprep.subr.mxu0 0.0
      %456 = vmatpush1.msra.mxu0 0.0
      %457 = vmatprep.subr.mxu0 0.0
      %458 = vmatpush1.msra.mxu0 0.0
      %459 = vmatprep.subr.mxu0 0.0
      %460 = vmatpush1.msra.mxu0 0.0
      %461 = vmatprep.subr.mxu0 0.0
      %462 = vmatpush1.msra.mxu0 0.0
      %463 = vmatprep.subr.mxu0 0.0
      %464 = vmatpush1.msra.mxu0 0.0
      %465 = vmatprep.subr.mxu0 0.0
      %466 = vmatpush1.msra.mxu0 0.0
      %467 = vmatprep.subr.mxu0 0.0
      %468 = vmatpush1.msra.mxu0 0.0
      %469 = vmatprep.subr.mxu0 0.0
      %470 = vmatpush1.msra.mxu0 0.0
      %471 = vmatprep.subr.mxu0 0.0
      %472 = vmatpush1.msra.mxu0 0.0
      %473 = vmatprep.subr.mxu0 0.0
      %474 = vmatpush1.msra.mxu0 0.0
      %475 = vmatprep.subr.mxu0 0.0
      %476 = vmatpush1.msra.mxu0 0.0
      %477 = vmatprep.subr.mxu0 0.0
      %478 = vmatpush1.msra.mxu0 0.0
      %479 = vmatprep.subr.mxu0 0.0
      %480 = vmatpush1.msra.mxu0 0.0
      %481 = vmatprep.subr.mxu0 0.0
      %482 = vmatpush1.msra.mxu0 0.0
      %483 = vmatprep.subr.mxu0 0.0
      %484 = vmatpush1.msra.mxu0 0.0
      %485 = vmatprep.subr.mxu0 0.0
      %486 = vmatpush1.msra.mxu0 0.0
      %487 = vmatprep.subr.mxu0 0.0
      %488 = vmatpush1.msra.mxu0 0.0
      %489 = vmatprep.subr.mxu0 0.0
      %490 = vmatpush1.msra.mxu0 0.0
      %491 = vmatprep.mubr.f32.mxu0 0.0
      %492 = vmatmul.mubr.f32.gmra.mrb[0].mxu0 %v404
      %v493 = vpop.f32.mrb[0].mxu0
      %v494 = vadd.f32 0.0, %v493
      %v495 = vpop.f32.mrb[0].mxu0
      %496 = vmatprep.mubr.f32.mxu0 0.0
      %497 = vmatmul.mubr.f32.gmra.mrb[0].mxu0 %v407
      %v498 = vpop.f32.mrb[0].mxu0
      %v499 = vadd.f32 0.0, %v498
      %v500 = vpop.f32.mrb[0].mxu0
      %501 = vmatprep.mubr.f32.mxu0 0.0
      %502 = vmatmul.mubr.f32.gmra.mrb[0].mxu0 %v410
      %v503 = vpop.f32.mrb[0].mxu0
      %v504 = vadd.f32 0.0, %v503
      %v505 = vpop.f32.mrb[0].mxu0
      %506 = vmatprep.mubr.f32.mxu0 0.0
      %507 = vmatmul.mubr.f32.gmra.mrb[0].mxu0 %v413
      %v508 = vpop.f32.mrb[0].mxu0
      %v509 = vadd.f32 0.0, %v508
      %v510 = vpop.f32.mrb[0].mxu0
      %511 = vmatprep.mubr.f32.mxu0 0.0
      %512 = vmatmul.mubr.f32.gmra.mrb[0].mxu0 %v416
      %v513 = vpop.f32.mrb[0].mxu0
      %v514 = vadd.f32 0.0, %v513
      %v515 = vpop.f32.mrb[0].mxu0
      %516 = vmatprep.mubr.f32.mxu0 0.0
      %517 = vmatmul.mubr.f32.gmra.mrb[0].mxu0 %v419
      %v518 = vpop.f32.mrb[0].mxu0
      %v519 = vadd.f32 0.0, %v518
      %v520 = vpop.f32.mrb[0].mxu0
      %521 = vmatprep.mubr.f32.mxu0 0.0
      %522 = vmatmul.mubr.f32.gmra.mrb[0].mxu0 %v422
      %v523 = vpop.f32.mrb[0].mxu0
      %v524 = vadd.f32 0.0, %v523
      %v525 = vpop.f32.mrb[0].mxu0
      %526 = vmatprep.mubr.f32.mxu0 0.0
      %527 = vmatmul.mubr.f32.gmra.mrb[0].mxu0 %v425
      %v528 = vpop.f32.mrb[0].mxu0
      %v529 = vadd.f32 0.0, %v528
      %v530 = vpop.f32.mrb[0].mxu0
      %531 = vdwg.mxu0
      %v532 = vlaneseq
      %v533 = vand.u32 %v532, 127
      %s534 = smul.u32 %s24, 128
      %s535 = ssub.s32 64, %s534
      %v536 = vstv %s535
      %vm537 = vcmp.lt.s32.totalorder %v533, %v536
      %v538 = vld [vmem:[%s362] sm:$0xff]
      %v539 = vld [vmem:[%s362 + $0x8] sm:$0xff]
      %v540 = vld [vmem:[%s362 + $0x10] sm:$0xff]
      %v541 = vld [vmem:[%s362 + $0x18] sm:$0xff]
      %v542 = vld [vmem:[%s362 + $0x20] sm:$0xff]
      %v543 = vld [vmem:[%s362 + $0x28] sm:$0xff]
      %v544 = vld [vmem:[%s362 + $0x30] sm:$0xff]
      %v545 = vld [vmem:[%s362 + $0x38] sm:$0xff]
      %v546 = vld [vmem:[%s369] sm:$0x1]
      %548 = vset.pattern.permute.xlu0 0
      %549 = vperm.xlu0 %548, %v538
      %v550 = vpop.permute.xlu0 %549
      %553 = vset.pattern.permute.xlu0 0
      %554 = vperm.xlu0 %553, %v539
      %v555 = vpop.permute.xlu0 %554
      %558 = vset.pattern.permute.xlu0 0
      %559 = vperm.xlu0 %558, %v540
      %v560 = vpop.permute.xlu0 %559
      %563 = vset.pattern.permute.xlu0 0
      %564 = vperm.xlu0 %563, %v541
      %v565 = vpop.permute.xlu0 %564
      %568 = vset.pattern.permute.xlu0 0
      %569 = vperm.xlu0 %568, %v542
      %v570 = vpop.permute.xlu0 %569
      %573 = vset.pattern.permute.xlu0 0
      %574 = vperm.xlu0 %573, %v543
      %v575 = vpop.permute.xlu0 %574
      %578 = vset.pattern.permute.xlu0 0
      %579 = vperm.xlu0 %578, %v544
      %v580 = vpop.permute.xlu0 %579
      %583 = vset.pattern.permute.xlu0 0
      %584 = vperm.xlu0 %583, %v545
      %v585 = vpop.permute.xlu0 %584
      %v588 = vlaneseq
      %v589 = vshrl.u32 %v588, 7
      %v590 = vsub.s32 0, %v589
      %v591 = vrot.slane %v546, %v590
      %v593 = vmul.f32 %v550, %v591
      %v594 = vmul.f32 %v555, %v591
      %v595 = vmul.f32 %v560, %v591
      %v596 = vmul.f32 %v565, %v591
      %v597 = vmul.f32 %v570, %v591
      %v598 = vmul.f32 %v575, %v591
      %v599 = vmul.f32 %v580, %v591
      %v600 = vmul.f32 %v585, %v591
      %v601 = vmul.f32 %v494, %v593
      %v602 = vmul.f32 %v499, %v594
      %v603 = vmul.f32 %v504, %v595
      %v604 = vmul.f32 %v509, %v596
      %v605 = vmul.f32 %v514, %v597
      %v606 = vmul.f32 %v519, %v598
      %v607 = vmul.f32 %v524, %v599
      %v608 = vmul.f32 %v529, %v600
      %v609 = vsel %vm537, %v601, -1e+30
      %v610 = vsel %vm537, %v602, -1e+30
      %v611 = vsel %vm537, %v603, -1e+30
      %v612 = vsel %vm537, %v604, -1e+30
      %v613 = vsel %vm537, %v605, -1e+30
      %v614 = vsel %vm537, %v606, -1e+30
      %v615 = vsel %vm537, %v607, -1e+30
      %v616 = vsel %vm537, %v608, -1e+30
      %617 = vmax.xlane.f32.xlu0 %v609
      %v618 = vpop.xlane.xlu0 %617
      %619 = vmax.xlane.f32.xlu0 %v610
      %v620 = vpop.xlane.xlu0 %619
      %621 = vmax.xlane.f32.xlu0 %v611
      %v622 = vpop.xlane.xlu0 %621
      %623 = vmax.xlane.f32.xlu0 %v612
      %v624 = vpop.xlane.xlu0 %623
      %625 = vmax.xlane.f32.xlu0 %v613
      %v626 = vpop.xlane.xlu0 %625
      %627 = vmax.xlane.f32.xlu0 %v614
      %v628 = vpop.xlane.xlu0 %627
      %629 = vmax.xlane.f32.xlu0 %v615
      %v630 = vpop.xlane.xlu0 %629
      %631 = vmax.xlane.f32.xlu0 %v616
      %v632 = vpop.xlane.xlu0 %631
      %p633 = scmp.eq.s32.totalorder %s24, 0
      // Predicated region
      $region37: #{coarse_reg_forward.9} parent=35 // pred_check
        %p634 = pneg %p633
      $region38: #{coarse_reg_forward.9} parent=35 // pred_check_branch
        %636 = sbr.rel (%p634) target = $region40
      $region39: #{coarse_reg_forward.9} parent=35 // pred_region
        %vm637 = vcmask 7168
        %638 = vst.msk [vmem:[%s378] sm:$0xff] %vm637, -1e+30
        %639 = vst.msk [vmem:[%s378 + $0x8] sm:$0xff] %vm637, -1e+30
        %640 = vst.msk [vmem:[%s378 + $0x10] sm:$0xff] %vm637, -1e+30
        %641 = vst.msk [vmem:[%s378 + $0x18] sm:$0xff] %vm637, -1e+30
        %642 = vst.msk [vmem:[%s378 + $0x20] sm:$0xff] %vm637, -1e+30
        %643 = vst.msk [vmem:[%s378 + $0x28] sm:$0xff] %vm637, -1e+30
        %644 = vst.msk [vmem:[%s378 + $0x30] sm:$0xff] %vm637, -1e+30
        %645 = vst.msk [vmem:[%s378 + $0x38] sm:$0xff] %vm637, -1e+30
      $region40: #{coarse_reg_forward.9} parent=35 // pred_fallthru
        _
      %v646 = vld [vmem:[%s378] sm:$0xff]
      %v647 = vld [vmem:[%s378 + $0x8] sm:$0xff]
      %v648 = vld [vmem:[%s378 + $0x10] sm:$0xff]
      %v649 = vld [vmem:[%s378 + $0x18] sm:$0xff]
      %v650 = vld [vmem:[%s378 + $0x20] sm:$0xff]
      %v651 = vld [vmem:[%s378 + $0x28] sm:$0xff]
      %v652 = vld [vmem:[%s378 + $0x30] sm:$0xff]
      %v653 = vld [vmem:[%s378 + $0x38] sm:$0xff]
      %v654 = vmax.f32 %v646, %v618
      %v655 = vmax.f32 %v647, %v620
      %v656 = vmax.f32 %v648, %v622
      %v657 = vmax.f32 %v649, %v624
      %v658 = vmax.f32 %v650, %v626
      %v659 = vmax.f32 %v651, %v628
      %v660 = vmax.f32 %v652, %v630
      %v661 = vmax.f32 %v653, %v632
      %vm662 = vcmask 7168
      %663 = vst.msk [vmem:[%s378] sm:$0xff] %vm662, %v654
      %664 = vst.msk [vmem:[%s378 + $0x8] sm:$0xff] %vm662, %v655
      %665 = vst.msk [vmem:[%s378 + $0x10] sm:$0xff] %vm662, %v656
      %666 = vst.msk [vmem:[%s378 + $0x18] sm:$0xff] %vm662, %v657
      %667 = vst.msk [vmem:[%s378 + $0x20] sm:$0xff] %vm662, %v658
      %668 = vst.msk [vmem:[%s378 + $0x28] sm:$0xff] %vm662, %v659
      %669 = vst.msk [vmem:[%s378 + $0x30] sm:$0xff] %vm662, %v660
      %670 = vst.msk [vmem:[%s378 + $0x38] sm:$0xff] %vm662, %v661
      %v671 = vmax.f32 %v609, %v613
      %v672 = vmax.f32 %v610, %v614
      %v673 = vmax.f32 %v611, %v615
      %v674 = vmax.f32 %v612, %v616
      %v675 = vmax.f32 %v671, %v672
      %v676 = vmax.f32 %v673, %v674
      %v677 = vmax.f32 %v675, %v676
      %v678 = vrot.slane %v677, 4
      %v679 = vmax.f32 %v677, %v678
      %v680 = vrot.slane %v679, 2
      %v681 = vmax.f32 %v679, %v680
      %v682 = vrot.slane %v681, 1
      %v683 = vmax.f32 %v681, %v682
      %684 = vst [vmem:[%s389] sm:$0xff] %v683
      %s685 = smul.u32 8, %s23
      %p686 = scmp.lt.s32.totalorder %s22, 1
      %s687 = scalar_select %p686, %s22, 1
      %p688 = scmp.lt.s32.totalorder %s685, 7
      %s689 = scalar_select %p688, %s685, 7
      %s690 = smul.addr %s687, 8
      %s691 = sadd.s32 %s689, %s690
      %s692 = smul.addr %s691, 8
      %s693 = scalar_lea.vmem %s4, %s692
      %p694 = scmp.lt.s32.totalorder %s22, 1
      %s695 = scalar_select %p694, %s22, 1
      %p696 = scmp.lt.s32.totalorder %s23, 0
      %s697 = scalar_select %p696, %s23, 0
      %p698 = scmp.lt.s32.totalorder %s24, 0
      %s699 = scalar_select %p698, %s24, 0
      %s700 = sadd.s32 %s699, %s697
      %s701 = sadd.s32 %s700, %s695
      %s702 = smul.addr %s701, 8
      %s703 = scalar_lea.vmem %s5, %s702
      // Predicated region
      $region41: #{coarse_reg_forward.9} parent=35 // pred_check
        %p704 = pneg %p168
      $region42: #{coarse_reg_forward.9} parent=35 // pred_check_branch
        %706 = sbr.rel (%p704) target = $region44
      $region43: #{coarse_reg_forward.9} parent=35 // pred_region
        %s707 = smul.u32 8, %s23
      $region44: #{coarse_reg_forward.9} parent=35 // pred_fallthru
        _
      // Predicated region
      $region45: #{coarse_reg_forward.9} parent=35 // pred_check
        %p708 = pneg %p198
      $region46: #{coarse_reg_forward.9} parent=35 // pred_check_branch
        %710 = sbr.rel (%p708) target = $region48
      $region47: #{coarse_reg_forward.9} parent=35 // pred_region
        _
      $region48: #{coarse_reg_forward.9} parent=35 // pred_fallthru
        _
    $region36: #{coarse_reg_forward.9} parent=5 // pred_fallthru
      _
    %p711 = scmp.le.s32.totalorder 2, %s12
    // Predicated region
    $region49: #{coarse_reg_forward.9} parent=5 // pred_check
      %p712 = pneg %p711
    $region50: #{coarse_reg_forward.9} parent=5 // pred_check_branch
      %714 = sbr.rel (%p712) target = $region52
    $region51: #{coarse_reg_forward.9} parent=5 // pred_region
      %s715 = ssub.s32 %s12, 2
      // Predicated region
      $region53: #{coarse_reg_forward.9} parent=51 // pred_check
        %p716 = pneg %p174
      $region54: #{coarse_reg_forward.9} parent=51 // pred_check_branch
        %718 = sbr.rel (%p716) target = $region56
      $region55: #{coarse_reg_forward.9} parent=51 // pred_region
        %s719 = smul.u32 8, %s26
        %p720 = scmp.lt.s32.totalorder %s25, 1
        %s721 = scalar_select %p720, %s25, 1
        %p722 = scmp.lt.s32.totalorder %s719, 7
        %s723 = scalar_select %p722, %s719, 7
        %s724 = smul.addr %s721, 8
        %s725 = sadd.s32 %s723, %s724
        %s726 = smul.addr %s725, 8
        %s727 = scalar_lea.vmem %s4, %s726
      $region56: #{coarse_reg_forward.9} parent=51 // pred_fallthru
        _
      // Predicated region
      $region57: #{coarse_reg_forward.9} parent=51 // pred_check
        %p728 = pneg %p204
      $region58: #{coarse_reg_forward.9} parent=51 // pred_check_branch
        %730 = sbr.rel (%p728) target = $region60
      $region59: #{coarse_reg_forward.9} parent=51 // pred_region
        %p731 = scmp.lt.s32.totalorder %s25, 1
        %s732 = scalar_select %p731, %s25, 1
        %p733 = scmp.lt.s32.totalorder %s26, 0
        %s734 = scalar_select %p733, %s26, 0
        %p735 = scmp.lt.s32.totalorder %s27, 0
        %s736 = scalar_select %p735, %s27, 0
        %s737 = sadd.s32 %s736, %s734
        %s738 = sadd.s32 %s737, %s732
        %s739 = smul.addr %s738, 8
        %s740 = scalar_lea.vmem %s5, %s739
      $region60: #{coarse_reg_forward.9} parent=51 // pred_fallthru
        _
    $region52: #{coarse_reg_forward.9} parent=5 // pred_fallthru
      _
  $region6: #{coarse_reg_forward.9} parent=0 // loop_footer
    %s16 = sadd.s32 1, %s12
  $region7: #{coarse_reg_forward.9} parent=0 // loop_footer_branch
    %11 = sbr.rel target = $region3
  $region8: #{coarse_reg_forward.9} parent=0 // loop_exit
    _

// kernel: coarse_reg_forward.6
$region0: #{coarse_reg_forward.6}
  #allocation0 [shape = 'u32[]', space=smem, size = 0x4, offset = 0x4, fixed_abs, tag = 'smem constant byte address 0x4 - core index']
  #allocation1 [shape = 'u32[144,128]{1,0:T(1,128)}', space=vmem, size = 0x12000, scoped, tag = 'internal scratch']
  %s0 = inlined_call_operand.vmem [shape: f32[2,64,32], index: 0, kind: input, shape index: {}]
  %s1 = inlined_call_operand.vmem [shape: f32[2,32,128], index: 1, kind: input, shape index: {}]
  %s2 = inlined_call_operand.vmem [shape: f32[2,64,1], index: 2, kind: input, shape index: {}]
  %s3 = inlined_call_operand.vmem [shape: f32[2,1,128], index: 3, kind: input, shape index: {}]
  %s4 = inlined_call_operand.vmem [shape: f32[2,64,1], index: 4, kind: input, shape index: {}]
  %s5 = inlined_call_operand.vmem [shape: f32[2,1,128], index: 5, kind: input, shape index: {}]
  %s6 = inlined_call_operand.vmem [shape: f32[2,64,128], index: 6, kind: output, shape index: {0}]
  %s7 = inlined_call_operand.vmem [shape: f32[2,64,1], index: 7, kind: output, shape index: {1}]
  %s8 = inlined_call_operand.vmem [shape: f32[2,8,128], index: 8, kind: output, shape index: {2}]
  %9 = xla_tuple %s6, %s7, %s8
  %s10 = sld [smem:[#allocation0]]
  $region77: #{coarse_reg_forward.6} parent=0
    _
  %s12 = ssub.s32 1, %s10
  %s13 = scalar_select 0, %s12, %s10
  loop: start=0, step=1, limit=4
  $region2: #{coarse_reg_forward.6} parent=0 // loop_pre_header
    _
  $region3: #{coarse_reg_forward.6} parent=0 // loop_header
    %s15 = sphi 0, %s19
    %p16 = scmp.ge.s32.totalorder %s15, 4
    %s22 = sphi 0, %s41
    %s23 = sphi 0, %s37
    %s24 = sphi 0, %s33
    %s25 = sphi 0, %s22
    %s26 = sphi 0, %s23
    %s27 = sphi 0, %s24
    %s28 = sphi 0, %s25
    %s29 = sphi 0, %s26
    %s30 = sphi 0, %s27
    %s46 = sphi 0, %s48
    %s49 = sphi 0, %s46
    %s50 = sphi 0, %s49
    %s66 = sphi 0, %s50
    %s74 = sphi 0, %s76
    %s77 = sphi 0, %s74
    %s78 = sphi 0, %s77
    %s94 = sphi 0, %s78
    %s102 = sphi 0, %s104
    %s105 = sphi 0, %s102
    %s106 = sphi 0, %s105
    %s122 = sphi 0, %s106
    %s130 = sphi 0, %s132
    %s133 = sphi 0, %s130
    %s134 = sphi 0, %s133
    %s150 = sphi 0, %s134
    %s158 = sphi 0, %s160
    %s161 = sphi 0, %s158
    %s162 = sphi 0, %s161
    %s178 = sphi 0, %s162
    %s186 = sphi 0, %s188
    %s189 = sphi 0, %s186
    %s190 = sphi 0, %s189
    %s206 = sphi 0, %s190
    %s216 = sphi 0, %s218
    %s219 = sphi 0, %s216
    %s220 = sphi 0, %s219
    %s236 = sphi 0, %s220
    %s244 = sphi 0, %s246
    %s247 = sphi 0, %s244
    %s248 = sphi 0, %s247
    %s264 = sphi 0, %s248
    %s274 = sphi 0, %s276
    %s277 = sphi 0, %s274
    %s278 = sphi 0, %s277
    %s294 = sphi 0, %s278
  $region4: #{coarse_reg_forward.6} parent=0 // loop_header_branch
    %18 = sbr.rel (%p16) target = $region8
  $region5: #{coarse_reg_forward.6} parent=0 // loop_body
    %s20 = ssub.s32 %s15, 1
    %s21 = ssub.s32 %s15, 2
    %s31 = sadd.s32 1, %s24
    %p32 = scmp.ge.s32.totalorder %s31, 1
    %s33 = scalar_select %p32, 0, %s31
    %s34 = sadd.s32 1, %s23
    %s35 = scalar_select %p32, %s34, %s23
    %p36 = scmp.ge.s32.totalorder %s35, 1
    %s37 = scalar_select %p36, 0, %s35
    %s38 = sadd.s32 1, %s22
    %s39 = scalar_select %p36, %s38, %s22
    %p40 = scmp.ge.s32.totalorder %s39, 2
    %s41 = scalar_select %p40, 0, %s39
    %s42 = ssub.s32 %s22, %s41
    %s43 = ssub.s32 %s23, %s37
    %s44 = sor.u32 %s42, %s43
    %p45 = scmp.eq.s32.totalorder %s44, 0
    %s47 = sadd.s32 %s46, 1
    %s48 = scalar_select %p45, %s46, %s47
    %p51 = pneg %p45
    %p52 = scmp.eq.s32.totalorder %s15, 1
    %p53 = por %p51, %p52
    %p54 = scmp.ne.s32.totalorder %s46, %s49
    %p55 = scmp.eq.s32.totalorder %s15, 0
    %p56 = por %p54, %p55
    %p57 = scmp.ne.s32.totalorder %s46, %s49
    %p58 = scmp.eq.s32.totalorder %s20, 1
    %p59 = por %p57, %p58
    %p60 = scmp.ne.s32.totalorder %s49, %s50
    %p61 = scmp.eq.s32.totalorder %s20, 0
    %p62 = por %p60, %p61
    %p63 = scmp.ne.s32.totalorder %s49, %s50
    %p64 = scmp.eq.s32.totalorder %s21, 1
    %p65 = por %p63, %p64
    %p67 = scmp.ne.s32.totalorder %s50, %s66
    %p68 = scmp.eq.s32.totalorder %s21, 0
    %p69 = por %p67, %p68
    %s70 = ssub.s32 %s22, %s41
    %s71 = ssub.s32 %s24, %s33
    %s72 = sor.u32 %s70, %s71
    %p73 = scmp.eq.s32.totalorder %s72, 0
    %s75 = sadd.s32 %s74, 1
    %s76 = scalar_select %p73, %s74, %s75
    %p79 = pneg %p73
    %p80 = scmp.eq.s32.totalorder %s15, 1
    %p81 = por %p79, %p80
    %p82 = scmp.ne.s32.totalorder %s74, %s77
    %p83 = scmp.eq.s32.totalorder %s15, 0
    %p84 = por %p82, %p83
    %p85 = scmp.ne.s32.totalorder %s74, %s77
    %p86 = scmp.eq.s32.totalorder %s20, 1
    %p87 = por %p85, %p86
    %p88 = scmp.ne.s32.totalorder %s77, %s78
    %p89 = scmp.eq.s32.totalorder %s20, 0
    %p90 = por %p88, %p89
    %p91 = scmp.ne.s32.totalorder %s77, %s78
    %p92 = scmp.eq.s32.totalorder %s21, 1
    %p93 = por %p91, %p92
    %p95 = scmp.ne.s32.totalorder %s78, %s94
    %p96 = scmp.eq.s32.totalorder %s21, 0
    %p97 = por %p95, %p96
    %s98 = ssub.s32 %s22, %s41
    %s99 = ssub.s32 %s23, %s37
    %s100 = sor.u32 %s98, %s99
    %p101 = scmp.eq.s32.totalorder %s100, 0
    %s103 = sadd.s32 %s102, 1
    %s104 = scalar_select %p101, %s102, %s103
    %p107 = pneg %p101
    %p108 = scmp.eq.s32.totalorder %s15, 1
    %p109 = por %p107, %p108
    %p110 = scmp.ne.s32.totalorder %s102, %s105
    %p111 = scmp.eq.s32.totalorder %s15, 0
    %p112 = por %p110, %p111
    %p113 = scmp.ne.s32.totalorder %s102, %s105
    %p114 = scmp.eq.s32.totalorder %s20, 1
    %p115 = por %p113, %p114
    %p116 = scmp.ne.s32.totalorder %s105, %s106
    %p117 = scmp.eq.s32.totalorder %s20, 0
    %p118 = por %p116, %p117
    %p119 = scmp.ne.s32.totalorder %s105, %s106
    %p120 = scmp.eq.s32.totalorder %s21, 1
    %p121 = por %p119, %p120
    %p123 = scmp.ne.s32.totalorder %s106, %s122
    %p124 = scmp.eq.s32.totalorder %s21, 0
    %p125 = por %p123, %p124
    %s126 = ssub.s32 %s22, %s41
    %s127 = ssub.s32 %s24, %s33
    %s128 = sor.u32 %s126, %s127
    %p129 = scmp.eq.s32.totalorder %s128, 0
    %s131 = sadd.s32 %s130, 1
    %s132 = scalar_select %p129, %s130, %s131
    %p135 = pneg %p129
    %p136 = scmp.eq.s32.totalorder %s15, 1
    %p137 = por %p135, %p136
    %p138 = scmp.ne.s32.totalorder %s130, %s133
    %p139 = scmp.eq.s32.totalorder %s15, 0
    %p140 = por %p138, %p139
    %p141 = scmp.ne.s32.totalorder %s130, %s133
    %p142 = scmp.eq.s32.totalorder %s20, 1
    %p143 = por %p141, %p142
    %p144 = scmp.ne.s32.totalorder %s133, %s134
    %p145 = scmp.eq.s32.totalorder %s20, 0
    %p146 = por %p144, %p145
    %p147 = scmp.ne.s32.totalorder %s133, %s134
    %p148 = scmp.eq.s32.totalorder %s21, 1
    %p149 = por %p147, %p148
    %p151 = scmp.ne.s32.totalorder %s134, %s150
    %p152 = scmp.eq.s32.totalorder %s21, 0
    %p153 = por %p151, %p152
    %s154 = ssub.s32 %s22, %s41
    %s155 = ssub.s32 %s23, %s37
    %s156 = sor.u32 %s154, %s155
    %p157 = scmp.eq.s32.totalorder %s156, 0
    %s159 = sadd.s32 %s158, 1
    %s160 = scalar_select %p157, %s158, %s159
    %p163 = pneg %p157
    %p164 = scmp.eq.s32.totalorder %s15, 1
    %p165 = por %p163, %p164
    %p166 = scmp.ne.s32.totalorder %s158, %s161
    %p167 = scmp.eq.s32.totalorder %s15, 0
    %p168 = por %p166, %p167
    %p169 = scmp.ne.s32.totalorder %s158, %s161
    %p170 = scmp.eq.s32.totalorder %s20, 1
    %p171 = por %p169, %p170
    %p172 = scmp.ne.s32.totalorder %s161, %s162
    %p173 = scmp.eq.s32.totalorder %s20, 0
    %p174 = por %p172, %p173
    %p175 = scmp.ne.s32.totalorder %s161, %s162
    %p176 = scmp.eq.s32.totalorder %s21, 1
    %p177 = por %p175, %p176
    %p179 = scmp.ne.s32.totalorder %s162, %s178
    %p180 = scmp.eq.s32.totalorder %s21, 0
    %p181 = por %p179, %p180
    %s182 = ssub.s32 %s22, %s41
    %s183 = ssub.s32 %s24, %s33
    %s184 = sor.u32 %s182, %s183
    %p185 = scmp.eq.s32.totalorder %s184, 0
    %s187 = sadd.s32 %s186, 1
    %s188 = scalar_select %p185, %s186, %s187
    %p191 = pneg %p185
    %p192 = scmp.eq.s32.totalorder %s15, 1
    %p193 = por %p191, %p192
    %p194 = scmp.ne.s32.totalorder %s186, %s189
    %p195 = scmp.eq.s32.totalorder %s15, 0
    %p196 = por %p194, %p195
    %p197 = scmp.ne.s32.totalorder %s186, %s189
    %p198 = scmp.eq.s32.totalorder %s20, 1
    %p199 = por %p197, %p198
    %p200 = scmp.ne.s32.totalorder %s189, %s190
    %p201 = scmp.eq.s32.totalorder %s20, 0
    %p202 = por %p200, %p201
    %p203 = scmp.ne.s32.totalorder %s189, %s190
    %p204 = scmp.eq.s32.totalorder %s21, 1
    %p205 = por %p203, %p204
    %p207 = scmp.ne.s32.totalorder %s190, %s206
    %p208 = scmp.eq.s32.totalorder %s21, 0
    %p209 = por %p207, %p208
    %s210 = ssub.s32 %s22, %s41
    %s211 = ssub.s32 %s23, %s37
    %s212 = sor.u32 %s210, %s211
    %s213 = ssub.s32 %s24, %s33
    %s214 = sor.u32 %s212, %s213
    %p215 = scmp.eq.s32.totalorder %s214, 0
    %s217 = sadd.s32 %s216, 1
    %s218 = scalar_select %p215, %s216, %s217
    %p221 = pneg %p215
    %p222 = scmp.eq.s32.totalorder %s15, 1
    %p223 = por %p221, %p222
    %p224 = scmp.ne.s32.totalorder %s216, %s219
    %p225 = scmp.eq.s32.totalorder %s15, 0
    %p226 = por %p224, %p225
    %p227 = scmp.ne.s32.totalorder %s216, %s219
    %p228 = scmp.eq.s32.totalorder %s20, 1
    %p229 = por %p227, %p228
    %p230 = scmp.ne.s32.totalorder %s219, %s220
    %p231 = scmp.eq.s32.totalorder %s20, 0
    %p232 = por %p230, %p231
    %p233 = scmp.ne.s32.totalorder %s219, %s220
    %p234 = scmp.eq.s32.totalorder %s21, 1
    %p235 = por %p233, %p234
    %p237 = scmp.ne.s32.totalorder %s220, %s236
    %p238 = scmp.eq.s32.totalorder %s21, 0
    %p239 = por %p237, %p238
    %s240 = ssub.s32 %s22, %s41
    %s241 = ssub.s32 %s23, %s37
    %s242 = sor.u32 %s240, %s241
    %p243 = scmp.eq.s32.totalorder %s242, 0
    %s245 = sadd.s32 %s244, 1
    %s246 = scalar_select %p243, %s244, %s245
    %p249 = pneg %p243
    %p250 = scmp.eq.s32.totalorder %s15, 1
    %p251 = por %p249, %p250
    %p252 = scmp.ne.s32.totalorder %s244, %s247
    %p253 = scmp.eq.s32.totalorder %s15, 0
    %p254 = por %p252, %p253
    %p255 = scmp.ne.s32.totalorder %s244, %s247
    %p256 = scmp.eq.s32.totalorder %s20, 1
    %p257 = por %p255, %p256
    %p258 = scmp.ne.s32.totalorder %s247, %s248
    %p259 = scmp.eq.s32.totalorder %s20, 0
    %p260 = por %p258, %p259
    %p261 = scmp.ne.s32.totalorder %s247, %s248
    %p262 = scmp.eq.s32.totalorder %s21, 1
    %p263 = por %p261, %p262
    %p265 = scmp.ne.s32.totalorder %s248, %s264
    %p266 = scmp.eq.s32.totalorder %s21, 0
    %p267 = por %p265, %p266
    %s268 = ssub.s32 %s22, %s41
    %s269 = ssub.s32 %s23, %s37
    %s270 = sor.u32 %s268, %s269
    %s271 = ssub.s32 %s24, %s33
    %s272 = sor.u32 %s270, %s271
    %p273 = scmp.eq.s32.totalorder %s272, 0
    %s275 = sadd.s32 %s274, 1
    %s276 = scalar_select %p273, %s274, %s275
    %p279 = pneg %p273
    %p280 = scmp.eq.s32.totalorder %s15, 1
    %p281 = por %p279, %p280
    %p282 = scmp.ne.s32.totalorder %s274, %s277
    %p283 = scmp.eq.s32.totalorder %s15, 0
    %p284 = por %p282, %p283
    %p285 = scmp.ne.s32.totalorder %s274, %s277
    %p286 = scmp.eq.s32.totalorder %s20, 1
    %p287 = por %p285, %p286
    %p288 = scmp.ne.s32.totalorder %s277, %s278
    %p289 = scmp.eq.s32.totalorder %s20, 0
    %p290 = por %p288, %p289
    %p291 = scmp.ne.s32.totalorder %s277, %s278
    %p292 = scmp.eq.s32.totalorder %s21, 1
    %p293 = por %p291, %p292
    %p295 = scmp.ne.s32.totalorder %s278, %s294
    %p296 = scmp.eq.s32.totalorder %s21, 0
    %p297 = por %p295, %p296
    %p298 = scmp.le.s32.totalorder 1, %s15
    %p299 = scmp.lt.s32.totalorder %s15, 3
    %p300 = pnand %p298, %p299
    %p301 = pneg %p300
    // Predicated region
    $region9: #{coarse_reg_forward.6} parent=5 // pred_check
      _
    $region10: #{coarse_reg_forward.6} parent=5 // pred_check_branch
      %303 = sbr.rel (%p300) target = $region12
    $region11: #{coarse_reg_forward.6} parent=5 // pred_region
      %s304 = ssub.s32 %s15, 1
    $region12: #{coarse_reg_forward.6} parent=5 // pred_fallthru
      _
    %p305 = scmp.lt.s32.totalorder %s15, 2
    // Predicated region
    $region13: #{coarse_reg_forward.6} parent=5 // pred_check
      %p306 = pneg %p305
    $region14: #{coarse_reg_forward.6} parent=5 // pred_check_branch
      %308 = sbr.rel (%p306) target = $region16
    $region15: #{coarse_reg_forward.6} parent=5 // pred_region
      // Predicated region
      $region17: #{coarse_reg_forward.6} parent=15 // pred_check
        %p309 = pneg %p56
      $region18: #{coarse_reg_forward.6} parent=15 // pred_check_branch
        %311 = sbr.rel (%p309) target = $region20
      $region19: #{coarse_reg_forward.6} parent=15 // pred_region
        %s312 = smul.u32 8, %s23
        %p313 = scmp.lt.s32.totalorder %s22, 1
        %s314 = scalar_select %p313, %s22, 1
        %p315 = scmp.lt.s32.totalorder %s312, 7
        %s316 = scalar_select %p315, %s312, 7
        %s317 = smul.addr %s314, 8
        %s318 = sadd.s32 %s316, %s317
        %s319 = smul.addr %s318, 8
        %s320 = scalar_lea.vmem %s0, %s319
        %s321 = smul.u32 8, %s23
      $region20: #{coarse_reg_forward.6} parent=15 // pred_fallthru
        _
      // Predicated region
      $region21: #{coarse_reg_forward.6} parent=15 // pred_check
        %p322 = pneg %p84
      $region22: #{coarse_reg_forward.6} parent=15 // pred_check_branch
        %324 = sbr.rel (%p322) target = $region24
      $region23: #{coarse_reg_forward.6} parent=15 // pred_region
        %p325 = scmp.lt.s32.totalorder %s22, 1
        %s326 = scalar_select %p325, %s22, 1
        %p327 = scmp.lt.s32.totalorder %s24, 0
        %s328 = scalar_select %p327, %s24, 0
        %s329 = smul.addr %s326, 4
        %s330 = sadd.s32 %s328, %s329
        %s331 = smul.addr %s330, 8
        %s332 = scalar_lea.vmem %s1, %s331
      $region24: #{coarse_reg_forward.6} parent=15 // pred_fallthru
        _
      // Predicated region
      $region25: #{coarse_reg_forward.6} parent=15 // pred_check
        %p333 = pneg %p112
      $region26: #{coarse_reg_forward.6} parent=15 // pred_check_branch
        %335 = sbr.rel (%p333) target = $region28
      $region27: #{coarse_reg_forward.6} parent=15 // pred_region
        %s336 = smul.u32 8, %s23
        %p337 = scmp.lt.s32.totalorder %s22, 1
        %s338 = scalar_select %p337, %s22, 1
        %p339 = scmp.lt.s32.totalorder %s336, 7
        %s340 = scalar_select %p339, %s336, 7
        %s341 = smul.addr %s338, 8
        %s342 = sadd.s32 %s340, %s341
        %s343 = smul.addr %s342, 8
        %s344 = scalar_lea.vmem %s2, %s343
        %s345 = smul.u32 8, %s23
      $region28: #{coarse_reg_forward.6} parent=15 // pred_fallthru
        _
      // Predicated region
      $region29: #{coarse_reg_forward.6} parent=15 // pred_check
        %p346 = pneg %p140
      $region30: #{coarse_reg_forward.6} parent=15 // pred_check_branch
        %348 = sbr.rel (%p346) target = $region32
      $region31: #{coarse_reg_forward.6} parent=15 // pred_region
        %p349 = scmp.lt.s32.totalorder %s22, 1
        %s350 = scalar_select %p349, %s22, 1
        %p351 = scmp.lt.s32.totalorder %s24, 0
        %s352 = scalar_select %p351, %s24, 0
        %s353 = sadd.s32 %s352, %s350
        %s354 = scalar_lea.vmem %s3, %s353
      $region32: #{coarse_reg_forward.6} parent=15 // pred_fallthru
        _
      // Predicated region
      $region33: #{coarse_reg_forward.6} parent=15 // pred_check
        %p355 = pneg %p168
      $region34: #{coarse_reg_forward.6} parent=15 // pred_check_branch
        %357 = sbr.rel (%p355) target = $region36
      $region35: #{coarse_reg_forward.6} parent=15 // pred_region
        %s358 = smul.u32 8, %s23
        %p359 = scmp.lt.s32.totalorder %s22, 1
        %s360 = scalar_select %p359, %s22, 1
        %p361 = scmp.lt.s32.totalorder %s358, 7
        %s362 = scalar_select %p361, %s358, 7
        %s363 = smul.addr %s360, 8
        %s364 = sadd.s32 %s362, %s363
        %s365 = smul.addr %s364, 8
        %s366 = scalar_lea.vmem %s4, %s365
        %s367 = smul.u32 8, %s23
      $region36: #{coarse_reg_forward.6} parent=15 // pred_fallthru
        _
      // Predicated region
      $region37: #{coarse_reg_forward.6} parent=15 // pred_check
        %p368 = pneg %p196
      $region38: #{coarse_reg_forward.6} parent=15 // pred_check_branch
        %370 = sbr.rel (%p368) target = $region40
      $region39: #{coarse_reg_forward.6} parent=15 // pred_region
        %p371 = scmp.lt.s32.totalorder %s22, 1
        %s372 = scalar_select %p371, %s22, 1
        %p373 = scmp.lt.s32.totalorder %s24, 0
        %s374 = scalar_select %p373, %s24, 0
        %s375 = sadd.s32 %s374, %s372
        %s376 = scalar_lea.vmem %s5, %s375
      $region40: #{coarse_reg_forward.6} parent=15 // pred_fallthru
        _
    $region16: #{coarse_reg_forward.6} parent=5 // pred_fallthru
      _
    %p377 = scmp.le.s32.totalorder 1, %s15
    %p378 = scmp.lt.s32.totalorder %s15, 3
    %p379 = pnand %p377, %p378
    %p380 = pneg %p379
    // Predicated region
    $region41: #{coarse_reg_forward.6} parent=5 // pred_check
      _
    $region42: #{coarse_reg_forward.6} parent=5 // pred_check_branch
      %382 = sbr.rel (%p379) target = $region44
    $region43: #{coarse_reg_forward.6} parent=5 // pred_region
      %s383 = ssub.s32 %s15, 1
      %s384 = smul.u32 8, %s26
      %p385 = scmp.lt.s32.totalorder %s25, 1
      %s386 = scalar_select %p385, %s25, 1
      %p387 = scmp.lt.s32.totalorder %s384, 7
      %s388 = scalar_select %p387, %s384, 7
      %s389 = smul.addr %s386, 8
      %s390 = sadd.s32 %s388, %s389
      %s391 = smul.addr %s390, 8
      %s392 = scalar_lea.vmem %s0, %s391
      %p393 = pneg %p62
      %p394 = pneg %p59
      %p395 = scmp.lt.s32.totalorder %s25, 1
      %s396 = scalar_select %p395, %s25, 1
      %p397 = scmp.lt.s32.totalorder %s27, 0
      %s398 = scalar_select %p397, %s27, 0
      %s399 = smul.addr %s396, 4
      %s400 = sadd.s32 %s398, %s399
      %s401 = smul.addr %s400, 8
      %s402 = scalar_lea.vmem %s1, %s401
      %p403 = pneg %p90
      %p404 = pneg %p87
      %s405 = smul.u32 8, %s26
      %p406 = scmp.lt.s32.totalorder %s25, 1
      %s407 = scalar_select %p406, %s25, 1
      %p408 = scmp.lt.s32.totalorder %s405, 7
      %s409 = scalar_select %p408, %s405, 7
      %s410 = smul.addr %s407, 8
      %s411 = sadd.s32 %s409, %s410
      %s412 = smul.addr %s411, 8
      %s413 = scalar_lea.vmem %s2, %s412
      %p414 = pneg %p118
      %p415 = pneg %p115
      %p416 = scmp.lt.s32.totalorder %s25, 1
      %s417 = scalar_select %p416, %s25, 1
      %p418 = scmp.lt.s32.totalorder %s27, 0
      %s419 = scalar_select %p418, %s27, 0
      %s420 = sadd.s32 %s419, %s417
      %s421 = scalar_lea.vmem %s3, %s420
      %p422 = pneg %p146
      %p423 = pneg %p143
      %s424 = smul.u32 8, %s26
      %p425 = scmp.lt.s32.totalorder %s25, 1
      %s426 = scalar_select %p425, %s25, 1
      %p427 = scmp.lt.s32.totalorder %s424, 7
      %s428 = scalar_select %p427, %s424, 7
      %s429 = smul.addr %s426, 8
      %s430 = sadd.s32 %s428, %s429
      %s431 = smul.addr %s430, 8
      %s432 = scalar_lea.vmem %s4, %s431
      %p433 = pneg %p174
      %p434 = pneg %p171
      %p435 = scmp.lt.s32.totalorder %s25, 1
      %s436 = scalar_select %p435, %s25, 1
      %p437 = scmp.lt.s32.totalorder %s27, 0
      %s438 = scalar_select %p437, %s27, 0
      %s439 = sadd.s32 %s438, %s436
      %s440 = scalar_lea.vmem %s5, %s439
      %p441 = pneg %p202
      %p442 = pneg %p199
      %p443 = pneg %p232
      %p444 = pneg %p229
      %s445 = smul.u32 8, %s26
      %p446 = scmp.lt.s32.totalorder %s25, 1
      %s447 = scalar_select %p446, %s25, 1
      %p448 = scmp.lt.s32.totalorder %s445, 7
      %s449 = scalar_select %p448, %s445, 7
      %p450 = scmp.lt.s32.totalorder %s27, 0
      %s451 = scalar_select %p450, %s27, 0
      %s452 = sadd.s32 %s451, %s449
      %s453 = smul.addr %s447, 8
      %s454 = sadd.s32 %s452, %s453
      %s455 = smul.addr %s454, 8
      %s456 = scalar_lea.vmem %s6, %s455
      %p457 = pneg %p260
      %p458 = pneg %p257
      %s459 = smul.u32 8, %s26
      %p460 = scmp.lt.s32.totalorder %s25, 1
      %s461 = scalar_select %p460, %s25, 1
      %p462 = scmp.lt.s32.totalorder %s459, 7
      %s463 = scalar_select %p462, %s459, 7
      %s464 = smul.addr %s461, 8
      %s465 = sadd.s32 %s463, %s464
      %s466 = smul.addr %s465, 8
      %s467 = scalar_lea.vmem %s7, %s466
      %p468 = pneg %p290
      %p469 = pneg %p287
      %p470 = scmp.lt.s32.totalorder %s25, 1
      %s471 = scalar_select %p470, %s25, 1
      %p472 = scmp.lt.s32.totalorder %s26, 0
      %s473 = scalar_select %p472, %s26, 0
      %p474 = scmp.lt.s32.totalorder %s27, 0
      %s475 = scalar_select %p474, %s27, 0
      %s476 = sadd.s32 %s475, %s473
      %s477 = sadd.s32 %s476, %s471
      %s478 = smul.addr %s477, 8
      %s479 = scalar_lea.vmem %s8, %s478
      %s480 = smul.u32 8, %s26
      %p481 = scmp.lt.s32.totalorder %s25, 1
      %s482 = scalar_select %p481, %s25, 1
      %p483 = scmp.lt.s32.totalorder %s480, 7
      %s484 = scalar_select %p483, %s480, 7
      %s485 = smul.addr %s482, 8
      %s486 = sadd.s32 %s484, %s485
      %s487 = smul.addr %s486, 8
      %s488 = scalar_lea.vmem %s0, %s487
      %s489 = smul.u32 8, %s26
      %p490 = scmp.lt.s32.totalorder %s25, 1
      %s491 = scalar_select %p490, %s25, 1
      %p492 = scmp.lt.s32.totalorder %s27, 0
      %s493 = scalar_select %p492, %s27, 0
      %s494 = smul.addr %s491, 4
      %s495 = sadd.s32 %s493, %s494
      %s496 = smul.addr %s495, 8
      %s497 = scalar_lea.vmem %s1, %s496
      %s498 = smul.u32 8, %s26
      %p499 = scmp.lt.s32.totalorder %s25, 1
      %s500 = scalar_select %p499, %s25, 1
      %p501 = scmp.lt.s32.totalorder %s498, 7
      %s502 = scalar_select %p501, %s498, 7
      %s503 = smul.addr %s500, 8
      %s504 = sadd.s32 %s502, %s503
      %s505 = smul.addr %s504, 8
      %s506 = scalar_lea.vmem %s2, %s505
      %s507 = smul.u32 8, %s26
      %p508 = scmp.lt.s32.totalorder %s25, 1
      %s509 = scalar_select %p508, %s25, 1
      %p510 = scmp.lt.s32.totalorder %s27, 0
      %s511 = scalar_select %p510, %s27, 0
      %s512 = sadd.s32 %s511, %s509
      %s513 = scalar_lea.vmem %s3, %s512
      %s514 = smul.u32 8, %s26
      %p515 = scmp.lt.s32.totalorder %s25, 1
      %s516 = scalar_select %p515, %s25, 1
      %p517 = scmp.lt.s32.totalorder %s514, 7
      %s518 = scalar_select %p517, %s514, 7
      %s519 = smul.addr %s516, 8
      %s520 = sadd.s32 %s518, %s519
      %s521 = smul.addr %s520, 8
      %s522 = scalar_lea.vmem %s4, %s521
      %s523 = smul.u32 8, %s26
      %p524 = scmp.lt.s32.totalorder %s25, 1
      %s525 = scalar_select %p524, %s25, 1
      %p526 = scmp.lt.s32.totalorder %s27, 0
      %s527 = scalar_select %p526, %s27, 0
      %s528 = sadd.s32 %s527, %s525
      %s529 = scalar_lea.vmem %s5, %s528
      %s530 = smul.u32 8, %s26
      %p531 = scmp.lt.s32.totalorder %s25, 1
      %s532 = scalar_select %p531, %s25, 1
      %p533 = scmp.lt.s32.totalorder %s530, 7
      %s534 = scalar_select %p533, %s530, 7
      %p535 = scmp.lt.s32.totalorder %s27, 0
      %s536 = scalar_select %p535, %s27, 0
      %s537 = sadd.s32 %s536, %s534
      %s538 = smul.addr %s532, 8
      %s539 = sadd.s32 %s537, %s538
      %s540 = smul.addr %s539, 8
      %s541 = scalar_lea.vmem %s6, %s540
      %s542 = smul.u32 8, %s26
      %s543 = smul.u32 8, %s26
      %p544 = scmp.lt.s32.totalorder %s25, 1
      %s545 = scalar_select %p544, %s25, 1
      %p546 = scmp.lt.s32.totalorder %s543, 7
      %s547 = scalar_select %p546, %s543, 7
      %s548 = smul.addr %s545, 8
      %s549 = sadd.s32 %s547, %s548
      %s550 = smul.addr %s549, 8
      %s551 = scalar_lea.vmem %s7, %s550
      %s552 = smul.u32 8, %s26
      %p553 = scmp.lt.s32.totalorder %s25, 1
      %s554 = scalar_select %p553, %s25, 1
      %p555 = scmp.lt.s32.totalorder %s26, 0
      %s556 = scalar_select %p555, %s26, 0
      %p557 = scmp.lt.s32.totalorder %s27, 0
      %s558 = scalar_select %p557, %s27, 0
      %s559 = sadd.s32 %s558, %s556
      %s560 = sadd.s32 %s559, %s554
      %s561 = smul.addr %s560, 8
      %s562 = scalar_lea.vmem %s8, %s561
      %v563 = vld [vmem:[%s488] sm:$0xff]
      %v564 = vld [vmem:[%s488 + $0x8] sm:$0xff]
      %v565 = vld [vmem:[%s488 + $0x10] sm:$0xff]
      %v566 = vld [vmem:[%s488 + $0x18] sm:$0xff]
      %v567 = vld [vmem:[%s488 + $0x20] sm:$0xff]
      %v568 = vld [vmem:[%s488 + $0x28] sm:$0xff]
      %v569 = vld [vmem:[%s488 + $0x30] sm:$0xff]
      %v570 = vld [vmem:[%s488 + $0x38] sm:$0xff]
      %v571 = vld [vmem:[%s497] sm:$0xff]
      %v572 = vld [vmem:[%s497 + $0x8] sm:$0xff]
      %v573 = vld [vmem:[%s497 + $0x10] sm:$0xff]
      %v574 = vld [vmem:[%s497 + $0x18] sm:$0xff]
      %vm575 = vcmask 261120
      %v577 = vsel %vm575, %v563, 0
      %v580 = vsel %vm575, %v564, 0
      %v583 = vsel %vm575, %v565, 0
      %v586 = vsel %vm575, %v566, 0
      %v589 = vsel %vm575, %v567, 0
      %v592 = vsel %vm575, %v568, 0
      %v595 = vsel %vm575, %v569, 0
      %v598 = vsel %vm575, %v570, 0
      %600 = vmatprep.subr.mxu0 0.0
      %601 = vmatpush1.msra.mxu0 %v571
      %602 = vmatprep.subr.mxu0 0.0
      %603 = vmatpush1.msra.mxu0 %v572
      %604 = vmatprep.subr.mxu0 0.0
      %605 = vmatpush1.msra.mxu0 %v573
      %606 = vmatprep.subr.mxu0 0.0
      %607 = vmatpush1.msra.mxu0 %v574
      %608 = vmatprep.subr.mxu0 0.0
      %609 = vmatpush1.msra.mxu0 0.0
      %610 = vmatprep.subr.mxu0 0.0
      %611 = vmatpush1.msra.mxu0 0.0
      %612 = vmatprep.subr.mxu0 0.0
      %613 = vmatpush1.msra.mxu0 0.0
      %614 = vmatprep.subr.mxu0 0.0
      %615 = vmatpush1.msra.mxu0 0.0
      %616 = vmatprep.subr.mxu0 0.0
      %617 = vmatpush1.msra.mxu0 0.0
      %618 = vmatprep.subr.mxu0 0.0
      %619 = vmatpush1.msra.mxu0 0.0
      %620 = vmatprep.subr.mxu0 0.0
      %621 = vmatpush1.msra.mxu0 0.0
      %622 = vmatprep.subr.mxu0 0.0
      %623 = vmatpush1.msra.mxu0 0.0
      %624 = vmatprep.subr.mxu0 0.0
      %625 = vmatpush1.msra.mxu0 0.0
      %626 = vmatprep.subr.mxu0 0.0
      %627 = vmatpush1.msra.mxu0 0.0
      %628 = vmatprep.subr.mxu0 0.0
      %629 = vmatpush1.msra.mxu0 0.0
      %630 = vmatprep.subr.mxu0 0.0
      %631 = vmatpush1.msra.mxu0 0.0
      %632 = vmatprep.subr.mxu0 0.0
      %633 = vmatpush1.msra.mxu0 0.0
      %634 = vmatprep.subr.mxu0 0.0
      %635 = vmatpush1.msra.mxu0 0.0
      %636 = vmatprep.subr.mxu0 0.0
      %637 = vmatpush1.msra.mxu0 0.0
      %638 = vmatprep.subr.mxu0 0.0
      %639 = vmatpush1.msra.mxu0 0.0
      %640 = vmatprep.subr.mxu0 0.0
      %641 = vmatpush1.msra.mxu0 0.0
      %642 = vmatprep.subr.mxu0 0.0
      %643 = vmatpush1.msra.mxu0 0.0
      %644 = vmatprep.subr.mxu0 0.0
      %645 = vmatpush1.msra.mxu0 0.0
      %646 = vmatprep.subr.mxu0 0.0
      %647 = vmatpush1.msra.mxu0 0.0
      %648 = vmatprep.subr.mxu0 0.0
      %649 = vmatpush1.msra.mxu0 0.0
      %650 = vmatprep.subr.mxu0 0.0
      %651 = vmatpush1.msra.mxu0 0.0
      %652 = vmatprep.subr.mxu0 0.0
      %653 = vmatpush1.msra.mxu0 0.0
      %654 = vmatprep.subr.mxu0 0.0
      %655 = vmatpush1.msra.mxu0 0.0
      %656 = vmatprep.subr.mxu0 0.0
      %657 = vmatpush1.msra.mxu0 0.0
      %658 = vmatprep.subr.mxu0 0.0
      %659 = vmatpush1.msra.mxu0 0.0
      %660 = vmatprep.subr.mxu0 0.0
      %661 = vmatpush1.msra.mxu0 0.0
      %662 = vmatprep.subr.mxu0 0.0
      %663 = vmatpush1.msra.mxu0 0.0
      %664 = vmatprep.mubr.f32.mxu0 0.0
      %665 = vmatmul.mubr.f32.gmra.mrb[0].mxu0 %v577
      %v666 = vpop.f32.mrb[0].mxu0
      %v667 = vadd.f32 0.0, %v666
      %v668 = vpop.f32.mrb[0].mxu0
      %669 = vmatprep.mubr.f32.mxu0 0.0
      %670 = vmatmul.mubr.f32.gmra.mrb[0].mxu0 %v580
      %v671 = vpop.f32.mrb[0].mxu0
      %v672 = vadd.f32 0.0, %v671
      %v673 = vpop.f32.mrb[0].mxu0
      %674 = vmatprep.mubr.f32.mxu0 0.0
      %675 = vmatmul.mubr.f32.gmra.mrb[0].mxu0 %v583
      %v676 = vpop.f32.mrb[0].mxu0
      %v677 = vadd.f32 0.0, %v676
      %v678 = vpop.f32.mrb[0].mxu0
      %679 = vmatprep.mubr.f32.mxu0 0.0
      %680 = vmatmul.mubr.f32.gmra.mrb[0].mxu0 %v586
      %v681 = vpop.f32.mrb[0].mxu0
      %v682 = vadd.f32 0.0, %v681
      %v683 = vpop.f32.mrb[0].mxu0
      %684 = vmatprep.mubr.f32.mxu0 0.0
      %685 = vmatmul.mubr.f32.gmra.mrb[0].mxu0 %v589
      %v686 = vpop.f32.mrb[0].mxu0
      %v687 = vadd.f32 0.0, %v686
      %v688 = vpop.f32.mrb[0].mxu0
      %689 = vmatprep.mubr.f32.mxu0 0.0
      %690 = vmatmul.mubr.f32.gmra.mrb[0].mxu0 %v592
      %v691 = vpop.f32.mrb[0].mxu0
      %v692 = vadd.f32 0.0, %v691
      %v693 = vpop.f32.mrb[0].mxu0
      %694 = vmatprep.mubr.f32.mxu0 0.0
      %695 = vmatmul.mubr.f32.gmra.mrb[0].mxu0 %v595
      %v696 = vpop.f32.mrb[0].mxu0
      %v697 = vadd.f32 0.0, %v696
      %v698 = vpop.f32.mrb[0].mxu0
      %699 = vmatprep.mubr.f32.mxu0 0.0
      %700 = vmatmul.mubr.f32.gmra.mrb[0].mxu0 %v598
      %v701 = vpop.f32.mrb[0].mxu0
      %v702 = vadd.f32 0.0, %v701
      %v703 = vpop.f32.mrb[0].mxu0
      %704 = vdwg.mxu0
      %v705 = vlaneseq
      %v706 = vand.u32 %v705, 127
      %s707 = smul.u32 %s27, 128
      %s708 = ssub.s32 64, %s707
      %v709 = vstv %s708
      %vm710 = vcmp.lt.s32.totalorder %v706, %v709
      %v711 = vld [vmem:[%s506] sm:$0xff]
      %v712 = vld [vmem:[%s506 + $0x8] sm:$0xff]
      %v713 = vld [vmem:[%s506 + $0x10] sm:$0xff]
      %v714 = vld [vmem:[%s506 + $0x18] sm:$0xff]
      %v715 = vld [vmem:[%s506 + $0x20] sm:$0xff]
      %v716 = vld [vmem:[%s506 + $0x28] sm:$0xff]
      %v717 = vld [vmem:[%s506 + $0x30] sm:$0xff]
      %v718 = vld [vmem:[%s506 + $0x38] sm:$0xff]
      %v719 = vld [vmem:[%s513] sm:$0x1]
      %721 = vset.pattern.permute.xlu0 0
      %722 = vperm.xlu0 %721, %v711
      %v723 = vpop.permute.xlu0 %722
      %726 = vset.pattern.permute.xlu0 0
      %727 = vperm.xlu0 %726, %v712
      %v728 = vpop.permute.xlu0 %727
      %731 = vset.pattern.permute.xlu0 0
      %732 = vperm.xlu0 %731, %v713
      %v733 = vpop.permute.xlu0 %732
      %736 = vset.pattern.permute.xlu0 0
      %737 = vperm.xlu0 %736, %v714
      %v738 = vpop.permute.xlu0 %737
      %741 = vset.pattern.permute.xlu0 0
      %742 = vperm.xlu0 %741, %v715
      %v743 = vpop.permute.xlu0 %742
      %746 = vset.pattern.permute.xlu0 0
      %747 = vperm.xlu0 %746, %v716
      %v748 = vpop.permute.xlu0 %747
      %751 = vset.pattern.permute.xlu0 0
      %752 = vperm.xlu0 %751, %v717
      %v753 = vpop.permute.xlu0 %752
      %756 = vset.pattern.permute.xlu0 0
      %757 = vperm.xlu0 %756, %v718
      %v758 = vpop.permute.xlu0 %757
      %v761 = vlaneseq
      %v762 = vshrl.u32 %v761, 7
      %v763 = vsub.s32 0, %v762
      %v764 = vrot.slane %v719, %v763
      %v766 = vadd.f32 %v723, %v764
      %v767 = vadd.f32 %v728, %v764
      %v768 = vadd.f32 %v733, %v764
      %v769 = vadd.f32 %v738, %v764
      %v770 = vadd.f32 %v743, %v764
      %v771 = vadd.f32 %v748, %v764
      %v772 = vadd.f32 %v753, %v764
      %v773 = vadd.f32 %v758, %v764
      %v774 = vmul.f32 %v667, 2.0
      %v775 = vmul.f32 %v672, 2.0
      %v776 = vmul.f32 %v677, 2.0
      %v777 = vmul.f32 %v682, 2.0
      %v778 = vmul.f32 %v687, 2.0
      %v779 = vmul.f32 %v692, 2.0
      %v780 = vmul.f32 %v697, 2.0
      %v781 = vmul.f32 %v702, 2.0
      %v782 = vsub.f32 %v766, %v774
      %v783 = vsub.f32 %v767, %v775
      %v784 = vsub.f32 %v768, %v776
      %v785 = vsub.f32 %v769, %v777
      %v786 = vsub.f32 %v770, %v778
      %v787 = vsub.f32 %v771, %v779
      %v788 = vsub.f32 %v772, %v780
      %v789 = vsub.f32 %v773, %v781
      %v790 = vsel %vm710, %v782, 1e+30
      %v791 = vsel %vm710, %v783, 1e+30
      %v792 = vsel %vm710, %v784, 1e+30
      %v793 = vsel %vm710, %v785, 1e+30
      %v794 = vsel %vm710, %v786, 1e+30
      %v795 = vsel %vm710, %v787, 1e+30
      %v796 = vsel %vm710, %v788, 1e+30
      %v797 = vsel %vm710, %v789, 1e+30
      %798 = vst [vmem:[%s541] sm:$0xff] %v790
      %799 = vst [vmem:[%s541 + $0x8] sm:$0xff] %v791
      %800 = vst [vmem:[%s541 + $0x10] sm:$0xff] %v792
      %801 = vst [vmem:[%s541 + $0x18] sm:$0xff] %v793
      %802 = vst [vmem:[%s541 + $0x20] sm:$0xff] %v794
      %803 = vst [vmem:[%s541 + $0x28] sm:$0xff] %v795
      %804 = vst [vmem:[%s541 + $0x30] sm:$0xff] %v796
      %805 = vst [vmem:[%s541 + $0x38] sm:$0xff] %v797
      %v806 = vld [vmem:[%s522] sm:$0xff]
      %v807 = vld [vmem:[%s522 + $0x8] sm:$0xff]
      %v808 = vld [vmem:[%s522 + $0x10] sm:$0xff]
      %v809 = vld [vmem:[%s522 + $0x18] sm:$0xff]
      %v810 = vld [vmem:[%s522 + $0x20] sm:$0xff]
      %v811 = vld [vmem:[%s522 + $0x28] sm:$0xff]
      %v812 = vld [vmem:[%s522 + $0x30] sm:$0xff]
      %v813 = vld [vmem:[%s522 + $0x38] sm:$0xff]
      %v814 = vld [vmem:[%s529] sm:$0x1]
      %816 = vset.pattern.permute.xlu0 0
      %817 = vperm.xlu0 %816, %v806
      %v818 = vpop.permute.xlu0 %817
      %821 = vset.pattern.permute.xlu0 0
      %822 = vperm.xlu0 %821, %v807
      %v823 = vpop.permute.xlu0 %822
      %826 = vset.pattern.permute.xlu0 0
      %827 = vperm.xlu0 %826, %v808
      %v828 = vpop.permute.xlu0 %827
      %831 = vset.pattern.permute.xlu0 0
      %832 = vperm.xlu0 %831, %v809
      %v833 = vpop.permute.xlu0 %832
      %836 = vset.pattern.permute.xlu0 0
      %837 = vperm.xlu0 %836, %v810
      %v838 = vpop.permute.xlu0 %837
      %841 = vset.pattern.permute.xlu0 0
      %842 = vperm.xlu0 %841, %v811
      %v843 = vpop.permute.xlu0 %842
      %846 = vset.pattern.permute.xlu0 0
      %847 = vperm.xlu0 %846, %v812
      %v848 = vpop.permute.xlu0 %847
      %851 = vset.pattern.permute.xlu0 0
      %852 = vperm.xlu0 %851, %v813
      %v853 = vpop.permute.xlu0 %852
      %v856 = vlaneseq
      %v857 = vshrl.u32 %v856, 7
      %v858 = vsub.s32 0, %v857
      %v859 = vrot.slane %v814, %v858
      %v861 = vmul.f32 %v818, %v859
      %v862 = vmul.f32 %v823, %v859
      %v863 = vmul.f32 %v828, %v859
      %v864 = vmul.f32 %v833, %v859
      %v865 = vmul.f32 %v838, %v859
      %v866 = vmul.f32 %v843, %v859
      %v867 = vmul.f32 %v848, %v859
      %v868 = vmul.f32 %v853, %v859
      %v869 = vmul.f32 %v667, %v861
      %v870 = vmul.f32 %v672, %v862
      %v871 = vmul.f32 %v677, %v863
      %v872 = vmul.f32 %v682, %v864
      %v873 = vmul.f32 %v687, %v865
      %v874 = vmul.f32 %v692, %v866
      %v875 = vmul.f32 %v697, %v867
      %v876 = vmul.f32 %v702, %v868
      %v877 = vsel %vm710, %v869, -1e+30
      %v878 = vsel %vm710, %v870, -1e+30
      %v879 = vsel %vm710, %v871, -1e+30
      %v880 = vsel %vm710, %v872, -1e+30
      %v881 = vsel %vm710, %v873, -1e+30
      %v882 = vsel %vm710, %v874, -1e+30
      %v883 = vsel %vm710, %v875, -1e+30
      %v884 = vsel %vm710, %v876, -1e+30
      %885 = vmax.xlane.f32.xlu0 %v877
      %v886 = vpop.xlane.xlu0 %885
      %887 = vmax.xlane.f32.xlu0 %v878
      %v888 = vpop.xlane.xlu0 %887
      %889 = vmax.xlane.f32.xlu0 %v879
      %v890 = vpop.xlane.xlu0 %889
      %891 = vmax.xlane.f32.xlu0 %v880
      %v892 = vpop.xlane.xlu0 %891
      %893 = vmax.xlane.f32.xlu0 %v881
      %v894 = vpop.xlane.xlu0 %893
      %895 = vmax.xlane.f32.xlu0 %v882
      %v896 = vpop.xlane.xlu0 %895
      %897 = vmax.xlane.f32.xlu0 %v883
      %v898 = vpop.xlane.xlu0 %897
      %899 = vmax.xlane.f32.xlu0 %v884
      %v900 = vpop.xlane.xlu0 %899
      %p901 = scmp.eq.s32.totalorder %s27, 0
      // Predicated region
      $region45: #{coarse_reg_forward.6} parent=43 // pred_check
        %p902 = pneg %p901
      $region46: #{coarse_reg_forward.6} parent=43 // pred_check_branch
        %904 = sbr.rel (%p902) target = $region48
      $region47: #{coarse_reg_forward.6} parent=43 // pred_region
        %vm905 = vcmask 7168
        %906 = vst.msk [vmem:[%s551] sm:$0xff] %vm905, -1e+30
        %907 = vst.msk [vmem:[%s551 + $0x8] sm:$0xff] %vm905, -1e+30
        %908 = vst.msk [vmem:[%s551 + $0x10] sm:$0xff] %vm905, -1e+30
        %909 = vst.msk [vmem:[%s551 + $0x18] sm:$0xff] %vm905, -1e+30
        %910 = vst.msk [vmem:[%s551 + $0x20] sm:$0xff] %vm905, -1e+30
        %911 = vst.msk [vmem:[%s551 + $0x28] sm:$0xff] %vm905, -1e+30
        %912 = vst.msk [vmem:[%s551 + $0x30] sm:$0xff] %vm905, -1e+30
        %913 = vst.msk [vmem:[%s551 + $0x38] sm:$0xff] %vm905, -1e+30
      $region48: #{coarse_reg_forward.6} parent=43 // pred_fallthru
        _
      %v914 = vld [vmem:[%s551] sm:$0xff]
      %v915 = vld [vmem:[%s551 + $0x8] sm:$0xff]
      %v916 = vld [vmem:[%s551 + $0x10] sm:$0xff]
      %v917 = vld [vmem:[%s551 + $0x18] sm:$0xff]
      %v918 = vld [vmem:[%s551 + $0x20] sm:$0xff]
      %v919 = vld [vmem:[%s551 + $0x28] sm:$0xff]
      %v920 = vld [vmem:[%s551 + $0x30] sm:$0xff]
      %v921 = vld [vmem:[%s551 + $0x38] sm:$0xff]
      %v922 = vmax.f32 %v914, %v886
      %v923 = vmax.f32 %v915, %v888
      %v924 = vmax.f32 %v916, %v890
      %v925 = vmax.f32 %v917, %v892
      %v926 = vmax.f32 %v918, %v894
      %v927 = vmax.f32 %v919, %v896
      %v928 = vmax.f32 %v920, %v898
      %v929 = vmax.f32 %v921, %v900
      %vm930 = vcmask 7168
      %931 = vst.msk [vmem:[%s551] sm:$0xff] %vm930, %v922
      %932 = vst.msk [vmem:[%s551 + $0x8] sm:$0xff] %vm930, %v923
      %933 = vst.msk [vmem:[%s551 + $0x10] sm:$0xff] %vm930, %v924
      %934 = vst.msk [vmem:[%s551 + $0x18] sm:$0xff] %vm930, %v925
      %935 = vst.msk [vmem:[%s551 + $0x20] sm:$0xff] %vm930, %v926
      %936 = vst.msk [vmem:[%s551 + $0x28] sm:$0xff] %vm930, %v927
      %937 = vst.msk [vmem:[%s551 + $0x30] sm:$0xff] %vm930, %v928
      %938 = vst.msk [vmem:[%s551 + $0x38] sm:$0xff] %vm930, %v929
      %v939 = vmax.f32 %v877, %v881
      %v940 = vmax.f32 %v878, %v882
      %v941 = vmax.f32 %v879, %v883
      %v942 = vmax.f32 %v880, %v884
      %v943 = vmax.f32 %v939, %v940
      %v944 = vmax.f32 %v941, %v942
      %v945 = vmax.f32 %v943, %v944
      %v946 = vrot.slane %v945, 4
      %v947 = vmax.f32 %v945, %v946
      %v948 = vrot.slane %v947, 2
      %v949 = vmax.f32 %v947, %v948
      %v950 = vrot.slane %v949, 1
      %v951 = vmax.f32 %v949, %v950
      %952 = vst [vmem:[%s562] sm:$0xff] %v951
      %s953 = smul.u32 8, %s26
      %p954 = scmp.lt.s32.totalorder %s25, 1
      %s955 = scalar_select %p954, %s25, 1
      %p956 = scmp.lt.s32.totalorder %s953, 7
      %s957 = scalar_select %p956, %s953, 7
      %p958 = scmp.lt.s32.totalorder %s27, 0
      %s959 = scalar_select %p958, %s27, 0
      %s960 = sadd.s32 %s959, %s957
      %s961 = smul.addr %s955, 8
      %s962 = sadd.s32 %s960, %s961
      %s963 = smul.addr %s962, 8
      %s964 = scalar_lea.vmem %s6, %s963
      %s965 = smul.u32 8, %s26
      %p966 = scmp.lt.s32.totalorder %s25, 1
      %s967 = scalar_select %p966, %s25, 1
      %p968 = scmp.lt.s32.totalorder %s965, 7
      %s969 = scalar_select %p968, %s965, 7
      %s970 = smul.addr %s967, 8
      %s971 = sadd.s32 %s969, %s970
      %s972 = smul.addr %s971, 8
      %s973 = scalar_lea.vmem %s7, %s972
      %p974 = scmp.lt.s32.totalorder %s25, 1
      %s975 = scalar_select %p974, %s25, 1
      %p976 = scmp.lt.s32.totalorder %s26, 0
      %s977 = scalar_select %p976, %s26, 0
      %p978 = scmp.lt.s32.totalorder %s27, 0
      %s979 = scalar_select %p978, %s27, 0
      %s980 = sadd.s32 %s979, %s977
      %s981 = sadd.s32 %s980, %s975
      %s982 = smul.addr %s981, 8
      %s983 = scalar_lea.vmem %s8, %s982
      // Predicated region
      $region49: #{coarse_reg_forward.6} parent=43 // pred_check
        %p984 = pneg %p229
      $region50: #{coarse_reg_forward.6} parent=43 // pred_check_branch
        %986 = sbr.rel (%p984) target = $region52
      $region51: #{coarse_reg_forward.6} parent=43 // pred_region
        %s987 = smul.u32 8, %s26
      $region52: #{coarse_reg_forward.6} parent=43 // pred_fallthru
        _
      // Predicated region
      $region53: #{coarse_reg_forward.6} parent=43 // pred_check
        %p988 = pneg %p257
      $region54: #{coarse_reg_forward.6} parent=43 // pred_check_branch
        %990 = sbr.rel (%p988) target = $region56
      $region55: #{coarse_reg_forward.6} parent=43 // pred_region
        %s991 = smul.u32 8, %s26
      $region56: #{coarse_reg_forward.6} parent=43 // pred_fallthru
        _
      // Predicated region
      $region57: #{coarse_reg_forward.6} parent=43 // pred_check
        %p992 = pneg %p287
      $region58: #{coarse_reg_forward.6} parent=43 // pred_check_branch
        %994 = sbr.rel (%p992) target = $region60
      $region59: #{coarse_reg_forward.6} parent=43 // pred_region
        _
      $region60: #{coarse_reg_forward.6} parent=43 // pred_fallthru
        _
    $region44: #{coarse_reg_forward.6} parent=5 // pred_fallthru
      _
    %p995 = scmp.le.s32.totalorder 2, %s15
    // Predicated region
    $region61: #{coarse_reg_forward.6} parent=5 // pred_check
      %p996 = pneg %p995
    $region62: #{coarse_reg_forward.6} parent=5 // pred_check_branch
      %998 = sbr.rel (%p996) target = $region64
    $region63: #{coarse_reg_forward.6} parent=5 // pred_region
      %s999 = ssub.s32 %s15, 2
      // Predicated region
      $region65: #{coarse_reg_forward.6} parent=63 // pred_check
        %p1000 = pneg %p235
      $region66: #{coarse_reg_forward.6} parent=63 // pred_check_branch
        %1002 = sbr.rel (%p1000) target = $region68
      $region67: #{coarse_reg_forward.6} parent=63 // pred_region
        %s1003 = smul.u32 8, %s29
        %p1004 = scmp.lt.s32.totalorder %s28, 1
        %s1005 = scalar_select %p1004, %s28, 1
        %p1006 = scmp.lt.s32.totalorder %s1003, 7
        %s1007 = scalar_select %p1006, %s1003, 7
        %p1008 = scmp.lt.s32.totalorder %s30, 0
        %s1009 = scalar_select %p1008, %s30, 0
        %s1010 = sadd.s32 %s1009, %s1007
        %s1011 = smul.addr %s1005, 8
        %s1012 = sadd.s32 %s1010, %s1011
        %s1013 = smul.addr %s1012, 8
        %s1014 = scalar_lea.vmem %s6, %s1013
      $region68: #{coarse_reg_forward.6} parent=63 // pred_fallthru
        _
      // Predicated region
      $region69: #{coarse_reg_forward.6} parent=63 // pred_check
        %p1015 = pneg %p263
      $region70: #{coarse_reg_forward.6} parent=63 // pred_check_branch
        %1017 = sbr.rel (%p1015) target = $region72
      $region71: #{coarse_reg_forward.6} parent=63 // pred_region
        %s1018 = smul.u32 8, %s29
        %p1019 = scmp.lt.s32.totalorder %s28, 1
        %s1020 = scalar_select %p1019, %s28, 1
        %p1021 = scmp.lt.s32.totalorder %s1018, 7
        %s1022 = scalar_select %p1021, %s1018, 7
        %s1023 = smul.addr %s1020, 8
        %s1024 = sadd.s32 %s1022, %s1023
        %s1025 = smul.addr %s1024, 8
        %s1026 = scalar_lea.vmem %s7, %s1025
      $region72: #{coarse_reg_forward.6} parent=63 // pred_fallthru
        _
      // Predicated region
      $region73: #{coarse_reg_forward.6} parent=63 // pred_check
        %p1027 = pneg %p293
      $region74: #{coarse_reg_forward.6} parent=63 // pred_check_branch
        %1029 = sbr.rel (%p1027) target = $region76
      $region75: #{coarse_reg_forward.6} parent=63 // pred_region
        %p1030 = scmp.lt.s32.totalorder %s28, 1
        %s1031 = scalar_select %p1030, %s28, 1
        %p1032 = scmp.lt.s32.totalorder %s29, 0
        %s1033 = scalar_select %p1032, %s29, 0
        %p1034 = scmp.lt.s32.totalorder %s30, 0
        %s1035 = scalar_select %p1034, %s30, 0
        %s1036 = sadd.s32 %s1035, %s1033
        %s1037 = sadd.s32 %s1036, %s1031
        %s1038 = smul.addr %s1037, 8
        %s1039 = scalar_lea.vmem %s8, %s1038
      $region76: #{coarse_reg_forward.6} parent=63 // pred_fallthru
        _
    $region64: #{coarse_reg_forward.6} parent=5 // pred_fallthru
      _
  $region6: #{coarse_reg_forward.6} parent=0 // loop_footer
    %s19 = sadd.s32 1, %s15
  $region7: #{coarse_reg_forward.6} parent=0 // loop_footer_branch
    %14 = sbr.rel target = $region3
  $region8: #{coarse_reg_forward.6} parent=0 // loop_exit
    _

// kernel: coarse_reg_forward.10
$region0: #{coarse_reg_forward.10}
  #allocation0 [shape = 'u32[]', space=smem, size = 0x4, offset = 0x4, fixed_abs, tag = 'smem constant byte address 0x4 - core index']
  #allocation1 [shape = 'u32[144,128]{1,0:T(1,128)}', space=vmem, size = 0x12000, scoped, tag = 'internal scratch']
  %s0 = inlined_call_operand.vmem [shape: f32[2,512,80], index: 0, kind: input, shape index: {}]
  %s1 = inlined_call_operand.vmem [shape: f32[64,80], index: 1, kind: input, shape index: {}]
  %s2 = inlined_call_operand.vmem [shape: f32[64,1], index: 2, kind: input, shape index: {}]
  %s3 = inlined_call_operand.vmem [shape: f32[64,64], index: 3, kind: input, shape index: {}]
  %s4 = inlined_call_operand.vmem [shape: f32[64,1], index: 4, kind: input, shape index: {}]
  %s5 = inlined_call_operand.vmem [shape: f32[64,64], index: 5, kind: input, shape index: {}]
  %s6 = inlined_call_operand.vmem [shape: f32[64,1], index: 6, kind: input, shape index: {}]
  %s7 = inlined_call_operand.vmem [shape: f32[2,64,512], index: 7, kind: output, shape index: {}]
  %s8 = sld [smem:[#allocation0]]
  $region61: #{coarse_reg_forward.10} parent=0
    _
  %s10 = ssub.s32 1, %s8
  %s11 = scalar_select 0, %s10, %s8
  loop: start=0, step=1, limit=4
  $region2: #{coarse_reg_forward.10} parent=0 // loop_pre_header
    _
  $region3: #{coarse_reg_forward.10} parent=0 // loop_header
    %s13 = sphi 0, %s17
    %p14 = scmp.ge.s32.totalorder %s13, 4
    %s20 = sphi 0, %s32
    %s21 = sphi 0, %s28
    %s22 = sphi 0, %s20
    %s23 = sphi 0, %s21
    %s24 = sphi 0, %s22
    %s25 = sphi 0, %s23
    %s37 = sphi 0, %s39
    %s40 = sphi 0, %s37
    %s41 = sphi 0, %s40
    %s57 = sphi 0, %s41
    %s61 = sphi 0, %s61
    %s63 = sphi 0, %s61
    %s64 = sphi 0, %s63
    %s78 = sphi 0, %s64
    %s82 = sphi 0, %s82
    %s84 = sphi 0, %s82
    %s85 = sphi 0, %s84
    %s99 = sphi 0, %s85
    %s103 = sphi 0, %s103
    %s105 = sphi 0, %s103
    %s106 = sphi 0, %s105
    %s120 = sphi 0, %s106
    %s124 = sphi 0, %s124
    %s126 = sphi 0, %s124
    %s127 = sphi 0, %s126
    %s141 = sphi 0, %s127
    %s145 = sphi 0, %s145
    %s147 = sphi 0, %s145
    %s148 = sphi 0, %s147
    %s162 = sphi 0, %s148
    %s166 = sphi 0, %s166
    %s168 = sphi 0, %s166
    %s169 = sphi 0, %s168
    %s183 = sphi 0, %s169
    %s191 = sphi 0, %s193
    %s194 = sphi 0, %s191
    %s195 = sphi 0, %s194
    %s211 = sphi 0, %s195
  $region4: #{coarse_reg_forward.10} parent=0 // loop_header_branch
    %16 = sbr.rel (%p14) target = $region8
  $region5: #{coarse_reg_forward.10} parent=0 // loop_body
    %s18 = ssub.s32 %s13, 1
    %s19 = ssub.s32 %s13, 2
    %s26 = sadd.s32 1, %s21
    %p27 = scmp.ge.s32.totalorder %s26, 1
    %s28 = scalar_select %p27, 0, %s26
    %s29 = sadd.s32 1, %s20
    %s30 = scalar_select %p27, %s29, %s20
    %p31 = scmp.ge.s32.totalorder %s30, 2
    %s32 = scalar_select %p31, 0, %s30
    %s33 = ssub.s32 %s20, %s32
    %s34 = ssub.s32 %s21, %s28
    %s35 = sor.u32 %s33, %s34
    %p36 = scmp.eq.s32.totalorder %s35, 0
    %s38 = sadd.s32 %s37, 1
    %s39 = scalar_select %p36, %s37, %s38
    %p42 = pneg %p36
    %p43 = scmp.eq.s32.totalorder %s13, 1
    %p44 = por %p42, %p43
    %p45 = scmp.ne.s32.totalorder %s37, %s40
    %p46 = scmp.eq.s32.totalorder %s13, 0
    %p47 = por %p45, %p46
    %p48 = scmp.ne.s32.totalorder %s37, %s40
    %p49 = scmp.eq.s32.totalorder %s18, 1
    %p50 = por %p48, %p49
    %p51 = scmp.ne.s32.totalorder %s40, %s41
    %p52 = scmp.eq.s32.totalorder %s18, 0
    %p53 = por %p51, %p52
    %p54 = scmp.ne.s32.totalorder %s40, %s41
    %p55 = scmp.eq.s32.totalorder %s19, 1
    %p56 = por %p54, %p55
    %p58 = scmp.ne.s32.totalorder %s41, %s57
    %p59 = scmp.eq.s32.totalorder %s19, 0
    %p60 = por %p58, %p59
    %s62 = sadd.s32 %s61, 1
    %p65 = scmp.eq.s32.totalorder %s13, 1
    %p66 = scmp.ne.s32.totalorder %s61, %s63
    %p67 = scmp.eq.s32.totalorder %s13, 0
    %p68 = por %p66, %p67
    %p69 = scmp.ne.s32.totalorder %s61, %s63
    %p70 = scmp.eq.s32.totalorder %s18, 1
    %p71 = por %p69, %p70
    %p72 = scmp.ne.s32.totalorder %s63, %s64
    %p73 = scmp.eq.s32.totalorder %s18, 0
    %p74 = por %p72, %p73
    %p75 = scmp.ne.s32.totalorder %s63, %s64
    %p76 = scmp.eq.s32.totalorder %s19, 1
    %p77 = por %p75, %p76
    %p79 = scmp.ne.s32.totalorder %s64, %s78
    %p80 = scmp.eq.s32.totalorder %s19, 0
    %p81 = por %p79, %p80
    %s83 = sadd.s32 %s82, 1
    %p86 = scmp.eq.s32.totalorder %s13, 1
    %p87 = scmp.ne.s32.totalorder %s82, %s84
    %p88 = scmp.eq.s32.totalorder %s13, 0
    %p89 = por %p87, %p88
    %p90 = scmp.ne.s32.totalorder %s82, %s84
    %p91 = scmp.eq.s32.totalorder %s18, 1
    %p92 = por %p90, %p91
    %p93 = scmp.ne.s32.totalorder %s84, %s85
    %p94 = scmp.eq.s32.totalorder %s18, 0
    %p95 = por %p93, %p94
    %p96 = scmp.ne.s32.totalorder %s84, %s85
    %p97 = scmp.eq.s32.totalorder %s19, 1
    %p98 = por %p96, %p97
    %p100 = scmp.ne.s32.totalorder %s85, %s99
    %p101 = scmp.eq.s32.totalorder %s19, 0
    %p102 = por %p100, %p101
    %s104 = sadd.s32 %s103, 1
    %p107 = scmp.eq.s32.totalorder %s13, 1
    %p108 = scmp.ne.s32.totalorder %s103, %s105
    %p109 = scmp.eq.s32.totalorder %s13, 0
    %p110 = por %p108, %p109
    %p111 = scmp.ne.s32.totalorder %s103, %s105
    %p112 = scmp.eq.s32.totalorder %s18, 1
    %p113 = por %p111, %p112
    %p114 = scmp.ne.s32.totalorder %s105, %s106
    %p115 = scmp.eq.s32.totalorder %s18, 0
    %p116 = por %p114, %p115
    %p117 = scmp.ne.s32.totalorder %s105, %s106
    %p118 = scmp.eq.s32.totalorder %s19, 1
    %p119 = por %p117, %p118
    %p121 = scmp.ne.s32.totalorder %s106, %s120
    %p122 = scmp.eq.s32.totalorder %s19, 0
    %p123 = por %p121, %p122
    %s125 = sadd.s32 %s124, 1
    %p128 = scmp.eq.s32.totalorder %s13, 1
    %p129 = scmp.ne.s32.totalorder %s124, %s126
    %p130 = scmp.eq.s32.totalorder %s13, 0
    %p131 = por %p129, %p130
    %p132 = scmp.ne.s32.totalorder %s124, %s126
    %p133 = scmp.eq.s32.totalorder %s18, 1
    %p134 = por %p132, %p133
    %p135 = scmp.ne.s32.totalorder %s126, %s127
    %p136 = scmp.eq.s32.totalorder %s18, 0
    %p137 = por %p135, %p136
    %p138 = scmp.ne.s32.totalorder %s126, %s127
    %p139 = scmp.eq.s32.totalorder %s19, 1
    %p140 = por %p138, %p139
    %p142 = scmp.ne.s32.totalorder %s127, %s141
    %p143 = scmp.eq.s32.totalorder %s19, 0
    %p144 = por %p142, %p143
    %s146 = sadd.s32 %s145, 1
    %p149 = scmp.eq.s32.totalorder %s13, 1
    %p150 = scmp.ne.s32.totalorder %s145, %s147
    %p151 = scmp.eq.s32.totalorder %s13, 0
    %p152 = por %p150, %p151
    %p153 = scmp.ne.s32.totalorder %s145, %s147
    %p154 = scmp.eq.s32.totalorder %s18, 1
    %p155 = por %p153, %p154
    %p156 = scmp.ne.s32.totalorder %s147, %s148
    %p157 = scmp.eq.s32.totalorder %s18, 0
    %p158 = por %p156, %p157
    %p159 = scmp.ne.s32.totalorder %s147, %s148
    %p160 = scmp.eq.s32.totalorder %s19, 1
    %p161 = por %p159, %p160
    %p163 = scmp.ne.s32.totalorder %s148, %s162
    %p164 = scmp.eq.s32.totalorder %s19, 0
    %p165 = por %p163, %p164
    %s167 = sadd.s32 %s166, 1
    %p170 = scmp.eq.s32.totalorder %s13, 1
    %p171 = scmp.ne.s32.totalorder %s166, %s168
    %p172 = scmp.eq.s32.totalorder %s13, 0
    %p173 = por %p171, %p172
    %p174 = scmp.ne.s32.totalorder %s166, %s168
    %p175 = scmp.eq.s32.totalorder %s18, 1
    %p176 = por %p174, %p175
    %p177 = scmp.ne.s32.totalorder %s168, %s169
    %p178 = scmp.eq.s32.totalorder %s18, 0
    %p179 = por %p177, %p178
    %p180 = scmp.ne.s32.totalorder %s168, %s169
    %p181 = scmp.eq.s32.totalorder %s19, 1
    %p182 = por %p180, %p181
    %p184 = scmp.ne.s32.totalorder %s169, %s183
    %p185 = scmp.eq.s32.totalorder %s19, 0
    %p186 = por %p184, %p185
    %s187 = ssub.s32 %s20, %s32
    %s188 = ssub.s32 %s21, %s28
    %s189 = sor.u32 %s187, %s188
    %p190 = scmp.eq.s32.totalorder %s189, 0
    %s192 = sadd.s32 %s191, 1
    %s193 = scalar_select %p190, %s191, %s192
    %p196 = pneg %p190
    %p197 = scmp.eq.s32.totalorder %s13, 1
    %p198 = por %p196, %p197
    %p199 = scmp.ne.s32.totalorder %s191, %s194
    %p200 = scmp.eq.s32.totalorder %s13, 0
    %p201 = por %p199, %p200
    %p202 = scmp.ne.s32.totalorder %s191, %s194
    %p203 = scmp.eq.s32.totalorder %s18, 1
    %p204 = por %p202, %p203
    %p205 = scmp.ne.s32.totalorder %s194, %s195
    %p206 = scmp.eq.s32.totalorder %s18, 0
    %p207 = por %p205, %p206
    %p208 = scmp.ne.s32.totalorder %s194, %s195
    %p209 = scmp.eq.s32.totalorder %s19, 1
    %p210 = por %p208, %p209
    %p212 = scmp.ne.s32.totalorder %s195, %s211
    %p213 = scmp.eq.s32.totalorder %s19, 0
    %p214 = por %p212, %p213
    %p215 = scmp.le.s32.totalorder 1, %s13
    %p216 = scmp.lt.s32.totalorder %s13, 3
    %p217 = pnand %p215, %p216
    %p218 = pneg %p217
    // Predicated region
    $region9: #{coarse_reg_forward.10} parent=5 // pred_check
      _
    $region10: #{coarse_reg_forward.10} parent=5 // pred_check_branch
      %220 = sbr.rel (%p217) target = $region12
    $region11: #{coarse_reg_forward.10} parent=5 // pred_region
      %s221 = ssub.s32 %s13, 1
      // Predicated region
      $region13: #{coarse_reg_forward.10} parent=11 // pred_check
        %p222 = pneg %p74
      $region14: #{coarse_reg_forward.10} parent=11 // pred_check_branch
        %224 = sbr.rel (%p222) target = $region16
      $region15: #{coarse_reg_forward.10} parent=11 // pred_region
        _
      $region16: #{coarse_reg_forward.10} parent=11 // pred_fallthru
        _
      // Predicated region
      $region17: #{coarse_reg_forward.10} parent=11 // pred_check
        %p225 = pneg %p95
      $region18: #{coarse_reg_forward.10} parent=11 // pred_check_branch
        %227 = sbr.rel (%p225) target = $region20
      $region19: #{coarse_reg_forward.10} parent=11 // pred_region
        _
      $region20: #{coarse_reg_forward.10} parent=11 // pred_fallthru
        _
      // Predicated region
      $region21: #{coarse_reg_forward.10} parent=11 // pred_check
        %p228 = pneg %p116
      $region22: #{coarse_reg_forward.10} parent=11 // pred_check_branch
        %230 = sbr.rel (%p228) target = $region24
      $region23: #{coarse_reg_forward.10} parent=11 // pred_region
        _
      $region24: #{coarse_reg_forward.10} parent=11 // pred_fallthru
        _
      // Predicated region
      $region25: #{coarse_reg_forward.10} parent=11 // pred_check
        %p231 = pneg %p137
      $region26: #{coarse_reg_forward.10} parent=11 // pred_check_branch
        %233 = sbr.rel (%p231) target = $region28
      $region27: #{coarse_reg_forward.10} parent=11 // pred_region
        _
      $region28: #{coarse_reg_forward.10} parent=11 // pred_fallthru
        _
      // Predicated region
      $region29: #{coarse_reg_forward.10} parent=11 // pred_check
        %p234 = pneg %p158
      $region30: #{coarse_reg_forward.10} parent=11 // pred_check_branch
        %236 = sbr.rel (%p234) target = $region32
      $region31: #{coarse_reg_forward.10} parent=11 // pred_region
        _
      $region32: #{coarse_reg_forward.10} parent=11 // pred_fallthru
        _
      // Predicated region
      $region33: #{coarse_reg_forward.10} parent=11 // pred_check
        %p237 = pneg %p179
      $region34: #{coarse_reg_forward.10} parent=11 // pred_check_branch
        %239 = sbr.rel (%p237) target = $region36
      $region35: #{coarse_reg_forward.10} parent=11 // pred_region
        _
      $region36: #{coarse_reg_forward.10} parent=11 // pred_fallthru
        _
    $region12: #{coarse_reg_forward.10} parent=5 // pred_fallthru
      _
    %p240 = scmp.lt.s32.totalorder %s13, 2
    // Predicated region
    $region37: #{coarse_reg_forward.10} parent=5 // pred_check
      %p241 = pneg %p240
    $region38: #{coarse_reg_forward.10} parent=5 // pred_check_branch
      %243 = sbr.rel (%p241) target = $region40
    $region39: #{coarse_reg_forward.10} parent=5 // pred_region
      // Predicated region
      $region41: #{coarse_reg_forward.10} parent=39 // pred_check
        %p244 = pneg %p47
      $region42: #{coarse_reg_forward.10} parent=39 // pred_check_branch
        %246 = sbr.rel (%p244) target = $region44
      $region43: #{coarse_reg_forward.10} parent=39 // pred_region
        %s247 = smul.u32 64, %s21
        %p248 = scmp.lt.s32.totalorder %s20, 1
        %s249 = scalar_select %p248, %s20, 1
        %p250 = scmp.lt.s32.totalorder %s247, 63
        %s251 = scalar_select %p250, %s247, 63
        %s252 = smul.addr %s249, 64
        %s253 = sadd.s32 %s251, %s252
        %s254 = smul.addr %s253, 8
        %s255 = scalar_lea.vmem %s0, %s254
        %s256 = smul.u32 64, %s21
      $region44: #{coarse_reg_forward.10} parent=39 // pred_fallthru
        _
    $region40: #{coarse_reg_forward.10} parent=5 // pred_fallthru
      _
    %p257 = scmp.le.s32.totalorder 1, %s13
    %p258 = scmp.lt.s32.totalorder %s13, 3
    %p259 = pnand %p257, %p258
    %p260 = pneg %p259
    // Predicated region
    $region45: #{coarse_reg_forward.10} parent=5 // pred_check
      _
    $region46: #{coarse_reg_forward.10} parent=5 // pred_check_branch
      %262 = sbr.rel (%p259) target = $region48
    $region47: #{coarse_reg_forward.10} parent=5 // pred_region
      %s263 = ssub.s32 %s13, 1
      %s264 = smul.u32 64, %s23
      %p265 = scmp.lt.s32.totalorder %s22, 1
      %s266 = scalar_select %p265, %s22, 1
      %p267 = scmp.lt.s32.totalorder %s264, 63
      %s268 = scalar_select %p267, %s264, 63
      %s269 = smul.addr %s266, 64
      %s270 = sadd.s32 %s268, %s269
      %s271 = smul.addr %s270, 8
      %s272 = scalar_lea.vmem %s0, %s271
      %p273 = pneg %p53
      %p274 = pneg %p50
      %p275 = pneg %p74
      %p276 = pneg %p71
      %p277 = pneg %p95
      %p278 = pneg %p92
      %p279 = pneg %p116
      %p280 = pneg %p113
      %p281 = pneg %p137
      %p282 = pneg %p134
      %p283 = pneg %p158
      %p284 = pneg %p155
      %p285 = pneg %p179
      %p286 = pneg %p176
      %p287 = pneg %p207
      %p288 = pneg %p204
      %s289 = smul.u32 4, %s23
      %p290 = scmp.lt.s32.totalorder %s22, 1
      %s291 = scalar_select %p290, %s22, 1
      %p292 = scmp.lt.s32.totalorder %s289, 3
      %s293 = scalar_select %p292, %s289, 3
      %s294 = smul.addr %s291, 32
      %s295 = sadd.s32 %s293, %s294
      %s296 = smul.addr %s295, 8
      %s297 = scalar_lea.vmem %s7, %s296
      %s298 = smul.u32 64, %s23
      %p299 = scmp.lt.s32.totalorder %s22, 1
      %s300 = scalar_select %p299, %s22, 1
      %p301 = scmp.lt.s32.totalorder %s298, 63
      %s302 = scalar_select %p301, %s298, 63
      %s303 = smul.addr %s300, 64
      %s304 = sadd.s32 %s302, %s303
      %s305 = smul.addr %s304, 8
      %s306 = scalar_lea.vmem %s0, %s305
      %s307 = smul.u32 64, %s23
      %s308 = smul.u32 4, %s23
      %p309 = scmp.lt.s32.totalorder %s22, 1
      %s310 = scalar_select %p309, %s22, 1
      %p311 = scmp.lt.s32.totalorder %s308, 3
      %s312 = scalar_select %p311, %s308, 3
      %s313 = smul.addr %s310, 32
      %s314 = sadd.s32 %s312, %s313
      %s315 = smul.addr %s314, 8
      %s316 = scalar_lea.vmem %s7, %s315
      %s317 = smul.u32 4, %s23
      %v318 = vld [vmem:[%s306] sm:$0xff]
      %v319 = vld [vmem:[%s306 + $0x8] sm:$0xff]
      %v320 = vld [vmem:[%s306 + $0x10] sm:$0xff]
      %v321 = vld [vmem:[%s306 + $0x18] sm:$0xff]
      %v322 = vld [vmem:[%s306 + $0x20] sm:$0xff]
      %v323 = vld [vmem:[%s306 + $0x28] sm:$0xff]
      %v324 = vld [vmem:[%s306 + $0x30] sm:$0xff]
      %v325 = vld [vmem:[%s306 + $0x38] sm:$0xff]
      %v326 = vld [vmem:[%s306 + $0x40] sm:$0xff]
      %v327 = vld [vmem:[%s306 + $0x48] sm:$0xff]
      %v328 = vld [vmem:[%s306 + $0x50] sm:$0xff]
      %v329 = vld [vmem:[%s306 + $0x58] sm:$0xff]
      %v330 = vld [vmem:[%s306 + $0x60] sm:$0xff]
      %v331 = vld [vmem:[%s306 + $0x68] sm:$0xff]
      %v332 = vld [vmem:[%s306 + $0x70] sm:$0xff]
      %v333 = vld [vmem:[%s306 + $0x78] sm:$0xff]
      %v334 = vld [vmem:[%s306 + $0x80] sm:$0xff]
      %v335 = vld [vmem:[%s306 + $0x88] sm:$0xff]
      %v336 = vld [vmem:[%s306 + $0x90] sm:$0xff]
      %v337 = vld [vmem:[%s306 + $0x98] sm:$0xff]
      %v338 = vld [vmem:[%s306 + $0xa0] sm:$0xff]
      %v339 = vld [vmem:[%s306 + $0xa8] sm:$0xff]
      %v340 = vld [vmem:[%s306 + $0xb0] sm:$0xff]
      %v341 = vld [vmem:[%s306 + $0xb8] sm:$0xff]
      %v342 = vld [vmem:[%s306 + $0xc0] sm:$0xff]
      %v343 = vld [vmem:[%s306 + $0xc8] sm:$0xff]
      %v344 = vld [vmem:[%s306 + $0xd0] sm:$0xff]
      %v345 = vld [vmem:[%s306 + $0xd8] sm:$0xff]
      %v346 = vld [vmem:[%s306 + $0xe0] sm:$0xff]
      %v347 = vld [vmem:[%s306 + $0xe8] sm:$0xff]
      %v348 = vld [vmem:[%s306 + $0xf0] sm:$0xff]
      %v349 = vld [vmem:[%s306 + $0xf8] sm:$0xff]
      %v350 = vld [vmem:[%s306 + $0x100] sm:$0xff]
      %v351 = vld [vmem:[%s306 + $0x108] sm:$0xff]
      %v352 = vld [vmem:[%s306 + $0x110] sm:$0xff]
      %v353 = vld [vmem:[%s306 + $0x118] sm:$0xff]
      %v354 = vld [vmem:[%s306 + $0x120] sm:$0xff]
      %v355 = vld [vmem:[%s306 + $0x128] sm:$0xff]
      %v356 = vld [vmem:[%s306 + $0x130] sm:$0xff]
      %v357 = vld [vmem:[%s306 + $0x138] sm:$0xff]
      %v358 = vld [vmem:[%s306 + $0x140] sm:$0xff]
      %v359 = vld [vmem:[%s306 + $0x148] sm:$0xff]
      %v360 = vld [vmem:[%s306 + $0x150] sm:$0xff]
      %v361 = vld [vmem:[%s306 + $0x158] sm:$0xff]
      %v362 = vld [vmem:[%s306 + $0x160] sm:$0xff]
      %v363 = vld [vmem:[%s306 + $0x168] sm:$0xff]
      %v364 = vld [vmem:[%s306 + $0x170] sm:$0xff]
      %v365 = vld [vmem:[%s306 + $0x178] sm:$0xff]
      %v366 = vld [vmem:[%s306 + $0x180] sm:$0xff]
      %v367 = vld [vmem:[%s306 + $0x188] sm:$0xff]
      %v368 = vld [vmem:[%s306 + $0x190] sm:$0xff]
      %v369 = vld [vmem:[%s306 + $0x198] sm:$0xff]
      %v370 = vld [vmem:[%s306 + $0x1a0] sm:$0xff]
      %v371 = vld [vmem:[%s306 + $0x1a8] sm:$0xff]
      %v372 = vld [vmem:[%s306 + $0x1b0] sm:$0xff]
      %v373 = vld [vmem:[%s306 + $0x1b8] sm:$0xff]
      %v374 = vld [vmem:[%s306 + $0x1c0] sm:$0xff]
      %v375 = vld [vmem:[%s306 + $0x1c8] sm:$0xff]
      %v376 = vld [vmem:[%s306 + $0x1d0] sm:$0xff]
      %v377 = vld [vmem:[%s306 + $0x1d8] sm:$0xff]
      %v378 = vld [vmem:[%s306 + $0x1e0] sm:$0xff]
      %v379 = vld [vmem:[%s306 + $0x1e8] sm:$0xff]
      %v380 = vld [vmem:[%s306 + $0x1f0] sm:$0xff]
      %v381 = vld [vmem:[%s306 + $0x1f8] sm:$0xff]
      %v382 = vld [vmem:[%s1] sm:$0xff]
      %v383 = vld [vmem:[%s1 + $0x8] sm:$0xff]
      %v384 = vld [vmem:[%s1 + $0x10] sm:$0xff]
      %v385 = vld [vmem:[%s1 + $0x18] sm:$0xff]
      %v386 = vld [vmem:[%s1 + $0x20] sm:$0xff]
      %v387 = vld [vmem:[%s1 + $0x28] sm:$0xff]
      %v388 = vld [vmem:[%s1 + $0x30] sm:$0xff]
      %v389 = vld [vmem:[%s1 + $0x38] sm:$0xff]
      %v390 = vld [vmem:[%s2] sm:$0xff]
      %v391 = vld [vmem:[%s2 + $0x8] sm:$0xff]
      %v392 = vld [vmem:[%s2 + $0x10] sm:$0xff]
      %v393 = vld [vmem:[%s2 + $0x18] sm:$0xff]
      %v394 = vld [vmem:[%s2 + $0x20] sm:$0xff]
      %v395 = vld [vmem:[%s2 + $0x28] sm:$0xff]
      %v396 = vld [vmem:[%s2 + $0x30] sm:$0xff]
      %v397 = vld [vmem:[%s2 + $0x38] sm:$0xff]
      %399 = vset.pattern.permute.xlu0 0
      %400 = vperm.xlu0 %399, %v390
      %v401 = vpop.permute.xlu0 %400
      %404 = vset.pattern.permute.xlu0 0
      %405 = vperm.xlu0 %404, %v391
      %v406 = vpop.permute.xlu0 %405
      %409 = vset.pattern.permute.xlu0 0
      %410 = vperm.xlu0 %409, %v392
      %v411 = vpop.permute.xlu0 %410
      %414 = vset.pattern.permute.xlu0 0
      %415 = vperm.xlu0 %414, %v393
      %v416 = vpop.permute.xlu0 %415
      %419 = vset.pattern.permute.xlu0 0
      %420 = vperm.xlu0 %419, %v394
      %v421 = vpop.permute.xlu0 %420
      %424 = vset.pattern.permute.xlu0 0
      %425 = vperm.xlu0 %424, %v395
      %v426 = vpop.permute.xlu0 %425
      %429 = vset.pattern.permute.xlu0 0
      %430 = vperm.xlu0 %429, %v396
      %v431 = vpop.permute.xlu0 %430
      %434 = vset.pattern.permute.xlu0 0
      %435 = vperm.xlu0 %434, %v397
      %v436 = vpop.permute.xlu0 %435
      %vm438 = vcmask 654336
      %v440 = vsel %vm438, %v382, 0
      %v443 = vsel %vm438, %v383, 0
      %v446 = vsel %vm438, %v384, 0
      %v449 = vsel %vm438, %v385, 0
      %v452 = vsel %vm438, %v386, 0
      %v455 = vsel %vm438, %v387, 0
      %v458 = vsel %vm438, %v388, 0
      %v461 = vsel %vm438, %v389, 0
      %v464 = vsel %vm438, %v318, 0
      %v467 = vsel %vm438, %v319, 0
      %v470 = vsel %vm438, %v320, 0
      %v473 = vsel %vm438, %v321, 0
      %v476 = vsel %vm438, %v322, 0
      %v479 = vsel %vm438, %v323, 0
      %v482 = vsel %vm438, %v324, 0
      %v485 = vsel %vm438, %v325, 0
      %v488 = vsel %vm438, %v326, 0
      %v491 = vsel %vm438, %v327, 0
      %v494 = vsel %vm438, %v328, 0
      %v497 = vsel %vm438, %v329, 0
      %v500 = vsel %vm438, %v330, 0
      %v503 = vsel %vm438, %v331, 0
      %v506 = vsel %vm438, %v332, 0
      %v509 = vsel %vm438, %v333, 0
      %v512 = vsel %vm438, %v334, 0
      %v515 = vsel %vm438, %v335, 0
      %v518 = vsel %vm438, %v336, 0
      %v521 = vsel %vm438, %v337, 0
      %v524 = vsel %vm438, %v338, 0
      %v527 = vsel %vm438, %v339, 0
      %v530 = vsel %vm438, %v340, 0
      %v533 = vsel %vm438, %v341, 0
      %v536 = vsel %vm438, %v342, 0
      %v539 = vsel %vm438, %v343, 0
      %v542 = vsel %vm438, %v344, 0
      %v545 = vsel %vm438, %v345, 0
      %v548 = vsel %vm438, %v346, 0
      %v551 = vsel %vm438, %v347, 0
      %v554 = vsel %vm438, %v348, 0
      %v557 = vsel %vm438, %v349, 0
      %v560 = vsel %vm438, %v350, 0
      %v563 = vsel %vm438, %v351, 0
      %v566 = vsel %vm438, %v352, 0
      %v569 = vsel %vm438, %v353, 0
      %v572 = vsel %vm438, %v354, 0
      %v575 = vsel %vm438, %v355, 0
      %v578 = vsel %vm438, %v356, 0
      %v581 = vsel %vm438, %v357, 0
      %v584 = vsel %vm438, %v358, 0
      %v587 = vsel %vm438, %v359, 0
      %v590 = vsel %vm438, %v360, 0
      %v593 = vsel %vm438, %v361, 0
      %v596 = vsel %vm438, %v362, 0
      %v599 = vsel %vm438, %v363, 0
      %v602 = vsel %vm438, %v364, 0
      %v605 = vsel %vm438, %v365, 0
      %v608 = vsel %vm438, %v366, 0
      %v611 = vsel %vm438, %v367, 0
      %v614 = vsel %vm438, %v368, 0
      %v617 = vsel %vm438, %v369, 0
      %v620 = vsel %vm438, %v370, 0
      %v623 = vsel %vm438, %v371, 0
      %v626 = vsel %vm438, %v372, 0
      %v629 = vsel %vm438, %v373, 0
      %v632 = vsel %vm438, %v374, 0
      %v635 = vsel %vm438, %v375, 0
      %v638 = vsel %vm438, %v376, 0
      %v641 = vsel %vm438, %v377, 0
      %v644 = vsel %vm438, %v378, 0
      %v647 = vsel %vm438, %v379, 0
      %v650 = vsel %vm438, %v380, 0
      %v653 = vsel %vm438, %v381, 0
      %655 = vmatprep.subr.mxu0 0.0
      %656 = vmatpush1.xpose.msra.mxu0 %v464
      %657 = vmatprep.subr.mxu0 0.0
      %658 = vmatpush1.xpose.msra.mxu0 %v467
      %659 = vmatprep.subr.mxu0 0.0
      %660 = vmatpush1.xpose.msra.mxu0 %v470
      %661 = vmatprep.subr.mxu0 0.0
      %662 = vmatpush1.xpose.msra.mxu0 %v473
      %663 = vmatprep.subr.mxu0 0.0
      %664 = vmatpush1.xpose.msra.mxu0 %v476
      %665 = vmatprep.subr.mxu0 0.0
      %666 = vmatpush1.xpose.msra.mxu0 %v479
      %667 = vmatprep.subr.mxu0 0.0
      %668 = vmatpush1.xpose.msra.mxu0 %v482
      %669 = vmatprep.subr.mxu0 0.0
      %670 = vmatpush1.xpose.msra.mxu0 %v485
      %671 = vmatprep.subr.mxu0 0.0
      %672 = vmatpush1.xpose.msra.mxu0 %v488
      %673 = vmatprep.subr.mxu0 0.0
      %674 = vmatpush1.xpose.msra.mxu0 %v491
      %675 = vmatprep.subr.mxu0 0.0
      %676 = vmatpush1.xpose.msra.mxu0 %v494
      %677 = vmatprep.subr.mxu0 0.0
      %678 = vmatpush1.xpose.msra.mxu0 %v497
      %679 = vmatprep.subr.mxu0 0.0
      %680 = vmatpush1.xpose.msra.mxu0 %v500
      %681 = vmatprep.subr.mxu0 0.0
      %682 = vmatpush1.xpose.msra.mxu0 %v503
      %683 = vmatprep.subr.mxu0 0.0
      %684 = vmatpush1.xpose.msra.mxu0 %v506
      %685 = vmatprep.subr.mxu0 0.0
      %686 = vmatpush1.xpose.msra.mxu0 %v509
      %687 = vmatprep.subr.mxu0 0.0
      %688 = vmatpush1.xpose.msra.mxu0 %v512
      %689 = vmatprep.subr.mxu0 0.0
      %690 = vmatpush1.xpose.msra.mxu0 %v515
      %691 = vmatprep.subr.mxu0 0.0
      %692 = vmatpush1.xpose.msra.mxu0 %v518
      %693 = vmatprep.subr.mxu0 0.0
      %694 = vmatpush1.xpose.msra.mxu0 %v521
      %695 = vmatprep.subr.mxu0 0.0
      %696 = vmatpush1.xpose.msra.mxu0 %v524
      %697 = vmatprep.subr.mxu0 0.0
      %698 = vmatpush1.xpose.msra.mxu0 %v527
      %699 = vmatprep.subr.mxu0 0.0
      %700 = vmatpush1.xpose.msra.mxu0 %v530
      %701 = vmatprep.subr.mxu0 0.0
      %702 = vmatpush1.xpose.msra.mxu0 %v533
      %703 = vmatprep.subr.mxu0 0.0
      %704 = vmatpush1.xpose.msra.mxu0 %v536
      %705 = vmatprep.subr.mxu0 0.0
      %706 = vmatpush1.xpose.msra.mxu0 %v539
      %707 = vmatprep.subr.mxu0 0.0
      %708 = vmatpush1.xpose.msra.mxu0 %v542
      %709 = vmatprep.subr.mxu0 0.0
      %710 = vmatpush1.xpose.msra.mxu0 %v545
      %711 = vmatprep.subr.mxu0 0.0
      %712 = vmatpush1.xpose.msra.mxu0 %v548
      %713 = vmatprep.subr.mxu0 0.0
      %714 = vmatpush1.xpose.msra.mxu0 %v551
      %715 = vmatprep.subr.mxu0 0.0
      %716 = vmatpush1.xpose.msra.mxu0 %v554
      %717 = vmatprep.subr.mxu0 0.0
      %718 = vmatpush1.xpose.msra.mxu0 %v557
      %719 = vmatprep.mubr.f32.mxu0 0.0
      %720 = vmatmul.mubr.f32.gmra.mrb[0].mxu0 %v440
      %v721 = vpop.f32.mrb[0].mxu0
      %v722 = vadd.f32 %v401, %v721
      %v723 = vpop.f32.mrb[0].mxu0
      %v724 = vadd.f32 %v401, %v723
      %725 = vmatprep.mubr.f32.mxu0 0.0
      %726 = vmatmul.mubr.f32.gmra.mrb[0].mxu0 %v443
      %v727 = vpop.f32.mrb[0].mxu0
      %v728 = vadd.f32 %v406, %v727
      %v729 = vpop.f32.mrb[0].mxu0
      %v730 = vadd.f32 %v406, %v729
      %731 = vmatprep.mubr.f32.mxu0 0.0
      %732 = vmatmul.mubr.f32.gmra.mrb[0].mxu0 %v446
      %v733 = vpop.f32.mrb[0].mxu0
      %v734 = vadd.f32 %v411, %v733
      %v735 = vpop.f32.mrb[0].mxu0
      %v736 = vadd.f32 %v411, %v735
      %737 = vmatprep.mubr.f32.mxu0 0.0
      %738 = vmatmul.mubr.f32.gmra.mrb[0].mxu0 %v449
      %v739 = vpop.f32.mrb[0].mxu0
      %v740 = vadd.f32 %v416, %v739
      %v741 = vpop.f32.mrb[0].mxu0
      %v742 = vadd.f32 %v416, %v741
      %743 = vmatprep.mubr.f32.mxu0 0.0
      %744 = vmatmul.mubr.f32.gmra.mrb[0].mxu0 %v452
      %v745 = vpop.f32.mrb[0].mxu0
      %v746 = vadd.f32 %v421, %v745
      %v747 = vpop.f32.mrb[0].mxu0
      %v748 = vadd.f32 %v421, %v747
      %749 = vmatprep.mubr.f32.mxu0 0.0
      %750 = vmatmul.mubr.f32.gmra.mrb[0].mxu0 %v455
      %v751 = vpop.f32.mrb[0].mxu0
      %v752 = vadd.f32 %v426, %v751
      %v753 = vpop.f32.mrb[0].mxu0
      %v754 = vadd.f32 %v426, %v753
      %755 = vmatprep.mubr.f32.mxu0 0.0
      %756 = vmatmul.mubr.f32.gmra.mrb[0].mxu0 %v458
      %v757 = vpop.f32.mrb[0].mxu0
      %v758 = vadd.f32 %v431, %v757
      %v759 = vpop.f32.mrb[0].mxu0
      %v760 = vadd.f32 %v431, %v759
      %761 = vmatprep.mubr.f32.mxu0 0.0
      %762 = vmatmul.mubr.f32.gmra.mrb[0].mxu0 %v461
      %v763 = vpop.f32.mrb[0].mxu0
      %v764 = vadd.f32 %v436, %v763
      %v765 = vpop.f32.mrb[0].mxu0
      %v766 = vadd.f32 %v436, %v765
      %767 = vdwg.mxu0
      %768 = vmatprep.subr.mxu0 0.0
      %769 = vmatpush1.xpose.msra.mxu0 %v560
      %770 = vmatprep.subr.mxu0 0.0
      %771 = vmatpush1.xpose.msra.mxu0 %v563
      %772 = vmatprep.subr.mxu0 0.0
      %773 = vmatpush1.xpose.msra.mxu0 %v566
      %774 = vmatprep.subr.mxu0 0.0
      %775 = vmatpush1.xpose.msra.mxu0 %v569
      %776 = vmatprep.subr.mxu0 0.0
      %777 = vmatpush1.xpose.msra.mxu0 %v572
      %778 = vmatprep.subr.mxu0 0.0
      %779 = vmatpush1.xpose.msra.mxu0 %v575
      %780 = vmatprep.subr.mxu0 0.0
      %781 = vmatpush1.xpose.msra.mxu0 %v578
      %782 = vmatprep.subr.mxu0 0.0
      %783 = vmatpush1.xpose.msra.mxu0 %v581
      %784 = vmatprep.subr.mxu0 0.0
      %785 = vmatpush1.xpose.msra.mxu0 %v584
      %786 = vmatprep.subr.mxu0 0.0
      %787 = vmatpush1.xpose.msra.mxu0 %v587
      %788 = vmatprep.subr.mxu0 0.0
      %789 = vmatpush1.xpose.msra.mxu0 %v590
      %790 = vmatprep.subr.mxu0 0.0
      %791 = vmatpush1.xpose.msra.mxu0 %v593
      %792 = vmatprep.subr.mxu0 0.0
      %793 = vmatpush1.xpose.msra.mxu0 %v596
      %794 = vmatprep.subr.mxu0 0.0
      %795 = vmatpush1.xpose.msra.mxu0 %v599
      %796 = vmatprep.subr.mxu0 0.0
      %797 = vmatpush1.xpose.msra.mxu0 %v602
      %798 = vmatprep.subr.mxu0 0.0
      %799 = vmatpush1.xpose.msra.mxu0 %v605
      %800 = vmatprep.subr.mxu0 0.0
      %801 = vmatpush1.xpose.msra.mxu0 %v608
      %802 = vmatprep.subr.mxu0 0.0
      %803 = vmatpush1.xpose.msra.mxu0 %v611
      %804 = vmatprep.subr.mxu0 0.0
      %805 = vmatpush1.xpose.msra.mxu0 %v614
      %806 = vmatprep.subr.mxu0 0.0
      %807 = vmatpush1.xpose.msra.mxu0 %v617
      %808 = vmatprep.subr.mxu0 0.0
      %809 = vmatpush1.xpose.msra.mxu0 %v620
      %810 = vmatprep.subr.mxu0 0.0
      %811 = vmatpush1.xpose.msra.mxu0 %v623
      %812 = vmatprep.subr.mxu0 0.0
      %813 = vmatpush1.xpose.msra.mxu0 %v626
      %814 = vmatprep.subr.mxu0 0.0
      %815 = vmatpush1.xpose.msra.mxu0 %v629
      %816 = vmatprep.subr.mxu0 0.0
      %817 = vmatpush1.xpose.msra.mxu0 %v632
      %818 = vmatprep.subr.mxu0 0.0
      %819 = vmatpush1.xpose.msra.mxu0 %v635
      %820 = vmatprep.subr.mxu0 0.0
      %821 = vmatpush1.xpose.msra.mxu0 %v638
      %822 = vmatprep.subr.mxu0 0.0
      %823 = vmatpush1.xpose.msra.mxu0 %v641
      %824 = vmatprep.subr.mxu0 0.0
      %825 = vmatpush1.xpose.msra.mxu0 %v644
      %826 = vmatprep.subr.mxu0 0.0
      %827 = vmatpush1.xpose.msra.mxu0 %v647
      %828 = vmatprep.subr.mxu0 0.0
      %829 = vmatpush1.xpose.msra.mxu0 %v650
      %830 = vmatprep.subr.mxu0 0.0
      %831 = vmatpush1.xpose.msra.mxu0 %v653
      %832 = vmatprep.mubr.f32.mxu0 0.0
      %833 = vmatmul.mubr.f32.gmra.mrb[0].mxu0 %v440
      %v834 = vpop.f32.mrb[0].mxu0
      %v835 = vadd.f32 %v401, %v834
      %v836 = vpop.f32.mrb[0].mxu0
      %v837 = vadd.f32 %v401, %v836
      %838 = vmatprep.mubr.f32.mxu0 0.0
      %839 = vmatmul.mubr.f32.gmra.mrb[0].mxu0 %v443
      %v840 = vpop.f32.mrb[0].mxu0
      %v841 = vadd.f32 %v406, %v840
      %v842 = vpop.f32.mrb[0].mxu0
      %v843 = vadd.f32 %v406, %v842
      %844 = vmatprep.mubr.f32.mxu0 0.0
      %845 = vmatmul.mubr.f32.gmra.mrb[0].mxu0 %v446
      %v846 = vpop.f32.mrb[0].mxu0
      %v847 = vadd.f32 %v411, %v846
      %v848 = vpop.f32.mrb[0].mxu0
      %v849 = vadd.f32 %v411, %v848
      %850 = vmatprep.mubr.f32.mxu0 0.0
      %851 = vmatmul.mubr.f32.gmra.mrb[0].mxu0 %v449
      %v852 = vpop.f32.mrb[0].mxu0
      %v853 = vadd.f32 %v416, %v852
      %v854 = vpop.f32.mrb[0].mxu0
      %v855 = vadd.f32 %v416, %v854
      %856 = vmatprep.mubr.f32.mxu0 0.0
      %857 = vmatmul.mubr.f32.gmra.mrb[0].mxu0 %v452
      %v858 = vpop.f32.mrb[0].mxu0
      %v859 = vadd.f32 %v421, %v858
      %v860 = vpop.f32.mrb[0].mxu0
      %v861 = vadd.f32 %v421, %v860
      %862 = vmatprep.mubr.f32.mxu0 0.0
      %863 = vmatmul.mubr.f32.gmra.mrb[0].mxu0 %v455
      %v864 = vpop.f32.mrb[0].mxu0
      %v865 = vadd.f32 %v426, %v864
      %v866 = vpop.f32.mrb[0].mxu0
      %v867 = vadd.f32 %v426, %v866
      %868 = vmatprep.mubr.f32.mxu0 0.0
      %869 = vmatmul.mubr.f32.gmra.mrb[0].mxu0 %v458
      %v870 = vpop.f32.mrb[0].mxu0
      %v871 = vadd.f32 %v431, %v870
      %v872 = vpop.f32.mrb[0].mxu0
      %v873 = vadd.f32 %v431, %v872
      %874 = vmatprep.mubr.f32.mxu0 0.0
      %875 = vmatmul.mubr.f32.gmra.mrb[0].mxu0 %v461
      %v876 = vpop.f32.mrb[0].mxu0
      %v877 = vadd.f32 %v436, %v876
      %v878 = vpop.f32.mrb[0].mxu0
      %v879 = vadd.f32 %v436, %v878
      %880 = vdwg.mxu0
      %v881 = vmax.f32 %v722, 0.0
      %v882 = vmax.f32 %v724, 0.0
      %v883 = vmax.f32 %v835, 0.0
      %v884 = vmax.f32 %v837, 0.0
      %v885 = vmax.f32 %v728, 0.0
      %v886 = vmax.f32 %v730, 0.0
      %v887 = vmax.f32 %v841, 0.0
      %v888 = vmax.f32 %v843, 0.0
      %v889 = vmax.f32 %v734, 0.0
      %v890 = vmax.f32 %v736, 0.0
      %v891 = vmax.f32 %v847, 0.0
      %v892 = vmax.f32 %v849, 0.0
      %v893 = vmax.f32 %v740, 0.0
      %v894 = vmax.f32 %v742, 0.0
      %v895 = vmax.f32 %v853, 0.0
      %v896 = vmax.f32 %v855, 0.0
      %v897 = vmax.f32 %v746, 0.0
      %v898 = vmax.f32 %v748, 0.0
      %v899 = vmax.f32 %v859, 0.0
      %v900 = vmax.f32 %v861, 0.0
      %v901 = vmax.f32 %v752, 0.0
      %v902 = vmax.f32 %v754, 0.0
      %v903 = vmax.f32 %v865, 0.0
      %v904 = vmax.f32 %v867, 0.0
      %v905 = vmax.f32 %v758, 0.0
      %v906 = vmax.f32 %v760, 0.0
      %v907 = vmax.f32 %v871, 0.0
      %v908 = vmax.f32 %v873, 0.0
      %v909 = vmax.f32 %v764, 0.0
      %v910 = vmax.f32 %v766, 0.0
      %v911 = vmax.f32 %v877, 0.0
      %v912 = vmax.f32 %v879, 0.0
      %v913 = vld [vmem:[%s3] sm:$0xff]
      %v914 = vld [vmem:[%s3 + $0x8] sm:$0xff]
      %v915 = vld [vmem:[%s3 + $0x10] sm:$0xff]
      %v916 = vld [vmem:[%s3 + $0x18] sm:$0xff]
      %v917 = vld [vmem:[%s3 + $0x20] sm:$0xff]
      %v918 = vld [vmem:[%s3 + $0x28] sm:$0xff]
      %v919 = vld [vmem:[%s3 + $0x30] sm:$0xff]
      %v920 = vld [vmem:[%s3 + $0x38] sm:$0xff]
      %v921 = vld [vmem:[%s4] sm:$0xff]
      %v922 = vld [vmem:[%s4 + $0x8] sm:$0xff]
      %v923 = vld [vmem:[%s4 + $0x10] sm:$0xff]
      %v924 = vld [vmem:[%s4 + $0x18] sm:$0xff]
      %v925 = vld [vmem:[%s4 + $0x20] sm:$0xff]
      %v926 = vld [vmem:[%s4 + $0x28] sm:$0xff]
      %v927 = vld [vmem:[%s4 + $0x30] sm:$0xff]
      %v928 = vld [vmem:[%s4 + $0x38] sm:$0xff]
      %930 = vset.pattern.permute.xlu0 0
      %931 = vperm.xlu0 %930, %v921
      %v932 = vpop.permute.xlu0 %931
      %935 = vset.pattern.permute.xlu0 0
      %936 = vperm.xlu0 %935, %v922
      %v937 = vpop.permute.xlu0 %936
      %940 = vset.pattern.permute.xlu0 0
      %941 = vperm.xlu0 %940, %v923
      %v942 = vpop.permute.xlu0 %941
      %945 = vset.pattern.permute.xlu0 0
      %946 = vperm.xlu0 %945, %v924
      %v947 = vpop.permute.xlu0 %946
      %950 = vset.pattern.permute.xlu0 0
      %951 = vperm.xlu0 %950, %v925
      %v952 = vpop.permute.xlu0 %951
      %955 = vset.pattern.permute.xlu0 0
      %956 = vperm.xlu0 %955, %v926
      %v957 = vpop.permute.xlu0 %956
      %960 = vset.pattern.permute.xlu0 0
      %961 = vperm.xlu0 %960, %v927
      %v962 = vpop.permute.xlu0 %961
      %965 = vset.pattern.permute.xlu0 0
      %966 = vperm.xlu0 %965, %v928
      %v967 = vpop.permute.xlu0 %966
      %vm969 = vcmask 523264
      %v971 = vsel %vm969, %v913, 0
      %v974 = vsel %vm969, %v914, 0
      %v977 = vsel %vm969, %v915, 0
      %v980 = vsel %vm969, %v916, 0
      %v983 = vsel %vm969, %v917, 0
      %v986 = vsel %vm969, %v918, 0
      %v989 = vsel %vm969, %v919, 0
      %v992 = vsel %vm969, %v920, 0
      %994 = vmatprep.subr.mxu0 %v882
      %995 = vmatpush1.msra.mxu0 %v881
      %996 = vmatprep.subr.mxu0 %v886
      %997 = vmatpush1.msra.mxu0 %v885
      %998 = vmatprep.subr.mxu0 %v890
      %999 = vmatpush1.msra.mxu0 %v889
      %1000 = vmatprep.subr.mxu0 %v894
      %1001 = vmatpush1.msra.mxu0 %v893
      %1002 = vmatprep.subr.mxu0 %v898
      %1003 = vmatpush1.msra.mxu0 %v897
      %1004 = vmatprep.subr.mxu0 %v902
      %1005 = vmatpush1.msra.mxu0 %v901
      %1006 = vmatprep.subr.mxu0 %v906
      %1007 = vmatpush1.msra.mxu0 %v905
      %1008 = vmatprep.subr.mxu0 %v910
      %1009 = vmatpush1.msra.mxu0 %v909
      %1010 = vmatprep.subr.mxu0 0.0
      %1011 = vmatpush1.msra.mxu0 0.0
      %1012 = vmatprep.subr.mxu0 0.0
      %1013 = vmatpush1.msra.mxu0 0.0
      %1014 = vmatprep.subr.mxu0 0.0
      %1015 = vmatpush1.msra.mxu0 0.0
      %1016 = vmatprep.subr.mxu0 0.0
      %1017 = vmatpush1.msra.mxu0 0.0
      %1018 = vmatprep.subr.mxu0 0.0
      %1019 = vmatpush1.msra.mxu0 0.0
      %1020 = vmatprep.subr.mxu0 0.0
      %1021 = vmatpush1.msra.mxu0 0.0
      %1022 = vmatprep.subr.mxu0 0.0
      %1023 = vmatpush1.msra.mxu0 0.0
      %1024 = vmatprep.subr.mxu0 0.0
      %1025 = vmatpush1.msra.mxu0 0.0
      %1026 = vmatprep.subr.mxu0 0.0
      %1027 = vmatpush1.msra.mxu0 0.0
      %1028 = vmatprep.subr.mxu0 0.0
      %1029 = vmatpush1.msra.mxu0 0.0
      %1030 = vmatprep.subr.mxu0 0.0
      %1031 = vmatpush1.msra.mxu0 0.0
      %1032 = vmatprep.subr.mxu0 0.0
      %1033 = vmatpush1.msra.mxu0 0.0
      %1034 = vmatprep.subr.mxu0 0.0
      %1035 = vmatpush1.msra.mxu0 0.0
      %1036 = vmatprep.subr.mxu0 0.0
      %1037 = vmatpush1.msra.mxu0 0.0
      %1038 = vmatprep.subr.mxu0 0.0
      %1039 = vmatpush1.msra.mxu0 0.0
      %1040 = vmatprep.subr.mxu0 0.0
      %1041 = vmatpush1.msra.mxu0 0.0
      %1042 = vmatprep.subr.mxu0 0.0
      %1043 = vmatpush1.msra.mxu0 0.0
      %1044 = vmatprep.subr.mxu0 0.0
      %1045 = vmatpush1.msra.mxu0 0.0
      %1046 = vmatprep.subr.mxu0 0.0
      %1047 = vmatpush1.msra.mxu0 0.0
      %1048 = vmatprep.subr.mxu0 0.0
      %1049 = vmatpush1.msra.mxu0 0.0
      %1050 = vmatprep.subr.mxu0 0.0
      %1051 = vmatpush1.msra.mxu0 0.0
      %1052 = vmatprep.subr.mxu0 0.0
      %1053 = vmatpush1.msra.mxu0 0.0
      %1054 = vmatprep.subr.mxu0 0.0
      %1055 = vmatpush1.msra.mxu0 0.0
      %1056 = vmatprep.subr.mxu0 0.0
      %1057 = vmatpush1.msra.mxu0 0.0
      %1058 = vmatprep.mubr.f32.mxu0 0.0
      %1059 = vmatmul.mubr.f32.gmra.mrb[0].mxu0 %v971
      %v1060 = vpop.f32.mrb[0].mxu0
      %v1061 = vadd.f32 %v932, %v1060
      %v1062 = vpop.f32.mrb[0].mxu0
      %v1063 = vadd.f32 %v932, %v1062
      %1064 = vmatprep.mubr.f32.mxu0 0.0
      %1065 = vmatmul.mubr.f32.gmra.mrb[0].mxu0 %v974
      %v1066 = vpop.f32.mrb[0].mxu0
      %v1067 = vadd.f32 %v937, %v1066
      %v1068 = vpop.f32.mrb[0].mxu0
      %v1069 = vadd.f32 %v937, %v1068
      %1070 = vmatprep.mubr.f32.mxu0 0.0
      %1071 = vmatmul.mubr.f32.gmra.mrb[0].mxu0 %v977
      %v1072 = vpop.f32.mrb[0].mxu0
      %v1073 = vadd.f32 %v942, %v1072
      %v1074 = vpop.f32.mrb[0].mxu0
      %v1075 = vadd.f32 %v942, %v1074
      %1076 = vmatprep.mubr.f32.mxu0 0.0
      %1077 = vmatmul.mubr.f32.gmra.mrb[0].mxu0 %v980
      %v1078 = vpop.f32.mrb[0].mxu0
      %v1079 = vadd.f32 %v947, %v1078
      %v1080 = vpop.f32.mrb[0].mxu0
      %v1081 = vadd.f32 %v947, %v1080
      %1082 = vmatprep.mubr.f32.mxu0 0.0
      %1083 = vmatmul.mubr.f32.gmra.mrb[0].mxu0 %v983
      %v1084 = vpop.f32.mrb[0].mxu0
      %v1085 = vadd.f32 %v952, %v1084
      %v1086 = vpop.f32.mrb[0].mxu0
      %v1087 = vadd.f32 %v952, %v1086
      %1088 = vmatprep.mubr.f32.mxu0 0.0
      %1089 = vmatmul.mubr.f32.gmra.mrb[0].mxu0 %v986
      %v1090 = vpop.f32.mrb[0].mxu0
      %v1091 = vadd.f32 %v957, %v1090
      %v1092 = vpop.f32.mrb[0].mxu0
      %v1093 = vadd.f32 %v957, %v1092
      %1094 = vmatprep.mubr.f32.mxu0 0.0
      %1095 = vmatmul.mubr.f32.gmra.mrb[0].mxu0 %v989
      %v1096 = vpop.f32.mrb[0].mxu0
      %v1097 = vadd.f32 %v962, %v1096
      %v1098 = vpop.f32.mrb[0].mxu0
      %v1099 = vadd.f32 %v962, %v1098
      %1100 = vmatprep.mubr.f32.mxu0 0.0
      %1101 = vmatmul.mubr.f32.gmra.mrb[0].mxu0 %v992
      %v1102 = vpop.f32.mrb[0].mxu0
      %v1103 = vadd.f32 %v967, %v1102
      %v1104 = vpop.f32.mrb[0].mxu0
      %v1105 = vadd.f32 %v967, %v1104
      %1106 = vdwg.mxu0
      %1107 = vmatprep.subr.mxu0 %v884
      %1108 = vmatpush1.msra.mxu0 %v883
      %1109 = vmatprep.subr.mxu0 %v888
      %1110 = vmatpush1.msra.mxu0 %v887
      %1111 = vmatprep.subr.mxu0 %v892
      %1112 = vmatpush1.msra.mxu0 %v891
      %1113 = vmatprep.subr.mxu0 %v896
      %1114 = vmatpush1.msra.mxu0 %v895
      %1115 = vmatprep.subr.mxu0 %v900
      %1116 = vmatpush1.msra.mxu0 %v899
      %1117 = vmatprep.subr.mxu0 %v904
      %1118 = vmatpush1.msra.mxu0 %v903
      %1119 = vmatprep.subr.mxu0 %v908
      %1120 = vmatpush1.msra.mxu0 %v907
      %1121 = vmatprep.subr.mxu0 %v912
      %1122 = vmatpush1.msra.mxu0 %v911
      %1123 = vmatprep.subr.mxu0 0.0
      %1124 = vmatpush1.msra.mxu0 0.0
      %1125 = vmatprep.subr.mxu0 0.0
      %1126 = vmatpush1.msra.mxu0 0.0
      %1127 = vmatprep.subr.mxu0 0.0
      %1128 = vmatpush1.msra.mxu0 0.0
      %1129 = vmatprep.subr.mxu0 0.0
      %1130 = vmatpush1.msra.mxu0 0.0
      %1131 = vmatprep.subr.mxu0 0.0
      %1132 = vmatpush1.msra.mxu0 0.0
      %1133 = vmatprep.subr.mxu0 0.0
      %1134 = vmatpush1.msra.mxu0 0.0
      %1135 = vmatprep.subr.mxu0 0.0
      %1136 = vmatpush1.msra.mxu0 0.0
      %1137 = vmatprep.subr.mxu0 0.0
      %1138 = vmatpush1.msra.mxu0 0.0
      %1139 = vmatprep.subr.mxu0 0.0
      %1140 = vmatpush1.msra.mxu0 0.0
      %1141 = vmatprep.subr.mxu0 0.0
      %1142 = vmatpush1.msra.mxu0 0.0
      %1143 = vmatprep.subr.mxu0 0.0
      %1144 = vmatpush1.msra.mxu0 0.0
      %1145 = vmatprep.subr.mxu0 0.0
      %1146 = vmatpush1.msra.mxu0 0.0
      %1147 = vmatprep.subr.mxu0 0.0
      %1148 = vmatpush1.msra.mxu0 0.0
      %1149 = vmatprep.subr.mxu0 0.0
      %1150 = vmatpush1.msra.mxu0 0.0
      %1151 = vmatprep.subr.mxu0 0.0
      %1152 = vmatpush1.msra.mxu0 0.0
      %1153 = vmatprep.subr.mxu0 0.0
      %1154 = vmatpush1.msra.mxu0 0.0
      %1155 = vmatprep.subr.mxu0 0.0
      %1156 = vmatpush1.msra.mxu0 0.0
      %1157 = vmatprep.subr.mxu0 0.0
      %1158 = vmatpush1.msra.mxu0 0.0
      %1159 = vmatprep.subr.mxu0 0.0
      %1160 = vmatpush1.msra.mxu0 0.0
      %1161 = vmatprep.subr.mxu0 0.0
      %1162 = vmatpush1.msra.mxu0 0.0
      %1163 = vmatprep.subr.mxu0 0.0
      %1164 = vmatpush1.msra.mxu0 0.0
      %1165 = vmatprep.subr.mxu0 0.0
      %1166 = vmatpush1.msra.mxu0 0.0
      %1167 = vmatprep.subr.mxu0 0.0
      %1168 = vmatpush1.msra.mxu0 0.0
      %1169 = vmatprep.subr.mxu0 0.0
      %1170 = vmatpush1.msra.mxu0 0.0
      %1171 = vmatprep.mubr.f32.mxu0 0.0
      %1172 = vmatmul.mubr.f32.gmra.mrb[0].mxu0 %v971
      %v1173 = vpop.f32.mrb[0].mxu0
      %v1174 = vadd.f32 %v932, %v1173
      %v1175 = vpop.f32.mrb[0].mxu0
      %v1176 = vadd.f32 %v932, %v1175
      %1177 = vmatprep.mubr.f32.mxu0 0.0
      %1178 = vmatmul.mubr.f32.gmra.mrb[0].mxu0 %v974
      %v1179 = vpop.f32.mrb[0].mxu0
      %v1180 = vadd.f32 %v937, %v1179
      %v1181 = vpop.f32.mrb[0].mxu0
      %v1182 = vadd.f32 %v937, %v1181
      %1183 = vmatprep.mubr.f32.mxu0 0.0
      %1184 = vmatmul.mubr.f32.gmra.mrb[0].mxu0 %v977
      %v1185 = vpop.f32.mrb[0].mxu0
      %v1186 = vadd.f32 %v942, %v1185
      %v1187 = vpop.f32.mrb[0].mxu0
      %v1188 = vadd.f32 %v942, %v1187
      %1189 = vmatprep.mubr.f32.mxu0 0.0
      %1190 = vmatmul.mubr.f32.gmra.mrb[0].mxu0 %v980
      %v1191 = vpop.f32.mrb[0].mxu0
      %v1192 = vadd.f32 %v947, %v1191
      %v1193 = vpop.f32.mrb[0].mxu0
      %v1194 = vadd.f32 %v947, %v1193
      %1195 = vmatprep.mubr.f32.mxu0 0.0
      %1196 = vmatmul.mubr.f32.gmra.mrb[0].mxu0 %v983
      %v1197 = vpop.f32.mrb[0].mxu0
      %v1198 = vadd.f32 %v952, %v1197
      %v1199 = vpop.f32.mrb[0].mxu0
      %v1200 = vadd.f32 %v952, %v1199
      %1201 = vmatprep.mubr.f32.mxu0 0.0
      %1202 = vmatmul.mubr.f32.gmra.mrb[0].mxu0 %v986
      %v1203 = vpop.f32.mrb[0].mxu0
      %v1204 = vadd.f32 %v957, %v1203
      %v1205 = vpop.f32.mrb[0].mxu0
      %v1206 = vadd.f32 %v957, %v1205
      %1207 = vmatprep.mubr.f32.mxu0 0.0
      %1208 = vmatmul.mubr.f32.gmra.mrb[0].mxu0 %v989
      %v1209 = vpop.f32.mrb[0].mxu0
      %v1210 = vadd.f32 %v962, %v1209
      %v1211 = vpop.f32.mrb[0].mxu0
      %v1212 = vadd.f32 %v962, %v1211
      %1213 = vmatprep.mubr.f32.mxu0 0.0
      %1214 = vmatmul.mubr.f32.gmra.mrb[0].mxu0 %v992
      %v1215 = vpop.f32.mrb[0].mxu0
      %v1216 = vadd.f32 %v967, %v1215
      %v1217 = vpop.f32.mrb[0].mxu0
      %v1218 = vadd.f32 %v967, %v1217
      %1219 = vdwg.mxu0
      %v1220 = vmax.f32 %v1061, 0.0
      %v1221 = vmax.f32 %v1063, 0.0
      %v1222 = vmax.f32 %v1174, 0.0
      %v1223 = vmax.f32 %v1176, 0.0
      %v1224 = vmax.f32 %v1067, 0.0
      %v1225 = vmax.f32 %v1069, 0.0
      %v1226 = vmax.f32 %v1180, 0.0
      %v1227 = vmax.f32 %v1182, 0.0
      %v1228 = vmax.f32 %v1073, 0.0
      %v1229 = vmax.f32 %v1075, 0.0
      %v1230 = vmax.f32 %v1186, 0.0
      %v1231 = vmax.f32 %v1188, 0.0
      %v1232 = vmax.f32 %v1079, 0.0
      %v1233 = vmax.f32 %v1081, 0.0
      %v1234 = vmax.f32 %v1192, 0.0
      %v1235 = vmax.f32 %v1194, 0.0
      %v1236 = vmax.f32 %v1085, 0.0
      %v1237 = vmax.f32 %v1087, 0.0
      %v1238 = vmax.f32 %v1198, 0.0
      %v1239 = vmax.f32 %v1200, 0.0
      %v1240 = vmax.f32 %v1091, 0.0
      %v1241 = vmax.f32 %v1093, 0.0
      %v1242 = vmax.f32 %v1204, 0.0
      %v1243 = vmax.f32 %v1206, 0.0
      %v1244 = vmax.f32 %v1097, 0.0
      %v1245 = vmax.f32 %v1099, 0.0
      %v1246 = vmax.f32 %v1210, 0.0
      %v1247 = vmax.f32 %v1212, 0.0
      %v1248 = vmax.f32 %v1103, 0.0
      %v1249 = vmax.f32 %v1105, 0.0
      %v1250 = vmax.f32 %v1216, 0.0
      %v1251 = vmax.f32 %v1218, 0.0
      %v1252 = vld [vmem:[%s5] sm:$0xff]
      %v1253 = vld [vmem:[%s5 + $0x8] sm:$0xff]
      %v1254 = vld [vmem:[%s5 + $0x10] sm:$0xff]
      %v1255 = vld [vmem:[%s5 + $0x18] sm:$0xff]
      %v1256 = vld [vmem:[%s5 + $0x20] sm:$0xff]
      %v1257 = vld [vmem:[%s5 + $0x28] sm:$0xff]
      %v1258 = vld [vmem:[%s5 + $0x30] sm:$0xff]
      %v1259 = vld [vmem:[%s5 + $0x38] sm:$0xff]
      %v1260 = vld [vmem:[%s6] sm:$0xff]
      %v1261 = vld [vmem:[%s6 + $0x8] sm:$0xff]
      %v1262 = vld [vmem:[%s6 + $0x10] sm:$0xff]
      %v1263 = vld [vmem:[%s6 + $0x18] sm:$0xff]
      %v1264 = vld [vmem:[%s6 + $0x20] sm:$0xff]
      %v1265 = vld [vmem:[%s6 + $0x28] sm:$0xff]
      %v1266 = vld [vmem:[%s6 + $0x30] sm:$0xff]
      %v1267 = vld [vmem:[%s6 + $0x38] sm:$0xff]
      %1269 = vset.pattern.permute.xlu0 0
      %1270 = vperm.xlu0 %1269, %v1260
      %v1271 = vpop.permute.xlu0 %1270
      %1274 = vset.pattern.permute.xlu0 0
      %1275 = vperm.xlu0 %1274, %v1261
      %v1276 = vpop.permute.xlu0 %1275
      %1279 = vset.pattern.permute.xlu0 0
      %1280 = vperm.xlu0 %1279, %v1262
      %v1281 = vpop.permute.xlu0 %1280
      %1284 = vset.pattern.permute.xlu0 0
      %1285 = vperm.xlu0 %1284, %v1263
      %v1286 = vpop.permute.xlu0 %1285
      %1289 = vset.pattern.permute.xlu0 0
      %1290 = vperm.xlu0 %1289, %v1264
      %v1291 = vpop.permute.xlu0 %1290
      %1294 = vset.pattern.permute.xlu0 0
      %1295 = vperm.xlu0 %1294, %v1265
      %v1296 = vpop.permute.xlu0 %1295
      %1299 = vset.pattern.permute.xlu0 0
      %1300 = vperm.xlu0 %1299, %v1266
      %v1301 = vpop.permute.xlu0 %1300
      %1304 = vset.pattern.permute.xlu0 0
      %1305 = vperm.xlu0 %1304, %v1267
      %v1306 = vpop.permute.xlu0 %1305
      %v1309 = vsel %vm969, %v1252, 0
      %v1312 = vsel %vm969, %v1253, 0
      %v1315 = vsel %vm969, %v1254, 0
      %v1318 = vsel %vm969, %v1255, 0
      %v1321 = vsel %vm969, %v1256, 0
      %v1324 = vsel %vm969, %v1257, 0
      %v1327 = vsel %vm969, %v1258, 0
      %v1330 = vsel %vm969, %v1259, 0
      %1332 = vmatprep.subr.mxu0 %v1221
      %1333 = vmatpush1.msra.mxu0 %v1220
      %1334 = vmatprep.subr.mxu0 %v1225
      %1335 = vmatpush1.msra.mxu0 %v1224
      %1336 = vmatprep.subr.mxu0 %v1229
      %1337 = vmatpush1.msra.mxu0 %v1228
      %1338 = vmatprep.subr.mxu0 %v1233
      %1339 = vmatpush1.msra.mxu0 %v1232
      %1340 = vmatprep.subr.mxu0 %v1237
      %1341 = vmatpush1.msra.mxu0 %v1236
      %1342 = vmatprep.subr.mxu0 %v1241
      %1343 = vmatpush1.msra.mxu0 %v1240
      %1344 = vmatprep.subr.mxu0 %v1245
      %1345 = vmatpush1.msra.mxu0 %v1244
      %1346 = vmatprep.subr.mxu0 %v1249
      %1347 = vmatpush1.msra.mxu0 %v1248
      %1348 = vmatprep.subr.mxu0 0.0
      %1349 = vmatpush1.msra.mxu0 0.0
      %1350 = vmatprep.subr.mxu0 0.0
      %1351 = vmatpush1.msra.mxu0 0.0
      %1352 = vmatprep.subr.mxu0 0.0
      %1353 = vmatpush1.msra.mxu0 0.0
      %1354 = vmatprep.subr.mxu0 0.0
      %1355 = vmatpush1.msra.mxu0 0.0
      %1356 = vmatprep.subr.mxu0 0.0
      %1357 = vmatpush1.msra.mxu0 0.0
      %1358 = vmatprep.subr.mxu0 0.0
      %1359 = vmatpush1.msra.mxu0 0.0
      %1360 = vmatprep.subr.mxu0 0.0
      %1361 = vmatpush1.msra.mxu0 0.0
      %1362 = vmatprep.subr.mxu0 0.0
      %1363 = vmatpush1.msra.mxu0 0.0
      %1364 = vmatprep.subr.mxu0 0.0
      %1365 = vmatpush1.msra.mxu0 0.0
      %1366 = vmatprep.subr.mxu0 0.0
      %1367 = vmatpush1.msra.mxu0 0.0
      %1368 = vmatprep.subr.mxu0 0.0
      %1369 = vmatpush1.msra.mxu0 0.0
      %1370 = vmatprep.subr.mxu0 0.0
      %1371 = vmatpush1.msra.mxu0 0.0
      %1372 = vmatprep.subr.mxu0 0.0
      %1373 = vmatpush1.msra.mxu0 0.0
      %1374 = vmatprep.subr.mxu0 0.0
      %1375 = vmatpush1.msra.mxu0 0.0
      %1376 = vmatprep.subr.mxu0 0.0
      %1377 = vmatpush1.msra.mxu0 0.0
      %1378 = vmatprep.subr.mxu0 0.0
      %1379 = vmatpush1.msra.mxu0 0.0
      %1380 = vmatprep.subr.mxu0 0.0
      %1381 = vmatpush1.msra.mxu0 0.0
      %1382 = vmatprep.subr.mxu0 0.0
      %1383 = vmatpush1.msra.mxu0 0.0
      %1384 = vmatprep.subr.mxu0 0.0
      %1385 = vmatpush1.msra.mxu0 0.0
      %1386 = vmatprep.subr.mxu0 0.0
      %1387 = vmatpush1.msra.mxu0 0.0
      %1388 = vmatprep.subr.mxu0 0.0
      %1389 = vmatpush1.msra.mxu0 0.0
      %1390 = vmatprep.subr.mxu0 0.0
      %1391 = vmatpush1.msra.mxu0 0.0
      %1392 = vmatprep.subr.mxu0 0.0
      %1393 = vmatpush1.msra.mxu0 0.0
      %1394 = vmatprep.subr.mxu0 0.0
      %1395 = vmatpush1.msra.mxu0 0.0
      %1396 = vmatprep.mubr.f32.mxu0 0.0
      %1397 = vmatmul.mubr.f32.gmra.mrb[0].mxu0 %v1309
      %v1398 = vpop.f32.mrb[0].mxu0
      %v1399 = vadd.f32 %v1271, %v1398
      %v1400 = vpop.f32.mrb[0].mxu0
      %v1401 = vadd.f32 %v1271, %v1400
      %1402 = vmatprep.mubr.f32.mxu0 0.0
      %1403 = vmatmul.mubr.f32.gmra.mrb[0].mxu0 %v1312
      %v1404 = vpop.f32.mrb[0].mxu0
      %v1405 = vadd.f32 %v1276, %v1404
      %v1406 = vpop.f32.mrb[0].mxu0
      %v1407 = vadd.f32 %v1276, %v1406
      %1408 = vmatprep.mubr.f32.mxu0 0.0
      %1409 = vmatmul.mubr.f32.gmra.mrb[0].mxu0 %v1315
      %v1410 = vpop.f32.mrb[0].mxu0
      %v1411 = vadd.f32 %v1281, %v1410
      %v1412 = vpop.f32.mrb[0].mxu0
      %v1413 = vadd.f32 %v1281, %v1412
      %1414 = vmatprep.mubr.f32.mxu0 0.0
      %1415 = vmatmul.mubr.f32.gmra.mrb[0].mxu0 %v1318
      %v1416 = vpop.f32.mrb[0].mxu0
      %v1417 = vadd.f32 %v1286, %v1416
      %v1418 = vpop.f32.mrb[0].mxu0
      %v1419 = vadd.f32 %v1286, %v1418
      %1420 = vmatprep.mubr.f32.mxu0 0.0
      %1421 = vmatmul.mubr.f32.gmra.mrb[0].mxu0 %v1321
      %v1422 = vpop.f32.mrb[0].mxu0
      %v1423 = vadd.f32 %v1291, %v1422
      %v1424 = vpop.f32.mrb[0].mxu0
      %v1425 = vadd.f32 %v1291, %v1424
      %1426 = vmatprep.mubr.f32.mxu0 0.0
      %1427 = vmatmul.mubr.f32.gmra.mrb[0].mxu0 %v1324
      %v1428 = vpop.f32.mrb[0].mxu0
      %v1429 = vadd.f32 %v1296, %v1428
      %v1430 = vpop.f32.mrb[0].mxu0
      %v1431 = vadd.f32 %v1296, %v1430
      %1432 = vmatprep.mubr.f32.mxu0 0.0
      %1433 = vmatmul.mubr.f32.gmra.mrb[0].mxu0 %v1327
      %v1434 = vpop.f32.mrb[0].mxu0
      %v1435 = vadd.f32 %v1301, %v1434
      %v1436 = vpop.f32.mrb[0].mxu0
      %v1437 = vadd.f32 %v1301, %v1436
      %1438 = vmatprep.mubr.f32.mxu0 0.0
      %1439 = vmatmul.mubr.f32.gmra.mrb[0].mxu0 %v1330
      %v1440 = vpop.f32.mrb[0].mxu0
      %v1441 = vadd.f32 %v1306, %v1440
      %v1442 = vpop.f32.mrb[0].mxu0
      %v1443 = vadd.f32 %v1306, %v1442
      %1444 = vdwg.mxu0
      %1445 = vmatprep.subr.mxu0 %v1223
      %1446 = vmatpush1.msra.mxu0 %v1222
      %1447 = vmatprep.subr.mxu0 %v1227
      %1448 = vmatpush1.msra.mxu0 %v1226
      %1449 = vmatprep.subr.mxu0 %v1231
      %1450 = vmatpush1.msra.mxu0 %v1230
      %1451 = vmatprep.subr.mxu0 %v1235
      %1452 = vmatpush1.msra.mxu0 %v1234
      %1453 = vmatprep.subr.mxu0 %v1239
      %1454 = vmatpush1.msra.mxu0 %v1238
      %1455 = vmatprep.subr.mxu0 %v1243
      %1456 = vmatpush1.msra.mxu0 %v1242
      %1457 = vmatprep.subr.mxu0 %v1247
      %1458 = vmatpush1.msra.mxu0 %v1246
      %1459 = vmatprep.subr.mxu0 %v1251
      %1460 = vmatpush1.msra.mxu0 %v1250
      %1461 = vmatprep.subr.mxu0 0.0
      %1462 = vmatpush1.msra.mxu0 0.0
      %1463 = vmatprep.subr.mxu0 0.0
      %1464 = vmatpush1.msra.mxu0 0.0
      %1465 = vmatprep.subr.mxu0 0.0
      %1466 = vmatpush1.msra.mxu0 0.0
      %1467 = vmatprep.subr.mxu0 0.0
      %1468 = vmatpush1.msra.mxu0 0.0
      %1469 = vmatprep.subr.mxu0 0.0
      %1470 = vmatpush1.msra.mxu0 0.0
      %1471 = vmatprep.subr.mxu0 0.0
      %1472 = vmatpush1.msra.mxu0 0.0
      %1473 = vmatprep.subr.mxu0 0.0
      %1474 = vmatpush1.msra.mxu0 0.0
      %1475 = vmatprep.subr.mxu0 0.0
      %1476 = vmatpush1.msra.mxu0 0.0
      %1477 = vmatprep.subr.mxu0 0.0
      %1478 = vmatpush1.msra.mxu0 0.0
      %1479 = vmatprep.subr.mxu0 0.0
      %1480 = vmatpush1.msra.mxu0 0.0
      %1481 = vmatprep.subr.mxu0 0.0
      %1482 = vmatpush1.msra.mxu0 0.0
      %1483 = vmatprep.subr.mxu0 0.0
      %1484 = vmatpush1.msra.mxu0 0.0
      %1485 = vmatprep.subr.mxu0 0.0
      %1486 = vmatpush1.msra.mxu0 0.0
      %1487 = vmatprep.subr.mxu0 0.0
      %1488 = vmatpush1.msra.mxu0 0.0
      %1489 = vmatprep.subr.mxu0 0.0
      %1490 = vmatpush1.msra.mxu0 0.0
      %1491 = vmatprep.subr.mxu0 0.0
      %1492 = vmatpush1.msra.mxu0 0.0
      %1493 = vmatprep.subr.mxu0 0.0
      %1494 = vmatpush1.msra.mxu0 0.0
      %1495 = vmatprep.subr.mxu0 0.0
      %1496 = vmatpush1.msra.mxu0 0.0
      %1497 = vmatprep.subr.mxu0 0.0
      %1498 = vmatpush1.msra.mxu0 0.0
      %1499 = vmatprep.subr.mxu0 0.0
      %1500 = vmatpush1.msra.mxu0 0.0
      %1501 = vmatprep.subr.mxu0 0.0
      %1502 = vmatpush1.msra.mxu0 0.0
      %1503 = vmatprep.subr.mxu0 0.0
      %1504 = vmatpush1.msra.mxu0 0.0
      %1505 = vmatprep.subr.mxu0 0.0
      %1506 = vmatpush1.msra.mxu0 0.0
      %1507 = vmatprep.subr.mxu0 0.0
      %1508 = vmatpush1.msra.mxu0 0.0
      %1509 = vmatprep.mubr.f32.mxu0 0.0
      %1510 = vmatmul.mubr.f32.gmra.mrb[0].mxu0 %v1309
      %v1511 = vpop.f32.mrb[0].mxu0
      %v1512 = vadd.f32 %v1271, %v1511
      %v1513 = vpop.f32.mrb[0].mxu0
      %v1514 = vadd.f32 %v1271, %v1513
      %1515 = vmatprep.mubr.f32.mxu0 0.0
      %1516 = vmatmul.mubr.f32.gmra.mrb[0].mxu0 %v1312
      %v1517 = vpop.f32.mrb[0].mxu0
      %v1518 = vadd.f32 %v1276, %v1517
      %v1519 = vpop.f32.mrb[0].mxu0
      %v1520 = vadd.f32 %v1276, %v1519
      %1521 = vmatprep.mubr.f32.mxu0 0.0
      %1522 = vmatmul.mubr.f32.gmra.mrb[0].mxu0 %v1315
      %v1523 = vpop.f32.mrb[0].mxu0
      %v1524 = vadd.f32 %v1281, %v1523
      %v1525 = vpop.f32.mrb[0].mxu0
      %v1526 = vadd.f32 %v1281, %v1525
      %1527 = vmatprep.mubr.f32.mxu0 0.0
      %1528 = vmatmul.mubr.f32.gmra.mrb[0].mxu0 %v1318
      %v1529 = vpop.f32.mrb[0].mxu0
      %v1530 = vadd.f32 %v1286, %v1529
      %v1531 = vpop.f32.mrb[0].mxu0
      %v1532 = vadd.f32 %v1286, %v1531
      %1533 = vmatprep.mubr.f32.mxu0 0.0
      %1534 = vmatmul.mubr.f32.gmra.mrb[0].mxu0 %v1321
      %v1535 = vpop.f32.mrb[0].mxu0
      %v1536 = vadd.f32 %v1291, %v1535
      %v1537 = vpop.f32.mrb[0].mxu0
      %v1538 = vadd.f32 %v1291, %v1537
      %1539 = vmatprep.mubr.f32.mxu0 0.0
      %1540 = vmatmul.mubr.f32.gmra.mrb[0].mxu0 %v1324
      %v1541 = vpop.f32.mrb[0].mxu0
      %v1542 = vadd.f32 %v1296, %v1541
      %v1543 = vpop.f32.mrb[0].mxu0
      %v1544 = vadd.f32 %v1296, %v1543
      %1545 = vmatprep.mubr.f32.mxu0 0.0
      %1546 = vmatmul.mubr.f32.gmra.mrb[0].mxu0 %v1327
      %v1547 = vpop.f32.mrb[0].mxu0
      %v1548 = vadd.f32 %v1301, %v1547
      %v1549 = vpop.f32.mrb[0].mxu0
      %v1550 = vadd.f32 %v1301, %v1549
      %1551 = vmatprep.mubr.f32.mxu0 0.0
      %1552 = vmatmul.mubr.f32.gmra.mrb[0].mxu0 %v1330
      %v1553 = vpop.f32.mrb[0].mxu0
      %v1554 = vadd.f32 %v1306, %v1553
      %v1555 = vpop.f32.mrb[0].mxu0
      %v1556 = vadd.f32 %v1306, %v1555
      %1557 = vdwg.mxu0
      %v1558 = vmax.f32 %v1399, 0.0
      %v1559 = vmax.f32 %v1401, 0.0
      %v1560 = vmax.f32 %v1512, 0.0
      %v1561 = vmax.f32 %v1514, 0.0
      %v1562 = vmax.f32 %v1405, 0.0
      %v1563 = vmax.f32 %v1407, 0.0
      %v1564 = vmax.f32 %v1518, 0.0
      %v1565 = vmax.f32 %v1520, 0.0
      %v1566 = vmax.f32 %v1411, 0.0
      %v1567 = vmax.f32 %v1413, 0.0
      %v1568 = vmax.f32 %v1524, 0.0
      %v1569 = vmax.f32 %v1526, 0.0
      %v1570 = vmax.f32 %v1417, 0.0
      %v1571 = vmax.f32 %v1419, 0.0
      %v1572 = vmax.f32 %v1530, 0.0
      %v1573 = vmax.f32 %v1532, 0.0
      %v1574 = vmax.f32 %v1423, 0.0
      %v1575 = vmax.f32 %v1425, 0.0
      %v1576 = vmax.f32 %v1536, 0.0
      %v1577 = vmax.f32 %v1538, 0.0
      %v1578 = vmax.f32 %v1429, 0.0
      %v1579 = vmax.f32 %v1431, 0.0
      %v1580 = vmax.f32 %v1542, 0.0
      %v1581 = vmax.f32 %v1544, 0.0
      %v1582 = vmax.f32 %v1435, 0.0
      %v1583 = vmax.f32 %v1437, 0.0
      %v1584 = vmax.f32 %v1548, 0.0
      %v1585 = vmax.f32 %v1550, 0.0
      %v1586 = vmax.f32 %v1441, 0.0
      %v1587 = vmax.f32 %v1443, 0.0
      %v1588 = vmax.f32 %v1554, 0.0
      %v1589 = vmax.f32 %v1556, 0.0
      %1590 = vst [vmem:[%s316] sm:$0xff] %v1558
      %1591 = vst [vmem:[%s316 + $0x8] sm:$0xff] %v1559
      %1592 = vst [vmem:[%s316 + $0x10] sm:$0xff] %v1560
      %1593 = vst [vmem:[%s316 + $0x18] sm:$0xff] %v1561
      %1594 = vst [vmem:[%s316 + $0x20] sm:$0xff] %v1562
      %1595 = vst [vmem:[%s316 + $0x28] sm:$0xff] %v1563
      %1596 = vst [vmem:[%s316 + $0x30] sm:$0xff] %v1564
      %1597 = vst [vmem:[%s316 + $0x38] sm:$0xff] %v1565
      %1598 = vst [vmem:[%s316 + $0x40] sm:$0xff] %v1566
      %1599 = vst [vmem:[%s316 + $0x48] sm:$0xff] %v1567
      %1600 = vst [vmem:[%s316 + $0x50] sm:$0xff] %v1568
      %1601 = vst [vmem:[%s316 + $0x58] sm:$0xff] %v1569
      %1602 = vst [vmem:[%s316 + $0x60] sm:$0xff] %v1570
      %1603 = vst [vmem:[%s316 + $0x68] sm:$0xff] %v1571
      %1604 = vst [vmem:[%s316 + $0x70] sm:$0xff] %v1572
      %1605 = vst [vmem:[%s316 + $0x78] sm:$0xff] %v1573
      %1606 = vst [vmem:[%s316 + $0x80] sm:$0xff] %v1574
      %1607 = vst [vmem:[%s316 + $0x88] sm:$0xff] %v1575
      %1608 = vst [vmem:[%s316 + $0x90] sm:$0xff] %v1576
      %1609 = vst [vmem:[%s316 + $0x98] sm:$0xff] %v1577
      %1610 = vst [vmem:[%s316 + $0xa0] sm:$0xff] %v1578
      %1611 = vst [vmem:[%s316 + $0xa8] sm:$0xff] %v1579
      %1612 = vst [vmem:[%s316 + $0xb0] sm:$0xff] %v1580
      %1613 = vst [vmem:[%s316 + $0xb8] sm:$0xff] %v1581
      %1614 = vst [vmem:[%s316 + $0xc0] sm:$0xff] %v1582
      %1615 = vst [vmem:[%s316 + $0xc8] sm:$0xff] %v1583
      %1616 = vst [vmem:[%s316 + $0xd0] sm:$0xff] %v1584
      %1617 = vst [vmem:[%s316 + $0xd8] sm:$0xff] %v1585
      %1618 = vst [vmem:[%s316 + $0xe0] sm:$0xff] %v1586
      %1619 = vst [vmem:[%s316 + $0xe8] sm:$0xff] %v1587
      %1620 = vst [vmem:[%s316 + $0xf0] sm:$0xff] %v1588
      %1621 = vst [vmem:[%s316 + $0xf8] sm:$0xff] %v1589
      %s1622 = smul.u32 4, %s23
      %p1623 = scmp.lt.s32.totalorder %s22, 1
      %s1624 = scalar_select %p1623, %s22, 1
      %p1625 = scmp.lt.s32.totalorder %s1622, 3
      %s1626 = scalar_select %p1625, %s1622, 3
      %s1627 = smul.addr %s1624, 32
      %s1628 = sadd.s32 %s1626, %s1627
      %s1629 = smul.addr %s1628, 8
      %s1630 = scalar_lea.vmem %s7, %s1629
      // Predicated region
      $region49: #{coarse_reg_forward.10} parent=47 // pred_check
        %p1631 = pneg %p204
      $region50: #{coarse_reg_forward.10} parent=47 // pred_check_branch
        %1633 = sbr.rel (%p1631) target = $region52
      $region51: #{coarse_reg_forward.10} parent=47 // pred_region
        %s1634 = smul.u32 4, %s23
      $region52: #{coarse_reg_forward.10} parent=47 // pred_fallthru
        _
    $region48: #{coarse_reg_forward.10} parent=5 // pred_fallthru
      _
    %p1635 = scmp.le.s32.totalorder 2, %s13
    // Predicated region
    $region53: #{coarse_reg_forward.10} parent=5 // pred_check
      %p1636 = pneg %p1635
    $region54: #{coarse_reg_forward.10} parent=5 // pred_check_branch
      %1638 = sbr.rel (%p1636) target = $region56
    $region55: #{coarse_reg_forward.10} parent=5 // pred_region
      %s1639 = ssub.s32 %s13, 2
      // Predicated region
      $region57: #{coarse_reg_forward.10} parent=55 // pred_check
        %p1640 = pneg %p210
      $region58: #{coarse_reg_forward.10} parent=55 // pred_check_branch
        %1642 = sbr.rel (%p1640) target = $region60
      $region59: #{coarse_reg_forward.10} parent=55 // pred_region
        %s1643 = smul.u32 4, %s25
        %p1644 = scmp.lt.s32.totalorder %s24, 1
        %s1645 = scalar_select %p1644, %s24, 1
        %p1646 = scmp.lt.s32.totalorder %s1643, 3
        %s1647 = scalar_select %p1646, %s1643, 3
        %s1648 = smul.addr %s1645, 32
        %s1649 = sadd.s32 %s1647, %s1648
        %s1650 = smul.addr %s1649, 8
        %s1651 = scalar_lea.vmem %s7, %s1650
      $region60: #{coarse_reg_forward.10} parent=55 // pred_fallthru
        _
    $region56: #{coarse_reg_forward.10} parent=5 // pred_fallthru
      _
  $region6: #{coarse_reg_forward.10} parent=0 // loop_footer
    %s17 = sadd.s32 1, %s13
  $region7: #{coarse_reg_forward.10} parent=0 // loop_footer_branch
    %12 = sbr.rel target = $region3
  $region8: #{coarse_reg_forward.10} parent=0 // loop_exit
    _

// kernel: coarse_reg_forward.11
$region0: #{coarse_reg_forward.11}
  #allocation0 [shape = 'u32[]', space=smem, size = 0x4, offset = 0x4, fixed_abs, tag = 'smem constant byte address 0x4 - core index']
  #allocation1 [shape = 'u32[144,128]{1,0:T(1,128)}', space=vmem, size = 0x12000, scoped, tag = 'internal scratch']
  #allocation2 [shape = 'f32[1,1]{1,0:T(1,128)S(1)}', space=vmem, size = 0x200, scoped, tag = 'scoped memory for coarse_reg_forward.11']
  %s0 = inlined_call_operand.vmem [shape: f32[2,64,128], index: 0, kind: input, shape index: {}]
  %s1 = inlined_call_operand.vmem [shape: f32[32,64], index: 1, kind: input, shape index: {}]
  %s2 = inlined_call_operand.vmem [shape: f32[32,1], index: 2, kind: input, shape index: {}]
  %s3 = inlined_call_operand.vmem [shape: f32[64,64], index: 3, kind: input, shape index: {}]
  %s4 = inlined_call_operand.vmem [shape: f32[64,1], index: 4, kind: input, shape index: {}]
  %s5 = inlined_call_operand.vmem [shape: f32[64,64], index: 5, kind: input, shape index: {}]
  %s6 = inlined_call_operand.vmem [shape: f32[64,1], index: 6, kind: input, shape index: {}]
  %s7 = inlined_call_operand.vmem [shape: f32[1,64], index: 7, kind: input, shape index: {}]
  %s8 = inlined_call_operand.<no memory space> [shape: f32[1,1], index: 8, kind: input, shape index: {}]
  %s9 = inlined_call_operand.vmem [shape: f32[2,32,128], index: 9, kind: output, shape index: {0}]
  %s10 = inlined_call_operand.vmem [shape: f32[2,1,128], index: 10, kind: output, shape index: {1}]
  %11 = xla_tuple %s9, %s10
  %s12 = sld [smem:[#allocation0]]
  $region77: #{coarse_reg_forward.11} parent=0
    _
  %s14 = ssub.s32 1, %s12
  %s15 = scalar_select 0, %s14, %s12
  %v16 = vstv %s8
  %17 = vst [vmem:[#allocation2] sm:$0x1] %v16
  loop: start=0, step=1, limit=4
  $region2: #{coarse_reg_forward.11} parent=0 // loop_pre_header
    _
  $region3: #{coarse_reg_forward.11} parent=0 // loop_header
    %s19 = sphi 0, %s23
    %p20 = scmp.ge.s32.totalorder %s19, 4
    %s26 = sphi 0, %s38
    %s27 = sphi 0, %s34
    %s28 = sphi 0, %s26
    %s29 = sphi 0, %s27
    %s30 = sphi 0, %s28
    %s31 = sphi 0, %s29
    %s43 = sphi 0, %s45
    %s46 = sphi 0, %s43
    %s47 = sphi 0, %s46
    %s63 = sphi 0, %s47
    %s67 = sphi 0, %s67
    %s69 = sphi 0, %s67
    %s70 = sphi 0, %s69
    %s84 = sphi 0, %s70
    %s88 = sphi 0, %s88
    %s90 = sphi 0, %s88
    %s91 = sphi 0, %s90
    %s105 = sphi 0, %s91
    %s109 = sphi 0, %s109
    %s111 = sphi 0, %s109
    %s112 = sphi 0, %s111
    %s126 = sphi 0, %s112
    %s130 = sphi 0, %s130
    %s132 = sphi 0, %s130
    %s133 = sphi 0, %s132
    %s147 = sphi 0, %s133
    %s151 = sphi 0, %s151
    %s153 = sphi 0, %s151
    %s154 = sphi 0, %s153
    %s168 = sphi 0, %s154
    %s172 = sphi 0, %s172
    %s174 = sphi 0, %s172
    %s175 = sphi 0, %s174
    %s189 = sphi 0, %s175
    %s193 = sphi 0, %s193
    %s195 = sphi 0, %s193
    %s196 = sphi 0, %s195
    %s210 = sphi 0, %s196
    %s214 = sphi 0, %s214
    %s216 = sphi 0, %s214
    %s217 = sphi 0, %s216
    %s231 = sphi 0, %s217
    %s239 = sphi 0, %s241
    %s242 = sphi 0, %s239
    %s243 = sphi 0, %s242
    %s259 = sphi 0, %s243
    %s267 = sphi 0, %s269
    %s270 = sphi 0, %s267
    %s271 = sphi 0, %s270
    %s287 = sphi 0, %s271
  $region4: #{coarse_reg_forward.11} parent=0 // loop_header_branch
    %22 = sbr.rel (%p20) target = $region8
  $region5: #{coarse_reg_forward.11} parent=0 // loop_body
    %s24 = ssub.s32 %s19, 1
    %s25 = ssub.s32 %s19, 2
    %s32 = sadd.s32 1, %s27
    %p33 = scmp.ge.s32.totalorder %s32, 1
    %s34 = scalar_select %p33, 0, %s32
    %s35 = sadd.s32 1, %s26
    %s36 = scalar_select %p33, %s35, %s26
    %p37 = scmp.ge.s32.totalorder %s36, 2
    %s38 = scalar_select %p37, 0, %s36
    %s39 = ssub.s32 %s26, %s38
    %s40 = ssub.s32 %s27, %s34
    %s41 = sor.u32 %s39, %s40
    %p42 = scmp.eq.s32.totalorder %s41, 0
    %s44 = sadd.s32 %s43, 1
    %s45 = scalar_select %p42, %s43, %s44
    %p48 = pneg %p42
    %p49 = scmp.eq.s32.totalorder %s19, 1
    %p50 = por %p48, %p49
    %p51 = scmp.ne.s32.totalorder %s43, %s46
    %p52 = scmp.eq.s32.totalorder %s19, 0
    %p53 = por %p51, %p52
    %p54 = scmp.ne.s32.totalorder %s43, %s46
    %p55 = scmp.eq.s32.totalorder %s24, 1
    %p56 = por %p54, %p55
    %p57 = scmp.ne.s32.totalorder %s46, %s47
    %p58 = scmp.eq.s32.totalorder %s24, 0
    %p59 = por %p57, %p58
    %p60 = scmp.ne.s32.totalorder %s46, %s47
    %p61 = scmp.eq.s32.totalorder %s25, 1
    %p62 = por %p60, %p61
    %p64 = scmp.ne.s32.totalorder %s47, %s63
    %p65 = scmp.eq.s32.totalorder %s25, 0
    %p66 = por %p64, %p65
    %s68 = sadd.s32 %s67, 1
    %p71 = scmp.eq.s32.totalorder %s19, 1
    %p72 = scmp.ne.s32.totalorder %s67, %s69
    %p73 = scmp.eq.s32.totalorder %s19, 0
    %p74 = por %p72, %p73
    %p75 = scmp.ne.s32.totalorder %s67, %s69
    %p76 = scmp.eq.s32.totalorder %s24, 1
    %p77 = por %p75, %p76
    %p78 = scmp.ne.s32.totalorder %s69, %s70
    %p79 = scmp.eq.s32.totalorder %s24, 0
    %p80 = por %p78, %p79
    %p81 = scmp.ne.s32.totalorder %s69, %s70
    %p82 = scmp.eq.s32.totalorder %s25, 1
    %p83 = por %p81, %p82
    %p85 = scmp.ne.s32.totalorder %s70, %s84
    %p86 = scmp.eq.s32.totalorder %s25, 0
    %p87 = por %p85, %p86
    %s89 = sadd.s32 %s88, 1
    %p92 = scmp.eq.s32.totalorder %s19, 1
    %p93 = scmp.ne.s32.totalorder %s88, %s90
    %p94 = scmp.eq.s32.totalorder %s19, 0
    %p95 = por %p93, %p94
    %p96 = scmp.ne.s32.totalorder %s88, %s90
    %p97 = scmp.eq.s32.totalorder %s24, 1
    %p98 = por %p96, %p97
    %p99 = scmp.ne.s32.totalorder %s90, %s91
    %p100 = scmp.eq.s32.totalorder %s24, 0
    %p101 = por %p99, %p100
    %p102 = scmp.ne.s32.totalorder %s90, %s91
    %p103 = scmp.eq.s32.totalorder %s25, 1
    %p104 = por %p102, %p103
    %p106 = scmp.ne.s32.totalorder %s91, %s105
    %p107 = scmp.eq.s32.totalorder %s25, 0
    %p108 = por %p106, %p107
    %s110 = sadd.s32 %s109, 1
    %p113 = scmp.eq.s32.totalorder %s19, 1
    %p114 = scmp.ne.s32.totalorder %s109, %s111
    %p115 = scmp.eq.s32.totalorder %s19, 0
    %p116 = por %p114, %p115
    %p117 = scmp.ne.s32.totalorder %s109, %s111
    %p118 = scmp.eq.s32.totalorder %s24, 1
    %p119 = por %p117, %p118
    %p120 = scmp.ne.s32.totalorder %s111, %s112
    %p121 = scmp.eq.s32.totalorder %s24, 0
    %p122 = por %p120, %p121
    %p123 = scmp.ne.s32.totalorder %s111, %s112
    %p124 = scmp.eq.s32.totalorder %s25, 1
    %p125 = por %p123, %p124
    %p127 = scmp.ne.s32.totalorder %s112, %s126
    %p128 = scmp.eq.s32.totalorder %s25, 0
    %p129 = por %p127, %p128
    %s131 = sadd.s32 %s130, 1
    %p134 = scmp.eq.s32.totalorder %s19, 1
    %p135 = scmp.ne.s32.totalorder %s130, %s132
    %p136 = scmp.eq.s32.totalorder %s19, 0
    %p137 = por %p135, %p136
    %p138 = scmp.ne.s32.totalorder %s130, %s132
    %p139 = scmp.eq.s32.totalorder %s24, 1
    %p140 = por %p138, %p139
    %p141 = scmp.ne.s32.totalorder %s132, %s133
    %p142 = scmp.eq.s32.totalorder %s24, 0
    %p143 = por %p141, %p142
    %p144 = scmp.ne.s32.totalorder %s132, %s133
    %p145 = scmp.eq.s32.totalorder %s25, 1
    %p146 = por %p144, %p145
    %p148 = scmp.ne.s32.totalorder %s133, %s147
    %p149 = scmp.eq.s32.totalorder %s25, 0
    %p150 = por %p148, %p149
    %s152 = sadd.s32 %s151, 1
    %p155 = scmp.eq.s32.totalorder %s19, 1
    %p156 = scmp.ne.s32.totalorder %s151, %s153
    %p157 = scmp.eq.s32.totalorder %s19, 0
    %p158 = por %p156, %p157
    %p159 = scmp.ne.s32.totalorder %s151, %s153
    %p160 = scmp.eq.s32.totalorder %s24, 1
    %p161 = por %p159, %p160
    %p162 = scmp.ne.s32.totalorder %s153, %s154
    %p163 = scmp.eq.s32.totalorder %s24, 0
    %p164 = por %p162, %p163
    %p165 = scmp.ne.s32.totalorder %s153, %s154
    %p166 = scmp.eq.s32.totalorder %s25, 1
    %p167 = por %p165, %p166
    %p169 = scmp.ne.s32.totalorder %s154, %s168
    %p170 = scmp.eq.s32.totalorder %s25, 0
    %p171 = por %p169, %p170
    %s173 = sadd.s32 %s172, 1
    %p176 = scmp.eq.s32.totalorder %s19, 1
    %p177 = scmp.ne.s32.totalorder %s172, %s174
    %p178 = scmp.eq.s32.totalorder %s19, 0
    %p179 = por %p177, %p178
    %p180 = scmp.ne.s32.totalorder %s172, %s174
    %p181 = scmp.eq.s32.totalorder %s24, 1
    %p182 = por %p180, %p181
    %p183 = scmp.ne.s32.totalorder %s174, %s175
    %p184 = scmp.eq.s32.totalorder %s24, 0
    %p185 = por %p183, %p184
    %p186 = scmp.ne.s32.totalorder %s174, %s175
    %p187 = scmp.eq.s32.totalorder %s25, 1
    %p188 = por %p186, %p187
    %p190 = scmp.ne.s32.totalorder %s175, %s189
    %p191 = scmp.eq.s32.totalorder %s25, 0
    %p192 = por %p190, %p191
    %s194 = sadd.s32 %s193, 1
    %p197 = scmp.eq.s32.totalorder %s19, 1
    %p198 = scmp.ne.s32.totalorder %s193, %s195
    %p199 = scmp.eq.s32.totalorder %s19, 0
    %p200 = por %p198, %p199
    %p201 = scmp.ne.s32.totalorder %s193, %s195
    %p202 = scmp.eq.s32.totalorder %s24, 1
    %p203 = por %p201, %p202
    %p204 = scmp.ne.s32.totalorder %s195, %s196
    %p205 = scmp.eq.s32.totalorder %s24, 0
    %p206 = por %p204, %p205
    %p207 = scmp.ne.s32.totalorder %s195, %s196
    %p208 = scmp.eq.s32.totalorder %s25, 1
    %p209 = por %p207, %p208
    %p211 = scmp.ne.s32.totalorder %s196, %s210
    %p212 = scmp.eq.s32.totalorder %s25, 0
    %p213 = por %p211, %p212
    %s215 = sadd.s32 %s214, 1
    %p218 = scmp.eq.s32.totalorder %s19, 1
    %p219 = scmp.ne.s32.totalorder %s214, %s216
    %p220 = scmp.eq.s32.totalorder %s19, 0
    %p221 = por %p219, %p220
    %p222 = scmp.ne.s32.totalorder %s214, %s216
    %p223 = scmp.eq.s32.totalorder %s24, 1
    %p224 = por %p222, %p223
    %p225 = scmp.ne.s32.totalorder %s216, %s217
    %p226 = scmp.eq.s32.totalorder %s24, 0
    %p227 = por %p225, %p226
    %p228 = scmp.ne.s32.totalorder %s216, %s217
    %p229 = scmp.eq.s32.totalorder %s25, 1
    %p230 = por %p228, %p229
    %p232 = scmp.ne.s32.totalorder %s217, %s231
    %p233 = scmp.eq.s32.totalorder %s25, 0
    %p234 = por %p232, %p233
    %s235 = ssub.s32 %s26, %s38
    %s236 = ssub.s32 %s27, %s34
    %s237 = sor.u32 %s235, %s236
    %p238 = scmp.eq.s32.totalorder %s237, 0
    %s240 = sadd.s32 %s239, 1
    %s241 = scalar_select %p238, %s239, %s240
    %p244 = pneg %p238
    %p245 = scmp.eq.s32.totalorder %s19, 1
    %p246 = por %p244, %p245
    %p247 = scmp.ne.s32.totalorder %s239, %s242
    %p248 = scmp.eq.s32.totalorder %s19, 0
    %p249 = por %p247, %p248
    %p250 = scmp.ne.s32.totalorder %s239, %s242
    %p251 = scmp.eq.s32.totalorder %s24, 1
    %p252 = por %p250, %p251
    %p253 = scmp.ne.s32.totalorder %s242, %s243
    %p254 = scmp.eq.s32.totalorder %s24, 0
    %p255 = por %p253, %p254
    %p256 = scmp.ne.s32.totalorder %s242, %s243
    %p257 = scmp.eq.s32.totalorder %s25, 1
    %p258 = por %p256, %p257
    %p260 = scmp.ne.s32.totalorder %s243, %s259
    %p261 = scmp.eq.s32.totalorder %s25, 0
    %p262 = por %p260, %p261
    %s263 = ssub.s32 %s26, %s38
    %s264 = ssub.s32 %s27, %s34
    %s265 = sor.u32 %s263, %s264
    %p266 = scmp.eq.s32.totalorder %s265, 0
    %s268 = sadd.s32 %s267, 1
    %s269 = scalar_select %p266, %s267, %s268
    %p272 = pneg %p266
    %p273 = scmp.eq.s32.totalorder %s19, 1
    %p274 = por %p272, %p273
    %p275 = scmp.ne.s32.totalorder %s267, %s270
    %p276 = scmp.eq.s32.totalorder %s19, 0
    %p277 = por %p275, %p276
    %p278 = scmp.ne.s32.totalorder %s267, %s270
    %p279 = scmp.eq.s32.totalorder %s24, 1
    %p280 = por %p278, %p279
    %p281 = scmp.ne.s32.totalorder %s270, %s271
    %p282 = scmp.eq.s32.totalorder %s24, 0
    %p283 = por %p281, %p282
    %p284 = scmp.ne.s32.totalorder %s270, %s271
    %p285 = scmp.eq.s32.totalorder %s25, 1
    %p286 = por %p284, %p285
    %p288 = scmp.ne.s32.totalorder %s271, %s287
    %p289 = scmp.eq.s32.totalorder %s25, 0
    %p290 = por %p288, %p289
    %p291 = scmp.le.s32.totalorder 1, %s19
    %p292 = scmp.lt.s32.totalorder %s19, 3
    %p293 = pnand %p291, %p292
    %p294 = pneg %p293
    // Predicated region
    $region9: #{coarse_reg_forward.11} parent=5 // pred_check
      _
    $region10: #{coarse_reg_forward.11} parent=5 // pred_check_branch
      %296 = sbr.rel (%p293) target = $region12
    $region11: #{coarse_reg_forward.11} parent=5 // pred_region
      %s297 = ssub.s32 %s19, 1
      // Predicated region
      $region13: #{coarse_reg_forward.11} parent=11 // pred_check
        %p298 = pneg %p80
      $region14: #{coarse_reg_forward.11} parent=11 // pred_check_branch
        %300 = sbr.rel (%p298) target = $region16
      $region15: #{coarse_reg_forward.11} parent=11 // pred_region
        _
      $region16: #{coarse_reg_forward.11} parent=11 // pred_fallthru
        _
      // Predicated region
      $region17: #{coarse_reg_forward.11} parent=11 // pred_check
        %p301 = pneg %p101
      $region18: #{coarse_reg_forward.11} parent=11 // pred_check_branch
        %303 = sbr.rel (%p301) target = $region20
      $region19: #{coarse_reg_forward.11} parent=11 // pred_region
        _
      $region20: #{coarse_reg_forward.11} parent=11 // pred_fallthru
        _
      // Predicated region
      $region21: #{coarse_reg_forward.11} parent=11 // pred_check
        %p304 = pneg %p122
      $region22: #{coarse_reg_forward.11} parent=11 // pred_check_branch
        %306 = sbr.rel (%p304) target = $region24
      $region23: #{coarse_reg_forward.11} parent=11 // pred_region
        _
      $region24: #{coarse_reg_forward.11} parent=11 // pred_fallthru
        _
      // Predicated region
      $region25: #{coarse_reg_forward.11} parent=11 // pred_check
        %p307 = pneg %p143
      $region26: #{coarse_reg_forward.11} parent=11 // pred_check_branch
        %309 = sbr.rel (%p307) target = $region28
      $region27: #{coarse_reg_forward.11} parent=11 // pred_region
        _
      $region28: #{coarse_reg_forward.11} parent=11 // pred_fallthru
        _
      // Predicated region
      $region29: #{coarse_reg_forward.11} parent=11 // pred_check
        %p310 = pneg %p164
      $region30: #{coarse_reg_forward.11} parent=11 // pred_check_branch
        %312 = sbr.rel (%p310) target = $region32
      $region31: #{coarse_reg_forward.11} parent=11 // pred_region
        _
      $region32: #{coarse_reg_forward.11} parent=11 // pred_fallthru
        _
      // Predicated region
      $region33: #{coarse_reg_forward.11} parent=11 // pred_check
        %p313 = pneg %p185
      $region34: #{coarse_reg_forward.11} parent=11 // pred_check_branch
        %315 = sbr.rel (%p313) target = $region36
      $region35: #{coarse_reg_forward.11} parent=11 // pred_region
        _
      $region36: #{coarse_reg_forward.11} parent=11 // pred_fallthru
        _
      // Predicated region
      $region37: #{coarse_reg_forward.11} parent=11 // pred_check
        %p316 = pneg %p206
      $region38: #{coarse_reg_forward.11} parent=11 // pred_check_branch
        %318 = sbr.rel (%p316) target = $region40
      $region39: #{coarse_reg_forward.11} parent=11 // pred_region
        _
      $region40: #{coarse_reg_forward.11} parent=11 // pred_fallthru
        _
      // Predicated region
      $region41: #{coarse_reg_forward.11} parent=11 // pred_check
        %p319 = pneg %p227
      $region42: #{coarse_reg_forward.11} parent=11 // pred_check_branch
        %321 = sbr.rel (%p319) target = $region44
      $region43: #{coarse_reg_forward.11} parent=11 // pred_region
        _
      $region44: #{coarse_reg_forward.11} parent=11 // pred_fallthru
        _
    $region12: #{coarse_reg_forward.11} parent=5 // pred_fallthru
      _
    %p322 = scmp.lt.s32.totalorder %s19, 2
    // Predicated region
    $region45: #{coarse_reg_forward.11} parent=5 // pred_check
      %p323 = pneg %p322
    $region46: #{coarse_reg_forward.11} parent=5 // pred_check_branch
      %325 = sbr.rel (%p323) target = $region48
    $region47: #{coarse_reg_forward.11} parent=5 // pred_region
      // Predicated region
      $region49: #{coarse_reg_forward.11} parent=47 // pred_check
        %p326 = pneg %p53
      $region50: #{coarse_reg_forward.11} parent=47 // pred_check_branch
        %328 = sbr.rel (%p326) target = $region52
      $region51: #{coarse_reg_forward.11} parent=47 // pred_region
        %p329 = scmp.lt.s32.totalorder %s26, 1
        %s330 = scalar_select %p329, %s26, 1
        %p331 = scmp.lt.s32.totalorder %s27, 0
        %s332 = scalar_select %p331, %s27, 0
        %s333 = smul.addr %s330, 8
        %s334 = sadd.s32 %s332, %s333
        %s335 = smul.addr %s334, 8
        %s336 = scalar_lea.vmem %s0, %s335
      $region52: #{coarse_reg_forward.11} parent=47 // pred_fallthru
        _
    $region48: #{coarse_reg_forward.11} parent=5 // pred_fallthru
      _
    %p337 = scmp.le.s32.totalorder 1, %s19
    %p338 = scmp.lt.s32.totalorder %s19, 3
    %p339 = pnand %p337, %p338
    %p340 = pneg %p339
    // Predicated region
    $region53: #{coarse_reg_forward.11} parent=5 // pred_check
      _
    $region54: #{coarse_reg_forward.11} parent=5 // pred_check_branch
      %342 = sbr.rel (%p339) target = $region56
    $region55: #{coarse_reg_forward.11} parent=5 // pred_region
      %s343 = ssub.s32 %s19, 1
      %p344 = scmp.lt.s32.totalorder %s28, 1
      %s345 = scalar_select %p344, %s28, 1
      %p346 = scmp.lt.s32.totalorder %s29, 0
      %s347 = scalar_select %p346, %s29, 0
      %s348 = smul.addr %s345, 8
      %s349 = sadd.s32 %s347, %s348
      %s350 = smul.addr %s349, 8
      %s351 = scalar_lea.vmem %s0, %s350
      %p352 = pneg %p59
      %p353 = pneg %p56
      %p354 = pneg %p80
      %p355 = pneg %p77
      %p356 = pneg %p101
      %p357 = pneg %p98
      %p358 = pneg %p122
      %p359 = pneg %p119
      %p360 = pneg %p143
      %p361 = pneg %p140
      %p362 = pneg %p164
      %p363 = pneg %p161
      %p364 = pneg %p185
      %p365 = pneg %p182
      %p366 = pneg %p206
      %p367 = pneg %p203
      %p368 = pneg %p227
      %p369 = pneg %p224
      %p370 = pneg %p255
      %p371 = pneg %p252
      %p372 = scmp.lt.s32.totalorder %s28, 1
      %s373 = scalar_select %p372, %s28, 1
      %p374 = scmp.lt.s32.totalorder %s29, 0
      %s375 = scalar_select %p374, %s29, 0
      %s376 = smul.addr %s373, 4
      %s377 = sadd.s32 %s375, %s376
      %s378 = smul.addr %s377, 8
      %s379 = scalar_lea.vmem %s9, %s378
      %p380 = pneg %p283
      %p381 = pneg %p280
      %p382 = scmp.lt.s32.totalorder %s28, 1
      %s383 = scalar_select %p382, %s28, 1
      %p384 = scmp.lt.s32.totalorder %s29, 0
      %s385 = scalar_select %p384, %s29, 0
      %s386 = sadd.s32 %s385, %s383
      %s387 = scalar_lea.vmem %s10, %s386
      %p388 = scmp.lt.s32.totalorder %s28, 1
      %s389 = scalar_select %p388, %s28, 1
      %p390 = scmp.lt.s32.totalorder %s29, 0
      %s391 = scalar_select %p390, %s29, 0
      %s392 = smul.addr %s389, 8
      %s393 = sadd.s32 %s391, %s392
      %s394 = smul.addr %s393, 8
      %s395 = scalar_lea.vmem %s0, %s394
      %p396 = scmp.lt.s32.totalorder %s28, 1
      %s397 = scalar_select %p396, %s28, 1
      %p398 = scmp.lt.s32.totalorder %s29, 0
      %s399 = scalar_select %p398, %s29, 0
      %s400 = smul.addr %s397, 4
      %s401 = sadd.s32 %s399, %s400
      %s402 = smul.addr %s401, 8
      %s403 = scalar_lea.vmem %s9, %s402
      %p404 = scmp.lt.s32.totalorder %s28, 1
      %s405 = scalar_select %p404, %s28, 1
      %p406 = scmp.lt.s32.totalorder %s29, 0
      %s407 = scalar_select %p406, %s29, 0
      %s408 = sadd.s32 %s407, %s405
      %s409 = scalar_lea.vmem %s10, %s408
      %v410 = vld [vmem:[%s395] sm:$0xff]
      %v411 = vld [vmem:[%s395 + $0x8] sm:$0xff]
      %v412 = vld [vmem:[%s395 + $0x10] sm:$0xff]
      %v413 = vld [vmem:[%s395 + $0x18] sm:$0xff]
      %v414 = vld [vmem:[%s395 + $0x20] sm:$0xff]
      %v415 = vld [vmem:[%s395 + $0x28] sm:$0xff]
      %v416 = vld [vmem:[%s395 + $0x30] sm:$0xff]
      %v417 = vld [vmem:[%s395 + $0x38] sm:$0xff]
      %v418 = vld [vmem:[%s1] sm:$0xff]
      %v419 = vld [vmem:[%s1 + $0x8] sm:$0xff]
      %v420 = vld [vmem:[%s1 + $0x10] sm:$0xff]
      %v421 = vld [vmem:[%s1 + $0x18] sm:$0xff]
      %v422 = vld [vmem:[%s2] sm:$0xff]
      %v423 = vld [vmem:[%s2 + $0x8] sm:$0xff]
      %v424 = vld [vmem:[%s2 + $0x10] sm:$0xff]
      %v425 = vld [vmem:[%s2 + $0x18] sm:$0xff]
      %427 = vset.pattern.permute.xlu0 0
      %428 = vperm.xlu0 %427, %v422
      %v429 = vpop.permute.xlu0 %428
      %432 = vset.pattern.permute.xlu0 0
      %433 = vperm.xlu0 %432, %v423
      %v434 = vpop.permute.xlu0 %433
      %437 = vset.pattern.permute.xlu0 0
      %438 = vperm.xlu0 %437, %v424
      %v439 = vpop.permute.xlu0 %438
      %442 = vset.pattern.permute.xlu0 0
      %443 = vperm.xlu0 %442, %v425
      %v444 = vpop.permute.xlu0 %443
      %vm446 = vcmask 523264
      %v448 = vsel %vm446, %v418, 0
      %v451 = vsel %vm446, %v419, 0
      %v454 = vsel %vm446, %v420, 0
      %v457 = vsel %vm446, %v421, 0
      %459 = vmatprep.subr.mxu0 0.0
      %460 = vmatpush1.msra.mxu0 %v410
      %461 = vmatprep.subr.mxu0 0.0
      %462 = vmatpush1.msra.mxu0 %v411
      %463 = vmatprep.subr.mxu0 0.0
      %464 = vmatpush1.msra.mxu0 %v412
      %465 = vmatprep.subr.mxu0 0.0
      %466 = vmatpush1.msra.mxu0 %v413
      %467 = vmatprep.subr.mxu0 0.0
      %468 = vmatpush1.msra.mxu0 %v414
      %469 = vmatprep.subr.mxu0 0.0
      %470 = vmatpush1.msra.mxu0 %v415
      %471 = vmatprep.subr.mxu0 0.0
      %472 = vmatpush1.msra.mxu0 %v416
      %473 = vmatprep.subr.mxu0 0.0
      %474 = vmatpush1.msra.mxu0 %v417
      %475 = vmatprep.subr.mxu0 0.0
      %476 = vmatpush1.msra.mxu0 0.0
      %477 = vmatprep.subr.mxu0 0.0
      %478 = vmatpush1.msra.mxu0 0.0
      %479 = vmatprep.subr.mxu0 0.0
      %480 = vmatpush1.msra.mxu0 0.0
      %481 = vmatprep.subr.mxu0 0.0
      %482 = vmatpush1.msra.mxu0 0.0
      %483 = vmatprep.subr.mxu0 0.0
      %484 = vmatpush1.msra.mxu0 0.0
      %485 = vmatprep.subr.mxu0 0.0
      %486 = vmatpush1.msra.mxu0 0.0
      %487 = vmatprep.subr.mxu0 0.0
      %488 = vmatpush1.msra.mxu0 0.0
      %489 = vmatprep.subr.mxu0 0.0
      %490 = vmatpush1.msra.mxu0 0.0
      %491 = vmatprep.subr.mxu0 0.0
      %492 = vmatpush1.msra.mxu0 0.0
      %493 = vmatprep.subr.mxu0 0.0
      %494 = vmatpush1.msra.mxu0 0.0
      %495 = vmatprep.subr.mxu0 0.0
      %496 = vmatpush1.msra.mxu0 0.0
      %497 = vmatprep.subr.mxu0 0.0
      %498 = vmatpush1.msra.mxu0 0.0
      %499 = vmatprep.subr.mxu0 0.0
      %500 = vmatpush1.msra.mxu0 0.0
      %501 = vmatprep.subr.mxu0 0.0
      %502 = vmatpush1.msra.mxu0 0.0
      %503 = vmatprep.subr.mxu0 0.0
      %504 = vmatpush1.msra.mxu0 0.0
      %505 = vmatprep.subr.mxu0 0.0
      %506 = vmatpush1.msra.mxu0 0.0
      %507 = vmatprep.subr.mxu0 0.0
      %508 = vmatpush1.msra.mxu0 0.0
      %509 = vmatprep.subr.mxu0 0.0
      %510 = vmatpush1.msra.mxu0 0.0
      %511 = vmatprep.subr.mxu0 0.0
      %512 = vmatpush1.msra.mxu0 0.0
      %513 = vmatprep.subr.mxu0 0.0
      %514 = vmatpush1.msra.mxu0 0.0
      %515 = vmatprep.subr.mxu0 0.0
      %516 = vmatpush1.msra.mxu0 0.0
      %517 = vmatprep.subr.mxu0 0.0
      %518 = vmatpush1.msra.mxu0 0.0
      %519 = vmatprep.subr.mxu0 0.0
      %520 = vmatpush1.msra.mxu0 0.0
      %521 = vmatprep.subr.mxu0 0.0
      %522 = vmatpush1.msra.mxu0 0.0
      %523 = vmatprep.mubr.f32.mxu0 0.0
      %524 = vmatmul.mubr.f32.gmra.mrb[0].mxu0 %v448
      %v525 = vpop.f32.mrb[0].mxu0
      %v526 = vadd.f32 %v429, %v525
      %v527 = vpop.f32.mrb[0].mxu0
      %528 = vmatprep.mubr.f32.mxu0 0.0
      %529 = vmatmul.mubr.f32.gmra.mrb[0].mxu0 %v451
      %v530 = vpop.f32.mrb[0].mxu0
      %v531 = vadd.f32 %v434, %v530
      %v532 = vpop.f32.mrb[0].mxu0
      %533 = vmatprep.mubr.f32.mxu0 0.0
      %534 = vmatmul.mubr.f32.gmra.mrb[0].mxu0 %v454
      %v535 = vpop.f32.mrb[0].mxu0
      %v536 = vadd.f32 %v439, %v535
      %v537 = vpop.f32.mrb[0].mxu0
      %538 = vmatprep.mubr.f32.mxu0 0.0
      %539 = vmatmul.mubr.f32.gmra.mrb[0].mxu0 %v457
      %v540 = vpop.f32.mrb[0].mxu0
      %v541 = vadd.f32 %v444, %v540
      %v542 = vpop.f32.mrb[0].mxu0
      %543 = vdwg.mxu0
      %v544 = vmax.f32 %v526, 0.0
      %v545 = vmax.f32 %v531, 0.0
      %v546 = vmax.f32 %v536, 0.0
      %v547 = vmax.f32 %v541, 0.0
      %548 = vst [vmem:[%s403] sm:$0xff] %v544
      %549 = vst [vmem:[%s403 + $0x8] sm:$0xff] %v545
      %550 = vst [vmem:[%s403 + $0x10] sm:$0xff] %v546
      %551 = vst [vmem:[%s403 + $0x18] sm:$0xff] %v547
      %v552 = vld [vmem:[%s3] sm:$0xff]
      %v553 = vld [vmem:[%s3 + $0x8] sm:$0xff]
      %v554 = vld [vmem:[%s3 + $0x10] sm:$0xff]
      %v555 = vld [vmem:[%s3 + $0x18] sm:$0xff]
      %v556 = vld [vmem:[%s3 + $0x20] sm:$0xff]
      %v557 = vld [vmem:[%s3 + $0x28] sm:$0xff]
      %v558 = vld [vmem:[%s3 + $0x30] sm:$0xff]
      %v559 = vld [vmem:[%s3 + $0x38] sm:$0xff]
      %v560 = vld [vmem:[%s4] sm:$0xff]
      %v561 = vld [vmem:[%s4 + $0x8] sm:$0xff]
      %v562 = vld [vmem:[%s4 + $0x10] sm:$0xff]
      %v563 = vld [vmem:[%s4 + $0x18] sm:$0xff]
      %v564 = vld [vmem:[%s4 + $0x20] sm:$0xff]
      %v565 = vld [vmem:[%s4 + $0x28] sm:$0xff]
      %v566 = vld [vmem:[%s4 + $0x30] sm:$0xff]
      %v567 = vld [vmem:[%s4 + $0x38] sm:$0xff]
      %569 = vset.pattern.permute.xlu0 0
      %570 = vperm.xlu0 %569, %v560
      %v571 = vpop.permute.xlu0 %570
      %574 = vset.pattern.permute.xlu0 0
      %575 = vperm.xlu0 %574, %v561
      %v576 = vpop.permute.xlu0 %575
      %579 = vset.pattern.permute.xlu0 0
      %580 = vperm.xlu0 %579, %v562
      %v581 = vpop.permute.xlu0 %580
      %584 = vset.pattern.permute.xlu0 0
      %585 = vperm.xlu0 %584, %v563
      %v586 = vpop.permute.xlu0 %585
      %589 = vset.pattern.permute.xlu0 0
      %590 = vperm.xlu0 %589, %v564
      %v591 = vpop.permute.xlu0 %590
      %594 = vset.pattern.permute.xlu0 0
      %595 = vperm.xlu0 %594, %v565
      %v596 = vpop.permute.xlu0 %595
      %599 = vset.pattern.permute.xlu0 0
      %600 = vperm.xlu0 %599, %v566
      %v601 = vpop.permute.xlu0 %600
      %604 = vset.pattern.permute.xlu0 0
      %605 = vperm.xlu0 %604, %v567
      %v606 = vpop.permute.xlu0 %605
      %v609 = vsel %vm446, %v552, 0
      %v612 = vsel %vm446, %v553, 0
      %v615 = vsel %vm446, %v554, 0
      %v618 = vsel %vm446, %v555, 0
      %v621 = vsel %vm446, %v556, 0
      %v624 = vsel %vm446, %v557, 0
      %v627 = vsel %vm446, %v558, 0
      %v630 = vsel %vm446, %v559, 0
      %632 = vmatprep.subr.mxu0 0.0
      %633 = vmatpush1.msra.mxu0 %v410
      %634 = vmatprep.subr.mxu0 0.0
      %635 = vmatpush1.msra.mxu0 %v411
      %636 = vmatprep.subr.mxu0 0.0
      %637 = vmatpush1.msra.mxu0 %v412
      %638 = vmatprep.subr.mxu0 0.0
      %639 = vmatpush1.msra.mxu0 %v413
      %640 = vmatprep.subr.mxu0 0.0
      %641 = vmatpush1.msra.mxu0 %v414
      %642 = vmatprep.subr.mxu0 0.0
      %643 = vmatpush1.msra.mxu0 %v415
      %644 = vmatprep.subr.mxu0 0.0
      %645 = vmatpush1.msra.mxu0 %v416
      %646 = vmatprep.subr.mxu0 0.0
      %647 = vmatpush1.msra.mxu0 %v417
      %648 = vmatprep.subr.mxu0 0.0
      %649 = vmatpush1.msra.mxu0 0.0
      %650 = vmatprep.subr.mxu0 0.0
      %651 = vmatpush1.msra.mxu0 0.0
      %652 = vmatprep.subr.mxu0 0.0
      %653 = vmatpush1.msra.mxu0 0.0
      %654 = vmatprep.subr.mxu0 0.0
      %655 = vmatpush1.msra.mxu0 0.0
      %656 = vmatprep.subr.mxu0 0.0
      %657 = vmatpush1.msra.mxu0 0.0
      %658 = vmatprep.subr.mxu0 0.0
      %659 = vmatpush1.msra.mxu0 0.0
      %660 = vmatprep.subr.mxu0 0.0
      %661 = vmatpush1.msra.mxu0 0.0
      %662 = vmatprep.subr.mxu0 0.0
      %663 = vmatpush1.msra.mxu0 0.0
      %664 = vmatprep.subr.mxu0 0.0
      %665 = vmatpush1.msra.mxu0 0.0
      %666 = vmatprep.subr.mxu0 0.0
      %667 = vmatpush1.msra.mxu0 0.0
      %668 = vmatprep.subr.mxu0 0.0
      %669 = vmatpush1.msra.mxu0 0.0
      %670 = vmatprep.subr.mxu0 0.0
      %671 = vmatpush1.msra.mxu0 0.0
      %672 = vmatprep.subr.mxu0 0.0
      %673 = vmatpush1.msra.mxu0 0.0
      %674 = vmatprep.subr.mxu0 0.0
      %675 = vmatpush1.msra.mxu0 0.0
      %676 = vmatprep.subr.mxu0 0.0
      %677 = vmatpush1.msra.mxu0 0.0
      %678 = vmatprep.subr.mxu0 0.0
      %679 = vmatpush1.msra.mxu0 0.0
      %680 = vmatprep.subr.mxu0 0.0
      %681 = vmatpush1.msra.mxu0 0.0
      %682 = vmatprep.subr.mxu0 0.0
      %683 = vmatpush1.msra.mxu0 0.0
      %684 = vmatprep.subr.mxu0 0.0
      %685 = vmatpush1.msra.mxu0 0.0
      %686 = vmatprep.subr.mxu0 0.0
      %687 = vmatpush1.msra.mxu0 0.0
      %688 = vmatprep.subr.mxu0 0.0
      %689 = vmatpush1.msra.mxu0 0.0
      %690 = vmatprep.subr.mxu0 0.0
      %691 = vmatpush1.msra.mxu0 0.0
      %692 = vmatprep.subr.mxu0 0.0
      %693 = vmatpush1.msra.mxu0 0.0
      %694 = vmatprep.subr.mxu0 0.0
      %695 = vmatpush1.msra.mxu0 0.0
      %696 = vmatprep.mubr.f32.mxu0 0.0
      %697 = vmatmul.mubr.f32.gmra.mrb[0].mxu0 %v609
      %v698 = vpop.f32.mrb[0].mxu0
      %v699 = vadd.f32 %v571, %v698
      %v700 = vpop.f32.mrb[0].mxu0
      %701 = vmatprep.mubr.f32.mxu0 0.0
      %702 = vmatmul.mubr.f32.gmra.mrb[0].mxu0 %v612
      %v703 = vpop.f32.mrb[0].mxu0
      %v704 = vadd.f32 %v576, %v703
      %v705 = vpop.f32.mrb[0].mxu0
      %706 = vmatprep.mubr.f32.mxu0 0.0
      %707 = vmatmul.mubr.f32.gmra.mrb[0].mxu0 %v615
      %v708 = vpop.f32.mrb[0].mxu0
      %v709 = vadd.f32 %v581, %v708
      %v710 = vpop.f32.mrb[0].mxu0
      %711 = vmatprep.mubr.f32.mxu0 0.0
      %712 = vmatmul.mubr.f32.gmra.mrb[0].mxu0 %v618
      %v713 = vpop.f32.mrb[0].mxu0
      %v714 = vadd.f32 %v586, %v713
      %v715 = vpop.f32.mrb[0].mxu0
      %716 = vmatprep.mubr.f32.mxu0 0.0
      %717 = vmatmul.mubr.f32.gmra.mrb[0].mxu0 %v621
      %v718 = vpop.f32.mrb[0].mxu0
      %v719 = vadd.f32 %v591, %v718
      %v720 = vpop.f32.mrb[0].mxu0
      %721 = vmatprep.mubr.f32.mxu0 0.0
      %722 = vmatmul.mubr.f32.gmra.mrb[0].mxu0 %v624
      %v723 = vpop.f32.mrb[0].mxu0
      %v724 = vadd.f32 %v596, %v723
      %v725 = vpop.f32.mrb[0].mxu0
      %726 = vmatprep.mubr.f32.mxu0 0.0
      %727 = vmatmul.mubr.f32.gmra.mrb[0].mxu0 %v627
      %v728 = vpop.f32.mrb[0].mxu0
      %v729 = vadd.f32 %v601, %v728
      %v730 = vpop.f32.mrb[0].mxu0
      %731 = vmatprep.mubr.f32.mxu0 0.0
      %732 = vmatmul.mubr.f32.gmra.mrb[0].mxu0 %v630
      %v733 = vpop.f32.mrb[0].mxu0
      %v734 = vadd.f32 %v606, %v733
      %v735 = vpop.f32.mrb[0].mxu0
      %736 = vdwg.mxu0
      %v737 = vmax.f32 %v699, 0.0
      %v738 = vmax.f32 %v704, 0.0
      %v739 = vmax.f32 %v709, 0.0
      %v740 = vmax.f32 %v714, 0.0
      %v741 = vmax.f32 %v719, 0.0
      %v742 = vmax.f32 %v724, 0.0
      %v743 = vmax.f32 %v729, 0.0
      %v744 = vmax.f32 %v734, 0.0
      %v745 = vld [vmem:[%s5] sm:$0xff]
      %v746 = vld [vmem:[%s5 + $0x8] sm:$0xff]
      %v747 = vld [vmem:[%s5 + $0x10] sm:$0xff]
      %v748 = vld [vmem:[%s5 + $0x18] sm:$0xff]
      %v749 = vld [vmem:[%s5 + $0x20] sm:$0xff]
      %v750 = vld [vmem:[%s5 + $0x28] sm:$0xff]
      %v751 = vld [vmem:[%s5 + $0x30] sm:$0xff]
      %v752 = vld [vmem:[%s5 + $0x38] sm:$0xff]
      %v753 = vld [vmem:[%s6] sm:$0xff]
      %v754 = vld [vmem:[%s6 + $0x8] sm:$0xff]
      %v755 = vld [vmem:[%s6 + $0x10] sm:$0xff]
      %v756 = vld [vmem:[%s6 + $0x18] sm:$0xff]
      %v757 = vld [vmem:[%s6 + $0x20] sm:$0xff]
      %v758 = vld [vmem:[%s6 + $0x28] sm:$0xff]
      %v759 = vld [vmem:[%s6 + $0x30] sm:$0xff]
      %v760 = vld [vmem:[%s6 + $0x38] sm:$0xff]
      %762 = vset.pattern.permute.xlu0 0
      %763 = vperm.xlu0 %762, %v753
      %v764 = vpop.permute.xlu0 %763
      %767 = vset.pattern.permute.xlu0 0
      %768 = vperm.xlu0 %767, %v754
      %v769 = vpop.permute.xlu0 %768
      %772 = vset.pattern.permute.xlu0 0
      %773 = vperm.xlu0 %772, %v755
      %v774 = vpop.permute.xlu0 %773
      %777 = vset.pattern.permute.xlu0 0
      %778 = vperm.xlu0 %777, %v756
      %v779 = vpop.permute.xlu0 %778
      %782 = vset.pattern.permute.xlu0 0
      %783 = vperm.xlu0 %782, %v757
      %v784 = vpop.permute.xlu0 %783
      %787 = vset.pattern.permute.xlu0 0
      %788 = vperm.xlu0 %787, %v758
      %v789 = vpop.permute.xlu0 %788
      %792 = vset.pattern.permute.xlu0 0
      %793 = vperm.xlu0 %792, %v759
      %v794 = vpop.permute.xlu0 %793
      %797 = vset.pattern.permute.xlu0 0
      %798 = vperm.xlu0 %797, %v760
      %v799 = vpop.permute.xlu0 %798
      %v802 = vsel %vm446, %v745, 0
      %v805 = vsel %vm446, %v746, 0
      %v808 = vsel %vm446, %v747, 0
      %v811 = vsel %vm446, %v748, 0
      %v814 = vsel %vm446, %v749, 0
      %v817 = vsel %vm446, %v750, 0
      %v820 = vsel %vm446, %v751, 0
      %v823 = vsel %vm446, %v752, 0
      %825 = vmatprep.subr.mxu0 0.0
      %826 = vmatpush1.msra.mxu0 %v737
      %827 = vmatprep.subr.mxu0 0.0
      %828 = vmatpush1.msra.mxu0 %v738
      %829 = vmatprep.subr.mxu0 0.0
      %830 = vmatpush1.msra.mxu0 %v739
      %831 = vmatprep.subr.mxu0 0.0
      %832 = vmatpush1.msra.mxu0 %v740
      %833 = vmatprep.subr.mxu0 0.0
      %834 = vmatpush1.msra.mxu0 %v741
      %835 = vmatprep.subr.mxu0 0.0
      %836 = vmatpush1.msra.mxu0 %v742
      %837 = vmatprep.subr.mxu0 0.0
      %838 = vmatpush1.msra.mxu0 %v743
      %839 = vmatprep.subr.mxu0 0.0
      %840 = vmatpush1.msra.mxu0 %v744
      %841 = vmatprep.subr.mxu0 0.0
      %842 = vmatpush1.msra.mxu0 0.0
      %843 = vmatprep.subr.mxu0 0.0
      %844 = vmatpush1.msra.mxu0 0.0
      %845 = vmatprep.subr.mxu0 0.0
      %846 = vmatpush1.msra.mxu0 0.0
      %847 = vmatprep.subr.mxu0 0.0
      %848 = vmatpush1.msra.mxu0 0.0
      %849 = vmatprep.subr.mxu0 0.0
      %850 = vmatpush1.msra.mxu0 0.0
      %851 = vmatprep.subr.mxu0 0.0
      %852 = vmatpush1.msra.mxu0 0.0
      %853 = vmatprep.subr.mxu0 0.0
      %854 = vmatpush1.msra.mxu0 0.0
      %855 = vmatprep.subr.mxu0 0.0
      %856 = vmatpush1.msra.mxu0 0.0
      %857 = vmatprep.subr.mxu0 0.0
      %858 = vmatpush1.msra.mxu0 0.0
      %859 = vmatprep.subr.mxu0 0.0
      %860 = vmatpush1.msra.mxu0 0.0
      %861 = vmatprep.subr.mxu0 0.0
      %862 = vmatpush1.msra.mxu0 0.0
      %863 = vmatprep.subr.mxu0 0.0
      %864 = vmatpush1.msra.mxu0 0.0
      %865 = vmatprep.subr.mxu0 0.0
      %866 = vmatpush1.msra.mxu0 0.0
      %867 = vmatprep.subr.mxu0 0.0
      %868 = vmatpush1.msra.mxu0 0.0
      %869 = vmatprep.subr.mxu0 0.0
      %870 = vmatpush1.msra.mxu0 0.0
      %871 = vmatprep.subr.mxu0 0.0
      %872 = vmatpush1.msra.mxu0 0.0
      %873 = vmatprep.subr.mxu0 0.0
      %874 = vmatpush1.msra.mxu0 0.0
      %875 = vmatprep.subr.mxu0 0.0
      %876 = vmatpush1.msra.mxu0 0.0
      %877 = vmatprep.subr.mxu0 0.0
      %878 = vmatpush1.msra.mxu0 0.0
      %879 = vmatprep.subr.mxu0 0.0
      %880 = vmatpush1.msra.mxu0 0.0
      %881 = vmatprep.subr.mxu0 0.0
      %882 = vmatpush1.msra.mxu0 0.0
      %883 = vmatprep.subr.mxu0 0.0
      %884 = vmatpush1.msra.mxu0 0.0
      %885 = vmatprep.subr.mxu0 0.0
      %886 = vmatpush1.msra.mxu0 0.0
      %887 = vmatprep.subr.mxu0 0.0
      %888 = vmatpush1.msra.mxu0 0.0
      %889 = vmatprep.mubr.f32.mxu0 0.0
      %890 = vmatmul.mubr.f32.gmra.mrb[0].mxu0 %v802
      %v891 = vpop.f32.mrb[0].mxu0
      %v892 = vadd.f32 %v764, %v891
      %v893 = vpop.f32.mrb[0].mxu0
      %894 = vmatprep.mubr.f32.mxu0 0.0
      %895 = vmatmul.mubr.f32.gmra.mrb[0].mxu0 %v805
      %v896 = vpop.f32.mrb[0].mxu0
      %v897 = vadd.f32 %v769, %v896
      %v898 = vpop.f32.mrb[0].mxu0
      %899 = vmatprep.mubr.f32.mxu0 0.0
      %900 = vmatmul.mubr.f32.gmra.mrb[0].mxu0 %v808
      %v901 = vpop.f32.mrb[0].mxu0
      %v902 = vadd.f32 %v774, %v901
      %v903 = vpop.f32.mrb[0].mxu0
      %904 = vmatprep.mubr.f32.mxu0 0.0
      %905 = vmatmul.mubr.f32.gmra.mrb[0].mxu0 %v811
      %v906 = vpop.f32.mrb[0].mxu0
      %v907 = vadd.f32 %v779, %v906
      %v908 = vpop.f32.mrb[0].mxu0
      %909 = vmatprep.mubr.f32.mxu0 0.0
      %910 = vmatmul.mubr.f32.gmra.mrb[0].mxu0 %v814
      %v911 = vpop.f32.mrb[0].mxu0
      %v912 = vadd.f32 %v784, %v911
      %v913 = vpop.f32.mrb[0].mxu0
      %914 = vmatprep.mubr.f32.mxu0 0.0
      %915 = vmatmul.mubr.f32.gmra.mrb[0].mxu0 %v817
      %v916 = vpop.f32.mrb[0].mxu0
      %v917 = vadd.f32 %v789, %v916
      %v918 = vpop.f32.mrb[0].mxu0
      %919 = vmatprep.mubr.f32.mxu0 0.0
      %920 = vmatmul.mubr.f32.gmra.mrb[0].mxu0 %v820
      %v921 = vpop.f32.mrb[0].mxu0
      %v922 = vadd.f32 %v794, %v921
      %v923 = vpop.f32.mrb[0].mxu0
      %924 = vmatprep.mubr.f32.mxu0 0.0
      %925 = vmatmul.mubr.f32.gmra.mrb[0].mxu0 %v823
      %v926 = vpop.f32.mrb[0].mxu0
      %v927 = vadd.f32 %v799, %v926
      %v928 = vpop.f32.mrb[0].mxu0
      %929 = vdwg.mxu0
      %v930 = vmax.f32 %v892, 0.0
      %v931 = vmax.f32 %v897, 0.0
      %v932 = vmax.f32 %v902, 0.0
      %v933 = vmax.f32 %v907, 0.0
      %v934 = vmax.f32 %v912, 0.0
      %v935 = vmax.f32 %v917, 0.0
      %v936 = vmax.f32 %v922, 0.0
      %v937 = vmax.f32 %v927, 0.0
      %v938 = vld [vmem:[%s7] sm:$0x1]
      %v939 = vld [vmem:[#allocation2] sm:$0x1]
      %941 = vset.pattern.permute.xlu0 0
      %942 = vperm.xlu0 %941, %v939
      %v943 = vpop.permute.xlu0 %942
      %v945 = vlaneseq
      %v946 = vshrl.u32 %v945, 7
      %v947 = vsub.s32 0, %v946
      %v948 = vrot.slane %v943, %v947
      %v950 = vsel %vm446, %v938, 0
      %952 = vmatprep.subr.mxu0 0.0
      %953 = vmatpush1.msra.mxu0 %v930
      %954 = vmatprep.subr.mxu0 0.0
      %955 = vmatpush1.msra.mxu0 %v931
      %956 = vmatprep.subr.mxu0 0.0
      %957 = vmatpush1.msra.mxu0 %v932
      %958 = vmatprep.subr.mxu0 0.0
      %959 = vmatpush1.msra.mxu0 %v933
      %960 = vmatprep.subr.mxu0 0.0
      %961 = vmatpush1.msra.mxu0 %v934
      %962 = vmatprep.subr.mxu0 0.0
      %963 = vmatpush1.msra.mxu0 %v935
      %964 = vmatprep.subr.mxu0 0.0
      %965 = vmatpush1.msra.mxu0 %v936
      %966 = vmatprep.subr.mxu0 0.0
      %967 = vmatpush1.msra.mxu0 %v937
      %968 = vmatprep.subr.mxu0 0.0
      %969 = vmatpush1.msra.mxu0 0.0
      %970 = vmatprep.subr.mxu0 0.0
      %971 = vmatpush1.msra.mxu0 0.0
      %972 = vmatprep.subr.mxu0 0.0
      %973 = vmatpush1.msra.mxu0 0.0
      %974 = vmatprep.subr.mxu0 0.0
      %975 = vmatpush1.msra.mxu0 0.0
      %976 = vmatprep.subr.mxu0 0.0
      %977 = vmatpush1.msra.mxu0 0.0
      %978 = vmatprep.subr.mxu0 0.0
      %979 = vmatpush1.msra.mxu0 0.0
      %980 = vmatprep.subr.mxu0 0.0
      %981 = vmatpush1.msra.mxu0 0.0
      %982 = vmatprep.subr.mxu0 0.0
      %983 = vmatpush1.msra.mxu0 0.0
      %984 = vmatprep.subr.mxu0 0.0
      %985 = vmatpush1.msra.mxu0 0.0
      %986 = vmatprep.subr.mxu0 0.0
      %987 = vmatpush1.msra.mxu0 0.0
      %988 = vmatprep.subr.mxu0 0.0
      %989 = vmatpush1.msra.mxu0 0.0
      %990 = vmatprep.subr.mxu0 0.0
      %991 = vmatpush1.msra.mxu0 0.0
      %992 = vmatprep.subr.mxu0 0.0
      %993 = vmatpush1.msra.mxu0 0.0
      %994 = vmatprep.subr.mxu0 0.0
      %995 = vmatpush1.msra.mxu0 0.0
      %996 = vmatprep.subr.mxu0 0.0
      %997 = vmatpush1.msra.mxu0 0.0
      %998 = vmatprep.subr.mxu0 0.0
      %999 = vmatpush1.msra.mxu0 0.0
      %1000 = vmatprep.subr.mxu0 0.0
      %1001 = vmatpush1.msra.mxu0 0.0
      %1002 = vmatprep.subr.mxu0 0.0
      %1003 = vmatpush1.msra.mxu0 0.0
      %1004 = vmatprep.subr.mxu0 0.0
      %1005 = vmatpush1.msra.mxu0 0.0
      %1006 = vmatprep.subr.mxu0 0.0
      %1007 = vmatpush1.msra.mxu0 0.0
      %1008 = vmatprep.subr.mxu0 0.0
      %1009 = vmatpush1.msra.mxu0 0.0
      %1010 = vmatprep.subr.mxu0 0.0
      %1011 = vmatpush1.msra.mxu0 0.0
      %1012 = vmatprep.subr.mxu0 0.0
      %1013 = vmatpush1.msra.mxu0 0.0
      %1014 = vmatprep.subr.mxu0 0.0
      %1015 = vmatpush1.msra.mxu0 0.0
      %1016 = vmatprep.mubr.f32.mxu0 0.0
      %1017 = vmatmul.mubr.f32.gmra.mrb[0].mxu0 %v950
      %v1018 = vpop.f32.mrb[0].mxu0
      %v1019 = vadd.f32 %v948, %v1018
      %v1020 = vpop.f32.mrb[0].mxu0
      %1021 = vdwg.mxu0
      %1022 = vst [vmem:[%s409] sm:$0x1] %v1019
      %p1023 = scmp.lt.s32.totalorder %s28, 1
      %s1024 = scalar_select %p1023, %s28, 1
      %p1025 = scmp.lt.s32.totalorder %s29, 0
      %s1026 = scalar_select %p1025, %s29, 0
      %s1027 = smul.addr %s1024, 4
      %s1028 = sadd.s32 %s1026, %s1027
      %s1029 = smul.addr %s1028, 8
      %s1030 = scalar_lea.vmem %s9, %s1029
      %p1031 = scmp.lt.s32.totalorder %s28, 1
      %s1032 = scalar_select %p1031, %s28, 1
      %p1033 = scmp.lt.s32.totalorder %s29, 0
      %s1034 = scalar_select %p1033, %s29, 0
      %s1035 = sadd.s32 %s1034, %s1032
      %s1036 = scalar_lea.vmem %s10, %s1035
      // Predicated region
      $region57: #{coarse_reg_forward.11} parent=55 // pred_check
        %p1037 = pneg %p252
      $region58: #{coarse_reg_forward.11} parent=55 // pred_check_branch
        %1039 = sbr.rel (%p1037) target = $region60
      $region59: #{coarse_reg_forward.11} parent=55 // pred_region
        _
      $region60: #{coarse_reg_forward.11} parent=55 // pred_fallthru
        _
      // Predicated region
      $region61: #{coarse_reg_forward.11} parent=55 // pred_check
        %p1040 = pneg %p280
      $region62: #{coarse_reg_forward.11} parent=55 // pred_check_branch
        %1042 = sbr.rel (%p1040) target = $region64
      $region63: #{coarse_reg_forward.11} parent=55 // pred_region
        _
      $region64: #{coarse_reg_forward.11} parent=55 // pred_fallthru
        _
    $region56: #{coarse_reg_forward.11} parent=5 // pred_fallthru
      _
    %p1043 = scmp.le.s32.totalorder 2, %s19
    // Predicated region
    $region65: #{coarse_reg_forward.11} parent=5 // pred_check
      %p1044 = pneg %p1043
    $region66: #{coarse_reg_forward.11} parent=5 // pred_check_branch
      %1046 = sbr.rel (%p1044) target = $region68
    $region67: #{coarse_reg_forward.11} parent=5 // pred_region
      %s1047 = ssub.s32 %s19, 2
      // Predicated region
      $region69: #{coarse_reg_forward.11} parent=67 // pred_check
        %p1048 = pneg %p258
      $region70: #{coarse_reg_forward.11} parent=67 // pred_check_branch
        %1050 = sbr.rel (%p1048) target = $region72
      $region71: #{coarse_reg_forward.11} parent=67 // pred_region
        %p1051 = scmp.lt.s32.totalorder %s30, 1
        %s1052 = scalar_select %p1051, %s30, 1
        %p1053 = scmp.lt.s32.totalorder %s31, 0
        %s1054 = scalar_select %p1053, %s31, 0
        %s1055 = smul.addr %s1052, 4
        %s1056 = sadd.s32 %s1054, %s1055
        %s1057 = smul.addr %s1056, 8
        %s1058 = scalar_lea.vmem %s9, %s1057
      $region72: #{coarse_reg_forward.11} parent=67 // pred_fallthru
        _
      // Predicated region
      $region73: #{coarse_reg_forward.11} parent=67 // pred_check
        %p1059 = pneg %p286
      $region74: #{coarse_reg_forward.11} parent=67 // pred_check_branch
        %1061 = sbr.rel (%p1059) target = $region76
      $region75: #{coarse_reg_forward.11} parent=67 // pred_region
        %p1062 = scmp.lt.s32.totalorder %s30, 1
        %s1063 = scalar_select %p1062, %s30, 1
        %p1064 = scmp.lt.s32.totalorder %s31, 0
        %s1065 = scalar_select %p1064, %s31, 0
        %s1066 = sadd.s32 %s1065, %s1063
        %s1067 = scalar_lea.vmem %s10, %s1066
      $region76: #{coarse_reg_forward.11} parent=67 // pred_fallthru
        _
    $region68: #{coarse_reg_forward.11} parent=5 // pred_fallthru
      _
  $region6: #{coarse_reg_forward.11} parent=0 // loop_footer
    %s23 = sadd.s32 1, %s19
  $region7: #{coarse_reg_forward.11} parent=0 // loop_footer_branch
    %18 = sbr.rel target = $region3
  $region8: #{coarse_reg_forward.11} parent=0 // loop_exit
    _

</llo_original>
